<compile_context>
chip_gen: v7x
topology: tpu7x:2x2x1
jax: 0.10.0
libtpu: 0.0.40
codegen_flags: <defaults>
</compile_context>

<pallas_src>
import functools

import jax
import jax.numpy as jnp
from jax.experimental import pallas as pl
from jax.experimental.pallas import tpu as pltpu


def conv_sigmoid_kernel(x_ref, w_ref, b_ref, o_ref, xpad_ref, xcol_ref, *,
                        k, stride, padding, OH, OW, Cpad):
    # x_ref:    (N, C, H, W)           raw NCHW input, f32
    # w_ref:    (F, k*k*Cpad)          bf16 weights, rows ordered (kh, kw, c_pad)
    # b_ref:    (F, 1)                 f32 bias (lane-broadcast)
    # o_ref:    (N, F, OH*OW)          lane-dense f32 output
    # xpad_ref: (N, Cpad, Hp, Wp)      f32 scratch: zero-padded, channel-padded input
    # xcol_ref: (k*k*Cpad, N*OH, OW)   f32 scratch: im2col taps (pre-relayout)
    N, C, H, W = x_ref.shape
    _, _, Hp, Wp = xpad_ref.shape
    M = OH * OW
    Kp = k * k * Cpad
    f32 = xpad_ref.dtype

    # --- fused padding: zero only the halo ring + the pad channels ----------
    if padding > 0:
        xpad_ref[:, :C, :padding, :] = jnp.zeros((N, C, padding, Wp), f32)
        xpad_ref[:, :C, padding + H:, :] = jnp.zeros((N, C, padding, Wp), f32)
        xpad_ref[:, :C, padding:padding + H, :padding] = jnp.zeros(
            (N, C, H, padding), f32)
        xpad_ref[:, :C, padding:padding + H, padding + W:] = jnp.zeros(
            (N, C, H, padding), f32)
    if Cpad > C:
        # Pad channels must be zero (never multiply uninitialized VMEM, even
        # against zero weight columns — 0 * NaN = NaN).
        xpad_ref[:, C:, :, :] = jnp.zeros((N, Cpad - C, Hp, Wp), f32)
    xpad_ref[:, :C, padding:padding + H, padding:padding + W] = (
        x_ref[...].astype(f32))

    # --- im2col: 8-row-aligned tap slabs, hoisted kh slices ------------------
    for n in range(N):                              # tiny static batch: unrolled
        xp_n = xpad_ref[n]                          # (Cpad, Hp, Wp)
        for kh in range(k):
            # One sublane-offset slice per (n, kh); kw taps come from this slab.
            kh_slab = jax.lax.slice(
                xp_n, (0, kh, 0),
                (Cpad, kh + (OH - 1) * stride + 1, Wp),
                (1, stride, 1))                     # (Cpad, OH, Wp)
            for kw in range(k):
                tap = jax.lax.slice(
                    kh_slab, (0, 0, kw),
                    (Cpad, OH, kw + (OW - 1) * stride + 1),
                    (1, 1, stride))                 # (Cpad, OH, OW)
                t = kh * k + kw
                # Aligned 8-row store; no reshape here (coalesced below).
                xcol_ref[t * Cpad:(t + 1) * Cpad, n * OH:(n + 1) * OH, :] = tap

    # --- single coalesced relayout + one bf16 MXU contraction ---------------
    xcol = xcol_ref[...].reshape(Kp, N * M).astype(jnp.bfloat16)   # (Kp, N*M)
    acc = jnp.dot(w_ref[...], xcol,
                  preferred_element_type=jnp.float32)              # (F, N*M) f32
    out = jax.nn.sigmoid(acc + b_ref[...])          # EUP sigmoid, (F,1) broadcast
    for n in range(N):
        # 128-multiple lane offsets -> unmasked lane-dense stores.
        o_ref[n] = out[:, n * M:(n + 1) * M].astype(o_ref.dtype)


def prepare_conv_params(weight, bias):
    """One-time relayout of PyTorch-layout Conv2d params for the kernel.

    weight: (F, C, k, k), bias: (F,).
    Returns (w_mat bf16 (F, k*k*Cpad), b2d f32 (F, 1), Cpad).
    """
    F_out, C, k, _ = weight.shape
    Cpad = ((C + 7) // 8) * 8
    w_t = jnp.transpose(weight.astype(jnp.float32), (0, 2, 3, 1))   # (F, kh, kw, C)
    w_p = jnp.pad(w_t, ((0, 0), (0, 0), (0, 0), (0, Cpad - C)))     # zero-pad channels
    w_mat = w_p.reshape(F_out, k * k * Cpad).astype(jnp.bfloat16)
    b2d = bias.reshape(F_out, 1).astype(jnp.float32)
    return w_mat, b2d, Cpad


@functools.partial(jax.jit, static_argnames=("k", "stride", "padding", "c_pad"))
def cnn_1stnet_forward(x_nchw, w_mat, b2d, *, k, stride, padding, c_pad):
    """Conv2d(C->F, k, padding, stride) + Sigmoid.  Returns NCHW (N, F, OH, OW)."""
    N, Cin, H, W = x_nchw.shape
    F_out = w_mat.shape[0]
    OH = (H + 2 * padding - k) // stride + 1
    OW = (W + 2 * padding - k) // stride + 1
    Hp, Wp = H + 2 * padding, W + 2 * padding
    Kp = k * k * c_pad

    kernel = functools.partial(conv_sigmoid_kernel, k=k, stride=stride,
                               padding=padding, OH=OH, OW=OW, Cpad=c_pad)

    out = pl.pallas_call(
        kernel,
        out_shape=jax.ShapeDtypeStruct((N, F_out, OH * OW), jnp.float32),
        in_specs=[
            pl.BlockSpec(memory_space=pltpu.MemorySpace.VMEM),
            pl.BlockSpec(memory_space=pltpu.MemorySpace.VMEM),
            pl.BlockSpec(memory_space=pltpu.MemorySpace.VMEM),
        ],
        out_specs=pl.BlockSpec(memory_space=pltpu.MemorySpace.VMEM),
        scratch_shapes=[
            pltpu.VMEM((N, c_pad, Hp, Wp), jnp.float32),     # padded input
            pltpu.VMEM((Kp, N * OH, OW), jnp.float32),       # im2col taps
        ],
    )(x_nchw.astype(jnp.float32), w_mat, b2d)

    # (N, F, OH*OW) -> (N, F, OH, OW): contiguous, free reshape.
    return out.reshape(N, F_out, OH, OW)


def _reference_forward(x_nchw, weight, bias, *, stride, padding):
    """Pure-JAX f32 reference (lax conv) for correctness checking."""
    out = jax.lax.conv_general_dilated(
        x_nchw.astype(jnp.float32),
        weight.astype(jnp.float32),
        window_strides=(stride, stride),
        padding=((padding, padding), (padding, padding)),
        dimension_numbers=("NCHW", "OIHW", "NCHW"),
    )
    return jax.nn.sigmoid(out + bias.reshape(1, -1, 1, 1))


if __name__ == "__main__":
    # Module hyper-parameters (small, consistent with CNN_1stNet.__init__):
    in_ch, nr_filters, k, p_size, s_size = 4, 8, 3, 1, 1
    N, H, W = 2, 16, 16

    key = jax.random.PRNGKey(0)
    kx, kwt, kb = jax.random.split(key, 3)

    # Deterministic init (uniform in +/- 1/sqrt(fan_in), like nn.Conv2d default).
    fan_in = in_ch * k * k
    bound = 1.0 / (fan_in ** 0.5)
    weight = jax.random.uniform(
        kwt, (nr_filters, in_ch, k, k), jnp.float32, -bound, bound
    )
    bias = jax.random.uniform(kb, (nr_filters,), jnp.float32, -bound, bound)
    x = jax.random.normal(kx, (N, in_ch, H, W), jnp.float32)

    # One-time parameter relayout (outside the per-call forward).
    w_mat, b2d, c_pad = prepare_conv_params(weight, bias)

    out = cnn_1stnet_forward(
        x, w_mat, b2d, k=k, stride=s_size, padding=p_size, c_pad=c_pad
    )
    out = jax.block_until_ready(out)

    ref = jax.block_until_ready(
        _reference_forward(x, weight, bias, stride=s_size, padding=p_size)
    )
    assert out.shape == (N, nr_filters, H, W), out.shape
    # bf16 MXU inputs -> loosened tolerance vs. the f32 reference.
    max_err = float(jnp.max(jnp.abs(out - ref)))
    assert jnp.allclose(out, ref, atol=1e-2, rtol=1e-2), max_err

    print("KERNEL_OK")
</pallas_src>

<mosaic_0001>
module attributes {stable_mosaic.version = 11 : i64} {
  func.func @conv_sigmoid_kernel(%arg0: memref<2x4x16x16xf32, #tpu.memory_space<vmem>>, %arg1: memref<8x72xbf16, #tpu.memory_space<vmem>>, %arg2: memref<8x1xf32, #tpu.memory_space<vmem>>, %arg3: memref<2x8x256xf32, #tpu.memory_space<vmem>>, %arg4: memref<2x8x18x18xf32, #tpu.memory_space<vmem>>, %arg5: memref<72x32x16xf32, #tpu.memory_space<vmem>>) attributes {dimension_semantics = [], scalar_prefetch = 0 : i64, scratch_operands = 2 : i64, tpu.core_type = #tpu.core_type<tc>} {
    %cst = arith.constant 0.000000e+00 : f32
    %0 = vector.broadcast %cst : f32 to vector<2x4x1x18xf32>
    %c0 = arith.constant 0 : index
    %c0_0 = arith.constant 0 : index
    %c0_1 = arith.constant 0 : index
    %c0_2 = arith.constant 0 : index
    %1 = vector.load %arg4[%c0, %c0_0, %c0_1, %c0_2] : memref<2x8x18x18xf32, #tpu.memory_space<vmem>>, vector<2x4x1x18xf32>
    tpu.vector_store %arg4[%c0, %c0_0, %c0_1, %c0_2], %0 {strides = array<i32>} : memref<2x8x18x18xf32, #tpu.memory_space<vmem>>, vector<2x4x1x18xf32>,
    %cst_3 = arith.constant 0.000000e+00 : f32
    %2 = vector.broadcast %cst_3 : f32 to vector<2x4x1x18xf32>
    %c0_4 = arith.constant 0 : index
    %c0_5 = arith.constant 0 : index
    %c17 = arith.constant 17 : index
    %c0_6 = arith.constant 0 : index
    %3 = vector.load %arg4[%c0_4, %c0_5, %c17, %c0_6] : memref<2x8x18x18xf32, #tpu.memory_space<vmem>>, vector<2x4x1x18xf32>
    tpu.vector_store %arg4[%c0_4, %c0_5, %c17, %c0_6], %2 {strides = array<i32>} : memref<2x8x18x18xf32, #tpu.memory_space<vmem>>, vector<2x4x1x18xf32>,
    %cst_7 = arith.constant 0.000000e+00 : f32
    %4 = vector.broadcast %cst_7 : f32 to vector<2x4x16x1xf32>
    %c0_8 = arith.constant 0 : index
    %c0_9 = arith.constant 0 : index
    %c1 = arith.constant 1 : index
    %c0_10 = arith.constant 0 : index
    %5 = vector.load %arg4[%c0_8, %c0_9, %c1, %c0_10] : memref<2x8x18x18xf32, #tpu.memory_space<vmem>>, vector<2x4x16x1xf32>
    tpu.vector_store %arg4[%c0_8, %c0_9, %c1, %c0_10], %4 {strides = array<i32>} : memref<2x8x18x18xf32, #tpu.memory_space<vmem>>, vector<2x4x16x1xf32>,
    %cst_11 = arith.constant 0.000000e+00 : f32
    %6 = vector.broadcast %cst_11 : f32 to vector<2x4x16x1xf32>
    %c0_12 = arith.constant 0 : index
    %c0_13 = arith.constant 0 : index
    %c1_14 = arith.constant 1 : index
    %c17_15 = arith.constant 17 : index
    %7 = vector.load %arg4[%c0_12, %c0_13, %c1_14, %c17_15] : memref<2x8x18x18xf32, #tpu.memory_space<vmem>>, vector<2x4x16x1xf32>
    tpu.vector_store %arg4[%c0_12, %c0_13, %c1_14, %c17_15], %6 {strides = array<i32>} : memref<2x8x18x18xf32, #tpu.memory_space<vmem>>, vector<2x4x16x1xf32>,
    %cst_16 = arith.constant 0.000000e+00 : f32
    %8 = vector.broadcast %cst_16 : f32 to vector<2x4x18x18xf32>
    %c0_17 = arith.constant 0 : index
    %c4 = arith.constant 4 : index
    %c0_18 = arith.constant 0 : index
    %c0_19 = arith.constant 0 : index
    %9 = vector.load %arg4[%c0_17, %c4, %c0_18, %c0_19] : memref<2x8x18x18xf32, #tpu.memory_space<vmem>>, vector<2x4x18x18xf32>
    tpu.vector_store %arg4[%c0_17, %c4, %c0_18, %c0_19], %8 {strides = array<i32>} : memref<2x8x18x18xf32, #tpu.memory_space<vmem>>, vector<2x4x18x18xf32>,
    %c0_20 = arith.constant 0 : index
    %c0_21 = arith.constant 0 : index
    %c0_22 = arith.constant 0 : index
    %c0_23 = arith.constant 0 : index
    %10 = vector.load %arg0[%c0_20, %c0_21, %c0_22, %c0_23] : memref<2x4x16x16xf32, #tpu.memory_space<vmem>>, vector<2x4x16x16xf32>
    %c0_24 = arith.constant 0 : index
    %c0_25 = arith.constant 0 : index
    %c1_26 = arith.constant 1 : index
    %c1_27 = arith.constant 1 : index
    %11 = vector.load %arg4[%c0_24, %c0_25, %c1_26, %c1_27] : memref<2x8x18x18xf32, #tpu.memory_space<vmem>>, vector<2x4x16x16xf32>
    tpu.vector_store %arg4[%c0_24, %c0_25, %c1_26, %c1_27], %10 {strides = array<i32>} : memref<2x8x18x18xf32, #tpu.memory_space<vmem>>, vector<2x4x16x16xf32>,
    %c0_28 = arith.constant 0 : index
    %c0_29 = arith.constant 0 : index
    %c0_30 = arith.constant 0 : index
    %c0_31 = arith.constant 0 : index
    %12 = vector.load %arg4[%c0_28, %c0_29, %c0_30, %c0_31] : memref<2x8x18x18xf32, #tpu.memory_space<vmem>>, vector<1x8x18x18xf32>
    %13 = vector.shape_cast %12 : vector<1x8x18x18xf32> to vector<8x18x18xf32>
    %14 = vector.extract_strided_slice %13 {offsets = [0, 0, 0], sizes = [8, 16, 18], strides = [1, 1, 1]} : vector<8x18x18xf32> to vector<8x16x18xf32>
    %15 = vector.extract_strided_slice %14 {offsets = [0, 0, 0], sizes = [8, 16, 16], strides = [1, 1, 1]} : vector<8x16x18xf32> to vector<8x16x16xf32>
    %c0_32 = arith.constant 0 : index
    %c0_33 = arith.constant 0 : index
    %c0_34 = arith.constant 0 : index
    %16 = vector.load %arg5[%c0_32, %c0_33, %c0_34] : memref<72x32x16xf32, #tpu.memory_space<vmem>>, vector<8x16x16xf32>
    tpu.vector_store %arg5[%c0_32, %c0_33, %c0_34], %15 {strides = array<i32>} : memref<72x32x16xf32, #tpu.memory_space<vmem>>, vector<8x16x16xf32>,
    %17 = vector.extract_strided_slice %14 {offsets = [0, 0, 1], sizes = [8, 16, 16], strides = [1, 1, 1]} : vector<8x16x18xf32> to vector<8x16x16xf32>
    %c8 = arith.constant 8 : index
    %c0_35 = arith.constant 0 : index
    %c0_36 = arith.constant 0 : index
    %18 = vector.load %arg5[%c8, %c0_35, %c0_36] : memref<72x32x16xf32, #tpu.memory_space<vmem>>, vector<8x16x16xf32>
    tpu.vector_store %arg5[%c8, %c0_35, %c0_36], %17 {strides = array<i32>} : memref<72x32x16xf32, #tpu.memory_space<vmem>>, vector<8x16x16xf32>,
    %19 = vector.extract_strided_slice %14 {offsets = [0, 0, 2], sizes = [8, 16, 16], strides = [1, 1, 1]} : vector<8x16x18xf32> to vector<8x16x16xf32>
    %c16 = arith.constant 16 : index
    %c0_37 = arith.constant 0 : index
    %c0_38 = arith.constant 0 : index
    %20 = vector.load %arg5[%c16, %c0_37, %c0_38] : memref<72x32x16xf32, #tpu.memory_space<vmem>>, vector<8x16x16xf32>
    tpu.vector_store %arg5[%c16, %c0_37, %c0_38], %19 {strides = array<i32>} : memref<72x32x16xf32, #tpu.memory_space<vmem>>, vector<8x16x16xf32>,
    %21 = vector.extract_strided_slice %13 {offsets = [0, 1, 0], sizes = [8, 16, 18], strides = [1, 1, 1]} : vector<8x18x18xf32> to vector<8x16x18xf32>
    %22 = vector.extract_strided_slice %21 {offsets = [0, 0, 0], sizes = [8, 16, 16], strides = [1, 1, 1]} : vector<8x16x18xf32> to vector<8x16x16xf32>
    %c24 = arith.constant 24 : index
    %c0_39 = arith.constant 0 : index
    %c0_40 = arith.constant 0 : index
    %23 = vector.load %arg5[%c24, %c0_39, %c0_40] : memref<72x32x16xf32, #tpu.memory_space<vmem>>, vector<8x16x16xf32>
    tpu.vector_store %arg5[%c24, %c0_39, %c0_40], %22 {strides = array<i32>} : memref<72x32x16xf32, #tpu.memory_space<vmem>>, vector<8x16x16xf32>,
    %24 = vector.extract_strided_slice %21 {offsets = [0, 0, 1], sizes = [8, 16, 16], strides = [1, 1, 1]} : vector<8x16x18xf32> to vector<8x16x16xf32>
    %c32 = arith.constant 32 : index
    %c0_41 = arith.constant 0 : index
    %c0_42 = arith.constant 0 : index
    %25 = vector.load %arg5[%c32, %c0_41, %c0_42] : memref<72x32x16xf32, #tpu.memory_space<vmem>>, vector<8x16x16xf32>
    tpu.vector_store %arg5[%c32, %c0_41, %c0_42], %24 {strides = array<i32>} : memref<72x32x16xf32, #tpu.memory_space<vmem>>, vector<8x16x16xf32>,
    %26 = vector.extract_strided_slice %21 {offsets = [0, 0, 2], sizes = [8, 16, 16], strides = [1, 1, 1]} : vector<8x16x18xf32> to vector<8x16x16xf32>
    %c40 = arith.constant 40 : index
    %c0_43 = arith.constant 0 : index
    %c0_44 = arith.constant 0 : index
    %27 = vector.load %arg5[%c40, %c0_43, %c0_44] : memref<72x32x16xf32, #tpu.memory_space<vmem>>, vector<8x16x16xf32>
    tpu.vector_store %arg5[%c40, %c0_43, %c0_44], %26 {strides = array<i32>} : memref<72x32x16xf32, #tpu.memory_space<vmem>>, vector<8x16x16xf32>,
    %28 = vector.extract_strided_slice %13 {offsets = [0, 2, 0], sizes = [8, 16, 18], strides = [1, 1, 1]} : vector<8x18x18xf32> to vector<8x16x18xf32>
    %29 = vector.extract_strided_slice %28 {offsets = [0, 0, 0], sizes = [8, 16, 16], strides = [1, 1, 1]} : vector<8x16x18xf32> to vector<8x16x16xf32>
    %c48 = arith.constant 48 : index
    %c0_45 = arith.constant 0 : index
    %c0_46 = arith.constant 0 : index
    %30 = vector.load %arg5[%c48, %c0_45, %c0_46] : memref<72x32x16xf32, #tpu.memory_space<vmem>>, vector<8x16x16xf32>
    tpu.vector_store %arg5[%c48, %c0_45, %c0_46], %29 {strides = array<i32>} : memref<72x32x16xf32, #tpu.memory_space<vmem>>, vector<8x16x16xf32>,
    %31 = vector.extract_strided_slice %28 {offsets = [0, 0, 1], sizes = [8, 16, 16], strides = [1, 1, 1]} : vector<8x16x18xf32> to vector<8x16x16xf32>
    %c56 = arith.constant 56 : index
    %c0_47 = arith.constant 0 : index
    %c0_48 = arith.constant 0 : index
    %32 = vector.load %arg5[%c56, %c0_47, %c0_48] : memref<72x32x16xf32, #tpu.memory_space<vmem>>, vector<8x16x16xf32>
    tpu.vector_store %arg5[%c56, %c0_47, %c0_48], %31 {strides = array<i32>} : memref<72x32x16xf32, #tpu.memory_space<vmem>>, vector<8x16x16xf32>,
    %33 = vector.extract_strided_slice %28 {offsets = [0, 0, 2], sizes = [8, 16, 16], strides = [1, 1, 1]} : vector<8x16x18xf32> to vector<8x16x16xf32>
    %c64 = arith.constant 64 : index
    %c0_49 = arith.constant 0 : index
    %c0_50 = arith.constant 0 : index
    %34 = vector.load %arg5[%c64, %c0_49, %c0_50] : memref<72x32x16xf32, #tpu.memory_space<vmem>>, vector<8x16x16xf32>
    tpu.vector_store %arg5[%c64, %c0_49, %c0_50], %33 {strides = array<i32>} : memref<72x32x16xf32, #tpu.memory_space<vmem>>, vector<8x16x16xf32>,
    %c1_51 = arith.constant 1 : index
    %c0_52 = arith.constant 0 : index
    %c0_53 = arith.constant 0 : index
    %c0_54 = arith.constant 0 : index
    %35 = vector.load %arg4[%c1_51, %c0_52, %c0_53, %c0_54] : memref<2x8x18x18xf32, #tpu.memory_space<vmem>>, vector<1x8x18x18xf32>
    %36 = vector.shape_cast %35 : vector<1x8x18x18xf32> to vector<8x18x18xf32>
    %37 = vector.extract_strided_slice %36 {offsets = [0, 0, 0], sizes = [8, 16, 18], strides = [1, 1, 1]} : vector<8x18x18xf32> to vector<8x16x18xf32>
    %38 = vector.extract_strided_slice %37 {offsets = [0, 0, 0], sizes = [8, 16, 16], strides = [1, 1, 1]} : vector<8x16x18xf32> to vector<8x16x16xf32>
    %c0_55 = arith.constant 0 : index
    %c16_56 = arith.constant 16 : index
    %c0_57 = arith.constant 0 : index
    %39 = vector.load %arg5[%c0_55, %c16_56, %c0_57] : memref<72x32x16xf32, #tpu.memory_space<vmem>>, vector<8x16x16xf32>
    tpu.vector_store %arg5[%c0_55, %c16_56, %c0_57], %38 {strides = array<i32>} : memref<72x32x16xf32, #tpu.memory_space<vmem>>, vector<8x16x16xf32>,
    %40 = vector.extract_strided_slice %37 {offsets = [0, 0, 1], sizes = [8, 16, 16], strides = [1, 1, 1]} : vector<8x16x18xf32> to vector<8x16x16xf32>
    %c8_58 = arith.constant 8 : index
    %c16_59 = arith.constant 16 : index
    %c0_60 = arith.constant 0 : index
    %41 = vector.load %arg5[%c8_58, %c16_59, %c0_60] : memref<72x32x16xf32, #tpu.memory_space<vmem>>, vector<8x16x16xf32>
    tpu.vector_store %arg5[%c8_58, %c16_59, %c0_60], %40 {strides = array<i32>} : memref<72x32x16xf32, #tpu.memory_space<vmem>>, vector<8x16x16xf32>,
    %42 = vector.extract_strided_slice %37 {offsets = [0, 0, 2], sizes = [8, 16, 16], strides = [1, 1, 1]} : vector<8x16x18xf32> to vector<8x16x16xf32>
    %c16_61 = arith.constant 16 : index
    %c16_62 = arith.constant 16 : index
    %c0_63 = arith.constant 0 : index
    %43 = vector.load %arg5[%c16_61, %c16_62, %c0_63] : memref<72x32x16xf32, #tpu.memory_space<vmem>>, vector<8x16x16xf32>
    tpu.vector_store %arg5[%c16_61, %c16_62, %c0_63], %42 {strides = array<i32>} : memref<72x32x16xf32, #tpu.memory_space<vmem>>, vector<8x16x16xf32>,
    %44 = vector.extract_strided_slice %36 {offsets = [0, 1, 0], sizes = [8, 16, 18], strides = [1, 1, 1]} : vector<8x18x18xf32> to vector<8x16x18xf32>
    %45 = vector.extract_strided_slice %44 {offsets = [0, 0, 0], sizes = [8, 16, 16], strides = [1, 1, 1]} : vector<8x16x18xf32> to vector<8x16x16xf32>
    %c24_64 = arith.constant 24 : index
    %c16_65 = arith.constant 16 : index
    %c0_66 = arith.constant 0 : index
    %46 = vector.load %arg5[%c24_64, %c16_65, %c0_66] : memref<72x32x16xf32, #tpu.memory_space<vmem>>, vector<8x16x16xf32>
    tpu.vector_store %arg5[%c24_64, %c16_65, %c0_66], %45 {strides = array<i32>} : memref<72x32x16xf32, #tpu.memory_space<vmem>>, vector<8x16x16xf32>,
    %47 = vector.extract_strided_slice %44 {offsets = [0, 0, 1], sizes = [8, 16, 16], strides = [1, 1, 1]} : vector<8x16x18xf32> to vector<8x16x16xf32>
    %c32_67 = arith.constant 32 : index
    %c16_68 = arith.constant 16 : index
    %c0_69 = arith.constant 0 : index
    %48 = vector.load %arg5[%c32_67, %c16_68, %c0_69] : memref<72x32x16xf32, #tpu.memory_space<vmem>>, vector<8x16x16xf32>
    tpu.vector_store %arg5[%c32_67, %c16_68, %c0_69], %47 {strides = array<i32>} : memref<72x32x16xf32, #tpu.memory_space<vmem>>, vector<8x16x16xf32>,
    %49 = vector.extract_strided_slice %44 {offsets = [0, 0, 2], sizes = [8, 16, 16], strides = [1, 1, 1]} : vector<8x16x18xf32> to vector<8x16x16xf32>
    %c40_70 = arith.constant 40 : index
    %c16_71 = arith.constant 16 : index
    %c0_72 = arith.constant 0 : index
    %50 = vector.load %arg5[%c40_70, %c16_71, %c0_72] : memref<72x32x16xf32, #tpu.memory_space<vmem>>, vector<8x16x16xf32>
    tpu.vector_store %arg5[%c40_70, %c16_71, %c0_72], %49 {strides = array<i32>} : memref<72x32x16xf32, #tpu.memory_space<vmem>>, vector<8x16x16xf32>,
    %51 = vector.extract_strided_slice %36 {offsets = [0, 2, 0], sizes = [8, 16, 18], strides = [1, 1, 1]} : vector<8x18x18xf32> to vector<8x16x18xf32>
    %52 = vector.extract_strided_slice %51 {offsets = [0, 0, 0], sizes = [8, 16, 16], strides = [1, 1, 1]} : vector<8x16x18xf32> to vector<8x16x16xf32>
    %c48_73 = arith.constant 48 : index
    %c16_74 = arith.constant 16 : index
    %c0_75 = arith.constant 0 : index
    %53 = vector.load %arg5[%c48_73, %c16_74, %c0_75] : memref<72x32x16xf32, #tpu.memory_space<vmem>>, vector<8x16x16xf32>
    tpu.vector_store %arg5[%c48_73, %c16_74, %c0_75], %52 {strides = array<i32>} : memref<72x32x16xf32, #tpu.memory_space<vmem>>, vector<8x16x16xf32>,
    %54 = vector.extract_strided_slice %51 {offsets = [0, 0, 1], sizes = [8, 16, 16], strides = [1, 1, 1]} : vector<8x16x18xf32> to vector<8x16x16xf32>
    %c56_76 = arith.constant 56 : index
    %c16_77 = arith.constant 16 : index
    %c0_78 = arith.constant 0 : index
    %55 = vector.load %arg5[%c56_76, %c16_77, %c0_78] : memref<72x32x16xf32, #tpu.memory_space<vmem>>, vector<8x16x16xf32>
    tpu.vector_store %arg5[%c56_76, %c16_77, %c0_78], %54 {strides = array<i32>} : memref<72x32x16xf32, #tpu.memory_space<vmem>>, vector<8x16x16xf32>,
    %56 = vector.extract_strided_slice %51 {offsets = [0, 0, 2], sizes = [8, 16, 16], strides = [1, 1, 1]} : vector<8x16x18xf32> to vector<8x16x16xf32>
    %c64_79 = arith.constant 64 : index
    %c16_80 = arith.constant 16 : index
    %c0_81 = arith.constant 0 : index
    %57 = vector.load %arg5[%c64_79, %c16_80, %c0_81] : memref<72x32x16xf32, #tpu.memory_space<vmem>>, vector<8x16x16xf32>
    tpu.vector_store %arg5[%c64_79, %c16_80, %c0_81], %56 {strides = array<i32>} : memref<72x32x16xf32, #tpu.memory_space<vmem>>, vector<8x16x16xf32>,
    %c0_82 = arith.constant 0 : index
    %c0_83 = arith.constant 0 : index
    %c0_84 = arith.constant 0 : index
    %58 = vector.load %arg5[%c0_82, %c0_83, %c0_84] : memref<72x32x16xf32, #tpu.memory_space<vmem>>, vector<72x32x16xf32>
    %59 = vector.shape_cast %58 : vector<72x32x16xf32> to vector<72x512xf32>
    %60 = arith.truncf %59 : vector<72x512xf32> to vector<72x512xbf16>
    %c0_85 = arith.constant 0 : index
    %c0_86 = arith.constant 0 : index
    %61 = vector.load %arg1[%c0_85, %c0_86] : memref<8x72xbf16, #tpu.memory_space<vmem>>, vector<8x72xbf16>
    %cst_87 = arith.constant dense<0.000000e+00> : vector<8x512xf32>
    %62 = tpu.matmul %61, %60, %cst_87 {dimension_numbers = #tpu.dot_dimension_numbers<[1], [0], [0], [1], [0, 0, 1, 1], [], []>} : vector<8x72xbf16>, vector<72x512xbf16>, vector<8x512xf32> -> vector<8x512xf32>
    %c0_88 = arith.constant 0 : index
    %c0_89 = arith.constant 0 : index
    %63 = vector.load %arg2[%c0_88, %c0_89] : memref<8x1xf32, #tpu.memory_space<vmem>>, vector<8x1xf32>
    %64 = vector.broadcast %63 : vector<8x1xf32> to vector<8x512xf32>
    %65 = arith.addf %62, %64 : vector<8x512xf32>
    %66 = arith.negf %65 : vector<8x512xf32>
    %67 = math.exp %66 : vector<8x512xf32>
    %cst_90 = arith.constant 1.000000e+00 : f32
    %68 = vector.broadcast %cst_90 : f32 to vector<8x512xf32>
    %69 = arith.addf %68, %67 : vector<8x512xf32>
    %70 = arith.divf %68, %69 : vector<8x512xf32>
    %71 = vector.extract_strided_slice %70 {offsets = [0, 0], sizes = [8, 256], strides = [1, 1]} : vector<8x512xf32> to vector<8x256xf32>
    %c0_91 = arith.constant 0 : index
    %c0_92 = arith.constant 0 : index
    %c0_93 = arith.constant 0 : index
    %72 = vector.load %arg3[%c0_91, %c0_92, %c0_93] : memref<2x8x256xf32, #tpu.memory_space<vmem>>, vector<1x8x256xf32>
    %73 = vector.shape_cast %72 : vector<1x8x256xf32> to vector<8x256xf32>
    %74 = vector.shape_cast %71 : vector<8x256xf32> to vector<1x8x256xf32>
    tpu.vector_store %arg3[%c0_91, %c0_92, %c0_93], %74 {strides = array<i32>} : memref<2x8x256xf32, #tpu.memory_space<vmem>>, vector<1x8x256xf32>,
    %75 = vector.extract_strided_slice %70 {offsets = [0, 256], sizes = [8, 256], strides = [1, 1]} : vector<8x512xf32> to vector<8x256xf32>
    %c1_94 = arith.constant 1 : index
    %c0_95 = arith.constant 0 : index
    %c0_96 = arith.constant 0 : index
    %76 = vector.load %arg3[%c1_94, %c0_95, %c0_96] : memref<2x8x256xf32, #tpu.memory_space<vmem>>, vector<1x8x256xf32>
    %77 = vector.shape_cast %76 : vector<1x8x256xf32> to vector<8x256xf32>
    %78 = vector.shape_cast %75 : vector<8x256xf32> to vector<1x8x256xf32>
    tpu.vector_store %arg3[%c1_94, %c0_95, %c0_96], %78 {strides = array<i32>} : memref<2x8x256xf32, #tpu.memory_space<vmem>>, vector<1x8x256xf32>,
    return
  }
}

</mosaic_0001>

<llo_original>
// kernel: cnn_1stnet_forward.1
$region0: #{cnn_1stnet_forward.1}
  #allocation0 [shape = 'u32[]', space=smem, size = 0x4, offset = 0x4, fixed_abs, tag = 'smem constant byte address 0x4 - core index']
  #allocation1 [shape = 'u32[144,128]{1,0:T(1,128)}', space=vmem, size = 0x12000, scoped, tag = 'internal scratch']
  #allocation2 [shape = 'f32[2,8,18,18]{3,2,1,0:T(8,128)}', space=vmem, size = 0x30000, scoped, tag = 'scratch operand']
  #allocation3 [shape = 'f32[72,32,16]{2,1,0:T(8,128)}', space=vmem, size = 0x120000, scoped, tag = 'scratch operand']
  %s0 = inlined_call_operand.hbm [shape: f32[2,4,16,16], index: 0, kind: input, shape index: {}]
  %s1 = inlined_call_operand.vmem [shape: bf16[8,72], index: 1, kind: input, shape index: {}]
  %s2 = inlined_call_operand.vmem [shape: f32[8,1], index: 2, kind: input, shape index: {}]
  %s3 = inlined_call_operand.vmem [shape: f32[2,8,256], index: 3, kind: output, shape index: {}]
  %s4 = sld [smem:[#allocation0]]
  $region26: #{cnn_1stnet_forward.1} parent=0
    _
  %s6 = ssub.s32 1, %s4
  %s7 = scalar_select 0, %s6, %s4
  $region1: #{cnn_1stnet_forward.1} parent=0
    #allocation4 [shape = 'u8[65536]{0}', space=vmem, size = 0x10000, scoped, tag = 'input window, operand 0, single buffered']
    #allocation5 [shape = 's32[1]{0}', space=sflag, size = 0x4, scoped, tag = 'scoped memory for cnn_1stnet_forward.1']
    %8 = vsyncpa [#allocation5], 0
    // Predicated region
    $region2: #{cnn_1stnet_forward.1} parent=1 // pred_check
      _
    $region3: #{cnn_1stnet_forward.1} parent=1 // pred_check_branch
      %10 = sbr.rel (0) target = $region5
    $region4: #{cnn_1stnet_forward.1} parent=1 // pred_region
      %s12 = ssub.s32 2048, 2048
      %13 = vsyncadd [#allocation5], %s12
      %s14 = sshll.u32 [#allocation4], 4
      %s15 = int_to_ptr.vmem [resolvable:$true] %s14
      %20 = dma.hbm_to_vmem [thread:$0]  %s0, 2048, %s15, [#allocation5], 128, 128, 8
    $region5: #{cnn_1stnet_forward.1} parent=1 // pred_fallthru
      _
    // Predicated region
    $region6: #{cnn_1stnet_forward.1} parent=1 // pred_check
      _
    $region7: #{cnn_1stnet_forward.1} parent=1 // pred_check_branch
      %22 = sbr.rel (0) target = $region9
    $region8: #{cnn_1stnet_forward.1} parent=1 // pred_region
      _
    $region9: #{cnn_1stnet_forward.1} parent=1 // pred_fallthru
      _
    // Predicated region
    $region10: #{cnn_1stnet_forward.1} parent=1 // pred_check
      _
    $region11: #{cnn_1stnet_forward.1} parent=1 // pred_check_branch
      %24 = sbr.rel (0) target = $region13
    $region12: #{cnn_1stnet_forward.1} parent=1 // pred_region
      _
    $region13: #{cnn_1stnet_forward.1} parent=1 // pred_fallthru
      _
    // Predicated region
    $region14: #{cnn_1stnet_forward.1} parent=1 // pred_check
      _
    $region15: #{cnn_1stnet_forward.1} parent=1 // pred_check_branch
      %26 = sbr.rel (0) target = $region17
    $region16: #{cnn_1stnet_forward.1} parent=1 // pred_region
      %27 = dma.done [#allocation5], 2048
    $region17: #{cnn_1stnet_forward.1} parent=1 // pred_fallthru
      _
    %vm29 = vcmask 139264
    %30 = vst.msk [vmem:[#allocation2] sm:$0x1] %vm29, 0.0
    %31 = vst.msk [vmem:[#allocation2 + $0x18] sm:$0x1] %vm29, 0.0
    %32 = vst.msk [vmem:[#allocation2 + $0x30] sm:$0x1] %vm29, 0.0
    %33 = vst.msk [vmem:[#allocation2 + $0x48] sm:$0x1] %vm29, 0.0
    %34 = vst.msk [vmem:[#allocation2 + $0xc0] sm:$0x1] %vm29, 0.0
    %35 = vst.msk [vmem:[#allocation2 + $0xd8] sm:$0x1] %vm29, 0.0
    %36 = vst.msk [vmem:[#allocation2 + $0xf0] sm:$0x1] %vm29, 0.0
    %37 = vst.msk [vmem:[#allocation2 + $0x108] sm:$0x1] %vm29, 0.0
    %38 = vst.msk [vmem:[#allocation2 + $0x11] sm:$0x1] %vm29, 0.0
    %39 = vst.msk [vmem:[#allocation2 + $0x29] sm:$0x1] %vm29, 0.0
    %40 = vst.msk [vmem:[#allocation2 + $0x41] sm:$0x1] %vm29, 0.0
    %41 = vst.msk [vmem:[#allocation2 + $0x59] sm:$0x1] %vm29, 0.0
    %42 = vst.msk [vmem:[#allocation2 + $0xd1] sm:$0x1] %vm29, 0.0
    %43 = vst.msk [vmem:[#allocation2 + $0xe9] sm:$0x1] %vm29, 0.0
    %44 = vst.msk [vmem:[#allocation2 + $0x101] sm:$0x1] %vm29, 0.0
    %45 = vst.msk [vmem:[#allocation2 + $0x119] sm:$0x1] %vm29, 0.0
    %vm46 = vcmask 7168
    %47 = vst.msk [vmem:[#allocation2 + $0x1] sm:$0xff] %vm46, 0.0
    %48 = vst.msk [vmem:[#allocation2 + $0x9] sm:$0xff] %vm46, 0.0
    %49 = vst.msk [vmem:[#allocation2 + $0x19] sm:$0xff] %vm46, 0.0
    %50 = vst.msk [vmem:[#allocation2 + $0x21] sm:$0xff] %vm46, 0.0
    %51 = vst.msk [vmem:[#allocation2 + $0x31] sm:$0xff] %vm46, 0.0
    %52 = vst.msk [vmem:[#allocation2 + $0x39] sm:$0xff] %vm46, 0.0
    %53 = vst.msk [vmem:[#allocation2 + $0x49] sm:$0xff] %vm46, 0.0
    %54 = vst.msk [vmem:[#allocation2 + $0x51] sm:$0xff] %vm46, 0.0
    %55 = vst.msk [vmem:[#allocation2 + $0xc1] sm:$0xff] %vm46, 0.0
    %56 = vst.msk [vmem:[#allocation2 + $0xc9] sm:$0xff] %vm46, 0.0
    %57 = vst.msk [vmem:[#allocation2 + $0xd9] sm:$0xff] %vm46, 0.0
    %58 = vst.msk [vmem:[#allocation2 + $0xe1] sm:$0xff] %vm46, 0.0
    %59 = vst.msk [vmem:[#allocation2 + $0xf1] sm:$0xff] %vm46, 0.0
    %60 = vst.msk [vmem:[#allocation2 + $0xf9] sm:$0xff] %vm46, 0.0
    %61 = vst.msk [vmem:[#allocation2 + $0x109] sm:$0xff] %vm46, 0.0
    %62 = vst.msk [vmem:[#allocation2 + $0x111] sm:$0xff] %vm46, 0.0
    %vm63 = vcmask 146568
    %64 = vst.msk [vmem:[#allocation2 + $0x1] sm:$0xff] %vm63, 0.0
    %65 = vst.msk [vmem:[#allocation2 + $0x9] sm:$0xff] %vm63, 0.0
    %66 = vst.msk [vmem:[#allocation2 + $0x19] sm:$0xff] %vm63, 0.0
    %67 = vst.msk [vmem:[#allocation2 + $0x21] sm:$0xff] %vm63, 0.0
    %68 = vst.msk [vmem:[#allocation2 + $0x31] sm:$0xff] %vm63, 0.0
    %69 = vst.msk [vmem:[#allocation2 + $0x39] sm:$0xff] %vm63, 0.0
    %70 = vst.msk [vmem:[#allocation2 + $0x49] sm:$0xff] %vm63, 0.0
    %71 = vst.msk [vmem:[#allocation2 + $0x51] sm:$0xff] %vm63, 0.0
    %72 = vst.msk [vmem:[#allocation2 + $0xc1] sm:$0xff] %vm63, 0.0
    %73 = vst.msk [vmem:[#allocation2 + $0xc9] sm:$0xff] %vm63, 0.0
    %74 = vst.msk [vmem:[#allocation2 + $0xd9] sm:$0xff] %vm63, 0.0
    %75 = vst.msk [vmem:[#allocation2 + $0xe1] sm:$0xff] %vm63, 0.0
    %76 = vst.msk [vmem:[#allocation2 + $0xf1] sm:$0xff] %vm63, 0.0
    %77 = vst.msk [vmem:[#allocation2 + $0xf9] sm:$0xff] %vm63, 0.0
    %78 = vst.msk [vmem:[#allocation2 + $0x109] sm:$0xff] %vm63, 0.0
    %79 = vst.msk [vmem:[#allocation2 + $0x111] sm:$0xff] %vm63, 0.0
    %s80 = scalar_lea.vmem [#allocation2], 96
    %vm81 = vcmask 146432
    %82 = vst.msk [vmem:[%s80] sm:$0xff] %vm81, 0.0
    %83 = vst.msk [vmem:[%s80 + $0x8] sm:$0xff] %vm81, 0.0
    %vm84 = vcmask 140288
    %85 = vst.msk [vmem:[%s80 + $0x10] sm:$0x3] %vm84, 0.0
    %86 = vst.msk [vmem:[%s80 + $0x18] sm:$0xff] %vm81, 0.0
    %87 = vst.msk [vmem:[%s80 + $0x20] sm:$0xff] %vm81, 0.0
    %88 = vst.msk [vmem:[%s80 + $0x28] sm:$0x3] %vm84, 0.0
    %89 = vst.msk [vmem:[%s80 + $0x30] sm:$0xff] %vm81, 0.0
    %90 = vst.msk [vmem:[%s80 + $0x38] sm:$0xff] %vm81, 0.0
    %91 = vst.msk [vmem:[%s80 + $0x40] sm:$0x3] %vm84, 0.0
    %92 = vst.msk [vmem:[%s80 + $0x48] sm:$0xff] %vm81, 0.0
    %93 = vst.msk [vmem:[%s80 + $0x50] sm:$0xff] %vm81, 0.0
    %94 = vst.msk [vmem:[%s80 + $0x58] sm:$0x3] %vm84, 0.0
    %95 = vst.msk [vmem:[%s80 + $0xc0] sm:$0xff] %vm81, 0.0
    %96 = vst.msk [vmem:[%s80 + $0xc8] sm:$0xff] %vm81, 0.0
    %97 = vst.msk [vmem:[%s80 + $0xd0] sm:$0x3] %vm84, 0.0
    %98 = vst.msk [vmem:[%s80 + $0xd8] sm:$0xff] %vm81, 0.0
    %99 = vst.msk [vmem:[%s80 + $0xe0] sm:$0xff] %vm81, 0.0
    %100 = vst.msk [vmem:[%s80 + $0xe8] sm:$0x3] %vm84, 0.0
    %101 = vst.msk [vmem:[%s80 + $0xf0] sm:$0xff] %vm81, 0.0
    %102 = vst.msk [vmem:[%s80 + $0xf8] sm:$0xff] %vm81, 0.0
    %103 = vst.msk [vmem:[%s80 + $0x100] sm:$0x3] %vm84, 0.0
    %104 = vst.msk [vmem:[%s80 + $0x108] sm:$0xff] %vm81, 0.0
    %105 = vst.msk [vmem:[%s80 + $0x110] sm:$0xff] %vm81, 0.0
    %106 = vst.msk [vmem:[%s80 + $0x118] sm:$0x3] %vm84, 0.0
    %v107 = vld [vmem:[#allocation4] sm:$0xff]
    %v108 = vld [vmem:[#allocation4 + $0x8] sm:$0xff]
    %v109 = vld [vmem:[#allocation4 + $0x10] sm:$0xff]
    %v110 = vld [vmem:[#allocation4 + $0x18] sm:$0xff]
    %v111 = vld [vmem:[#allocation4 + $0x20] sm:$0xff]
    %v112 = vld [vmem:[#allocation4 + $0x28] sm:$0xff]
    %v113 = vld [vmem:[#allocation4 + $0x30] sm:$0xff]
    %v114 = vld [vmem:[#allocation4 + $0x38] sm:$0xff]
    %v115 = vld [vmem:[#allocation4 + $0x40] sm:$0xff]
    %v116 = vld [vmem:[#allocation4 + $0x48] sm:$0xff]
    %v117 = vld [vmem:[#allocation4 + $0x50] sm:$0xff]
    %v118 = vld [vmem:[#allocation4 + $0x58] sm:$0xff]
    %v119 = vld [vmem:[#allocation4 + $0x60] sm:$0xff]
    %v120 = vld [vmem:[#allocation4 + $0x68] sm:$0xff]
    %v121 = vld [vmem:[#allocation4 + $0x70] sm:$0xff]
    %v122 = vld [vmem:[#allocation4 + $0x78] sm:$0xff]
    %139 = vrot.lane.b32.xlu0 %v107, 1
    %v140 = vpop.permute.xlu0 %139
    %141 = vrot.lane.b32.xlu0 %v108, 1
    %v142 = vpop.permute.xlu0 %141
    %143 = vrot.lane.b32.xlu0 %v109, 1
    %v144 = vpop.permute.xlu0 %143
    %145 = vrot.lane.b32.xlu0 %v110, 1
    %v146 = vpop.permute.xlu0 %145
    %147 = vrot.lane.b32.xlu0 %v111, 1
    %v148 = vpop.permute.xlu0 %147
    %149 = vrot.lane.b32.xlu0 %v112, 1
    %v150 = vpop.permute.xlu0 %149
    %151 = vrot.lane.b32.xlu0 %v113, 1
    %v152 = vpop.permute.xlu0 %151
    %153 = vrot.lane.b32.xlu0 %v114, 1
    %v154 = vpop.permute.xlu0 %153
    %155 = vrot.lane.b32.xlu0 %v115, 1
    %v156 = vpop.permute.xlu0 %155
    %157 = vrot.lane.b32.xlu0 %v116, 1
    %v158 = vpop.permute.xlu0 %157
    %159 = vrot.lane.b32.xlu0 %v117, 1
    %v160 = vpop.permute.xlu0 %159
    %161 = vrot.lane.b32.xlu0 %v118, 1
    %v162 = vpop.permute.xlu0 %161
    %163 = vrot.lane.b32.xlu0 %v119, 1
    %v164 = vpop.permute.xlu0 %163
    %165 = vrot.lane.b32.xlu0 %v120, 1
    %v166 = vpop.permute.xlu0 %165
    %167 = vrot.lane.b32.xlu0 %v121, 1
    %v168 = vpop.permute.xlu0 %167
    %169 = vrot.lane.b32.xlu0 %v122, 1
    %v170 = vpop.permute.xlu0 %169
    %vm187 = vcmask 138248
    %188 = vst.msk [vmem:[#allocation2 + $0x1] sm:$0xff] %vm187, %v140
    %189 = vst.msk [vmem:[#allocation2 + $0x9] sm:$0xff] %vm187, %v142
    %190 = vst.msk [vmem:[#allocation2 + $0x19] sm:$0xff] %vm187, %v144
    %191 = vst.msk [vmem:[#allocation2 + $0x21] sm:$0xff] %vm187, %v146
    %192 = vst.msk [vmem:[#allocation2 + $0x31] sm:$0xff] %vm187, %v148
    %193 = vst.msk [vmem:[#allocation2 + $0x39] sm:$0xff] %vm187, %v150
    %194 = vst.msk [vmem:[#allocation2 + $0x49] sm:$0xff] %vm187, %v152
    %195 = vst.msk [vmem:[#allocation2 + $0x51] sm:$0xff] %vm187, %v154
    %196 = vst.msk [vmem:[#allocation2 + $0xc1] sm:$0xff] %vm187, %v156
    %197 = vst.msk [vmem:[#allocation2 + $0xc9] sm:$0xff] %vm187, %v158
    %198 = vst.msk [vmem:[#allocation2 + $0xd9] sm:$0xff] %vm187, %v160
    %199 = vst.msk [vmem:[#allocation2 + $0xe1] sm:$0xff] %vm187, %v162
    %200 = vst.msk [vmem:[#allocation2 + $0xf1] sm:$0xff] %vm187, %v164
    %201 = vst.msk [vmem:[#allocation2 + $0xf9] sm:$0xff] %vm187, %v166
    %202 = vst.msk [vmem:[#allocation2 + $0x109] sm:$0xff] %vm187, %v168
    %203 = vst.msk [vmem:[#allocation2 + $0x111] sm:$0xff] %vm187, %v170
    %v204 = vld [vmem:[#allocation2] sm:$0xff]
    %v205 = vld [vmem:[#allocation2 + $0x8] sm:$0xff]
    %v206 = vld [vmem:[#allocation2 + $0x10] sm:$0x3]
    %v207 = vld [vmem:[#allocation2 + $0x18] sm:$0xff]
    %v208 = vld [vmem:[#allocation2 + $0x20] sm:$0xff]
    %v209 = vld [vmem:[#allocation2 + $0x28] sm:$0x3]
    %v210 = vld [vmem:[#allocation2 + $0x30] sm:$0xff]
    %v211 = vld [vmem:[#allocation2 + $0x38] sm:$0xff]
    %v212 = vld [vmem:[#allocation2 + $0x40] sm:$0x3]
    %v213 = vld [vmem:[#allocation2 + $0x48] sm:$0xff]
    %v214 = vld [vmem:[#allocation2 + $0x50] sm:$0xff]
    %v215 = vld [vmem:[#allocation2 + $0x58] sm:$0x3]
    %v216 = vld [vmem:[#allocation2 + $0x60] sm:$0xff]
    %v217 = vld [vmem:[#allocation2 + $0x68] sm:$0xff]
    %v218 = vld [vmem:[#allocation2 + $0x70] sm:$0x3]
    %v219 = vld [vmem:[#allocation2 + $0x78] sm:$0xff]
    %v220 = vld [vmem:[#allocation2 + $0x80] sm:$0xff]
    %v221 = vld [vmem:[#allocation2 + $0x88] sm:$0x3]
    %v222 = vld [vmem:[#allocation2 + $0x90] sm:$0xff]
    %v223 = vld [vmem:[#allocation2 + $0x98] sm:$0xff]
    %v224 = vld [vmem:[#allocation2 + $0xa0] sm:$0x3]
    %v225 = vld [vmem:[#allocation2 + $0xa8] sm:$0xff]
    %v226 = vld [vmem:[#allocation2 + $0xb0] sm:$0xff]
    %v227 = vld [vmem:[#allocation2 + $0xb8] sm:$0x3]
    %vm228 = vcmask 130048
    %229 = vst.msk [vmem:[#allocation3] sm:$0xff] %vm228, %v204
    %230 = vst.msk [vmem:[#allocation3 + $0x8] sm:$0xff] %vm228, %v205
    %231 = vst.msk [vmem:[#allocation3 + $0x20] sm:$0xff] %vm228, %v207
    %232 = vst.msk [vmem:[#allocation3 + $0x28] sm:$0xff] %vm228, %v208
    %233 = vst.msk [vmem:[#allocation3 + $0x40] sm:$0xff] %vm228, %v210
    %234 = vst.msk [vmem:[#allocation3 + $0x48] sm:$0xff] %vm228, %v211
    %235 = vst.msk [vmem:[#allocation3 + $0x60] sm:$0xff] %vm228, %v213
    %236 = vst.msk [vmem:[#allocation3 + $0x68] sm:$0xff] %vm228, %v214
    %237 = vst.msk [vmem:[#allocation3 + $0x80] sm:$0xff] %vm228, %v216
    %238 = vst.msk [vmem:[#allocation3 + $0x88] sm:$0xff] %vm228, %v217
    %239 = vst.msk [vmem:[#allocation3 + $0xa0] sm:$0xff] %vm228, %v219
    %240 = vst.msk [vmem:[#allocation3 + $0xa8] sm:$0xff] %vm228, %v220
    %241 = vst.msk [vmem:[#allocation3 + $0xc0] sm:$0xff] %vm228, %v222
    %242 = vst.msk [vmem:[#allocation3 + $0xc8] sm:$0xff] %vm228, %v223
    %243 = vst.msk [vmem:[#allocation3 + $0xe0] sm:$0xff] %vm228, %v225
    %244 = vst.msk [vmem:[#allocation3 + $0xe8] sm:$0xff] %vm228, %v226
    %261 = vrot.lane.b32.xlu0 %v204, 127
    %v262 = vpop.permute.xlu0 %261
    %263 = vrot.lane.b32.xlu0 %v205, 127
    %v264 = vpop.permute.xlu0 %263
    %265 = vrot.lane.b32.xlu0 %v207, 127
    %v266 = vpop.permute.xlu0 %265
    %267 = vrot.lane.b32.xlu0 %v208, 127
    %v268 = vpop.permute.xlu0 %267
    %269 = vrot.lane.b32.xlu0 %v210, 127
    %v270 = vpop.permute.xlu0 %269
    %271 = vrot.lane.b32.xlu0 %v211, 127
    %v272 = vpop.permute.xlu0 %271
    %273 = vrot.lane.b32.xlu0 %v213, 127
    %v274 = vpop.permute.xlu0 %273
    %275 = vrot.lane.b32.xlu0 %v214, 127
    %v276 = vpop.permute.xlu0 %275
    %277 = vrot.lane.b32.xlu0 %v216, 127
    %v278 = vpop.permute.xlu0 %277
    %279 = vrot.lane.b32.xlu0 %v217, 127
    %v280 = vpop.permute.xlu0 %279
    %281 = vrot.lane.b32.xlu0 %v219, 127
    %v282 = vpop.permute.xlu0 %281
    %283 = vrot.lane.b32.xlu0 %v220, 127
    %v284 = vpop.permute.xlu0 %283
    %285 = vrot.lane.b32.xlu0 %v222, 127
    %v286 = vpop.permute.xlu0 %285
    %287 = vrot.lane.b32.xlu0 %v223, 127
    %v288 = vpop.permute.xlu0 %287
    %289 = vrot.lane.b32.xlu0 %v225, 127
    %v290 = vpop.permute.xlu0 %289
    %291 = vrot.lane.b32.xlu0 %v226, 127
    %v292 = vpop.permute.xlu0 %291
    %s309 = scalar_lea.vmem [#allocation3], 256
    %310 = vst.msk [vmem:[%s309] sm:$0xff] %vm228, %v262
    %311 = vst.msk [vmem:[%s309 + $0x8] sm:$0xff] %vm228, %v264
    %312 = vst.msk [vmem:[%s309 + $0x20] sm:$0xff] %vm228, %v266
    %313 = vst.msk [vmem:[%s309 + $0x28] sm:$0xff] %vm228, %v268
    %314 = vst.msk [vmem:[%s309 + $0x40] sm:$0xff] %vm228, %v270
    %315 = vst.msk [vmem:[%s309 + $0x48] sm:$0xff] %vm228, %v272
    %316 = vst.msk [vmem:[%s309 + $0x60] sm:$0xff] %vm228, %v274
    %317 = vst.msk [vmem:[%s309 + $0x68] sm:$0xff] %vm228, %v276
    %318 = vst.msk [vmem:[%s309 + $0x80] sm:$0xff] %vm228, %v278
    %319 = vst.msk [vmem:[%s309 + $0x88] sm:$0xff] %vm228, %v280
    %320 = vst.msk [vmem:[%s309 + $0xa0] sm:$0xff] %vm228, %v282
    %321 = vst.msk [vmem:[%s309 + $0xa8] sm:$0xff] %vm228, %v284
    %322 = vst.msk [vmem:[%s309 + $0xc0] sm:$0xff] %vm228, %v286
    %323 = vst.msk [vmem:[%s309 + $0xc8] sm:$0xff] %vm228, %v288
    %324 = vst.msk [vmem:[%s309 + $0xe0] sm:$0xff] %vm228, %v290
    %325 = vst.msk [vmem:[%s309 + $0xe8] sm:$0xff] %vm228, %v292
    %326 = vrot.lane.b32.xlu0 %v204, 126
    %v327 = vpop.permute.xlu0 %326
    %328 = vrot.lane.b32.xlu0 %v205, 126
    %v329 = vpop.permute.xlu0 %328
    %330 = vrot.lane.b32.xlu0 %v207, 126
    %v331 = vpop.permute.xlu0 %330
    %332 = vrot.lane.b32.xlu0 %v208, 126
    %v333 = vpop.permute.xlu0 %332
    %334 = vrot.lane.b32.xlu0 %v210, 126
    %v335 = vpop.permute.xlu0 %334
    %336 = vrot.lane.b32.xlu0 %v211, 126
    %v337 = vpop.permute.xlu0 %336
    %338 = vrot.lane.b32.xlu0 %v213, 126
    %v339 = vpop.permute.xlu0 %338
    %340 = vrot.lane.b32.xlu0 %v214, 126
    %v341 = vpop.permute.xlu0 %340
    %342 = vrot.lane.b32.xlu0 %v216, 126
    %v343 = vpop.permute.xlu0 %342
    %344 = vrot.lane.b32.xlu0 %v217, 126
    %v345 = vpop.permute.xlu0 %344
    %346 = vrot.lane.b32.xlu0 %v219, 126
    %v347 = vpop.permute.xlu0 %346
    %348 = vrot.lane.b32.xlu0 %v220, 126
    %v349 = vpop.permute.xlu0 %348
    %350 = vrot.lane.b32.xlu0 %v222, 126
    %v351 = vpop.permute.xlu0 %350
    %352 = vrot.lane.b32.xlu0 %v223, 126
    %v353 = vpop.permute.xlu0 %352
    %354 = vrot.lane.b32.xlu0 %v225, 126
    %v355 = vpop.permute.xlu0 %354
    %356 = vrot.lane.b32.xlu0 %v226, 126
    %v357 = vpop.permute.xlu0 %356
    %s374 = scalar_lea.vmem [#allocation3], 512
    %375 = vst.msk [vmem:[%s374] sm:$0xff] %vm228, %v327
    %376 = vst.msk [vmem:[%s374 + $0x8] sm:$0xff] %vm228, %v329
    %377 = vst.msk [vmem:[%s374 + $0x20] sm:$0xff] %vm228, %v331
    %378 = vst.msk [vmem:[%s374 + $0x28] sm:$0xff] %vm228, %v333
    %379 = vst.msk [vmem:[%s374 + $0x40] sm:$0xff] %vm228, %v335
    %380 = vst.msk [vmem:[%s374 + $0x48] sm:$0xff] %vm228, %v337
    %381 = vst.msk [vmem:[%s374 + $0x60] sm:$0xff] %vm228, %v339
    %382 = vst.msk [vmem:[%s374 + $0x68] sm:$0xff] %vm228, %v341
    %383 = vst.msk [vmem:[%s374 + $0x80] sm:$0xff] %vm228, %v343
    %384 = vst.msk [vmem:[%s374 + $0x88] sm:$0xff] %vm228, %v345
    %385 = vst.msk [vmem:[%s374 + $0xa0] sm:$0xff] %vm228, %v347
    %386 = vst.msk [vmem:[%s374 + $0xa8] sm:$0xff] %vm228, %v349
    %387 = vst.msk [vmem:[%s374 + $0xc0] sm:$0xff] %vm228, %v351
    %388 = vst.msk [vmem:[%s374 + $0xc8] sm:$0xff] %vm228, %v353
    %389 = vst.msk [vmem:[%s374 + $0xe0] sm:$0xff] %vm228, %v355
    %390 = vst.msk [vmem:[%s374 + $0xe8] sm:$0xff] %vm228, %v357
    %s391 = scalar_lea.vmem [#allocation3], 768
    %vm392 = vcmask 130049
    %393 = vst.msk [vmem:[%s391 - $0x1] sm:$0xfe] %vm392, %v204
    %394 = vst.msk [vmem:[%s391 + $0x7] sm:$0xff] %vm228, %v205
    %vm395 = vcmask 122880
    %396 = vst.msk [vmem:[%s391 + $0xf] sm:$0x1] %vm395, %v206
    %397 = vst.msk [vmem:[%s391 + $0x1f] sm:$0xfe] %vm392, %v207
    %398 = vst.msk [vmem:[%s391 + $0x27] sm:$0xff] %vm228, %v208
    %399 = vst.msk [vmem:[%s391 + $0x2f] sm:$0x1] %vm395, %v209
    %400 = vst.msk [vmem:[%s391 + $0x3f] sm:$0xfe] %vm392, %v210
    %401 = vst.msk [vmem:[%s391 + $0x47] sm:$0xff] %vm228, %v211
    %402 = vst.msk [vmem:[%s391 + $0x4f] sm:$0x1] %vm395, %v212
    %403 = vst.msk [vmem:[%s391 + $0x5f] sm:$0xfe] %vm392, %v213
    %404 = vst.msk [vmem:[%s391 + $0x67] sm:$0xff] %vm228, %v214
    %405 = vst.msk [vmem:[%s391 + $0x6f] sm:$0x1] %vm395, %v215
    %406 = vst.msk [vmem:[%s391 + $0x7f] sm:$0xfe] %vm392, %v216
    %407 = vst.msk [vmem:[%s391 + $0x87] sm:$0xff] %vm228, %v217
    %408 = vst.msk [vmem:[%s391 + $0x8f] sm:$0x1] %vm395, %v218
    %409 = vst.msk [vmem:[%s391 + $0x9f] sm:$0xfe] %vm392, %v219
    %410 = vst.msk [vmem:[%s391 + $0xa7] sm:$0xff] %vm228, %v220
    %411 = vst.msk [vmem:[%s391 + $0xaf] sm:$0x1] %vm395, %v221
    %412 = vst.msk [vmem:[%s391 + $0xbf] sm:$0xfe] %vm392, %v222
    %413 = vst.msk [vmem:[%s391 + $0xc7] sm:$0xff] %vm228, %v223
    %414 = vst.msk [vmem:[%s391 + $0xcf] sm:$0x1] %vm395, %v224
    %415 = vst.msk [vmem:[%s391 + $0xdf] sm:$0xfe] %vm392, %v225
    %416 = vst.msk [vmem:[%s391 + $0xe7] sm:$0xff] %vm228, %v226
    %417 = vst.msk [vmem:[%s391 + $0xef] sm:$0x1] %vm395, %v227
    %426 = vrot.lane.b32.xlu0 %v206, 127
    %v427 = vpop.permute.xlu0 %426
    %428 = vrot.lane.b32.xlu0 %v209, 127
    %v429 = vpop.permute.xlu0 %428
    %430 = vrot.lane.b32.xlu0 %v212, 127
    %v431 = vpop.permute.xlu0 %430
    %432 = vrot.lane.b32.xlu0 %v215, 127
    %v433 = vpop.permute.xlu0 %432
    %434 = vrot.lane.b32.xlu0 %v218, 127
    %v435 = vpop.permute.xlu0 %434
    %436 = vrot.lane.b32.xlu0 %v221, 127
    %v437 = vpop.permute.xlu0 %436
    %438 = vrot.lane.b32.xlu0 %v224, 127
    %v439 = vpop.permute.xlu0 %438
    %440 = vrot.lane.b32.xlu0 %v227, 127
    %v441 = vpop.permute.xlu0 %440
    %s450 = scalar_lea.vmem [#allocation3], 1024
    %451 = vst.msk [vmem:[%s450 - $0x1] sm:$0xfe] %vm392, %v262
    %452 = vst.msk [vmem:[%s450 + $0x7] sm:$0xff] %vm228, %v264
    %453 = vst.msk [vmem:[%s450 + $0xf] sm:$0x1] %vm395, %v427
    %454 = vst.msk [vmem:[%s450 + $0x1f] sm:$0xfe] %vm392, %v266
    %455 = vst.msk [vmem:[%s450 + $0x27] sm:$0xff] %vm228, %v268
    %456 = vst.msk [vmem:[%s450 + $0x2f] sm:$0x1] %vm395, %v429
    %457 = vst.msk [vmem:[%s450 + $0x3f] sm:$0xfe] %vm392, %v270
    %458 = vst.msk [vmem:[%s450 + $0x47] sm:$0xff] %vm228, %v272
    %459 = vst.msk [vmem:[%s450 + $0x4f] sm:$0x1] %vm395, %v431
    %460 = vst.msk [vmem:[%s450 + $0x5f] sm:$0xfe] %vm392, %v274
    %461 = vst.msk [vmem:[%s450 + $0x67] sm:$0xff] %vm228, %v276
    %462 = vst.msk [vmem:[%s450 + $0x6f] sm:$0x1] %vm395, %v433
    %463 = vst.msk [vmem:[%s450 + $0x7f] sm:$0xfe] %vm392, %v278
    %464 = vst.msk [vmem:[%s450 + $0x87] sm:$0xff] %vm228, %v280
    %465 = vst.msk [vmem:[%s450 + $0x8f] sm:$0x1] %vm395, %v435
    %466 = vst.msk [vmem:[%s450 + $0x9f] sm:$0xfe] %vm392, %v282
    %467 = vst.msk [vmem:[%s450 + $0xa7] sm:$0xff] %vm228, %v284
    %468 = vst.msk [vmem:[%s450 + $0xaf] sm:$0x1] %vm395, %v437
    %469 = vst.msk [vmem:[%s450 + $0xbf] sm:$0xfe] %vm392, %v286
    %470 = vst.msk [vmem:[%s450 + $0xc7] sm:$0xff] %vm228, %v288
    %471 = vst.msk [vmem:[%s450 + $0xcf] sm:$0x1] %vm395, %v439
    %472 = vst.msk [vmem:[%s450 + $0xdf] sm:$0xfe] %vm392, %v290
    %473 = vst.msk [vmem:[%s450 + $0xe7] sm:$0xff] %vm228, %v292
    %474 = vst.msk [vmem:[%s450 + $0xef] sm:$0x1] %vm395, %v441
    %475 = vrot.lane.b32.xlu0 %v206, 126
    %v476 = vpop.permute.xlu0 %475
    %477 = vrot.lane.b32.xlu0 %v209, 126
    %v478 = vpop.permute.xlu0 %477
    %479 = vrot.lane.b32.xlu0 %v212, 126
    %v480 = vpop.permute.xlu0 %479
    %481 = vrot.lane.b32.xlu0 %v215, 126
    %v482 = vpop.permute.xlu0 %481
    %483 = vrot.lane.b32.xlu0 %v218, 126
    %v484 = vpop.permute.xlu0 %483
    %485 = vrot.lane.b32.xlu0 %v221, 126
    %v486 = vpop.permute.xlu0 %485
    %487 = vrot.lane.b32.xlu0 %v224, 126
    %v488 = vpop.permute.xlu0 %487
    %489 = vrot.lane.b32.xlu0 %v227, 126
    %v490 = vpop.permute.xlu0 %489
    %s499 = scalar_lea.vmem [#allocation3], 1280
    %500 = vst.msk [vmem:[%s499 - $0x1] sm:$0xfe] %vm392, %v327
    %501 = vst.msk [vmem:[%s499 + $0x7] sm:$0xff] %vm228, %v329
    %502 = vst.msk [vmem:[%s499 + $0xf] sm:$0x1] %vm395, %v476
    %503 = vst.msk [vmem:[%s499 + $0x1f] sm:$0xfe] %vm392, %v331
    %504 = vst.msk [vmem:[%s499 + $0x27] sm:$0xff] %vm228, %v333
    %505 = vst.msk [vmem:[%s499 + $0x2f] sm:$0x1] %vm395, %v478
    %506 = vst.msk [vmem:[%s499 + $0x3f] sm:$0xfe] %vm392, %v335
    %507 = vst.msk [vmem:[%s499 + $0x47] sm:$0xff] %vm228, %v337
    %508 = vst.msk [vmem:[%s499 + $0x4f] sm:$0x1] %vm395, %v480
    %509 = vst.msk [vmem:[%s499 + $0x5f] sm:$0xfe] %vm392, %v339
    %510 = vst.msk [vmem:[%s499 + $0x67] sm:$0xff] %vm228, %v341
    %511 = vst.msk [vmem:[%s499 + $0x6f] sm:$0x1] %vm395, %v482
    %512 = vst.msk [vmem:[%s499 + $0x7f] sm:$0xfe] %vm392, %v343
    %513 = vst.msk [vmem:[%s499 + $0x87] sm:$0xff] %vm228, %v345
    %514 = vst.msk [vmem:[%s499 + $0x8f] sm:$0x1] %vm395, %v484
    %515 = vst.msk [vmem:[%s499 + $0x9f] sm:$0xfe] %vm392, %v347
    %516 = vst.msk [vmem:[%s499 + $0xa7] sm:$0xff] %vm228, %v349
    %517 = vst.msk [vmem:[%s499 + $0xaf] sm:$0x1] %vm395, %v486
    %518 = vst.msk [vmem:[%s499 + $0xbf] sm:$0xfe] %vm392, %v351
    %519 = vst.msk [vmem:[%s499 + $0xc7] sm:$0xff] %vm228, %v353
    %520 = vst.msk [vmem:[%s499 + $0xcf] sm:$0x1] %vm395, %v488
    %521 = vst.msk [vmem:[%s499 + $0xdf] sm:$0xfe] %vm392, %v355
    %522 = vst.msk [vmem:[%s499 + $0xe7] sm:$0xff] %vm228, %v357
    %523 = vst.msk [vmem:[%s499 + $0xef] sm:$0x1] %vm395, %v490
    %s524 = scalar_lea.vmem [#allocation3], 1536
    %vm525 = vcmask 130050
    %526 = vst.msk [vmem:[%s524 - $0x2] sm:$0xfc] %vm525, %v204
    %527 = vst.msk [vmem:[%s524 + $0x6] sm:$0xff] %vm228, %v205
    %vm528 = vcmask 123904
    %529 = vst.msk [vmem:[%s524 + $0xe] sm:$0x3] %vm528, %v206
    %530 = vst.msk [vmem:[%s524 + $0x1e] sm:$0xfc] %vm525, %v207
    %531 = vst.msk [vmem:[%s524 + $0x26] sm:$0xff] %vm228, %v208
    %532 = vst.msk [vmem:[%s524 + $0x2e] sm:$0x3] %vm528, %v209
    %533 = vst.msk [vmem:[%s524 + $0x3e] sm:$0xfc] %vm525, %v210
    %534 = vst.msk [vmem:[%s524 + $0x46] sm:$0xff] %vm228, %v211
    %535 = vst.msk [vmem:[%s524 + $0x4e] sm:$0x3] %vm528, %v212
    %536 = vst.msk [vmem:[%s524 + $0x5e] sm:$0xfc] %vm525, %v213
    %537 = vst.msk [vmem:[%s524 + $0x66] sm:$0xff] %vm228, %v214
    %538 = vst.msk [vmem:[%s524 + $0x6e] sm:$0x3] %vm528, %v215
    %539 = vst.msk [vmem:[%s524 + $0x7e] sm:$0xfc] %vm525, %v216
    %540 = vst.msk [vmem:[%s524 + $0x86] sm:$0xff] %vm228, %v217
    %541 = vst.msk [vmem:[%s524 + $0x8e] sm:$0x3] %vm528, %v218
    %542 = vst.msk [vmem:[%s524 + $0x9e] sm:$0xfc] %vm525, %v219
    %543 = vst.msk [vmem:[%s524 + $0xa6] sm:$0xff] %vm228, %v220
    %544 = vst.msk [vmem:[%s524 + $0xae] sm:$0x3] %vm528, %v221
    %545 = vst.msk [vmem:[%s524 + $0xbe] sm:$0xfc] %vm525, %v222
    %546 = vst.msk [vmem:[%s524 + $0xc6] sm:$0xff] %vm228, %v223
    %547 = vst.msk [vmem:[%s524 + $0xce] sm:$0x3] %vm528, %v224
    %548 = vst.msk [vmem:[%s524 + $0xde] sm:$0xfc] %vm525, %v225
    %549 = vst.msk [vmem:[%s524 + $0xe6] sm:$0xff] %vm228, %v226
    %550 = vst.msk [vmem:[%s524 + $0xee] sm:$0x3] %vm528, %v227
    %s551 = scalar_lea.vmem [#allocation3], 1792
    %552 = vst.msk [vmem:[%s551 - $0x2] sm:$0xfc] %vm525, %v262
    %553 = vst.msk [vmem:[%s551 + $0x6] sm:$0xff] %vm228, %v264
    %554 = vst.msk [vmem:[%s551 + $0xe] sm:$0x3] %vm528, %v427
    %555 = vst.msk [vmem:[%s551 + $0x1e] sm:$0xfc] %vm525, %v266
    %556 = vst.msk [vmem:[%s551 + $0x26] sm:$0xff] %vm228, %v268
    %557 = vst.msk [vmem:[%s551 + $0x2e] sm:$0x3] %vm528, %v429
    %558 = vst.msk [vmem:[%s551 + $0x3e] sm:$0xfc] %vm525, %v270
    %559 = vst.msk [vmem:[%s551 + $0x46] sm:$0xff] %vm228, %v272
    %560 = vst.msk [vmem:[%s551 + $0x4e] sm:$0x3] %vm528, %v431
    %561 = vst.msk [vmem:[%s551 + $0x5e] sm:$0xfc] %vm525, %v274
    %562 = vst.msk [vmem:[%s551 + $0x66] sm:$0xff] %vm228, %v276
    %563 = vst.msk [vmem:[%s551 + $0x6e] sm:$0x3] %vm528, %v433
    %564 = vst.msk [vmem:[%s551 + $0x7e] sm:$0xfc] %vm525, %v278
    %565 = vst.msk [vmem:[%s551 + $0x86] sm:$0xff] %vm228, %v280
    %566 = vst.msk [vmem:[%s551 + $0x8e] sm:$0x3] %vm528, %v435
    %567 = vst.msk [vmem:[%s551 + $0x9e] sm:$0xfc] %vm525, %v282
    %568 = vst.msk [vmem:[%s551 + $0xa6] sm:$0xff] %vm228, %v284
    %569 = vst.msk [vmem:[%s551 + $0xae] sm:$0x3] %vm528, %v437
    %570 = vst.msk [vmem:[%s551 + $0xbe] sm:$0xfc] %vm525, %v286
    %571 = vst.msk [vmem:[%s551 + $0xc6] sm:$0xff] %vm228, %v288
    %572 = vst.msk [vmem:[%s551 + $0xce] sm:$0x3] %vm528, %v439
    %573 = vst.msk [vmem:[%s551 + $0xde] sm:$0xfc] %vm525, %v290
    %574 = vst.msk [vmem:[%s551 + $0xe6] sm:$0xff] %vm228, %v292
    %575 = vst.msk [vmem:[%s551 + $0xee] sm:$0x3] %vm528, %v441
    %s576 = scalar_lea.vmem [#allocation3], 2048
    %577 = vst.msk [vmem:[%s576 - $0x2] sm:$0xfc] %vm525, %v327
    %578 = vst.msk [vmem:[%s576 + $0x6] sm:$0xff] %vm228, %v329
    %579 = vst.msk [vmem:[%s576 + $0xe] sm:$0x3] %vm528, %v476
    %580 = vst.msk [vmem:[%s576 + $0x1e] sm:$0xfc] %vm525, %v331
    %581 = vst.msk [vmem:[%s576 + $0x26] sm:$0xff] %vm228, %v333
    %582 = vst.msk [vmem:[%s576 + $0x2e] sm:$0x3] %vm528, %v478
    %583 = vst.msk [vmem:[%s576 + $0x3e] sm:$0xfc] %vm525, %v335
    %584 = vst.msk [vmem:[%s576 + $0x46] sm:$0xff] %vm228, %v337
    %585 = vst.msk [vmem:[%s576 + $0x4e] sm:$0x3] %vm528, %v480
    %586 = vst.msk [vmem:[%s576 + $0x5e] sm:$0xfc] %vm525, %v339
    %587 = vst.msk [vmem:[%s576 + $0x66] sm:$0xff] %vm228, %v341
    %588 = vst.msk [vmem:[%s576 + $0x6e] sm:$0x3] %vm528, %v482
    %589 = vst.msk [vmem:[%s576 + $0x7e] sm:$0xfc] %vm525, %v343
    %590 = vst.msk [vmem:[%s576 + $0x86] sm:$0xff] %vm228, %v345
    %591 = vst.msk [vmem:[%s576 + $0x8e] sm:$0x3] %vm528, %v484
    %592 = vst.msk [vmem:[%s576 + $0x9e] sm:$0xfc] %vm525, %v347
    %593 = vst.msk [vmem:[%s576 + $0xa6] sm:$0xff] %vm228, %v349
    %594 = vst.msk [vmem:[%s576 + $0xae] sm:$0x3] %vm528, %v486
    %595 = vst.msk [vmem:[%s576 + $0xbe] sm:$0xfc] %vm525, %v351
    %596 = vst.msk [vmem:[%s576 + $0xc6] sm:$0xff] %vm228, %v353
    %597 = vst.msk [vmem:[%s576 + $0xce] sm:$0x3] %vm528, %v488
    %598 = vst.msk [vmem:[%s576 + $0xde] sm:$0xfc] %vm525, %v355
    %599 = vst.msk [vmem:[%s576 + $0xe6] sm:$0xff] %vm228, %v357
    %600 = vst.msk [vmem:[%s576 + $0xee] sm:$0x3] %vm528, %v490
    %s601 = scalar_lea.vmem [#allocation2], 192
    %v602 = vld [vmem:[%s601] sm:$0xff]
    %v603 = vld [vmem:[%s601 + $0x8] sm:$0xff]
    %v604 = vld [vmem:[%s601 + $0x10] sm:$0x3]
    %v605 = vld [vmem:[%s601 + $0x18] sm:$0xff]
    %v606 = vld [vmem:[%s601 + $0x20] sm:$0xff]
    %v607 = vld [vmem:[%s601 + $0x28] sm:$0x3]
    %v608 = vld [vmem:[%s601 + $0x30] sm:$0xff]
    %v609 = vld [vmem:[%s601 + $0x38] sm:$0xff]
    %v610 = vld [vmem:[%s601 + $0x40] sm:$0x3]
    %v611 = vld [vmem:[%s601 + $0x48] sm:$0xff]
    %v612 = vld [vmem:[%s601 + $0x50] sm:$0xff]
    %v613 = vld [vmem:[%s601 + $0x58] sm:$0x3]
    %v614 = vld [vmem:[%s601 + $0x60] sm:$0xff]
    %v615 = vld [vmem:[%s601 + $0x68] sm:$0xff]
    %v616 = vld [vmem:[%s601 + $0x70] sm:$0x3]
    %v617 = vld [vmem:[%s601 + $0x78] sm:$0xff]
    %v618 = vld [vmem:[%s601 + $0x80] sm:$0xff]
    %v619 = vld [vmem:[%s601 + $0x88] sm:$0x3]
    %v620 = vld [vmem:[%s601 + $0x90] sm:$0xff]
    %v621 = vld [vmem:[%s601 + $0x98] sm:$0xff]
    %v622 = vld [vmem:[%s601 + $0xa0] sm:$0x3]
    %v623 = vld [vmem:[%s601 + $0xa8] sm:$0xff]
    %v624 = vld [vmem:[%s601 + $0xb0] sm:$0xff]
    %v625 = vld [vmem:[%s601 + $0xb8] sm:$0x3]
    %626 = vst.msk [vmem:[#allocation3 + $0x10] sm:$0xff] %vm228, %v602
    %627 = vst.msk [vmem:[#allocation3 + $0x18] sm:$0xff] %vm228, %v603
    %628 = vst.msk [vmem:[#allocation3 + $0x30] sm:$0xff] %vm228, %v605
    %629 = vst.msk [vmem:[#allocation3 + $0x38] sm:$0xff] %vm228, %v606
    %630 = vst.msk [vmem:[#allocation3 + $0x50] sm:$0xff] %vm228, %v608
    %631 = vst.msk [vmem:[#allocation3 + $0x58] sm:$0xff] %vm228, %v609
    %632 = vst.msk [vmem:[#allocation3 + $0x70] sm:$0xff] %vm228, %v611
    %633 = vst.msk [vmem:[#allocation3 + $0x78] sm:$0xff] %vm228, %v612
    %634 = vst.msk [vmem:[#allocation3 + $0x90] sm:$0xff] %vm228, %v614
    %635 = vst.msk [vmem:[#allocation3 + $0x98] sm:$0xff] %vm228, %v615
    %636 = vst.msk [vmem:[#allocation3 + $0xb0] sm:$0xff] %vm228, %v617
    %637 = vst.msk [vmem:[#allocation3 + $0xb8] sm:$0xff] %vm228, %v618
    %638 = vst.msk [vmem:[#allocation3 + $0xd0] sm:$0xff] %vm228, %v620
    %639 = vst.msk [vmem:[#allocation3 + $0xd8] sm:$0xff] %vm228, %v621
    %640 = vst.msk [vmem:[#allocation3 + $0xf0] sm:$0xff] %vm228, %v623
    %641 = vst.msk [vmem:[#allocation3 + $0xf8] sm:$0xff] %vm228, %v624
    %658 = vrot.lane.b32.xlu0 %v602, 127
    %v659 = vpop.permute.xlu0 %658
    %660 = vrot.lane.b32.xlu0 %v603, 127
    %v661 = vpop.permute.xlu0 %660
    %662 = vrot.lane.b32.xlu0 %v605, 127
    %v663 = vpop.permute.xlu0 %662
    %664 = vrot.lane.b32.xlu0 %v606, 127
    %v665 = vpop.permute.xlu0 %664
    %666 = vrot.lane.b32.xlu0 %v608, 127
    %v667 = vpop.permute.xlu0 %666
    %668 = vrot.lane.b32.xlu0 %v609, 127
    %v669 = vpop.permute.xlu0 %668
    %670 = vrot.lane.b32.xlu0 %v611, 127
    %v671 = vpop.permute.xlu0 %670
    %672 = vrot.lane.b32.xlu0 %v612, 127
    %v673 = vpop.permute.xlu0 %672
    %674 = vrot.lane.b32.xlu0 %v614, 127
    %v675 = vpop.permute.xlu0 %674
    %676 = vrot.lane.b32.xlu0 %v615, 127
    %v677 = vpop.permute.xlu0 %676
    %678 = vrot.lane.b32.xlu0 %v617, 127
    %v679 = vpop.permute.xlu0 %678
    %680 = vrot.lane.b32.xlu0 %v618, 127
    %v681 = vpop.permute.xlu0 %680
    %682 = vrot.lane.b32.xlu0 %v620, 127
    %v683 = vpop.permute.xlu0 %682
    %684 = vrot.lane.b32.xlu0 %v621, 127
    %v685 = vpop.permute.xlu0 %684
    %686 = vrot.lane.b32.xlu0 %v623, 127
    %v687 = vpop.permute.xlu0 %686
    %688 = vrot.lane.b32.xlu0 %v624, 127
    %v689 = vpop.permute.xlu0 %688
    %706 = vst.msk [vmem:[%s309 + $0x10] sm:$0xff] %vm228, %v659
    %707 = vst.msk [vmem:[%s309 + $0x18] sm:$0xff] %vm228, %v661
    %708 = vst.msk [vmem:[%s309 + $0x30] sm:$0xff] %vm228, %v663
    %709 = vst.msk [vmem:[%s309 + $0x38] sm:$0xff] %vm228, %v665
    %710 = vst.msk [vmem:[%s309 + $0x50] sm:$0xff] %vm228, %v667
    %711 = vst.msk [vmem:[%s309 + $0x58] sm:$0xff] %vm228, %v669
    %712 = vst.msk [vmem:[%s309 + $0x70] sm:$0xff] %vm228, %v671
    %713 = vst.msk [vmem:[%s309 + $0x78] sm:$0xff] %vm228, %v673
    %714 = vst.msk [vmem:[%s309 + $0x90] sm:$0xff] %vm228, %v675
    %715 = vst.msk [vmem:[%s309 + $0x98] sm:$0xff] %vm228, %v677
    %716 = vst.msk [vmem:[%s309 + $0xb0] sm:$0xff] %vm228, %v679
    %717 = vst.msk [vmem:[%s309 + $0xb8] sm:$0xff] %vm228, %v681
    %718 = vst.msk [vmem:[%s309 + $0xd0] sm:$0xff] %vm228, %v683
    %719 = vst.msk [vmem:[%s309 + $0xd8] sm:$0xff] %vm228, %v685
    %720 = vst.msk [vmem:[%s309 + $0xf0] sm:$0xff] %vm228, %v687
    %721 = vst.msk [vmem:[%s309 + $0xf8] sm:$0xff] %vm228, %v689
    %722 = vrot.lane.b32.xlu0 %v602, 126
    %v723 = vpop.permute.xlu0 %722
    %724 = vrot.lane.b32.xlu0 %v603, 126
    %v725 = vpop.permute.xlu0 %724
    %726 = vrot.lane.b32.xlu0 %v605, 126
    %v727 = vpop.permute.xlu0 %726
    %728 = vrot.lane.b32.xlu0 %v606, 126
    %v729 = vpop.permute.xlu0 %728
    %730 = vrot.lane.b32.xlu0 %v608, 126
    %v731 = vpop.permute.xlu0 %730
    %732 = vrot.lane.b32.xlu0 %v609, 126
    %v733 = vpop.permute.xlu0 %732
    %734 = vrot.lane.b32.xlu0 %v611, 126
    %v735 = vpop.permute.xlu0 %734
    %736 = vrot.lane.b32.xlu0 %v612, 126
    %v737 = vpop.permute.xlu0 %736
    %738 = vrot.lane.b32.xlu0 %v614, 126
    %v739 = vpop.permute.xlu0 %738
    %740 = vrot.lane.b32.xlu0 %v615, 126
    %v741 = vpop.permute.xlu0 %740
    %742 = vrot.lane.b32.xlu0 %v617, 126
    %v743 = vpop.permute.xlu0 %742
    %744 = vrot.lane.b32.xlu0 %v618, 126
    %v745 = vpop.permute.xlu0 %744
    %746 = vrot.lane.b32.xlu0 %v620, 126
    %v747 = vpop.permute.xlu0 %746
    %748 = vrot.lane.b32.xlu0 %v621, 126
    %v749 = vpop.permute.xlu0 %748
    %750 = vrot.lane.b32.xlu0 %v623, 126
    %v751 = vpop.permute.xlu0 %750
    %752 = vrot.lane.b32.xlu0 %v624, 126
    %v753 = vpop.permute.xlu0 %752
    %770 = vst.msk [vmem:[%s374 + $0x10] sm:$0xff] %vm228, %v723
    %771 = vst.msk [vmem:[%s374 + $0x18] sm:$0xff] %vm228, %v725
    %772 = vst.msk [vmem:[%s374 + $0x30] sm:$0xff] %vm228, %v727
    %773 = vst.msk [vmem:[%s374 + $0x38] sm:$0xff] %vm228, %v729
    %774 = vst.msk [vmem:[%s374 + $0x50] sm:$0xff] %vm228, %v731
    %775 = vst.msk [vmem:[%s374 + $0x58] sm:$0xff] %vm228, %v733
    %776 = vst.msk [vmem:[%s374 + $0x70] sm:$0xff] %vm228, %v735
    %777 = vst.msk [vmem:[%s374 + $0x78] sm:$0xff] %vm228, %v737
    %778 = vst.msk [vmem:[%s374 + $0x90] sm:$0xff] %vm228, %v739
    %779 = vst.msk [vmem:[%s374 + $0x98] sm:$0xff] %vm228, %v741
    %780 = vst.msk [vmem:[%s374 + $0xb0] sm:$0xff] %vm228, %v743
    %781 = vst.msk [vmem:[%s374 + $0xb8] sm:$0xff] %vm228, %v745
    %782 = vst.msk [vmem:[%s374 + $0xd0] sm:$0xff] %vm228, %v747
    %783 = vst.msk [vmem:[%s374 + $0xd8] sm:$0xff] %vm228, %v749
    %784 = vst.msk [vmem:[%s374 + $0xf0] sm:$0xff] %vm228, %v751
    %785 = vst.msk [vmem:[%s374 + $0xf8] sm:$0xff] %vm228, %v753
    %786 = vst.msk [vmem:[%s391 + $0xf] sm:$0xfe] %vm392, %v602
    %787 = vst.msk [vmem:[%s391 + $0x17] sm:$0xff] %vm228, %v603
    %788 = vst.msk [vmem:[%s391 + $0x1f] sm:$0x1] %vm395, %v604
    %789 = vst.msk [vmem:[%s391 + $0x2f] sm:$0xfe] %vm392, %v605
    %790 = vst.msk [vmem:[%s391 + $0x37] sm:$0xff] %vm228, %v606
    %791 = vst.msk [vmem:[%s391 + $0x3f] sm:$0x1] %vm395, %v607
    %792 = vst.msk [vmem:[%s391 + $0x4f] sm:$0xfe] %vm392, %v608
    %793 = vst.msk [vmem:[%s391 + $0x57] sm:$0xff] %vm228, %v609
    %794 = vst.msk [vmem:[%s391 + $0x5f] sm:$0x1] %vm395, %v610
    %795 = vst.msk [vmem:[%s391 + $0x6f] sm:$0xfe] %vm392, %v611
    %796 = vst.msk [vmem:[%s391 + $0x77] sm:$0xff] %vm228, %v612
    %797 = vst.msk [vmem:[%s391 + $0x7f] sm:$0x1] %vm395, %v613
    %798 = vst.msk [vmem:[%s391 + $0x8f] sm:$0xfe] %vm392, %v614
    %799 = vst.msk [vmem:[%s391 + $0x97] sm:$0xff] %vm228, %v615
    %800 = vst.msk [vmem:[%s391 + $0x9f] sm:$0x1] %vm395, %v616
    %801 = vst.msk [vmem:[%s391 + $0xaf] sm:$0xfe] %vm392, %v617
    %802 = vst.msk [vmem:[%s391 + $0xb7] sm:$0xff] %vm228, %v618
    %803 = vst.msk [vmem:[%s391 + $0xbf] sm:$0x1] %vm395, %v619
    %804 = vst.msk [vmem:[%s391 + $0xcf] sm:$0xfe] %vm392, %v620
    %805 = vst.msk [vmem:[%s391 + $0xd7] sm:$0xff] %vm228, %v621
    %806 = vst.msk [vmem:[%s391 + $0xdf] sm:$0x1] %vm395, %v622
    %807 = vst.msk [vmem:[%s391 + $0xef] sm:$0xfe] %vm392, %v623
    %808 = vst.msk [vmem:[%s391 + $0xf7] sm:$0xff] %vm228, %v624
    %809 = vst.msk [vmem:[%s391 + $0xff] sm:$0x1] %vm395, %v625
    %818 = vrot.lane.b32.xlu0 %v604, 127
    %v819 = vpop.permute.xlu0 %818
    %820 = vrot.lane.b32.xlu0 %v607, 127
    %v821 = vpop.permute.xlu0 %820
    %822 = vrot.lane.b32.xlu0 %v610, 127
    %v823 = vpop.permute.xlu0 %822
    %824 = vrot.lane.b32.xlu0 %v613, 127
    %v825 = vpop.permute.xlu0 %824
    %826 = vrot.lane.b32.xlu0 %v616, 127
    %v827 = vpop.permute.xlu0 %826
    %828 = vrot.lane.b32.xlu0 %v619, 127
    %v829 = vpop.permute.xlu0 %828
    %830 = vrot.lane.b32.xlu0 %v622, 127
    %v831 = vpop.permute.xlu0 %830
    %832 = vrot.lane.b32.xlu0 %v625, 127
    %v833 = vpop.permute.xlu0 %832
    %842 = vst.msk [vmem:[%s450 + $0xf] sm:$0xfe] %vm392, %v659
    %843 = vst.msk [vmem:[%s450 + $0x17] sm:$0xff] %vm228, %v661
    %844 = vst.msk [vmem:[%s450 + $0x1f] sm:$0x1] %vm395, %v819
    %845 = vst.msk [vmem:[%s450 + $0x2f] sm:$0xfe] %vm392, %v663
    %846 = vst.msk [vmem:[%s450 + $0x37] sm:$0xff] %vm228, %v665
    %847 = vst.msk [vmem:[%s450 + $0x3f] sm:$0x1] %vm395, %v821
    %848 = vst.msk [vmem:[%s450 + $0x4f] sm:$0xfe] %vm392, %v667
    %849 = vst.msk [vmem:[%s450 + $0x57] sm:$0xff] %vm228, %v669
    %850 = vst.msk [vmem:[%s450 + $0x5f] sm:$0x1] %vm395, %v823
    %851 = vst.msk [vmem:[%s450 + $0x6f] sm:$0xfe] %vm392, %v671
    %852 = vst.msk [vmem:[%s450 + $0x77] sm:$0xff] %vm228, %v673
    %853 = vst.msk [vmem:[%s450 + $0x7f] sm:$0x1] %vm395, %v825
    %854 = vst.msk [vmem:[%s450 + $0x8f] sm:$0xfe] %vm392, %v675
    %855 = vst.msk [vmem:[%s450 + $0x97] sm:$0xff] %vm228, %v677
    %856 = vst.msk [vmem:[%s450 + $0x9f] sm:$0x1] %vm395, %v827
    %857 = vst.msk [vmem:[%s450 + $0xaf] sm:$0xfe] %vm392, %v679
    %858 = vst.msk [vmem:[%s450 + $0xb7] sm:$0xff] %vm228, %v681
    %859 = vst.msk [vmem:[%s450 + $0xbf] sm:$0x1] %vm395, %v829
    %860 = vst.msk [vmem:[%s450 + $0xcf] sm:$0xfe] %vm392, %v683
    %861 = vst.msk [vmem:[%s450 + $0xd7] sm:$0xff] %vm228, %v685
    %862 = vst.msk [vmem:[%s450 + $0xdf] sm:$0x1] %vm395, %v831
    %863 = vst.msk [vmem:[%s450 + $0xef] sm:$0xfe] %vm392, %v687
    %864 = vst.msk [vmem:[%s450 + $0xf7] sm:$0xff] %vm228, %v689
    %865 = vst.msk [vmem:[%s450 + $0xff] sm:$0x1] %vm395, %v833
    %866 = vrot.lane.b32.xlu0 %v604, 126
    %v867 = vpop.permute.xlu0 %866
    %868 = vrot.lane.b32.xlu0 %v607, 126
    %v869 = vpop.permute.xlu0 %868
    %870 = vrot.lane.b32.xlu0 %v610, 126
    %v871 = vpop.permute.xlu0 %870
    %872 = vrot.lane.b32.xlu0 %v613, 126
    %v873 = vpop.permute.xlu0 %872
    %874 = vrot.lane.b32.xlu0 %v616, 126
    %v875 = vpop.permute.xlu0 %874
    %876 = vrot.lane.b32.xlu0 %v619, 126
    %v877 = vpop.permute.xlu0 %876
    %878 = vrot.lane.b32.xlu0 %v622, 126
    %v879 = vpop.permute.xlu0 %878
    %880 = vrot.lane.b32.xlu0 %v625, 126
    %v881 = vpop.permute.xlu0 %880
    %890 = vst.msk [vmem:[%s499 + $0xf] sm:$0xfe] %vm392, %v723
    %891 = vst.msk [vmem:[%s499 + $0x17] sm:$0xff] %vm228, %v725
    %892 = vst.msk [vmem:[%s499 + $0x1f] sm:$0x1] %vm395, %v867
    %893 = vst.msk [vmem:[%s499 + $0x2f] sm:$0xfe] %vm392, %v727
    %894 = vst.msk [vmem:[%s499 + $0x37] sm:$0xff] %vm228, %v729
    %895 = vst.msk [vmem:[%s499 + $0x3f] sm:$0x1] %vm395, %v869
    %896 = vst.msk [vmem:[%s499 + $0x4f] sm:$0xfe] %vm392, %v731
    %897 = vst.msk [vmem:[%s499 + $0x57] sm:$0xff] %vm228, %v733
    %898 = vst.msk [vmem:[%s499 + $0x5f] sm:$0x1] %vm395, %v871
    %899 = vst.msk [vmem:[%s499 + $0x6f] sm:$0xfe] %vm392, %v735
    %900 = vst.msk [vmem:[%s499 + $0x77] sm:$0xff] %vm228, %v737
    %901 = vst.msk [vmem:[%s499 + $0x7f] sm:$0x1] %vm395, %v873
    %902 = vst.msk [vmem:[%s499 + $0x8f] sm:$0xfe] %vm392, %v739
    %903 = vst.msk [vmem:[%s499 + $0x97] sm:$0xff] %vm228, %v741
    %904 = vst.msk [vmem:[%s499 + $0x9f] sm:$0x1] %vm395, %v875
    %905 = vst.msk [vmem:[%s499 + $0xaf] sm:$0xfe] %vm392, %v743
    %906 = vst.msk [vmem:[%s499 + $0xb7] sm:$0xff] %vm228, %v745
    %907 = vst.msk [vmem:[%s499 + $0xbf] sm:$0x1] %vm395, %v877
    %908 = vst.msk [vmem:[%s499 + $0xcf] sm:$0xfe] %vm392, %v747
    %909 = vst.msk [vmem:[%s499 + $0xd7] sm:$0xff] %vm228, %v749
    %910 = vst.msk [vmem:[%s499 + $0xdf] sm:$0x1] %vm395, %v879
    %911 = vst.msk [vmem:[%s499 + $0xef] sm:$0xfe] %vm392, %v751
    %912 = vst.msk [vmem:[%s499 + $0xf7] sm:$0xff] %vm228, %v753
    %913 = vst.msk [vmem:[%s499 + $0xff] sm:$0x1] %vm395, %v881
    %914 = vst.msk [vmem:[%s524 + $0xe] sm:$0xfc] %vm525, %v602
    %915 = vst.msk [vmem:[%s524 + $0x16] sm:$0xff] %vm228, %v603
    %916 = vst.msk [vmem:[%s524 + $0x1e] sm:$0x3] %vm528, %v604
    %917 = vst.msk [vmem:[%s524 + $0x2e] sm:$0xfc] %vm525, %v605
    %918 = vst.msk [vmem:[%s524 + $0x36] sm:$0xff] %vm228, %v606
    %919 = vst.msk [vmem:[%s524 + $0x3e] sm:$0x3] %vm528, %v607
    %920 = vst.msk [vmem:[%s524 + $0x4e] sm:$0xfc] %vm525, %v608
    %921 = vst.msk [vmem:[%s524 + $0x56] sm:$0xff] %vm228, %v609
    %922 = vst.msk [vmem:[%s524 + $0x5e] sm:$0x3] %vm528, %v610
    %923 = vst.msk [vmem:[%s524 + $0x6e] sm:$0xfc] %vm525, %v611
    %924 = vst.msk [vmem:[%s524 + $0x76] sm:$0xff] %vm228, %v612
    %925 = vst.msk [vmem:[%s524 + $0x7e] sm:$0x3] %vm528, %v613
    %926 = vst.msk [vmem:[%s524 + $0x8e] sm:$0xfc] %vm525, %v614
    %927 = vst.msk [vmem:[%s524 + $0x96] sm:$0xff] %vm228, %v615
    %928 = vst.msk [vmem:[%s524 + $0x9e] sm:$0x3] %vm528, %v616
    %929 = vst.msk [vmem:[%s524 + $0xae] sm:$0xfc] %vm525, %v617
    %930 = vst.msk [vmem:[%s524 + $0xb6] sm:$0xff] %vm228, %v618
    %931 = vst.msk [vmem:[%s524 + $0xbe] sm:$0x3] %vm528, %v619
    %932 = vst.msk [vmem:[%s524 + $0xce] sm:$0xfc] %vm525, %v620
    %933 = vst.msk [vmem:[%s524 + $0xd6] sm:$0xff] %vm228, %v621
    %934 = vst.msk [vmem:[%s524 + $0xde] sm:$0x3] %vm528, %v622
    %935 = vst.msk [vmem:[%s524 + $0xee] sm:$0xfc] %vm525, %v623
    %936 = vst.msk [vmem:[%s524 + $0xf6] sm:$0xff] %vm228, %v624
    %937 = vst.msk [vmem:[%s524 + $0xfe] sm:$0x3] %vm528, %v625
    %938 = vst.msk [vmem:[%s551 + $0xe] sm:$0xfc] %vm525, %v659
    %939 = vst.msk [vmem:[%s551 + $0x16] sm:$0xff] %vm228, %v661
    %940 = vst.msk [vmem:[%s551 + $0x1e] sm:$0x3] %vm528, %v819
    %941 = vst.msk [vmem:[%s551 + $0x2e] sm:$0xfc] %vm525, %v663
    %942 = vst.msk [vmem:[%s551 + $0x36] sm:$0xff] %vm228, %v665
    %943 = vst.msk [vmem:[%s551 + $0x3e] sm:$0x3] %vm528, %v821
    %944 = vst.msk [vmem:[%s551 + $0x4e] sm:$0xfc] %vm525, %v667
    %945 = vst.msk [vmem:[%s551 + $0x56] sm:$0xff] %vm228, %v669
    %946 = vst.msk [vmem:[%s551 + $0x5e] sm:$0x3] %vm528, %v823
    %947 = vst.msk [vmem:[%s551 + $0x6e] sm:$0xfc] %vm525, %v671
    %948 = vst.msk [vmem:[%s551 + $0x76] sm:$0xff] %vm228, %v673
    %949 = vst.msk [vmem:[%s551 + $0x7e] sm:$0x3] %vm528, %v825
    %950 = vst.msk [vmem:[%s551 + $0x8e] sm:$0xfc] %vm525, %v675
    %951 = vst.msk [vmem:[%s551 + $0x96] sm:$0xff] %vm228, %v677
    %952 = vst.msk [vmem:[%s551 + $0x9e] sm:$0x3] %vm528, %v827
    %953 = vst.msk [vmem:[%s551 + $0xae] sm:$0xfc] %vm525, %v679
    %954 = vst.msk [vmem:[%s551 + $0xb6] sm:$0xff] %vm228, %v681
    %955 = vst.msk [vmem:[%s551 + $0xbe] sm:$0x3] %vm528, %v829
    %956 = vst.msk [vmem:[%s551 + $0xce] sm:$0xfc] %vm525, %v683
    %957 = vst.msk [vmem:[%s551 + $0xd6] sm:$0xff] %vm228, %v685
    %958 = vst.msk [vmem:[%s551 + $0xde] sm:$0x3] %vm528, %v831
    %959 = vst.msk [vmem:[%s551 + $0xee] sm:$0xfc] %vm525, %v687
    %960 = vst.msk [vmem:[%s551 + $0xf6] sm:$0xff] %vm228, %v689
    %961 = vst.msk [vmem:[%s551 + $0xfe] sm:$0x3] %vm528, %v833
    %962 = vst.msk [vmem:[%s576 + $0xe] sm:$0xfc] %vm525, %v723
    %963 = vst.msk [vmem:[%s576 + $0x16] sm:$0xff] %vm228, %v725
    %964 = vst.msk [vmem:[%s576 + $0x1e] sm:$0x3] %vm528, %v867
    %965 = vst.msk [vmem:[%s576 + $0x2e] sm:$0xfc] %vm525, %v727
    %966 = vst.msk [vmem:[%s576 + $0x36] sm:$0xff] %vm228, %v729
    %967 = vst.msk [vmem:[%s576 + $0x3e] sm:$0x3] %vm528, %v869
    %968 = vst.msk [vmem:[%s576 + $0x4e] sm:$0xfc] %vm525, %v731
    %969 = vst.msk [vmem:[%s576 + $0x56] sm:$0xff] %vm228, %v733
    %970 = vst.msk [vmem:[%s576 + $0x5e] sm:$0x3] %vm528, %v871
    %971 = vst.msk [vmem:[%s576 + $0x6e] sm:$0xfc] %vm525, %v735
    %972 = vst.msk [vmem:[%s576 + $0x76] sm:$0xff] %vm228, %v737
    %973 = vst.msk [vmem:[%s576 + $0x7e] sm:$0x3] %vm528, %v873
    %974 = vst.msk [vmem:[%s576 + $0x8e] sm:$0xfc] %vm525, %v739
    %975 = vst.msk [vmem:[%s576 + $0x96] sm:$0xff] %vm228, %v741
    %976 = vst.msk [vmem:[%s576 + $0x9e] sm:$0x3] %vm528, %v875
    %977 = vst.msk [vmem:[%s576 + $0xae] sm:$0xfc] %vm525, %v743
    %978 = vst.msk [vmem:[%s576 + $0xb6] sm:$0xff] %vm228, %v745
    %979 = vst.msk [vmem:[%s576 + $0xbe] sm:$0x3] %vm528, %v877
    %980 = vst.msk [vmem:[%s576 + $0xce] sm:$0xfc] %vm525, %v747
    %981 = vst.msk [vmem:[%s576 + $0xd6] sm:$0xff] %vm228, %v749
    %982 = vst.msk [vmem:[%s576 + $0xde] sm:$0x3] %vm528, %v879
    %983 = vst.msk [vmem:[%s576 + $0xee] sm:$0xfc] %vm525, %v751
    %984 = vst.msk [vmem:[%s576 + $0xf6] sm:$0xff] %vm228, %v753
    %985 = vst.msk [vmem:[%s576 + $0xfe] sm:$0x3] %vm528, %v881
    %v986 = vld [vmem:[#allocation3] sm:$0xff]
    %v987 = vld [vmem:[#allocation3 + $0x8] sm:$0xff]
    %v988 = vld [vmem:[#allocation3 + $0x10] sm:$0xff]
    %v989 = vld [vmem:[#allocation3 + $0x18] sm:$0xff]
    %v990 = vld [vmem:[#allocation3 + $0x20] sm:$0xff]
    %v991 = vld [vmem:[#allocation3 + $0x28] sm:$0xff]
    %v992 = vld [vmem:[#allocation3 + $0x30] sm:$0xff]
    %v993 = vld [vmem:[#allocation3 + $0x38] sm:$0xff]
    %v994 = vld [vmem:[#allocation3 + $0x40] sm:$0xff]
    %v995 = vld [vmem:[#allocation3 + $0x48] sm:$0xff]
    %v996 = vld [vmem:[#allocation3 + $0x50] sm:$0xff]
    %v997 = vld [vmem:[#allocation3 + $0x58] sm:$0xff]
    %v998 = vld [vmem:[#allocation3 + $0x60] sm:$0xff]
    %v999 = vld [vmem:[#allocation3 + $0x68] sm:$0xff]
    %v1000 = vld [vmem:[#allocation3 + $0x70] sm:$0xff]
    %v1001 = vld [vmem:[#allocation3 + $0x78] sm:$0xff]
    %v1002 = vld [vmem:[#allocation3 + $0x80] sm:$0xff]
    %v1003 = vld [vmem:[#allocation3 + $0x88] sm:$0xff]
    %v1004 = vld [vmem:[#allocation3 + $0x90] sm:$0xff]
    %v1005 = vld [vmem:[#allocation3 + $0x98] sm:$0xff]
    %v1006 = vld [vmem:[#allocation3 + $0xa0] sm:$0xff]
    %v1007 = vld [vmem:[#allocation3 + $0xa8] sm:$0xff]
    %v1008 = vld [vmem:[#allocation3 + $0xb0] sm:$0xff]
    %v1009 = vld [vmem:[#allocation3 + $0xb8] sm:$0xff]
    %v1010 = vld [vmem:[#allocation3 + $0xc0] sm:$0xff]
    %v1011 = vld [vmem:[#allocation3 + $0xc8] sm:$0xff]
    %v1012 = vld [vmem:[#allocation3 + $0xd0] sm:$0xff]
    %v1013 = vld [vmem:[#allocation3 + $0xd8] sm:$0xff]
    %v1014 = vld [vmem:[#allocation3 + $0xe0] sm:$0xff]
    %v1015 = vld [vmem:[#allocation3 + $0xe8] sm:$0xff]
    %v1016 = vld [vmem:[#allocation3 + $0xf0] sm:$0xff]
    %v1017 = vld [vmem:[#allocation3 + $0xf8] sm:$0xff]
    %v1018 = vld [vmem:[#allocation3 + $0x100] sm:$0xff]
    %v1019 = vld [vmem:[#allocation3 + $0x108] sm:$0xff]
    %v1020 = vld [vmem:[#allocation3 + $0x110] sm:$0xff]
    %v1021 = vld [vmem:[#allocation3 + $0x118] sm:$0xff]
    %v1022 = vld [vmem:[#allocation3 + $0x120] sm:$0xff]
    %v1023 = vld [vmem:[#allocation3 + $0x128] sm:$0xff]
    %v1024 = vld [vmem:[#allocation3 + $0x130] sm:$0xff]
    %v1025 = vld [vmem:[#allocation3 + $0x138] sm:$0xff]
    %v1026 = vld [vmem:[#allocation3 + $0x140] sm:$0xff]
    %v1027 = vld [vmem:[#allocation3 + $0x148] sm:$0xff]
    %v1028 = vld [vmem:[#allocation3 + $0x150] sm:$0xff]
    %v1029 = vld [vmem:[#allocation3 + $0x158] sm:$0xff]
    %v1030 = vld [vmem:[#allocation3 + $0x160] sm:$0xff]
    %v1031 = vld [vmem:[#allocation3 + $0x168] sm:$0xff]
    %v1032 = vld [vmem:[#allocation3 + $0x170] sm:$0xff]
    %v1033 = vld [vmem:[#allocation3 + $0x178] sm:$0xff]
    %v1034 = vld [vmem:[#allocation3 + $0x180] sm:$0xff]
    %v1035 = vld [vmem:[#allocation3 + $0x188] sm:$0xff]
    %v1036 = vld [vmem:[#allocation3 + $0x190] sm:$0xff]
    %v1037 = vld [vmem:[#allocation3 + $0x198] sm:$0xff]
    %v1038 = vld [vmem:[#allocation3 + $0x1a0] sm:$0xff]
    %v1039 = vld [vmem:[#allocation3 + $0x1a8] sm:$0xff]
    %v1040 = vld [vmem:[#allocation3 + $0x1b0] sm:$0xff]
    %v1041 = vld [vmem:[#allocation3 + $0x1b8] sm:$0xff]
    %v1042 = vld [vmem:[#allocation3 + $0x1c0] sm:$0xff]
    %v1043 = vld [vmem:[#allocation3 + $0x1c8] sm:$0xff]
    %v1044 = vld [vmem:[#allocation3 + $0x1d0] sm:$0xff]
    %v1045 = vld [vmem:[#allocation3 + $0x1d8] sm:$0xff]
    %v1046 = vld [vmem:[#allocation3 + $0x1e0] sm:$0xff]
    %v1047 = vld [vmem:[#allocation3 + $0x1e8] sm:$0xff]
    %v1048 = vld [vmem:[#allocation3 + $0x1f0] sm:$0xff]
    %v1049 = vld [vmem:[#allocation3 + $0x1f8] sm:$0xff]
    %v1050 = vld [vmem:[#allocation3 + $0x200] sm:$0xff]
    %v1051 = vld [vmem:[#allocation3 + $0x208] sm:$0xff]
    %v1052 = vld [vmem:[#allocation3 + $0x210] sm:$0xff]
    %v1053 = vld [vmem:[#allocation3 + $0x218] sm:$0xff]
    %v1054 = vld [vmem:[#allocation3 + $0x220] sm:$0xff]
    %v1055 = vld [vmem:[#allocation3 + $0x228] sm:$0xff]
    %v1056 = vld [vmem:[#allocation3 + $0x230] sm:$0xff]
    %v1057 = vld [vmem:[#allocation3 + $0x238] sm:$0xff]
    %v1058 = vld [vmem:[#allocation3 + $0x240] sm:$0xff]
    %v1059 = vld [vmem:[#allocation3 + $0x248] sm:$0xff]
    %v1060 = vld [vmem:[#allocation3 + $0x250] sm:$0xff]
    %v1061 = vld [vmem:[#allocation3 + $0x258] sm:$0xff]
    %v1062 = vld [vmem:[#allocation3 + $0x260] sm:$0xff]
    %v1063 = vld [vmem:[#allocation3 + $0x268] sm:$0xff]
    %v1064 = vld [vmem:[#allocation3 + $0x270] sm:$0xff]
    %v1065 = vld [vmem:[#allocation3 + $0x278] sm:$0xff]
    %v1066 = vld [vmem:[#allocation3 + $0x280] sm:$0xff]
    %v1067 = vld [vmem:[#allocation3 + $0x288] sm:$0xff]
    %v1068 = vld [vmem:[#allocation3 + $0x290] sm:$0xff]
    %v1069 = vld [vmem:[#allocation3 + $0x298] sm:$0xff]
    %v1070 = vld [vmem:[#allocation3 + $0x2a0] sm:$0xff]
    %v1071 = vld [vmem:[#allocation3 + $0x2a8] sm:$0xff]
    %v1072 = vld [vmem:[#allocation3 + $0x2b0] sm:$0xff]
    %v1073 = vld [vmem:[#allocation3 + $0x2b8] sm:$0xff]
    %v1074 = vld [vmem:[#allocation3 + $0x2c0] sm:$0xff]
    %v1075 = vld [vmem:[#allocation3 + $0x2c8] sm:$0xff]
    %v1076 = vld [vmem:[#allocation3 + $0x2d0] sm:$0xff]
    %v1077 = vld [vmem:[#allocation3 + $0x2d8] sm:$0xff]
    %v1078 = vld [vmem:[#allocation3 + $0x2e0] sm:$0xff]
    %v1079 = vld [vmem:[#allocation3 + $0x2e8] sm:$0xff]
    %v1080 = vld [vmem:[#allocation3 + $0x2f0] sm:$0xff]
    %v1081 = vld [vmem:[#allocation3 + $0x2f8] sm:$0xff]
    %v1082 = vld [vmem:[#allocation3 + $0x300] sm:$0xff]
    %v1083 = vld [vmem:[#allocation3 + $0x308] sm:$0xff]
    %v1084 = vld [vmem:[#allocation3 + $0x310] sm:$0xff]
    %v1085 = vld [vmem:[#allocation3 + $0x318] sm:$0xff]
    %v1086 = vld [vmem:[#allocation3 + $0x320] sm:$0xff]
    %v1087 = vld [vmem:[#allocation3 + $0x328] sm:$0xff]
    %v1088 = vld [vmem:[#allocation3 + $0x330] sm:$0xff]
    %v1089 = vld [vmem:[#allocation3 + $0x338] sm:$0xff]
    %v1090 = vld [vmem:[#allocation3 + $0x340] sm:$0xff]
    %v1091 = vld [vmem:[#allocation3 + $0x348] sm:$0xff]
    %v1092 = vld [vmem:[#allocation3 + $0x350] sm:$0xff]
    %v1093 = vld [vmem:[#allocation3 + $0x358] sm:$0xff]
    %v1094 = vld [vmem:[#allocation3 + $0x360] sm:$0xff]
    %v1095 = vld [vmem:[#allocation3 + $0x368] sm:$0xff]
    %v1096 = vld [vmem:[#allocation3 + $0x370] sm:$0xff]
    %v1097 = vld [vmem:[#allocation3 + $0x378] sm:$0xff]
    %v1098 = vld [vmem:[#allocation3 + $0x380] sm:$0xff]
    %v1099 = vld [vmem:[#allocation3 + $0x388] sm:$0xff]
    %v1100 = vld [vmem:[#allocation3 + $0x390] sm:$0xff]
    %v1101 = vld [vmem:[#allocation3 + $0x398] sm:$0xff]
    %v1102 = vld [vmem:[#allocation3 + $0x3a0] sm:$0xff]
    %v1103 = vld [vmem:[#allocation3 + $0x3a8] sm:$0xff]
    %v1104 = vld [vmem:[#allocation3 + $0x3b0] sm:$0xff]
    %v1105 = vld [vmem:[#allocation3 + $0x3b8] sm:$0xff]
    %v1106 = vld [vmem:[#allocation3 + $0x3c0] sm:$0xff]
    %v1107 = vld [vmem:[#allocation3 + $0x3c8] sm:$0xff]
    %v1108 = vld [vmem:[#allocation3 + $0x3d0] sm:$0xff]
    %v1109 = vld [vmem:[#allocation3 + $0x3d8] sm:$0xff]
    %v1110 = vld [vmem:[#allocation3 + $0x3e0] sm:$0xff]
    %v1111 = vld [vmem:[#allocation3 + $0x3e8] sm:$0xff]
    %v1112 = vld [vmem:[#allocation3 + $0x3f0] sm:$0xff]
    %v1113 = vld [vmem:[#allocation3 + $0x3f8] sm:$0xff]
    %v1114 = vld [vmem:[#allocation3 + $0x400] sm:$0xff]
    %v1115 = vld [vmem:[#allocation3 + $0x408] sm:$0xff]
    %v1116 = vld [vmem:[#allocation3 + $0x410] sm:$0xff]
    %v1117 = vld [vmem:[#allocation3 + $0x418] sm:$0xff]
    %v1118 = vld [vmem:[#allocation3 + $0x420] sm:$0xff]
    %v1119 = vld [vmem:[#allocation3 + $0x428] sm:$0xff]
    %v1120 = vld [vmem:[#allocation3 + $0x430] sm:$0xff]
    %v1121 = vld [vmem:[#allocation3 + $0x438] sm:$0xff]
    %v1122 = vld [vmem:[#allocation3 + $0x440] sm:$0xff]
    %v1123 = vld [vmem:[#allocation3 + $0x448] sm:$0xff]
    %v1124 = vld [vmem:[#allocation3 + $0x450] sm:$0xff]
    %v1125 = vld [vmem:[#allocation3 + $0x458] sm:$0xff]
    %v1126 = vld [vmem:[#allocation3 + $0x460] sm:$0xff]
    %v1127 = vld [vmem:[#allocation3 + $0x468] sm:$0xff]
    %v1128 = vld [vmem:[#allocation3 + $0x470] sm:$0xff]
    %v1129 = vld [vmem:[#allocation3 + $0x478] sm:$0xff]
    %v1130 = vld [vmem:[#allocation3 + $0x480] sm:$0xff]
    %v1131 = vld [vmem:[#allocation3 + $0x488] sm:$0xff]
    %v1132 = vld [vmem:[#allocation3 + $0x490] sm:$0xff]
    %v1133 = vld [vmem:[#allocation3 + $0x498] sm:$0xff]
    %v1134 = vld [vmem:[#allocation3 + $0x4a0] sm:$0xff]
    %v1135 = vld [vmem:[#allocation3 + $0x4a8] sm:$0xff]
    %v1136 = vld [vmem:[#allocation3 + $0x4b0] sm:$0xff]
    %v1137 = vld [vmem:[#allocation3 + $0x4b8] sm:$0xff]
    %v1138 = vld [vmem:[#allocation3 + $0x4c0] sm:$0xff]
    %v1139 = vld [vmem:[#allocation3 + $0x4c8] sm:$0xff]
    %v1140 = vld [vmem:[#allocation3 + $0x4d0] sm:$0xff]
    %v1141 = vld [vmem:[#allocation3 + $0x4d8] sm:$0xff]
    %v1142 = vld [vmem:[#allocation3 + $0x4e0] sm:$0xff]
    %v1143 = vld [vmem:[#allocation3 + $0x4e8] sm:$0xff]
    %v1144 = vld [vmem:[#allocation3 + $0x4f0] sm:$0xff]
    %v1145 = vld [vmem:[#allocation3 + $0x4f8] sm:$0xff]
    %v1146 = vld [vmem:[#allocation3 + $0x500] sm:$0xff]
    %v1147 = vld [vmem:[#allocation3 + $0x508] sm:$0xff]
    %v1148 = vld [vmem:[#allocation3 + $0x510] sm:$0xff]
    %v1149 = vld [vmem:[#allocation3 + $0x518] sm:$0xff]
    %v1150 = vld [vmem:[#allocation3 + $0x520] sm:$0xff]
    %v1151 = vld [vmem:[#allocation3 + $0x528] sm:$0xff]
    %v1152 = vld [vmem:[#allocation3 + $0x530] sm:$0xff]
    %v1153 = vld [vmem:[#allocation3 + $0x538] sm:$0xff]
    %v1154 = vld [vmem:[#allocation3 + $0x540] sm:$0xff]
    %v1155 = vld [vmem:[#allocation3 + $0x548] sm:$0xff]
    %v1156 = vld [vmem:[#allocation3 + $0x550] sm:$0xff]
    %v1157 = vld [vmem:[#allocation3 + $0x558] sm:$0xff]
    %v1158 = vld [vmem:[#allocation3 + $0x560] sm:$0xff]
    %v1159 = vld [vmem:[#allocation3 + $0x568] sm:$0xff]
    %v1160 = vld [vmem:[#allocation3 + $0x570] sm:$0xff]
    %v1161 = vld [vmem:[#allocation3 + $0x578] sm:$0xff]
    %v1162 = vld [vmem:[#allocation3 + $0x580] sm:$0xff]
    %v1163 = vld [vmem:[#allocation3 + $0x588] sm:$0xff]
    %v1164 = vld [vmem:[#allocation3 + $0x590] sm:$0xff]
    %v1165 = vld [vmem:[#allocation3 + $0x598] sm:$0xff]
    %v1166 = vld [vmem:[#allocation3 + $0x5a0] sm:$0xff]
    %v1167 = vld [vmem:[#allocation3 + $0x5a8] sm:$0xff]
    %v1168 = vld [vmem:[#allocation3 + $0x5b0] sm:$0xff]
    %v1169 = vld [vmem:[#allocation3 + $0x5b8] sm:$0xff]
    %v1170 = vld [vmem:[#allocation3 + $0x5c0] sm:$0xff]
    %v1171 = vld [vmem:[#allocation3 + $0x5c8] sm:$0xff]
    %v1172 = vld [vmem:[#allocation3 + $0x5d0] sm:$0xff]
    %v1173 = vld [vmem:[#allocation3 + $0x5d8] sm:$0xff]
    %v1174 = vld [vmem:[#allocation3 + $0x5e0] sm:$0xff]
    %v1175 = vld [vmem:[#allocation3 + $0x5e8] sm:$0xff]
    %v1176 = vld [vmem:[#allocation3 + $0x5f0] sm:$0xff]
    %v1177 = vld [vmem:[#allocation3 + $0x5f8] sm:$0xff]
    %v1178 = vld [vmem:[#allocation3 + $0x600] sm:$0xff]
    %v1179 = vld [vmem:[#allocation3 + $0x608] sm:$0xff]
    %v1180 = vld [vmem:[#allocation3 + $0x610] sm:$0xff]
    %v1181 = vld [vmem:[#allocation3 + $0x618] sm:$0xff]
    %v1182 = vld [vmem:[#allocation3 + $0x620] sm:$0xff]
    %v1183 = vld [vmem:[#allocation3 + $0x628] sm:$0xff]
    %v1184 = vld [vmem:[#allocation3 + $0x630] sm:$0xff]
    %v1185 = vld [vmem:[#allocation3 + $0x638] sm:$0xff]
    %v1186 = vld [vmem:[#allocation3 + $0x640] sm:$0xff]
    %v1187 = vld [vmem:[#allocation3 + $0x648] sm:$0xff]
    %v1188 = vld [vmem:[#allocation3 + $0x650] sm:$0xff]
    %v1189 = vld [vmem:[#allocation3 + $0x658] sm:$0xff]
    %v1190 = vld [vmem:[#allocation3 + $0x660] sm:$0xff]
    %v1191 = vld [vmem:[#allocation3 + $0x668] sm:$0xff]
    %v1192 = vld [vmem:[#allocation3 + $0x670] sm:$0xff]
    %v1193 = vld [vmem:[#allocation3 + $0x678] sm:$0xff]
    %v1194 = vld [vmem:[#allocation3 + $0x680] sm:$0xff]
    %v1195 = vld [vmem:[#allocation3 + $0x688] sm:$0xff]
    %v1196 = vld [vmem:[#allocation3 + $0x690] sm:$0xff]
    %v1197 = vld [vmem:[#allocation3 + $0x698] sm:$0xff]
    %v1198 = vld [vmem:[#allocation3 + $0x6a0] sm:$0xff]
    %v1199 = vld [vmem:[#allocation3 + $0x6a8] sm:$0xff]
    %v1200 = vld [vmem:[#allocation3 + $0x6b0] sm:$0xff]
    %v1201 = vld [vmem:[#allocation3 + $0x6b8] sm:$0xff]
    %v1202 = vld [vmem:[#allocation3 + $0x6c0] sm:$0xff]
    %v1203 = vld [vmem:[#allocation3 + $0x6c8] sm:$0xff]
    %v1204 = vld [vmem:[#allocation3 + $0x6d0] sm:$0xff]
    %v1205 = vld [vmem:[#allocation3 + $0x6d8] sm:$0xff]
    %v1206 = vld [vmem:[#allocation3 + $0x6e0] sm:$0xff]
    %v1207 = vld [vmem:[#allocation3 + $0x6e8] sm:$0xff]
    %v1208 = vld [vmem:[#allocation3 + $0x6f0] sm:$0xff]
    %v1209 = vld [vmem:[#allocation3 + $0x6f8] sm:$0xff]
    %v1210 = vld [vmem:[#allocation3 + $0x700] sm:$0xff]
    %v1211 = vld [vmem:[#allocation3 + $0x708] sm:$0xff]
    %v1212 = vld [vmem:[#allocation3 + $0x710] sm:$0xff]
    %v1213 = vld [vmem:[#allocation3 + $0x718] sm:$0xff]
    %v1214 = vld [vmem:[#allocation3 + $0x720] sm:$0xff]
    %v1215 = vld [vmem:[#allocation3 + $0x728] sm:$0xff]
    %v1216 = vld [vmem:[#allocation3 + $0x730] sm:$0xff]
    %v1217 = vld [vmem:[#allocation3 + $0x738] sm:$0xff]
    %v1218 = vld [vmem:[#allocation3 + $0x740] sm:$0xff]
    %v1219 = vld [vmem:[#allocation3 + $0x748] sm:$0xff]
    %v1220 = vld [vmem:[#allocation3 + $0x750] sm:$0xff]
    %v1221 = vld [vmem:[#allocation3 + $0x758] sm:$0xff]
    %v1222 = vld [vmem:[#allocation3 + $0x760] sm:$0xff]
    %v1223 = vld [vmem:[#allocation3 + $0x768] sm:$0xff]
    %v1224 = vld [vmem:[#allocation3 + $0x770] sm:$0xff]
    %v1225 = vld [vmem:[#allocation3 + $0x778] sm:$0xff]
    %v1226 = vld [vmem:[#allocation3 + $0x780] sm:$0xff]
    %v1227 = vld [vmem:[#allocation3 + $0x788] sm:$0xff]
    %v1228 = vld [vmem:[#allocation3 + $0x790] sm:$0xff]
    %v1229 = vld [vmem:[#allocation3 + $0x798] sm:$0xff]
    %v1230 = vld [vmem:[#allocation3 + $0x7a0] sm:$0xff]
    %v1231 = vld [vmem:[#allocation3 + $0x7a8] sm:$0xff]
    %v1232 = vld [vmem:[#allocation3 + $0x7b0] sm:$0xff]
    %v1233 = vld [vmem:[#allocation3 + $0x7b8] sm:$0xff]
    %v1234 = vld [vmem:[#allocation3 + $0x7c0] sm:$0xff]
    %v1235 = vld [vmem:[#allocation3 + $0x7c8] sm:$0xff]
    %v1236 = vld [vmem:[#allocation3 + $0x7d0] sm:$0xff]
    %v1237 = vld [vmem:[#allocation3 + $0x7d8] sm:$0xff]
    %v1238 = vld [vmem:[#allocation3 + $0x7e0] sm:$0xff]
    %v1239 = vld [vmem:[#allocation3 + $0x7e8] sm:$0xff]
    %v1240 = vld [vmem:[#allocation3 + $0x7f0] sm:$0xff]
    %v1241 = vld [vmem:[#allocation3 + $0x7f8] sm:$0xff]
    %v1242 = vld [vmem:[#allocation3 + $0x800] sm:$0xff]
    %v1243 = vld [vmem:[#allocation3 + $0x808] sm:$0xff]
    %v1244 = vld [vmem:[#allocation3 + $0x810] sm:$0xff]
    %v1245 = vld [vmem:[#allocation3 + $0x818] sm:$0xff]
    %v1246 = vld [vmem:[#allocation3 + $0x820] sm:$0xff]
    %v1247 = vld [vmem:[#allocation3 + $0x828] sm:$0xff]
    %v1248 = vld [vmem:[#allocation3 + $0x830] sm:$0xff]
    %v1249 = vld [vmem:[#allocation3 + $0x838] sm:$0xff]
    %v1250 = vld [vmem:[#allocation3 + $0x840] sm:$0xff]
    %v1251 = vld [vmem:[#allocation3 + $0x848] sm:$0xff]
    %v1252 = vld [vmem:[#allocation3 + $0x850] sm:$0xff]
    %v1253 = vld [vmem:[#allocation3 + $0x858] sm:$0xff]
    %v1254 = vld [vmem:[#allocation3 + $0x860] sm:$0xff]
    %v1255 = vld [vmem:[#allocation3 + $0x868] sm:$0xff]
    %v1256 = vld [vmem:[#allocation3 + $0x870] sm:$0xff]
    %v1257 = vld [vmem:[#allocation3 + $0x878] sm:$0xff]
    %v1258 = vld [vmem:[#allocation3 + $0x880] sm:$0xff]
    %v1259 = vld [vmem:[#allocation3 + $0x888] sm:$0xff]
    %v1260 = vld [vmem:[#allocation3 + $0x890] sm:$0xff]
    %v1261 = vld [vmem:[#allocation3 + $0x898] sm:$0xff]
    %v1262 = vld [vmem:[#allocation3 + $0x8a0] sm:$0xff]
    %v1263 = vld [vmem:[#allocation3 + $0x8a8] sm:$0xff]
    %v1264 = vld [vmem:[#allocation3 + $0x8b0] sm:$0xff]
    %v1265 = vld [vmem:[#allocation3 + $0x8b8] sm:$0xff]
    %v1266 = vld [vmem:[#allocation3 + $0x8c0] sm:$0xff]
    %v1267 = vld [vmem:[#allocation3 + $0x8c8] sm:$0xff]
    %v1268 = vld [vmem:[#allocation3 + $0x8d0] sm:$0xff]
    %v1269 = vld [vmem:[#allocation3 + $0x8d8] sm:$0xff]
    %v1270 = vld [vmem:[#allocation3 + $0x8e0] sm:$0xff]
    %v1271 = vld [vmem:[#allocation3 + $0x8e8] sm:$0xff]
    %v1272 = vld [vmem:[#allocation3 + $0x8f0] sm:$0xff]
    %v1273 = vld [vmem:[#allocation3 + $0x8f8] sm:$0xff]
    %v1274 = vcombine.low %v986, %v994
    %v1275 = vcombine.high %v986, %v994
    %v1277 = vunpack.c.l.s4 1983009808
    %v1278 = vunpack.c.0.s8 %v1277
    %v1279 = vlaneseq
    %v1280 = vshrl.u32 %v1279, 7
    %v1281 = vsub.s32 %v1278, %v1280
    %v1282 = vrot.slane %v1274, %v1281
    %v1284 = vunpack.c.l.s4 1983009808
    %v1285 = vunpack.c.0.s8 %v1284
    %v1286 = vlaneseq
    %v1287 = vshrl.u32 %v1286, 7
    %v1288 = vsub.s32 %v1285, %v1287
    %v1289 = vrot.slane %v1275, %v1288
    %v1290 = vcombine.low %v990, %v998
    %v1291 = vcombine.high %v990, %v998
    %v1293 = vunpack.c.l.s4 1983009808
    %v1294 = vunpack.c.0.s8 %v1293
    %v1295 = vlaneseq
    %v1296 = vshrl.u32 %v1295, 7
    %v1297 = vsub.s32 %v1294, %v1296
    %v1298 = vrot.slane %v1290, %v1297
    %v1300 = vunpack.c.l.s4 1983009808
    %v1301 = vunpack.c.0.s8 %v1300
    %v1302 = vlaneseq
    %v1303 = vshrl.u32 %v1302, 7
    %v1304 = vsub.s32 %v1301, %v1303
    %v1305 = vrot.slane %v1291, %v1304
    %v1306 = vcombine.low %v1002, %v1010
    %v1307 = vcombine.high %v1002, %v1010
    %v1309 = vunpack.c.l.s4 1983009808
    %v1310 = vunpack.c.0.s8 %v1309
    %v1311 = vlaneseq
    %v1312 = vshrl.u32 %v1311, 7
    %v1313 = vsub.s32 %v1310, %v1312
    %v1314 = vrot.slane %v1306, %v1313
    %v1316 = vunpack.c.l.s4 1983009808
    %v1317 = vunpack.c.0.s8 %v1316
    %v1318 = vlaneseq
    %v1319 = vshrl.u32 %v1318, 7
    %v1320 = vsub.s32 %v1317, %v1319
    %v1321 = vrot.slane %v1307, %v1320
    %v1322 = vcombine.low %v1006, %v1014
    %v1323 = vcombine.high %v1006, %v1014
    %v1325 = vunpack.c.l.s4 1983009808
    %v1326 = vunpack.c.0.s8 %v1325
    %v1327 = vlaneseq
    %v1328 = vshrl.u32 %v1327, 7
    %v1329 = vsub.s32 %v1326, %v1328
    %v1330 = vrot.slane %v1322, %v1329
    %v1332 = vunpack.c.l.s4 1983009808
    %v1333 = vunpack.c.0.s8 %v1332
    %v1334 = vlaneseq
    %v1335 = vshrl.u32 %v1334, 7
    %v1336 = vsub.s32 %v1333, %v1335
    %v1337 = vrot.slane %v1323, %v1336
    %v1338 = vcombine.low %v1282, %v1298
    %v1339 = vcombine.high %v1282, %v1298
    %v1341 = vunpack.c.l.s4 1934713408
    %v1342 = vunpack.c.0.s8 %v1341
    %v1343 = vlaneseq
    %v1344 = vshrl.u32 %v1343, 7
    %v1345 = vsub.s32 %v1342, %v1344
    %v1346 = vrot.slane %v1338, %v1345
    %v1348 = vunpack.c.l.s4 1934713408
    %v1349 = vunpack.c.0.s8 %v1348
    %v1350 = vlaneseq
    %v1351 = vshrl.u32 %v1350, 7
    %v1352 = vsub.s32 %v1349, %v1351
    %v1353 = vrot.slane %v1339, %v1352
    %v1354 = vcombine.low %v1289, %v1305
    %v1355 = vcombine.high %v1289, %v1305
    %v1357 = vunpack.c.l.s4 1934713408
    %v1358 = vunpack.c.0.s8 %v1357
    %v1359 = vlaneseq
    %v1360 = vshrl.u32 %v1359, 7
    %v1361 = vsub.s32 %v1358, %v1360
    %v1362 = vrot.slane %v1354, %v1361
    %v1364 = vunpack.c.l.s4 1934713408
    %v1365 = vunpack.c.0.s8 %v1364
    %v1366 = vlaneseq
    %v1367 = vshrl.u32 %v1366, 7
    %v1368 = vsub.s32 %v1365, %v1367
    %v1369 = vrot.slane %v1355, %v1368
    %v1370 = vcombine.low %v1314, %v1330
    %v1371 = vcombine.high %v1314, %v1330
    %v1373 = vunpack.c.l.s4 1934713408
    %v1374 = vunpack.c.0.s8 %v1373
    %v1375 = vlaneseq
    %v1376 = vshrl.u32 %v1375, 7
    %v1377 = vsub.s32 %v1374, %v1376
    %v1378 = vrot.slane %v1370, %v1377
    %v1380 = vunpack.c.l.s4 1934713408
    %v1381 = vunpack.c.0.s8 %v1380
    %v1382 = vlaneseq
    %v1383 = vshrl.u32 %v1382, 7
    %v1384 = vsub.s32 %v1381, %v1383
    %v1385 = vrot.slane %v1371, %v1384
    %v1386 = vcombine.low %v1321, %v1337
    %v1387 = vcombine.high %v1321, %v1337
    %v1389 = vunpack.c.l.s4 1934713408
    %v1390 = vunpack.c.0.s8 %v1389
    %v1391 = vlaneseq
    %v1392 = vshrl.u32 %v1391, 7
    %v1393 = vsub.s32 %v1390, %v1392
    %v1394 = vrot.slane %v1386, %v1393
    %v1396 = vunpack.c.l.s4 1934713408
    %v1397 = vunpack.c.0.s8 %v1396
    %v1398 = vlaneseq
    %v1399 = vshrl.u32 %v1398, 7
    %v1400 = vsub.s32 %v1397, %v1399
    %v1401 = vrot.slane %v1387, %v1400
    %v1402 = vcombine.low %v1346, %v1378
    %v1403 = vcombine.high %v1346, %v1378
    %v1404 = vcombine.low %v1353, %v1385
    %v1405 = vcombine.high %v1353, %v1385
    %v1406 = vcombine.low %v1362, %v1394
    %v1407 = vcombine.high %v1362, %v1394
    %v1408 = vcombine.low %v1369, %v1401
    %v1409 = vcombine.high %v1369, %v1401
    %v1410 = vcombine.low %v1018, %v1026
    %v1411 = vcombine.high %v1018, %v1026
    %v1413 = vunpack.c.l.s4 1983009808
    %v1414 = vunpack.c.0.s8 %v1413
    %v1415 = vlaneseq
    %v1416 = vshrl.u32 %v1415, 7
    %v1417 = vsub.s32 %v1414, %v1416
    %v1418 = vrot.slane %v1410, %v1417
    %v1420 = vunpack.c.l.s4 1983009808
    %v1421 = vunpack.c.0.s8 %v1420
    %v1422 = vlaneseq
    %v1423 = vshrl.u32 %v1422, 7
    %v1424 = vsub.s32 %v1421, %v1423
    %v1425 = vrot.slane %v1411, %v1424
    %v1426 = vcombine.low %v1022, %v1030
    %v1427 = vcombine.high %v1022, %v1030
    %v1429 = vunpack.c.l.s4 1983009808
    %v1430 = vunpack.c.0.s8 %v1429
    %v1431 = vlaneseq
    %v1432 = vshrl.u32 %v1431, 7
    %v1433 = vsub.s32 %v1430, %v1432
    %v1434 = vrot.slane %v1426, %v1433
    %v1436 = vunpack.c.l.s4 1983009808
    %v1437 = vunpack.c.0.s8 %v1436
    %v1438 = vlaneseq
    %v1439 = vshrl.u32 %v1438, 7
    %v1440 = vsub.s32 %v1437, %v1439
    %v1441 = vrot.slane %v1427, %v1440
    %v1442 = vcombine.low %v1034, %v1042
    %v1443 = vcombine.high %v1034, %v1042
    %v1445 = vunpack.c.l.s4 1983009808
    %v1446 = vunpack.c.0.s8 %v1445
    %v1447 = vlaneseq
    %v1448 = vshrl.u32 %v1447, 7
    %v1449 = vsub.s32 %v1446, %v1448
    %v1450 = vrot.slane %v1442, %v1449
    %v1452 = vunpack.c.l.s4 1983009808
    %v1453 = vunpack.c.0.s8 %v1452
    %v1454 = vlaneseq
    %v1455 = vshrl.u32 %v1454, 7
    %v1456 = vsub.s32 %v1453, %v1455
    %v1457 = vrot.slane %v1443, %v1456
    %v1458 = vcombine.low %v1038, %v1046
    %v1459 = vcombine.high %v1038, %v1046
    %v1461 = vunpack.c.l.s4 1983009808
    %v1462 = vunpack.c.0.s8 %v1461
    %v1463 = vlaneseq
    %v1464 = vshrl.u32 %v1463, 7
    %v1465 = vsub.s32 %v1462, %v1464
    %v1466 = vrot.slane %v1458, %v1465
    %v1468 = vunpack.c.l.s4 1983009808
    %v1469 = vunpack.c.0.s8 %v1468
    %v1470 = vlaneseq
    %v1471 = vshrl.u32 %v1470, 7
    %v1472 = vsub.s32 %v1469, %v1471
    %v1473 = vrot.slane %v1459, %v1472
    %v1474 = vcombine.low %v1418, %v1434
    %v1475 = vcombine.high %v1418, %v1434
    %v1477 = vunpack.c.l.s4 1934713408
    %v1478 = vunpack.c.0.s8 %v1477
    %v1479 = vlaneseq
    %v1480 = vshrl.u32 %v1479, 7
    %v1481 = vsub.s32 %v1478, %v1480
    %v1482 = vrot.slane %v1474, %v1481
    %v1484 = vunpack.c.l.s4 1934713408
    %v1485 = vunpack.c.0.s8 %v1484
    %v1486 = vlaneseq
    %v1487 = vshrl.u32 %v1486, 7
    %v1488 = vsub.s32 %v1485, %v1487
    %v1489 = vrot.slane %v1475, %v1488
    %v1490 = vcombine.low %v1425, %v1441
    %v1491 = vcombine.high %v1425, %v1441
    %v1493 = vunpack.c.l.s4 1934713408
    %v1494 = vunpack.c.0.s8 %v1493
    %v1495 = vlaneseq
    %v1496 = vshrl.u32 %v1495, 7
    %v1497 = vsub.s32 %v1494, %v1496
    %v1498 = vrot.slane %v1490, %v1497
    %v1500 = vunpack.c.l.s4 1934713408
    %v1501 = vunpack.c.0.s8 %v1500
    %v1502 = vlaneseq
    %v1503 = vshrl.u32 %v1502, 7
    %v1504 = vsub.s32 %v1501, %v1503
    %v1505 = vrot.slane %v1491, %v1504
    %v1506 = vcombine.low %v1450, %v1466
    %v1507 = vcombine.high %v1450, %v1466
    %v1509 = vunpack.c.l.s4 1934713408
    %v1510 = vunpack.c.0.s8 %v1509
    %v1511 = vlaneseq
    %v1512 = vshrl.u32 %v1511, 7
    %v1513 = vsub.s32 %v1510, %v1512
    %v1514 = vrot.slane %v1506, %v1513
    %v1516 = vunpack.c.l.s4 1934713408
    %v1517 = vunpack.c.0.s8 %v1516
    %v1518 = vlaneseq
    %v1519 = vshrl.u32 %v1518, 7
    %v1520 = vsub.s32 %v1517, %v1519
    %v1521 = vrot.slane %v1507, %v1520
    %v1522 = vcombine.low %v1457, %v1473
    %v1523 = vcombine.high %v1457, %v1473
    %v1525 = vunpack.c.l.s4 1934713408
    %v1526 = vunpack.c.0.s8 %v1525
    %v1527 = vlaneseq
    %v1528 = vshrl.u32 %v1527, 7
    %v1529 = vsub.s32 %v1526, %v1528
    %v1530 = vrot.slane %v1522, %v1529
    %v1532 = vunpack.c.l.s4 1934713408
    %v1533 = vunpack.c.0.s8 %v1532
    %v1534 = vlaneseq
    %v1535 = vshrl.u32 %v1534, 7
    %v1536 = vsub.s32 %v1533, %v1535
    %v1537 = vrot.slane %v1523, %v1536
    %v1538 = vcombine.low %v1482, %v1514
    %v1539 = vcombine.high %v1482, %v1514
    %v1540 = vcombine.low %v1489, %v1521
    %v1541 = vcombine.high %v1489, %v1521
    %v1542 = vcombine.low %v1498, %v1530
    %v1543 = vcombine.high %v1498, %v1530
    %v1544 = vcombine.low %v1505, %v1537
    %v1545 = vcombine.high %v1505, %v1537
    %v1546 = vcombine.low %v1050, %v1058
    %v1547 = vcombine.high %v1050, %v1058
    %v1549 = vunpack.c.l.s4 1983009808
    %v1550 = vunpack.c.0.s8 %v1549
    %v1551 = vlaneseq
    %v1552 = vshrl.u32 %v1551, 7
    %v1553 = vsub.s32 %v1550, %v1552
    %v1554 = vrot.slane %v1546, %v1553
    %v1556 = vunpack.c.l.s4 1983009808
    %v1557 = vunpack.c.0.s8 %v1556
    %v1558 = vlaneseq
    %v1559 = vshrl.u32 %v1558, 7
    %v1560 = vsub.s32 %v1557, %v1559
    %v1561 = vrot.slane %v1547, %v1560
    %v1562 = vcombine.low %v1054, %v1062
    %v1563 = vcombine.high %v1054, %v1062
    %v1565 = vunpack.c.l.s4 1983009808
    %v1566 = vunpack.c.0.s8 %v1565
    %v1567 = vlaneseq
    %v1568 = vshrl.u32 %v1567, 7
    %v1569 = vsub.s32 %v1566, %v1568
    %v1570 = vrot.slane %v1562, %v1569
    %v1572 = vunpack.c.l.s4 1983009808
    %v1573 = vunpack.c.0.s8 %v1572
    %v1574 = vlaneseq
    %v1575 = vshrl.u32 %v1574, 7
    %v1576 = vsub.s32 %v1573, %v1575
    %v1577 = vrot.slane %v1563, %v1576
    %v1578 = vcombine.low %v1066, %v1074
    %v1579 = vcombine.high %v1066, %v1074
    %v1581 = vunpack.c.l.s4 1983009808
    %v1582 = vunpack.c.0.s8 %v1581
    %v1583 = vlaneseq
    %v1584 = vshrl.u32 %v1583, 7
    %v1585 = vsub.s32 %v1582, %v1584
    %v1586 = vrot.slane %v1578, %v1585
    %v1588 = vunpack.c.l.s4 1983009808
    %v1589 = vunpack.c.0.s8 %v1588
    %v1590 = vlaneseq
    %v1591 = vshrl.u32 %v1590, 7
    %v1592 = vsub.s32 %v1589, %v1591
    %v1593 = vrot.slane %v1579, %v1592
    %v1594 = vcombine.low %v1070, %v1078
    %v1595 = vcombine.high %v1070, %v1078
    %v1597 = vunpack.c.l.s4 1983009808
    %v1598 = vunpack.c.0.s8 %v1597
    %v1599 = vlaneseq
    %v1600 = vshrl.u32 %v1599, 7
    %v1601 = vsub.s32 %v1598, %v1600
    %v1602 = vrot.slane %v1594, %v1601
    %v1604 = vunpack.c.l.s4 1983009808
    %v1605 = vunpack.c.0.s8 %v1604
    %v1606 = vlaneseq
    %v1607 = vshrl.u32 %v1606, 7
    %v1608 = vsub.s32 %v1605, %v1607
    %v1609 = vrot.slane %v1595, %v1608
    %v1610 = vcombine.low %v1554, %v1570
    %v1611 = vcombine.high %v1554, %v1570
    %v1613 = vunpack.c.l.s4 1934713408
    %v1614 = vunpack.c.0.s8 %v1613
    %v1615 = vlaneseq
    %v1616 = vshrl.u32 %v1615, 7
    %v1617 = vsub.s32 %v1614, %v1616
    %v1618 = vrot.slane %v1610, %v1617
    %v1620 = vunpack.c.l.s4 1934713408
    %v1621 = vunpack.c.0.s8 %v1620
    %v1622 = vlaneseq
    %v1623 = vshrl.u32 %v1622, 7
    %v1624 = vsub.s32 %v1621, %v1623
    %v1625 = vrot.slane %v1611, %v1624
    %v1626 = vcombine.low %v1561, %v1577
    %v1627 = vcombine.high %v1561, %v1577
    %v1629 = vunpack.c.l.s4 1934713408
    %v1630 = vunpack.c.0.s8 %v1629
    %v1631 = vlaneseq
    %v1632 = vshrl.u32 %v1631, 7
    %v1633 = vsub.s32 %v1630, %v1632
    %v1634 = vrot.slane %v1626, %v1633
    %v1636 = vunpack.c.l.s4 1934713408
    %v1637 = vunpack.c.0.s8 %v1636
    %v1638 = vlaneseq
    %v1639 = vshrl.u32 %v1638, 7
    %v1640 = vsub.s32 %v1637, %v1639
    %v1641 = vrot.slane %v1627, %v1640
    %v1642 = vcombine.low %v1586, %v1602
    %v1643 = vcombine.high %v1586, %v1602
    %v1645 = vunpack.c.l.s4 1934713408
    %v1646 = vunpack.c.0.s8 %v1645
    %v1647 = vlaneseq
    %v1648 = vshrl.u32 %v1647, 7
    %v1649 = vsub.s32 %v1646, %v1648
    %v1650 = vrot.slane %v1642, %v1649
    %v1652 = vunpack.c.l.s4 1934713408
    %v1653 = vunpack.c.0.s8 %v1652
    %v1654 = vlaneseq
    %v1655 = vshrl.u32 %v1654, 7
    %v1656 = vsub.s32 %v1653, %v1655
    %v1657 = vrot.slane %v1643, %v1656
    %v1658 = vcombine.low %v1593, %v1609
    %v1659 = vcombine.high %v1593, %v1609
    %v1661 = vunpack.c.l.s4 1934713408
    %v1662 = vunpack.c.0.s8 %v1661
    %v1663 = vlaneseq
    %v1664 = vshrl.u32 %v1663, 7
    %v1665 = vsub.s32 %v1662, %v1664
    %v1666 = vrot.slane %v1658, %v1665
    %v1668 = vunpack.c.l.s4 1934713408
    %v1669 = vunpack.c.0.s8 %v1668
    %v1670 = vlaneseq
    %v1671 = vshrl.u32 %v1670, 7
    %v1672 = vsub.s32 %v1669, %v1671
    %v1673 = vrot.slane %v1659, %v1672
    %v1674 = vcombine.low %v1618, %v1650
    %v1675 = vcombine.high %v1618, %v1650
    %v1676 = vcombine.low %v1625, %v1657
    %v1677 = vcombine.high %v1625, %v1657
    %v1678 = vcombine.low %v1634, %v1666
    %v1679 = vcombine.high %v1634, %v1666
    %v1680 = vcombine.low %v1641, %v1673
    %v1681 = vcombine.high %v1641, %v1673
    %v1682 = vcombine.low %v1082, %v1090
    %v1683 = vcombine.high %v1082, %v1090
    %v1685 = vunpack.c.l.s4 1983009808
    %v1686 = vunpack.c.0.s8 %v1685
    %v1687 = vlaneseq
    %v1688 = vshrl.u32 %v1687, 7
    %v1689 = vsub.s32 %v1686, %v1688
    %v1690 = vrot.slane %v1682, %v1689
    %v1692 = vunpack.c.l.s4 1983009808
    %v1693 = vunpack.c.0.s8 %v1692
    %v1694 = vlaneseq
    %v1695 = vshrl.u32 %v1694, 7
    %v1696 = vsub.s32 %v1693, %v1695
    %v1697 = vrot.slane %v1683, %v1696
    %v1698 = vcombine.low %v1086, %v1094
    %v1699 = vcombine.high %v1086, %v1094
    %v1701 = vunpack.c.l.s4 1983009808
    %v1702 = vunpack.c.0.s8 %v1701
    %v1703 = vlaneseq
    %v1704 = vshrl.u32 %v1703, 7
    %v1705 = vsub.s32 %v1702, %v1704
    %v1706 = vrot.slane %v1698, %v1705
    %v1708 = vunpack.c.l.s4 1983009808
    %v1709 = vunpack.c.0.s8 %v1708
    %v1710 = vlaneseq
    %v1711 = vshrl.u32 %v1710, 7
    %v1712 = vsub.s32 %v1709, %v1711
    %v1713 = vrot.slane %v1699, %v1712
    %v1714 = vcombine.low %v1098, %v1106
    %v1715 = vcombine.high %v1098, %v1106
    %v1717 = vunpack.c.l.s4 1983009808
    %v1718 = vunpack.c.0.s8 %v1717
    %v1719 = vlaneseq
    %v1720 = vshrl.u32 %v1719, 7
    %v1721 = vsub.s32 %v1718, %v1720
    %v1722 = vrot.slane %v1714, %v1721
    %v1724 = vunpack.c.l.s4 1983009808
    %v1725 = vunpack.c.0.s8 %v1724
    %v1726 = vlaneseq
    %v1727 = vshrl.u32 %v1726, 7
    %v1728 = vsub.s32 %v1725, %v1727
    %v1729 = vrot.slane %v1715, %v1728
    %v1730 = vcombine.low %v1102, %v1110
    %v1731 = vcombine.high %v1102, %v1110
    %v1733 = vunpack.c.l.s4 1983009808
    %v1734 = vunpack.c.0.s8 %v1733
    %v1735 = vlaneseq
    %v1736 = vshrl.u32 %v1735, 7
    %v1737 = vsub.s32 %v1734, %v1736
    %v1738 = vrot.slane %v1730, %v1737
    %v1740 = vunpack.c.l.s4 1983009808
    %v1741 = vunpack.c.0.s8 %v1740
    %v1742 = vlaneseq
    %v1743 = vshrl.u32 %v1742, 7
    %v1744 = vsub.s32 %v1741, %v1743
    %v1745 = vrot.slane %v1731, %v1744
    %v1746 = vcombine.low %v1690, %v1706
    %v1747 = vcombine.high %v1690, %v1706
    %v1749 = vunpack.c.l.s4 1934713408
    %v1750 = vunpack.c.0.s8 %v1749
    %v1751 = vlaneseq
    %v1752 = vshrl.u32 %v1751, 7
    %v1753 = vsub.s32 %v1750, %v1752
    %v1754 = vrot.slane %v1746, %v1753
    %v1756 = vunpack.c.l.s4 1934713408
    %v1757 = vunpack.c.0.s8 %v1756
    %v1758 = vlaneseq
    %v1759 = vshrl.u32 %v1758, 7
    %v1760 = vsub.s32 %v1757, %v1759
    %v1761 = vrot.slane %v1747, %v1760
    %v1762 = vcombine.low %v1697, %v1713
    %v1763 = vcombine.high %v1697, %v1713
    %v1765 = vunpack.c.l.s4 1934713408
    %v1766 = vunpack.c.0.s8 %v1765
    %v1767 = vlaneseq
    %v1768 = vshrl.u32 %v1767, 7
    %v1769 = vsub.s32 %v1766, %v1768
    %v1770 = vrot.slane %v1762, %v1769
    %v1772 = vunpack.c.l.s4 1934713408
    %v1773 = vunpack.c.0.s8 %v1772
    %v1774 = vlaneseq
    %v1775 = vshrl.u32 %v1774, 7
    %v1776 = vsub.s32 %v1773, %v1775
    %v1777 = vrot.slane %v1763, %v1776
    %v1778 = vcombine.low %v1722, %v1738
    %v1779 = vcombine.high %v1722, %v1738
    %v1781 = vunpack.c.l.s4 1934713408
    %v1782 = vunpack.c.0.s8 %v1781
    %v1783 = vlaneseq
    %v1784 = vshrl.u32 %v1783, 7
    %v1785 = vsub.s32 %v1782, %v1784
    %v1786 = vrot.slane %v1778, %v1785
    %v1788 = vunpack.c.l.s4 1934713408
    %v1789 = vunpack.c.0.s8 %v1788
    %v1790 = vlaneseq
    %v1791 = vshrl.u32 %v1790, 7
    %v1792 = vsub.s32 %v1789, %v1791
    %v1793 = vrot.slane %v1779, %v1792
    %v1794 = vcombine.low %v1729, %v1745
    %v1795 = vcombine.high %v1729, %v1745
    %v1797 = vunpack.c.l.s4 1934713408
    %v1798 = vunpack.c.0.s8 %v1797
    %v1799 = vlaneseq
    %v1800 = vshrl.u32 %v1799, 7
    %v1801 = vsub.s32 %v1798, %v1800
    %v1802 = vrot.slane %v1794, %v1801
    %v1804 = vunpack.c.l.s4 1934713408
    %v1805 = vunpack.c.0.s8 %v1804
    %v1806 = vlaneseq
    %v1807 = vshrl.u32 %v1806, 7
    %v1808 = vsub.s32 %v1805, %v1807
    %v1809 = vrot.slane %v1795, %v1808
    %v1810 = vcombine.low %v1754, %v1786
    %v1811 = vcombine.high %v1754, %v1786
    %v1812 = vcombine.low %v1761, %v1793
    %v1813 = vcombine.high %v1761, %v1793
    %v1814 = vcombine.low %v1770, %v1802
    %v1815 = vcombine.high %v1770, %v1802
    %v1816 = vcombine.low %v1777, %v1809
    %v1817 = vcombine.high %v1777, %v1809
    %v1818 = vcombine.low %v1114, %v1122
    %v1819 = vcombine.high %v1114, %v1122
    %v1821 = vunpack.c.l.s4 1983009808
    %v1822 = vunpack.c.0.s8 %v1821
    %v1823 = vlaneseq
    %v1824 = vshrl.u32 %v1823, 7
    %v1825 = vsub.s32 %v1822, %v1824
    %v1826 = vrot.slane %v1818, %v1825
    %v1828 = vunpack.c.l.s4 1983009808
    %v1829 = vunpack.c.0.s8 %v1828
    %v1830 = vlaneseq
    %v1831 = vshrl.u32 %v1830, 7
    %v1832 = vsub.s32 %v1829, %v1831
    %v1833 = vrot.slane %v1819, %v1832
    %v1834 = vcombine.low %v1118, %v1126
    %v1835 = vcombine.high %v1118, %v1126
    %v1837 = vunpack.c.l.s4 1983009808
    %v1838 = vunpack.c.0.s8 %v1837
    %v1839 = vlaneseq
    %v1840 = vshrl.u32 %v1839, 7
    %v1841 = vsub.s32 %v1838, %v1840
    %v1842 = vrot.slane %v1834, %v1841
    %v1844 = vunpack.c.l.s4 1983009808
    %v1845 = vunpack.c.0.s8 %v1844
    %v1846 = vlaneseq
    %v1847 = vshrl.u32 %v1846, 7
    %v1848 = vsub.s32 %v1845, %v1847
    %v1849 = vrot.slane %v1835, %v1848
    %v1850 = vcombine.low %v1130, %v1138
    %v1851 = vcombine.high %v1130, %v1138
    %v1853 = vunpack.c.l.s4 1983009808
    %v1854 = vunpack.c.0.s8 %v1853
    %v1855 = vlaneseq
    %v1856 = vshrl.u32 %v1855, 7
    %v1857 = vsub.s32 %v1854, %v1856
    %v1858 = vrot.slane %v1850, %v1857
    %v1860 = vunpack.c.l.s4 1983009808
    %v1861 = vunpack.c.0.s8 %v1860
    %v1862 = vlaneseq
    %v1863 = vshrl.u32 %v1862, 7
    %v1864 = vsub.s32 %v1861, %v1863
    %v1865 = vrot.slane %v1851, %v1864
    %v1866 = vcombine.low %v1134, %v1142
    %v1867 = vcombine.high %v1134, %v1142
    %v1869 = vunpack.c.l.s4 1983009808
    %v1870 = vunpack.c.0.s8 %v1869
    %v1871 = vlaneseq
    %v1872 = vshrl.u32 %v1871, 7
    %v1873 = vsub.s32 %v1870, %v1872
    %v1874 = vrot.slane %v1866, %v1873
    %v1876 = vunpack.c.l.s4 1983009808
    %v1877 = vunpack.c.0.s8 %v1876
    %v1878 = vlaneseq
    %v1879 = vshrl.u32 %v1878, 7
    %v1880 = vsub.s32 %v1877, %v1879
    %v1881 = vrot.slane %v1867, %v1880
    %v1882 = vcombine.low %v1826, %v1842
    %v1883 = vcombine.high %v1826, %v1842
    %v1885 = vunpack.c.l.s4 1934713408
    %v1886 = vunpack.c.0.s8 %v1885
    %v1887 = vlaneseq
    %v1888 = vshrl.u32 %v1887, 7
    %v1889 = vsub.s32 %v1886, %v1888
    %v1890 = vrot.slane %v1882, %v1889
    %v1892 = vunpack.c.l.s4 1934713408
    %v1893 = vunpack.c.0.s8 %v1892
    %v1894 = vlaneseq
    %v1895 = vshrl.u32 %v1894, 7
    %v1896 = vsub.s32 %v1893, %v1895
    %v1897 = vrot.slane %v1883, %v1896
    %v1898 = vcombine.low %v1833, %v1849
    %v1899 = vcombine.high %v1833, %v1849
    %v1901 = vunpack.c.l.s4 1934713408
    %v1902 = vunpack.c.0.s8 %v1901
    %v1903 = vlaneseq
    %v1904 = vshrl.u32 %v1903, 7
    %v1905 = vsub.s32 %v1902, %v1904
    %v1906 = vrot.slane %v1898, %v1905
    %v1908 = vunpack.c.l.s4 1934713408
    %v1909 = vunpack.c.0.s8 %v1908
    %v1910 = vlaneseq
    %v1911 = vshrl.u32 %v1910, 7
    %v1912 = vsub.s32 %v1909, %v1911
    %v1913 = vrot.slane %v1899, %v1912
    %v1914 = vcombine.low %v1858, %v1874
    %v1915 = vcombine.high %v1858, %v1874
    %v1917 = vunpack.c.l.s4 1934713408
    %v1918 = vunpack.c.0.s8 %v1917
    %v1919 = vlaneseq
    %v1920 = vshrl.u32 %v1919, 7
    %v1921 = vsub.s32 %v1918, %v1920
    %v1922 = vrot.slane %v1914, %v1921
    %v1924 = vunpack.c.l.s4 1934713408
    %v1925 = vunpack.c.0.s8 %v1924
    %v1926 = vlaneseq
    %v1927 = vshrl.u32 %v1926, 7
    %v1928 = vsub.s32 %v1925, %v1927
    %v1929 = vrot.slane %v1915, %v1928
    %v1930 = vcombine.low %v1865, %v1881
    %v1931 = vcombine.high %v1865, %v1881
    %v1933 = vunpack.c.l.s4 1934713408
    %v1934 = vunpack.c.0.s8 %v1933
    %v1935 = vlaneseq
    %v1936 = vshrl.u32 %v1935, 7
    %v1937 = vsub.s32 %v1934, %v1936
    %v1938 = vrot.slane %v1930, %v1937
    %v1940 = vunpack.c.l.s4 1934713408
    %v1941 = vunpack.c.0.s8 %v1940
    %v1942 = vlaneseq
    %v1943 = vshrl.u32 %v1942, 7
    %v1944 = vsub.s32 %v1941, %v1943
    %v1945 = vrot.slane %v1931, %v1944
    %v1946 = vcombine.low %v1890, %v1922
    %v1947 = vcombine.high %v1890, %v1922
    %v1948 = vcombine.low %v1897, %v1929
    %v1949 = vcombine.high %v1897, %v1929
    %v1950 = vcombine.low %v1906, %v1938
    %v1951 = vcombine.high %v1906, %v1938
    %v1952 = vcombine.low %v1913, %v1945
    %v1953 = vcombine.high %v1913, %v1945
    %v1954 = vcombine.low %v1146, %v1154
    %v1955 = vcombine.high %v1146, %v1154
    %v1957 = vunpack.c.l.s4 1983009808
    %v1958 = vunpack.c.0.s8 %v1957
    %v1959 = vlaneseq
    %v1960 = vshrl.u32 %v1959, 7
    %v1961 = vsub.s32 %v1958, %v1960
    %v1962 = vrot.slane %v1954, %v1961
    %v1964 = vunpack.c.l.s4 1983009808
    %v1965 = vunpack.c.0.s8 %v1964
    %v1966 = vlaneseq
    %v1967 = vshrl.u32 %v1966, 7
    %v1968 = vsub.s32 %v1965, %v1967
    %v1969 = vrot.slane %v1955, %v1968
    %v1970 = vcombine.low %v1150, %v1158
    %v1971 = vcombine.high %v1150, %v1158
    %v1973 = vunpack.c.l.s4 1983009808
    %v1974 = vunpack.c.0.s8 %v1973
    %v1975 = vlaneseq
    %v1976 = vshrl.u32 %v1975, 7
    %v1977 = vsub.s32 %v1974, %v1976
    %v1978 = vrot.slane %v1970, %v1977
    %v1980 = vunpack.c.l.s4 1983009808
    %v1981 = vunpack.c.0.s8 %v1980
    %v1982 = vlaneseq
    %v1983 = vshrl.u32 %v1982, 7
    %v1984 = vsub.s32 %v1981, %v1983
    %v1985 = vrot.slane %v1971, %v1984
    %v1986 = vcombine.low %v1162, %v1170
    %v1987 = vcombine.high %v1162, %v1170
    %v1989 = vunpack.c.l.s4 1983009808
    %v1990 = vunpack.c.0.s8 %v1989
    %v1991 = vlaneseq
    %v1992 = vshrl.u32 %v1991, 7
    %v1993 = vsub.s32 %v1990, %v1992
    %v1994 = vrot.slane %v1986, %v1993
    %v1996 = vunpack.c.l.s4 1983009808
    %v1997 = vunpack.c.0.s8 %v1996
    %v1998 = vlaneseq
    %v1999 = vshrl.u32 %v1998, 7
    %v2000 = vsub.s32 %v1997, %v1999
    %v2001 = vrot.slane %v1987, %v2000
    %v2002 = vcombine.low %v1166, %v1174
    %v2003 = vcombine.high %v1166, %v1174
    %v2005 = vunpack.c.l.s4 1983009808
    %v2006 = vunpack.c.0.s8 %v2005
    %v2007 = vlaneseq
    %v2008 = vshrl.u32 %v2007, 7
    %v2009 = vsub.s32 %v2006, %v2008
    %v2010 = vrot.slane %v2002, %v2009
    %v2012 = vunpack.c.l.s4 1983009808
    %v2013 = vunpack.c.0.s8 %v2012
    %v2014 = vlaneseq
    %v2015 = vshrl.u32 %v2014, 7
    %v2016 = vsub.s32 %v2013, %v2015
    %v2017 = vrot.slane %v2003, %v2016
    %v2018 = vcombine.low %v1962, %v1978
    %v2019 = vcombine.high %v1962, %v1978
    %v2021 = vunpack.c.l.s4 1934713408
    %v2022 = vunpack.c.0.s8 %v2021
    %v2023 = vlaneseq
    %v2024 = vshrl.u32 %v2023, 7
    %v2025 = vsub.s32 %v2022, %v2024
    %v2026 = vrot.slane %v2018, %v2025
    %v2028 = vunpack.c.l.s4 1934713408
    %v2029 = vunpack.c.0.s8 %v2028
    %v2030 = vlaneseq
    %v2031 = vshrl.u32 %v2030, 7
    %v2032 = vsub.s32 %v2029, %v2031
    %v2033 = vrot.slane %v2019, %v2032
    %v2034 = vcombine.low %v1969, %v1985
    %v2035 = vcombine.high %v1969, %v1985
    %v2037 = vunpack.c.l.s4 1934713408
    %v2038 = vunpack.c.0.s8 %v2037
    %v2039 = vlaneseq
    %v2040 = vshrl.u32 %v2039, 7
    %v2041 = vsub.s32 %v2038, %v2040
    %v2042 = vrot.slane %v2034, %v2041
    %v2044 = vunpack.c.l.s4 1934713408
    %v2045 = vunpack.c.0.s8 %v2044
    %v2046 = vlaneseq
    %v2047 = vshrl.u32 %v2046, 7
    %v2048 = vsub.s32 %v2045, %v2047
    %v2049 = vrot.slane %v2035, %v2048
    %v2050 = vcombine.low %v1994, %v2010
    %v2051 = vcombine.high %v1994, %v2010
    %v2053 = vunpack.c.l.s4 1934713408
    %v2054 = vunpack.c.0.s8 %v2053
    %v2055 = vlaneseq
    %v2056 = vshrl.u32 %v2055, 7
    %v2057 = vsub.s32 %v2054, %v2056
    %v2058 = vrot.slane %v2050, %v2057
    %v2060 = vunpack.c.l.s4 1934713408
    %v2061 = vunpack.c.0.s8 %v2060
    %v2062 = vlaneseq
    %v2063 = vshrl.u32 %v2062, 7
    %v2064 = vsub.s32 %v2061, %v2063
    %v2065 = vrot.slane %v2051, %v2064
    %v2066 = vcombine.low %v2001, %v2017
    %v2067 = vcombine.high %v2001, %v2017
    %v2069 = vunpack.c.l.s4 1934713408
    %v2070 = vunpack.c.0.s8 %v2069
    %v2071 = vlaneseq
    %v2072 = vshrl.u32 %v2071, 7
    %v2073 = vsub.s32 %v2070, %v2072
    %v2074 = vrot.slane %v2066, %v2073
    %v2076 = vunpack.c.l.s4 1934713408
    %v2077 = vunpack.c.0.s8 %v2076
    %v2078 = vlaneseq
    %v2079 = vshrl.u32 %v2078, 7
    %v2080 = vsub.s32 %v2077, %v2079
    %v2081 = vrot.slane %v2067, %v2080
    %v2082 = vcombine.low %v2026, %v2058
    %v2083 = vcombine.high %v2026, %v2058
    %v2084 = vcombine.low %v2033, %v2065
    %v2085 = vcombine.high %v2033, %v2065
    %v2086 = vcombine.low %v2042, %v2074
    %v2087 = vcombine.high %v2042, %v2074
    %v2088 = vcombine.low %v2049, %v2081
    %v2089 = vcombine.high %v2049, %v2081
    %v2090 = vcombine.low %v1178, %v1186
    %v2091 = vcombine.high %v1178, %v1186
    %v2093 = vunpack.c.l.s4 1983009808
    %v2094 = vunpack.c.0.s8 %v2093
    %v2095 = vlaneseq
    %v2096 = vshrl.u32 %v2095, 7
    %v2097 = vsub.s32 %v2094, %v2096
    %v2098 = vrot.slane %v2090, %v2097
    %v2100 = vunpack.c.l.s4 1983009808
    %v2101 = vunpack.c.0.s8 %v2100
    %v2102 = vlaneseq
    %v2103 = vshrl.u32 %v2102, 7
    %v2104 = vsub.s32 %v2101, %v2103
    %v2105 = vrot.slane %v2091, %v2104
    %v2106 = vcombine.low %v1182, %v1190
    %v2107 = vcombine.high %v1182, %v1190
    %v2109 = vunpack.c.l.s4 1983009808
    %v2110 = vunpack.c.0.s8 %v2109
    %v2111 = vlaneseq
    %v2112 = vshrl.u32 %v2111, 7
    %v2113 = vsub.s32 %v2110, %v2112
    %v2114 = vrot.slane %v2106, %v2113
    %v2116 = vunpack.c.l.s4 1983009808
    %v2117 = vunpack.c.0.s8 %v2116
    %v2118 = vlaneseq
    %v2119 = vshrl.u32 %v2118, 7
    %v2120 = vsub.s32 %v2117, %v2119
    %v2121 = vrot.slane %v2107, %v2120
    %v2122 = vcombine.low %v1194, %v1202
    %v2123 = vcombine.high %v1194, %v1202
    %v2125 = vunpack.c.l.s4 1983009808
    %v2126 = vunpack.c.0.s8 %v2125
    %v2127 = vlaneseq
    %v2128 = vshrl.u32 %v2127, 7
    %v2129 = vsub.s32 %v2126, %v2128
    %v2130 = vrot.slane %v2122, %v2129
    %v2132 = vunpack.c.l.s4 1983009808
    %v2133 = vunpack.c.0.s8 %v2132
    %v2134 = vlaneseq
    %v2135 = vshrl.u32 %v2134, 7
    %v2136 = vsub.s32 %v2133, %v2135
    %v2137 = vrot.slane %v2123, %v2136
    %v2138 = vcombine.low %v1198, %v1206
    %v2139 = vcombine.high %v1198, %v1206
    %v2141 = vunpack.c.l.s4 1983009808
    %v2142 = vunpack.c.0.s8 %v2141
    %v2143 = vlaneseq
    %v2144 = vshrl.u32 %v2143, 7
    %v2145 = vsub.s32 %v2142, %v2144
    %v2146 = vrot.slane %v2138, %v2145
    %v2148 = vunpack.c.l.s4 1983009808
    %v2149 = vunpack.c.0.s8 %v2148
    %v2150 = vlaneseq
    %v2151 = vshrl.u32 %v2150, 7
    %v2152 = vsub.s32 %v2149, %v2151
    %v2153 = vrot.slane %v2139, %v2152
    %v2154 = vcombine.low %v2098, %v2114
    %v2155 = vcombine.high %v2098, %v2114
    %v2157 = vunpack.c.l.s4 1934713408
    %v2158 = vunpack.c.0.s8 %v2157
    %v2159 = vlaneseq
    %v2160 = vshrl.u32 %v2159, 7
    %v2161 = vsub.s32 %v2158, %v2160
    %v2162 = vrot.slane %v2154, %v2161
    %v2164 = vunpack.c.l.s4 1934713408
    %v2165 = vunpack.c.0.s8 %v2164
    %v2166 = vlaneseq
    %v2167 = vshrl.u32 %v2166, 7
    %v2168 = vsub.s32 %v2165, %v2167
    %v2169 = vrot.slane %v2155, %v2168
    %v2170 = vcombine.low %v2105, %v2121
    %v2171 = vcombine.high %v2105, %v2121
    %v2173 = vunpack.c.l.s4 1934713408
    %v2174 = vunpack.c.0.s8 %v2173
    %v2175 = vlaneseq
    %v2176 = vshrl.u32 %v2175, 7
    %v2177 = vsub.s32 %v2174, %v2176
    %v2178 = vrot.slane %v2170, %v2177
    %v2180 = vunpack.c.l.s4 1934713408
    %v2181 = vunpack.c.0.s8 %v2180
    %v2182 = vlaneseq
    %v2183 = vshrl.u32 %v2182, 7
    %v2184 = vsub.s32 %v2181, %v2183
    %v2185 = vrot.slane %v2171, %v2184
    %v2186 = vcombine.low %v2130, %v2146
    %v2187 = vcombine.high %v2130, %v2146
    %v2189 = vunpack.c.l.s4 1934713408
    %v2190 = vunpack.c.0.s8 %v2189
    %v2191 = vlaneseq
    %v2192 = vshrl.u32 %v2191, 7
    %v2193 = vsub.s32 %v2190, %v2192
    %v2194 = vrot.slane %v2186, %v2193
    %v2196 = vunpack.c.l.s4 1934713408
    %v2197 = vunpack.c.0.s8 %v2196
    %v2198 = vlaneseq
    %v2199 = vshrl.u32 %v2198, 7
    %v2200 = vsub.s32 %v2197, %v2199
    %v2201 = vrot.slane %v2187, %v2200
    %v2202 = vcombine.low %v2137, %v2153
    %v2203 = vcombine.high %v2137, %v2153
    %v2205 = vunpack.c.l.s4 1934713408
    %v2206 = vunpack.c.0.s8 %v2205
    %v2207 = vlaneseq
    %v2208 = vshrl.u32 %v2207, 7
    %v2209 = vsub.s32 %v2206, %v2208
    %v2210 = vrot.slane %v2202, %v2209
    %v2212 = vunpack.c.l.s4 1934713408
    %v2213 = vunpack.c.0.s8 %v2212
    %v2214 = vlaneseq
    %v2215 = vshrl.u32 %v2214, 7
    %v2216 = vsub.s32 %v2213, %v2215
    %v2217 = vrot.slane %v2203, %v2216
    %v2218 = vcombine.low %v2162, %v2194
    %v2219 = vcombine.high %v2162, %v2194
    %v2220 = vcombine.low %v2169, %v2201
    %v2221 = vcombine.high %v2169, %v2201
    %v2222 = vcombine.low %v2178, %v2210
    %v2223 = vcombine.high %v2178, %v2210
    %v2224 = vcombine.low %v2185, %v2217
    %v2225 = vcombine.high %v2185, %v2217
    %v2226 = vcombine.low %v1210, %v1218
    %v2227 = vcombine.high %v1210, %v1218
    %v2229 = vunpack.c.l.s4 1983009808
    %v2230 = vunpack.c.0.s8 %v2229
    %v2231 = vlaneseq
    %v2232 = vshrl.u32 %v2231, 7
    %v2233 = vsub.s32 %v2230, %v2232
    %v2234 = vrot.slane %v2226, %v2233
    %v2236 = vunpack.c.l.s4 1983009808
    %v2237 = vunpack.c.0.s8 %v2236
    %v2238 = vlaneseq
    %v2239 = vshrl.u32 %v2238, 7
    %v2240 = vsub.s32 %v2237, %v2239
    %v2241 = vrot.slane %v2227, %v2240
    %v2242 = vcombine.low %v1214, %v1222
    %v2243 = vcombine.high %v1214, %v1222
    %v2245 = vunpack.c.l.s4 1983009808
    %v2246 = vunpack.c.0.s8 %v2245
    %v2247 = vlaneseq
    %v2248 = vshrl.u32 %v2247, 7
    %v2249 = vsub.s32 %v2246, %v2248
    %v2250 = vrot.slane %v2242, %v2249
    %v2252 = vunpack.c.l.s4 1983009808
    %v2253 = vunpack.c.0.s8 %v2252
    %v2254 = vlaneseq
    %v2255 = vshrl.u32 %v2254, 7
    %v2256 = vsub.s32 %v2253, %v2255
    %v2257 = vrot.slane %v2243, %v2256
    %v2258 = vcombine.low %v1226, %v1234
    %v2259 = vcombine.high %v1226, %v1234
    %v2261 = vunpack.c.l.s4 1983009808
    %v2262 = vunpack.c.0.s8 %v2261
    %v2263 = vlaneseq
    %v2264 = vshrl.u32 %v2263, 7
    %v2265 = vsub.s32 %v2262, %v2264
    %v2266 = vrot.slane %v2258, %v2265
    %v2268 = vunpack.c.l.s4 1983009808
    %v2269 = vunpack.c.0.s8 %v2268
    %v2270 = vlaneseq
    %v2271 = vshrl.u32 %v2270, 7
    %v2272 = vsub.s32 %v2269, %v2271
    %v2273 = vrot.slane %v2259, %v2272
    %v2274 = vcombine.low %v1230, %v1238
    %v2275 = vcombine.high %v1230, %v1238
    %v2277 = vunpack.c.l.s4 1983009808
    %v2278 = vunpack.c.0.s8 %v2277
    %v2279 = vlaneseq
    %v2280 = vshrl.u32 %v2279, 7
    %v2281 = vsub.s32 %v2278, %v2280
    %v2282 = vrot.slane %v2274, %v2281
    %v2284 = vunpack.c.l.s4 1983009808
    %v2285 = vunpack.c.0.s8 %v2284
    %v2286 = vlaneseq
    %v2287 = vshrl.u32 %v2286, 7
    %v2288 = vsub.s32 %v2285, %v2287
    %v2289 = vrot.slane %v2275, %v2288
    %v2290 = vcombine.low %v2234, %v2250
    %v2291 = vcombine.high %v2234, %v2250
    %v2293 = vunpack.c.l.s4 1934713408
    %v2294 = vunpack.c.0.s8 %v2293
    %v2295 = vlaneseq
    %v2296 = vshrl.u32 %v2295, 7
    %v2297 = vsub.s32 %v2294, %v2296
    %v2298 = vrot.slane %v2290, %v2297
    %v2300 = vunpack.c.l.s4 1934713408
    %v2301 = vunpack.c.0.s8 %v2300
    %v2302 = vlaneseq
    %v2303 = vshrl.u32 %v2302, 7
    %v2304 = vsub.s32 %v2301, %v2303
    %v2305 = vrot.slane %v2291, %v2304
    %v2306 = vcombine.low %v2241, %v2257
    %v2307 = vcombine.high %v2241, %v2257
    %v2309 = vunpack.c.l.s4 1934713408
    %v2310 = vunpack.c.0.s8 %v2309
    %v2311 = vlaneseq
    %v2312 = vshrl.u32 %v2311, 7
    %v2313 = vsub.s32 %v2310, %v2312
    %v2314 = vrot.slane %v2306, %v2313
    %v2316 = vunpack.c.l.s4 1934713408
    %v2317 = vunpack.c.0.s8 %v2316
    %v2318 = vlaneseq
    %v2319 = vshrl.u32 %v2318, 7
    %v2320 = vsub.s32 %v2317, %v2319
    %v2321 = vrot.slane %v2307, %v2320
    %v2322 = vcombine.low %v2266, %v2282
    %v2323 = vcombine.high %v2266, %v2282
    %v2325 = vunpack.c.l.s4 1934713408
    %v2326 = vunpack.c.0.s8 %v2325
    %v2327 = vlaneseq
    %v2328 = vshrl.u32 %v2327, 7
    %v2329 = vsub.s32 %v2326, %v2328
    %v2330 = vrot.slane %v2322, %v2329
    %v2332 = vunpack.c.l.s4 1934713408
    %v2333 = vunpack.c.0.s8 %v2332
    %v2334 = vlaneseq
    %v2335 = vshrl.u32 %v2334, 7
    %v2336 = vsub.s32 %v2333, %v2335
    %v2337 = vrot.slane %v2323, %v2336
    %v2338 = vcombine.low %v2273, %v2289
    %v2339 = vcombine.high %v2273, %v2289
    %v2341 = vunpack.c.l.s4 1934713408
    %v2342 = vunpack.c.0.s8 %v2341
    %v2343 = vlaneseq
    %v2344 = vshrl.u32 %v2343, 7
    %v2345 = vsub.s32 %v2342, %v2344
    %v2346 = vrot.slane %v2338, %v2345
    %v2348 = vunpack.c.l.s4 1934713408
    %v2349 = vunpack.c.0.s8 %v2348
    %v2350 = vlaneseq
    %v2351 = vshrl.u32 %v2350, 7
    %v2352 = vsub.s32 %v2349, %v2351
    %v2353 = vrot.slane %v2339, %v2352
    %v2354 = vcombine.low %v2298, %v2330
    %v2355 = vcombine.high %v2298, %v2330
    %v2356 = vcombine.low %v2305, %v2337
    %v2357 = vcombine.high %v2305, %v2337
    %v2358 = vcombine.low %v2314, %v2346
    %v2359 = vcombine.high %v2314, %v2346
    %v2360 = vcombine.low %v2321, %v2353
    %v2361 = vcombine.high %v2321, %v2353
    %v2362 = vcombine.low %v1242, %v1250
    %v2363 = vcombine.high %v1242, %v1250
    %v2365 = vunpack.c.l.s4 1983009808
    %v2366 = vunpack.c.0.s8 %v2365
    %v2367 = vlaneseq
    %v2368 = vshrl.u32 %v2367, 7
    %v2369 = vsub.s32 %v2366, %v2368
    %v2370 = vrot.slane %v2362, %v2369
    %v2372 = vunpack.c.l.s4 1983009808
    %v2373 = vunpack.c.0.s8 %v2372
    %v2374 = vlaneseq
    %v2375 = vshrl.u32 %v2374, 7
    %v2376 = vsub.s32 %v2373, %v2375
    %v2377 = vrot.slane %v2363, %v2376
    %v2378 = vcombine.low %v1246, %v1254
    %v2379 = vcombine.high %v1246, %v1254
    %v2381 = vunpack.c.l.s4 1983009808
    %v2382 = vunpack.c.0.s8 %v2381
    %v2383 = vlaneseq
    %v2384 = vshrl.u32 %v2383, 7
    %v2385 = vsub.s32 %v2382, %v2384
    %v2386 = vrot.slane %v2378, %v2385
    %v2388 = vunpack.c.l.s4 1983009808
    %v2389 = vunpack.c.0.s8 %v2388
    %v2390 = vlaneseq
    %v2391 = vshrl.u32 %v2390, 7
    %v2392 = vsub.s32 %v2389, %v2391
    %v2393 = vrot.slane %v2379, %v2392
    %v2394 = vcombine.low %v1258, %v1266
    %v2395 = vcombine.high %v1258, %v1266
    %v2397 = vunpack.c.l.s4 1983009808
    %v2398 = vunpack.c.0.s8 %v2397
    %v2399 = vlaneseq
    %v2400 = vshrl.u32 %v2399, 7
    %v2401 = vsub.s32 %v2398, %v2400
    %v2402 = vrot.slane %v2394, %v2401
    %v2404 = vunpack.c.l.s4 1983009808
    %v2405 = vunpack.c.0.s8 %v2404
    %v2406 = vlaneseq
    %v2407 = vshrl.u32 %v2406, 7
    %v2408 = vsub.s32 %v2405, %v2407
    %v2409 = vrot.slane %v2395, %v2408
    %v2410 = vcombine.low %v1262, %v1270
    %v2411 = vcombine.high %v1262, %v1270
    %v2413 = vunpack.c.l.s4 1983009808
    %v2414 = vunpack.c.0.s8 %v2413
    %v2415 = vlaneseq
    %v2416 = vshrl.u32 %v2415, 7
    %v2417 = vsub.s32 %v2414, %v2416
    %v2418 = vrot.slane %v2410, %v2417
    %v2420 = vunpack.c.l.s4 1983009808
    %v2421 = vunpack.c.0.s8 %v2420
    %v2422 = vlaneseq
    %v2423 = vshrl.u32 %v2422, 7
    %v2424 = vsub.s32 %v2421, %v2423
    %v2425 = vrot.slane %v2411, %v2424
    %v2426 = vcombine.low %v2370, %v2386
    %v2427 = vcombine.high %v2370, %v2386
    %v2429 = vunpack.c.l.s4 1934713408
    %v2430 = vunpack.c.0.s8 %v2429
    %v2431 = vlaneseq
    %v2432 = vshrl.u32 %v2431, 7
    %v2433 = vsub.s32 %v2430, %v2432
    %v2434 = vrot.slane %v2426, %v2433
    %v2436 = vunpack.c.l.s4 1934713408
    %v2437 = vunpack.c.0.s8 %v2436
    %v2438 = vlaneseq
    %v2439 = vshrl.u32 %v2438, 7
    %v2440 = vsub.s32 %v2437, %v2439
    %v2441 = vrot.slane %v2427, %v2440
    %v2442 = vcombine.low %v2377, %v2393
    %v2443 = vcombine.high %v2377, %v2393
    %v2445 = vunpack.c.l.s4 1934713408
    %v2446 = vunpack.c.0.s8 %v2445
    %v2447 = vlaneseq
    %v2448 = vshrl.u32 %v2447, 7
    %v2449 = vsub.s32 %v2446, %v2448
    %v2450 = vrot.slane %v2442, %v2449
    %v2452 = vunpack.c.l.s4 1934713408
    %v2453 = vunpack.c.0.s8 %v2452
    %v2454 = vlaneseq
    %v2455 = vshrl.u32 %v2454, 7
    %v2456 = vsub.s32 %v2453, %v2455
    %v2457 = vrot.slane %v2443, %v2456
    %v2458 = vcombine.low %v2402, %v2418
    %v2459 = vcombine.high %v2402, %v2418
    %v2461 = vunpack.c.l.s4 1934713408
    %v2462 = vunpack.c.0.s8 %v2461
    %v2463 = vlaneseq
    %v2464 = vshrl.u32 %v2463, 7
    %v2465 = vsub.s32 %v2462, %v2464
    %v2466 = vrot.slane %v2458, %v2465
    %v2468 = vunpack.c.l.s4 1934713408
    %v2469 = vunpack.c.0.s8 %v2468
    %v2470 = vlaneseq
    %v2471 = vshrl.u32 %v2470, 7
    %v2472 = vsub.s32 %v2469, %v2471
    %v2473 = vrot.slane %v2459, %v2472
    %v2474 = vcombine.low %v2409, %v2425
    %v2475 = vcombine.high %v2409, %v2425
    %v2477 = vunpack.c.l.s4 1934713408
    %v2478 = vunpack.c.0.s8 %v2477
    %v2479 = vlaneseq
    %v2480 = vshrl.u32 %v2479, 7
    %v2481 = vsub.s32 %v2478, %v2480
    %v2482 = vrot.slane %v2474, %v2481
    %v2484 = vunpack.c.l.s4 1934713408
    %v2485 = vunpack.c.0.s8 %v2484
    %v2486 = vlaneseq
    %v2487 = vshrl.u32 %v2486, 7
    %v2488 = vsub.s32 %v2485, %v2487
    %v2489 = vrot.slane %v2475, %v2488
    %v2490 = vcombine.low %v2434, %v2466
    %v2491 = vcombine.high %v2434, %v2466
    %v2492 = vcombine.low %v2441, %v2473
    %v2493 = vcombine.high %v2441, %v2473
    %v2494 = vcombine.low %v2450, %v2482
    %v2495 = vcombine.high %v2450, %v2482
    %v2496 = vcombine.low %v2457, %v2489
    %v2497 = vcombine.high %v2457, %v2489
    %v2498 = vcombine.low %v987, %v995
    %v2499 = vcombine.high %v987, %v995
    %v2501 = vunpack.c.l.s4 1983009808
    %v2502 = vunpack.c.0.s8 %v2501
    %v2503 = vlaneseq
    %v2504 = vshrl.u32 %v2503, 7
    %v2505 = vsub.s32 %v2502, %v2504
    %v2506 = vrot.slane %v2498, %v2505
    %v2508 = vunpack.c.l.s4 1983009808
    %v2509 = vunpack.c.0.s8 %v2508
    %v2510 = vlaneseq
    %v2511 = vshrl.u32 %v2510, 7
    %v2512 = vsub.s32 %v2509, %v2511
    %v2513 = vrot.slane %v2499, %v2512
    %v2514 = vcombine.low %v991, %v999
    %v2515 = vcombine.high %v991, %v999
    %v2517 = vunpack.c.l.s4 1983009808
    %v2518 = vunpack.c.0.s8 %v2517
    %v2519 = vlaneseq
    %v2520 = vshrl.u32 %v2519, 7
    %v2521 = vsub.s32 %v2518, %v2520
    %v2522 = vrot.slane %v2514, %v2521
    %v2524 = vunpack.c.l.s4 1983009808
    %v2525 = vunpack.c.0.s8 %v2524
    %v2526 = vlaneseq
    %v2527 = vshrl.u32 %v2526, 7
    %v2528 = vsub.s32 %v2525, %v2527
    %v2529 = vrot.slane %v2515, %v2528
    %v2530 = vcombine.low %v1003, %v1011
    %v2531 = vcombine.high %v1003, %v1011
    %v2533 = vunpack.c.l.s4 1983009808
    %v2534 = vunpack.c.0.s8 %v2533
    %v2535 = vlaneseq
    %v2536 = vshrl.u32 %v2535, 7
    %v2537 = vsub.s32 %v2534, %v2536
    %v2538 = vrot.slane %v2530, %v2537
    %v2540 = vunpack.c.l.s4 1983009808
    %v2541 = vunpack.c.0.s8 %v2540
    %v2542 = vlaneseq
    %v2543 = vshrl.u32 %v2542, 7
    %v2544 = vsub.s32 %v2541, %v2543
    %v2545 = vrot.slane %v2531, %v2544
    %v2546 = vcombine.low %v1007, %v1015
    %v2547 = vcombine.high %v1007, %v1015
    %v2549 = vunpack.c.l.s4 1983009808
    %v2550 = vunpack.c.0.s8 %v2549
    %v2551 = vlaneseq
    %v2552 = vshrl.u32 %v2551, 7
    %v2553 = vsub.s32 %v2550, %v2552
    %v2554 = vrot.slane %v2546, %v2553
    %v2556 = vunpack.c.l.s4 1983009808
    %v2557 = vunpack.c.0.s8 %v2556
    %v2558 = vlaneseq
    %v2559 = vshrl.u32 %v2558, 7
    %v2560 = vsub.s32 %v2557, %v2559
    %v2561 = vrot.slane %v2547, %v2560
    %v2562 = vcombine.low %v2506, %v2522
    %v2563 = vcombine.high %v2506, %v2522
    %v2565 = vunpack.c.l.s4 1934713408
    %v2566 = vunpack.c.0.s8 %v2565
    %v2567 = vlaneseq
    %v2568 = vshrl.u32 %v2567, 7
    %v2569 = vsub.s32 %v2566, %v2568
    %v2570 = vrot.slane %v2562, %v2569
    %v2572 = vunpack.c.l.s4 1934713408
    %v2573 = vunpack.c.0.s8 %v2572
    %v2574 = vlaneseq
    %v2575 = vshrl.u32 %v2574, 7
    %v2576 = vsub.s32 %v2573, %v2575
    %v2577 = vrot.slane %v2563, %v2576
    %v2578 = vcombine.low %v2513, %v2529
    %v2579 = vcombine.high %v2513, %v2529
    %v2581 = vunpack.c.l.s4 1934713408
    %v2582 = vunpack.c.0.s8 %v2581
    %v2583 = vlaneseq
    %v2584 = vshrl.u32 %v2583, 7
    %v2585 = vsub.s32 %v2582, %v2584
    %v2586 = vrot.slane %v2578, %v2585
    %v2588 = vunpack.c.l.s4 1934713408
    %v2589 = vunpack.c.0.s8 %v2588
    %v2590 = vlaneseq
    %v2591 = vshrl.u32 %v2590, 7
    %v2592 = vsub.s32 %v2589, %v2591
    %v2593 = vrot.slane %v2579, %v2592
    %v2594 = vcombine.low %v2538, %v2554
    %v2595 = vcombine.high %v2538, %v2554
    %v2597 = vunpack.c.l.s4 1934713408
    %v2598 = vunpack.c.0.s8 %v2597
    %v2599 = vlaneseq
    %v2600 = vshrl.u32 %v2599, 7
    %v2601 = vsub.s32 %v2598, %v2600
    %v2602 = vrot.slane %v2594, %v2601
    %v2604 = vunpack.c.l.s4 1934713408
    %v2605 = vunpack.c.0.s8 %v2604
    %v2606 = vlaneseq
    %v2607 = vshrl.u32 %v2606, 7
    %v2608 = vsub.s32 %v2605, %v2607
    %v2609 = vrot.slane %v2595, %v2608
    %v2610 = vcombine.low %v2545, %v2561
    %v2611 = vcombine.high %v2545, %v2561
    %v2613 = vunpack.c.l.s4 1934713408
    %v2614 = vunpack.c.0.s8 %v2613
    %v2615 = vlaneseq
    %v2616 = vshrl.u32 %v2615, 7
    %v2617 = vsub.s32 %v2614, %v2616
    %v2618 = vrot.slane %v2610, %v2617
    %v2620 = vunpack.c.l.s4 1934713408
    %v2621 = vunpack.c.0.s8 %v2620
    %v2622 = vlaneseq
    %v2623 = vshrl.u32 %v2622, 7
    %v2624 = vsub.s32 %v2621, %v2623
    %v2625 = vrot.slane %v2611, %v2624
    %v2626 = vcombine.low %v2570, %v2602
    %v2627 = vcombine.high %v2570, %v2602
    %v2628 = vcombine.low %v2577, %v2609
    %v2629 = vcombine.high %v2577, %v2609
    %v2630 = vcombine.low %v2586, %v2618
    %v2631 = vcombine.high %v2586, %v2618
    %v2632 = vcombine.low %v2593, %v2625
    %v2633 = vcombine.high %v2593, %v2625
    %v2634 = vcombine.low %v1019, %v1027
    %v2635 = vcombine.high %v1019, %v1027
    %v2637 = vunpack.c.l.s4 1983009808
    %v2638 = vunpack.c.0.s8 %v2637
    %v2639 = vlaneseq
    %v2640 = vshrl.u32 %v2639, 7
    %v2641 = vsub.s32 %v2638, %v2640
    %v2642 = vrot.slane %v2634, %v2641
    %v2644 = vunpack.c.l.s4 1983009808
    %v2645 = vunpack.c.0.s8 %v2644
    %v2646 = vlaneseq
    %v2647 = vshrl.u32 %v2646, 7
    %v2648 = vsub.s32 %v2645, %v2647
    %v2649 = vrot.slane %v2635, %v2648
    %v2650 = vcombine.low %v1023, %v1031
    %v2651 = vcombine.high %v1023, %v1031
    %v2653 = vunpack.c.l.s4 1983009808
    %v2654 = vunpack.c.0.s8 %v2653
    %v2655 = vlaneseq
    %v2656 = vshrl.u32 %v2655, 7
    %v2657 = vsub.s32 %v2654, %v2656
    %v2658 = vrot.slane %v2650, %v2657
    %v2660 = vunpack.c.l.s4 1983009808
    %v2661 = vunpack.c.0.s8 %v2660
    %v2662 = vlaneseq
    %v2663 = vshrl.u32 %v2662, 7
    %v2664 = vsub.s32 %v2661, %v2663
    %v2665 = vrot.slane %v2651, %v2664
    %v2666 = vcombine.low %v1035, %v1043
    %v2667 = vcombine.high %v1035, %v1043
    %v2669 = vunpack.c.l.s4 1983009808
    %v2670 = vunpack.c.0.s8 %v2669
    %v2671 = vlaneseq
    %v2672 = vshrl.u32 %v2671, 7
    %v2673 = vsub.s32 %v2670, %v2672
    %v2674 = vrot.slane %v2666, %v2673
    %v2676 = vunpack.c.l.s4 1983009808
    %v2677 = vunpack.c.0.s8 %v2676
    %v2678 = vlaneseq
    %v2679 = vshrl.u32 %v2678, 7
    %v2680 = vsub.s32 %v2677, %v2679
    %v2681 = vrot.slane %v2667, %v2680
    %v2682 = vcombine.low %v1039, %v1047
    %v2683 = vcombine.high %v1039, %v1047
    %v2685 = vunpack.c.l.s4 1983009808
    %v2686 = vunpack.c.0.s8 %v2685
    %v2687 = vlaneseq
    %v2688 = vshrl.u32 %v2687, 7
    %v2689 = vsub.s32 %v2686, %v2688
    %v2690 = vrot.slane %v2682, %v2689
    %v2692 = vunpack.c.l.s4 1983009808
    %v2693 = vunpack.c.0.s8 %v2692
    %v2694 = vlaneseq
    %v2695 = vshrl.u32 %v2694, 7
    %v2696 = vsub.s32 %v2693, %v2695
    %v2697 = vrot.slane %v2683, %v2696
    %v2698 = vcombine.low %v2642, %v2658
    %v2699 = vcombine.high %v2642, %v2658
    %v2701 = vunpack.c.l.s4 1934713408
    %v2702 = vunpack.c.0.s8 %v2701
    %v2703 = vlaneseq
    %v2704 = vshrl.u32 %v2703, 7
    %v2705 = vsub.s32 %v2702, %v2704
    %v2706 = vrot.slane %v2698, %v2705
    %v2708 = vunpack.c.l.s4 1934713408
    %v2709 = vunpack.c.0.s8 %v2708
    %v2710 = vlaneseq
    %v2711 = vshrl.u32 %v2710, 7
    %v2712 = vsub.s32 %v2709, %v2711
    %v2713 = vrot.slane %v2699, %v2712
    %v2714 = vcombine.low %v2649, %v2665
    %v2715 = vcombine.high %v2649, %v2665
    %v2717 = vunpack.c.l.s4 1934713408
    %v2718 = vunpack.c.0.s8 %v2717
    %v2719 = vlaneseq
    %v2720 = vshrl.u32 %v2719, 7
    %v2721 = vsub.s32 %v2718, %v2720
    %v2722 = vrot.slane %v2714, %v2721
    %v2724 = vunpack.c.l.s4 1934713408
    %v2725 = vunpack.c.0.s8 %v2724
    %v2726 = vlaneseq
    %v2727 = vshrl.u32 %v2726, 7
    %v2728 = vsub.s32 %v2725, %v2727
    %v2729 = vrot.slane %v2715, %v2728
    %v2730 = vcombine.low %v2674, %v2690
    %v2731 = vcombine.high %v2674, %v2690
    %v2733 = vunpack.c.l.s4 1934713408
    %v2734 = vunpack.c.0.s8 %v2733
    %v2735 = vlaneseq
    %v2736 = vshrl.u32 %v2735, 7
    %v2737 = vsub.s32 %v2734, %v2736
    %v2738 = vrot.slane %v2730, %v2737
    %v2740 = vunpack.c.l.s4 1934713408
    %v2741 = vunpack.c.0.s8 %v2740
    %v2742 = vlaneseq
    %v2743 = vshrl.u32 %v2742, 7
    %v2744 = vsub.s32 %v2741, %v2743
    %v2745 = vrot.slane %v2731, %v2744
    %v2746 = vcombine.low %v2681, %v2697
    %v2747 = vcombine.high %v2681, %v2697
    %v2749 = vunpack.c.l.s4 1934713408
    %v2750 = vunpack.c.0.s8 %v2749
    %v2751 = vlaneseq
    %v2752 = vshrl.u32 %v2751, 7
    %v2753 = vsub.s32 %v2750, %v2752
    %v2754 = vrot.slane %v2746, %v2753
    %v2756 = vunpack.c.l.s4 1934713408
    %v2757 = vunpack.c.0.s8 %v2756
    %v2758 = vlaneseq
    %v2759 = vshrl.u32 %v2758, 7
    %v2760 = vsub.s32 %v2757, %v2759
    %v2761 = vrot.slane %v2747, %v2760
    %v2762 = vcombine.low %v2706, %v2738
    %v2763 = vcombine.high %v2706, %v2738
    %v2764 = vcombine.low %v2713, %v2745
    %v2765 = vcombine.high %v2713, %v2745
    %v2766 = vcombine.low %v2722, %v2754
    %v2767 = vcombine.high %v2722, %v2754
    %v2768 = vcombine.low %v2729, %v2761
    %v2769 = vcombine.high %v2729, %v2761
    %v2770 = vcombine.low %v1051, %v1059
    %v2771 = vcombine.high %v1051, %v1059
    %v2773 = vunpack.c.l.s4 1983009808
    %v2774 = vunpack.c.0.s8 %v2773
    %v2775 = vlaneseq
    %v2776 = vshrl.u32 %v2775, 7
    %v2777 = vsub.s32 %v2774, %v2776
    %v2778 = vrot.slane %v2770, %v2777
    %v2780 = vunpack.c.l.s4 1983009808
    %v2781 = vunpack.c.0.s8 %v2780
    %v2782 = vlaneseq
    %v2783 = vshrl.u32 %v2782, 7
    %v2784 = vsub.s32 %v2781, %v2783
    %v2785 = vrot.slane %v2771, %v2784
    %v2786 = vcombine.low %v1055, %v1063
    %v2787 = vcombine.high %v1055, %v1063
    %v2789 = vunpack.c.l.s4 1983009808
    %v2790 = vunpack.c.0.s8 %v2789
    %v2791 = vlaneseq
    %v2792 = vshrl.u32 %v2791, 7
    %v2793 = vsub.s32 %v2790, %v2792
    %v2794 = vrot.slane %v2786, %v2793
    %v2796 = vunpack.c.l.s4 1983009808
    %v2797 = vunpack.c.0.s8 %v2796
    %v2798 = vlaneseq
    %v2799 = vshrl.u32 %v2798, 7
    %v2800 = vsub.s32 %v2797, %v2799
    %v2801 = vrot.slane %v2787, %v2800
    %v2802 = vcombine.low %v1067, %v1075
    %v2803 = vcombine.high %v1067, %v1075
    %v2805 = vunpack.c.l.s4 1983009808
    %v2806 = vunpack.c.0.s8 %v2805
    %v2807 = vlaneseq
    %v2808 = vshrl.u32 %v2807, 7
    %v2809 = vsub.s32 %v2806, %v2808
    %v2810 = vrot.slane %v2802, %v2809
    %v2812 = vunpack.c.l.s4 1983009808
    %v2813 = vunpack.c.0.s8 %v2812
    %v2814 = vlaneseq
    %v2815 = vshrl.u32 %v2814, 7
    %v2816 = vsub.s32 %v2813, %v2815
    %v2817 = vrot.slane %v2803, %v2816
    %v2818 = vcombine.low %v1071, %v1079
    %v2819 = vcombine.high %v1071, %v1079
    %v2821 = vunpack.c.l.s4 1983009808
    %v2822 = vunpack.c.0.s8 %v2821
    %v2823 = vlaneseq
    %v2824 = vshrl.u32 %v2823, 7
    %v2825 = vsub.s32 %v2822, %v2824
    %v2826 = vrot.slane %v2818, %v2825
    %v2828 = vunpack.c.l.s4 1983009808
    %v2829 = vunpack.c.0.s8 %v2828
    %v2830 = vlaneseq
    %v2831 = vshrl.u32 %v2830, 7
    %v2832 = vsub.s32 %v2829, %v2831
    %v2833 = vrot.slane %v2819, %v2832
    %v2834 = vcombine.low %v2778, %v2794
    %v2835 = vcombine.high %v2778, %v2794
    %v2837 = vunpack.c.l.s4 1934713408
    %v2838 = vunpack.c.0.s8 %v2837
    %v2839 = vlaneseq
    %v2840 = vshrl.u32 %v2839, 7
    %v2841 = vsub.s32 %v2838, %v2840
    %v2842 = vrot.slane %v2834, %v2841
    %v2844 = vunpack.c.l.s4 1934713408
    %v2845 = vunpack.c.0.s8 %v2844
    %v2846 = vlaneseq
    %v2847 = vshrl.u32 %v2846, 7
    %v2848 = vsub.s32 %v2845, %v2847
    %v2849 = vrot.slane %v2835, %v2848
    %v2850 = vcombine.low %v2785, %v2801
    %v2851 = vcombine.high %v2785, %v2801
    %v2853 = vunpack.c.l.s4 1934713408
    %v2854 = vunpack.c.0.s8 %v2853
    %v2855 = vlaneseq
    %v2856 = vshrl.u32 %v2855, 7
    %v2857 = vsub.s32 %v2854, %v2856
    %v2858 = vrot.slane %v2850, %v2857
    %v2860 = vunpack.c.l.s4 1934713408
    %v2861 = vunpack.c.0.s8 %v2860
    %v2862 = vlaneseq
    %v2863 = vshrl.u32 %v2862, 7
    %v2864 = vsub.s32 %v2861, %v2863
    %v2865 = vrot.slane %v2851, %v2864
    %v2866 = vcombine.low %v2810, %v2826
    %v2867 = vcombine.high %v2810, %v2826
    %v2869 = vunpack.c.l.s4 1934713408
    %v2870 = vunpack.c.0.s8 %v2869
    %v2871 = vlaneseq
    %v2872 = vshrl.u32 %v2871, 7
    %v2873 = vsub.s32 %v2870, %v2872
    %v2874 = vrot.slane %v2866, %v2873
    %v2876 = vunpack.c.l.s4 1934713408
    %v2877 = vunpack.c.0.s8 %v2876
    %v2878 = vlaneseq
    %v2879 = vshrl.u32 %v2878, 7
    %v2880 = vsub.s32 %v2877, %v2879
    %v2881 = vrot.slane %v2867, %v2880
    %v2882 = vcombine.low %v2817, %v2833
    %v2883 = vcombine.high %v2817, %v2833
    %v2885 = vunpack.c.l.s4 1934713408
    %v2886 = vunpack.c.0.s8 %v2885
    %v2887 = vlaneseq
    %v2888 = vshrl.u32 %v2887, 7
    %v2889 = vsub.s32 %v2886, %v2888
    %v2890 = vrot.slane %v2882, %v2889
    %v2892 = vunpack.c.l.s4 1934713408
    %v2893 = vunpack.c.0.s8 %v2892
    %v2894 = vlaneseq
    %v2895 = vshrl.u32 %v2894, 7
    %v2896 = vsub.s32 %v2893, %v2895
    %v2897 = vrot.slane %v2883, %v2896
    %v2898 = vcombine.low %v2842, %v2874
    %v2899 = vcombine.high %v2842, %v2874
    %v2900 = vcombine.low %v2849, %v2881
    %v2901 = vcombine.high %v2849, %v2881
    %v2902 = vcombine.low %v2858, %v2890
    %v2903 = vcombine.high %v2858, %v2890
    %v2904 = vcombine.low %v2865, %v2897
    %v2905 = vcombine.high %v2865, %v2897
    %v2906 = vcombine.low %v1083, %v1091
    %v2907 = vcombine.high %v1083, %v1091
    %v2909 = vunpack.c.l.s4 1983009808
    %v2910 = vunpack.c.0.s8 %v2909
    %v2911 = vlaneseq
    %v2912 = vshrl.u32 %v2911, 7
    %v2913 = vsub.s32 %v2910, %v2912
    %v2914 = vrot.slane %v2906, %v2913
    %v2916 = vunpack.c.l.s4 1983009808
    %v2917 = vunpack.c.0.s8 %v2916
    %v2918 = vlaneseq
    %v2919 = vshrl.u32 %v2918, 7
    %v2920 = vsub.s32 %v2917, %v2919
    %v2921 = vrot.slane %v2907, %v2920
    %v2922 = vcombine.low %v1087, %v1095
    %v2923 = vcombine.high %v1087, %v1095
    %v2925 = vunpack.c.l.s4 1983009808
    %v2926 = vunpack.c.0.s8 %v2925
    %v2927 = vlaneseq
    %v2928 = vshrl.u32 %v2927, 7
    %v2929 = vsub.s32 %v2926, %v2928
    %v2930 = vrot.slane %v2922, %v2929
    %v2932 = vunpack.c.l.s4 1983009808
    %v2933 = vunpack.c.0.s8 %v2932
    %v2934 = vlaneseq
    %v2935 = vshrl.u32 %v2934, 7
    %v2936 = vsub.s32 %v2933, %v2935
    %v2937 = vrot.slane %v2923, %v2936
    %v2938 = vcombine.low %v1099, %v1107
    %v2939 = vcombine.high %v1099, %v1107
    %v2941 = vunpack.c.l.s4 1983009808
    %v2942 = vunpack.c.0.s8 %v2941
    %v2943 = vlaneseq
    %v2944 = vshrl.u32 %v2943, 7
    %v2945 = vsub.s32 %v2942, %v2944
    %v2946 = vrot.slane %v2938, %v2945
    %v2948 = vunpack.c.l.s4 1983009808
    %v2949 = vunpack.c.0.s8 %v2948
    %v2950 = vlaneseq
    %v2951 = vshrl.u32 %v2950, 7
    %v2952 = vsub.s32 %v2949, %v2951
    %v2953 = vrot.slane %v2939, %v2952
    %v2954 = vcombine.low %v1103, %v1111
    %v2955 = vcombine.high %v1103, %v1111
    %v2957 = vunpack.c.l.s4 1983009808
    %v2958 = vunpack.c.0.s8 %v2957
    %v2959 = vlaneseq
    %v2960 = vshrl.u32 %v2959, 7
    %v2961 = vsub.s32 %v2958, %v2960
    %v2962 = vrot.slane %v2954, %v2961
    %v2964 = vunpack.c.l.s4 1983009808
    %v2965 = vunpack.c.0.s8 %v2964
    %v2966 = vlaneseq
    %v2967 = vshrl.u32 %v2966, 7
    %v2968 = vsub.s32 %v2965, %v2967
    %v2969 = vrot.slane %v2955, %v2968
    %v2970 = vcombine.low %v2914, %v2930
    %v2971 = vcombine.high %v2914, %v2930
    %v2973 = vunpack.c.l.s4 1934713408
    %v2974 = vunpack.c.0.s8 %v2973
    %v2975 = vlaneseq
    %v2976 = vshrl.u32 %v2975, 7
    %v2977 = vsub.s32 %v2974, %v2976
    %v2978 = vrot.slane %v2970, %v2977
    %v2980 = vunpack.c.l.s4 1934713408
    %v2981 = vunpack.c.0.s8 %v2980
    %v2982 = vlaneseq
    %v2983 = vshrl.u32 %v2982, 7
    %v2984 = vsub.s32 %v2981, %v2983
    %v2985 = vrot.slane %v2971, %v2984
    %v2986 = vcombine.low %v2921, %v2937
    %v2987 = vcombine.high %v2921, %v2937
    %v2989 = vunpack.c.l.s4 1934713408
    %v2990 = vunpack.c.0.s8 %v2989
    %v2991 = vlaneseq
    %v2992 = vshrl.u32 %v2991, 7
    %v2993 = vsub.s32 %v2990, %v2992
    %v2994 = vrot.slane %v2986, %v2993
    %v2996 = vunpack.c.l.s4 1934713408
    %v2997 = vunpack.c.0.s8 %v2996
    %v2998 = vlaneseq
    %v2999 = vshrl.u32 %v2998, 7
    %v3000 = vsub.s32 %v2997, %v2999
    %v3001 = vrot.slane %v2987, %v3000
    %v3002 = vcombine.low %v2946, %v2962
    %v3003 = vcombine.high %v2946, %v2962
    %v3005 = vunpack.c.l.s4 1934713408
    %v3006 = vunpack.c.0.s8 %v3005
    %v3007 = vlaneseq
    %v3008 = vshrl.u32 %v3007, 7
    %v3009 = vsub.s32 %v3006, %v3008
    %v3010 = vrot.slane %v3002, %v3009
    %v3012 = vunpack.c.l.s4 1934713408
    %v3013 = vunpack.c.0.s8 %v3012
    %v3014 = vlaneseq
    %v3015 = vshrl.u32 %v3014, 7
    %v3016 = vsub.s32 %v3013, %v3015
    %v3017 = vrot.slane %v3003, %v3016
    %v3018 = vcombine.low %v2953, %v2969
    %v3019 = vcombine.high %v2953, %v2969
    %v3021 = vunpack.c.l.s4 1934713408
    %v3022 = vunpack.c.0.s8 %v3021
    %v3023 = vlaneseq
    %v3024 = vshrl.u32 %v3023, 7
    %v3025 = vsub.s32 %v3022, %v3024
    %v3026 = vrot.slane %v3018, %v3025
    %v3028 = vunpack.c.l.s4 1934713408
    %v3029 = vunpack.c.0.s8 %v3028
    %v3030 = vlaneseq
    %v3031 = vshrl.u32 %v3030, 7
    %v3032 = vsub.s32 %v3029, %v3031
    %v3033 = vrot.slane %v3019, %v3032
    %v3034 = vcombine.low %v2978, %v3010
    %v3035 = vcombine.high %v2978, %v3010
    %v3036 = vcombine.low %v2985, %v3017
    %v3037 = vcombine.high %v2985, %v3017
    %v3038 = vcombine.low %v2994, %v3026
    %v3039 = vcombine.high %v2994, %v3026
    %v3040 = vcombine.low %v3001, %v3033
    %v3041 = vcombine.high %v3001, %v3033
    %v3042 = vcombine.low %v1115, %v1123
    %v3043 = vcombine.high %v1115, %v1123
    %v3045 = vunpack.c.l.s4 1983009808
    %v3046 = vunpack.c.0.s8 %v3045
    %v3047 = vlaneseq
    %v3048 = vshrl.u32 %v3047, 7
    %v3049 = vsub.s32 %v3046, %v3048
    %v3050 = vrot.slane %v3042, %v3049
    %v3052 = vunpack.c.l.s4 1983009808
    %v3053 = vunpack.c.0.s8 %v3052
    %v3054 = vlaneseq
    %v3055 = vshrl.u32 %v3054, 7
    %v3056 = vsub.s32 %v3053, %v3055
    %v3057 = vrot.slane %v3043, %v3056
    %v3058 = vcombine.low %v1119, %v1127
    %v3059 = vcombine.high %v1119, %v1127
    %v3061 = vunpack.c.l.s4 1983009808
    %v3062 = vunpack.c.0.s8 %v3061
    %v3063 = vlaneseq
    %v3064 = vshrl.u32 %v3063, 7
    %v3065 = vsub.s32 %v3062, %v3064
    %v3066 = vrot.slane %v3058, %v3065
    %v3068 = vunpack.c.l.s4 1983009808
    %v3069 = vunpack.c.0.s8 %v3068
    %v3070 = vlaneseq
    %v3071 = vshrl.u32 %v3070, 7
    %v3072 = vsub.s32 %v3069, %v3071
    %v3073 = vrot.slane %v3059, %v3072
    %v3074 = vcombine.low %v1131, %v1139
    %v3075 = vcombine.high %v1131, %v1139
    %v3077 = vunpack.c.l.s4 1983009808
    %v3078 = vunpack.c.0.s8 %v3077
    %v3079 = vlaneseq
    %v3080 = vshrl.u32 %v3079, 7
    %v3081 = vsub.s32 %v3078, %v3080
    %v3082 = vrot.slane %v3074, %v3081
    %v3084 = vunpack.c.l.s4 1983009808
    %v3085 = vunpack.c.0.s8 %v3084
    %v3086 = vlaneseq
    %v3087 = vshrl.u32 %v3086, 7
    %v3088 = vsub.s32 %v3085, %v3087
    %v3089 = vrot.slane %v3075, %v3088
    %v3090 = vcombine.low %v1135, %v1143
    %v3091 = vcombine.high %v1135, %v1143
    %v3093 = vunpack.c.l.s4 1983009808
    %v3094 = vunpack.c.0.s8 %v3093
    %v3095 = vlaneseq
    %v3096 = vshrl.u32 %v3095, 7
    %v3097 = vsub.s32 %v3094, %v3096
    %v3098 = vrot.slane %v3090, %v3097
    %v3100 = vunpack.c.l.s4 1983009808
    %v3101 = vunpack.c.0.s8 %v3100
    %v3102 = vlaneseq
    %v3103 = vshrl.u32 %v3102, 7
    %v3104 = vsub.s32 %v3101, %v3103
    %v3105 = vrot.slane %v3091, %v3104
    %v3106 = vcombine.low %v3050, %v3066
    %v3107 = vcombine.high %v3050, %v3066
    %v3109 = vunpack.c.l.s4 1934713408
    %v3110 = vunpack.c.0.s8 %v3109
    %v3111 = vlaneseq
    %v3112 = vshrl.u32 %v3111, 7
    %v3113 = vsub.s32 %v3110, %v3112
    %v3114 = vrot.slane %v3106, %v3113
    %v3116 = vunpack.c.l.s4 1934713408
    %v3117 = vunpack.c.0.s8 %v3116
    %v3118 = vlaneseq
    %v3119 = vshrl.u32 %v3118, 7
    %v3120 = vsub.s32 %v3117, %v3119
    %v3121 = vrot.slane %v3107, %v3120
    %v3122 = vcombine.low %v3057, %v3073
    %v3123 = vcombine.high %v3057, %v3073
    %v3125 = vunpack.c.l.s4 1934713408
    %v3126 = vunpack.c.0.s8 %v3125
    %v3127 = vlaneseq
    %v3128 = vshrl.u32 %v3127, 7
    %v3129 = vsub.s32 %v3126, %v3128
    %v3130 = vrot.slane %v3122, %v3129
    %v3132 = vunpack.c.l.s4 1934713408
    %v3133 = vunpack.c.0.s8 %v3132
    %v3134 = vlaneseq
    %v3135 = vshrl.u32 %v3134, 7
    %v3136 = vsub.s32 %v3133, %v3135
    %v3137 = vrot.slane %v3123, %v3136
    %v3138 = vcombine.low %v3082, %v3098
    %v3139 = vcombine.high %v3082, %v3098
    %v3141 = vunpack.c.l.s4 1934713408
    %v3142 = vunpack.c.0.s8 %v3141
    %v3143 = vlaneseq
    %v3144 = vshrl.u32 %v3143, 7
    %v3145 = vsub.s32 %v3142, %v3144
    %v3146 = vrot.slane %v3138, %v3145
    %v3148 = vunpack.c.l.s4 1934713408
    %v3149 = vunpack.c.0.s8 %v3148
    %v3150 = vlaneseq
    %v3151 = vshrl.u32 %v3150, 7
    %v3152 = vsub.s32 %v3149, %v3151
    %v3153 = vrot.slane %v3139, %v3152
    %v3154 = vcombine.low %v3089, %v3105
    %v3155 = vcombine.high %v3089, %v3105
    %v3157 = vunpack.c.l.s4 1934713408
    %v3158 = vunpack.c.0.s8 %v3157
    %v3159 = vlaneseq
    %v3160 = vshrl.u32 %v3159, 7
    %v3161 = vsub.s32 %v3158, %v3160
    %v3162 = vrot.slane %v3154, %v3161
    %v3164 = vunpack.c.l.s4 1934713408
    %v3165 = vunpack.c.0.s8 %v3164
    %v3166 = vlaneseq
    %v3167 = vshrl.u32 %v3166, 7
    %v3168 = vsub.s32 %v3165, %v3167
    %v3169 = vrot.slane %v3155, %v3168
    %v3170 = vcombine.low %v3114, %v3146
    %v3171 = vcombine.high %v3114, %v3146
    %v3172 = vcombine.low %v3121, %v3153
    %v3173 = vcombine.high %v3121, %v3153
    %v3174 = vcombine.low %v3130, %v3162
    %v3175 = vcombine.high %v3130, %v3162
    %v3176 = vcombine.low %v3137, %v3169
    %v3177 = vcombine.high %v3137, %v3169
    %v3178 = vcombine.low %v1147, %v1155
    %v3179 = vcombine.high %v1147, %v1155
    %v3181 = vunpack.c.l.s4 1983009808
    %v3182 = vunpack.c.0.s8 %v3181
    %v3183 = vlaneseq
    %v3184 = vshrl.u32 %v3183, 7
    %v3185 = vsub.s32 %v3182, %v3184
    %v3186 = vrot.slane %v3178, %v3185
    %v3188 = vunpack.c.l.s4 1983009808
    %v3189 = vunpack.c.0.s8 %v3188
    %v3190 = vlaneseq
    %v3191 = vshrl.u32 %v3190, 7
    %v3192 = vsub.s32 %v3189, %v3191
    %v3193 = vrot.slane %v3179, %v3192
    %v3194 = vcombine.low %v1151, %v1159
    %v3195 = vcombine.high %v1151, %v1159
    %v3197 = vunpack.c.l.s4 1983009808
    %v3198 = vunpack.c.0.s8 %v3197
    %v3199 = vlaneseq
    %v3200 = vshrl.u32 %v3199, 7
    %v3201 = vsub.s32 %v3198, %v3200
    %v3202 = vrot.slane %v3194, %v3201
    %v3204 = vunpack.c.l.s4 1983009808
    %v3205 = vunpack.c.0.s8 %v3204
    %v3206 = vlaneseq
    %v3207 = vshrl.u32 %v3206, 7
    %v3208 = vsub.s32 %v3205, %v3207
    %v3209 = vrot.slane %v3195, %v3208
    %v3210 = vcombine.low %v1163, %v1171
    %v3211 = vcombine.high %v1163, %v1171
    %v3213 = vunpack.c.l.s4 1983009808
    %v3214 = vunpack.c.0.s8 %v3213
    %v3215 = vlaneseq
    %v3216 = vshrl.u32 %v3215, 7
    %v3217 = vsub.s32 %v3214, %v3216
    %v3218 = vrot.slane %v3210, %v3217
    %v3220 = vunpack.c.l.s4 1983009808
    %v3221 = vunpack.c.0.s8 %v3220
    %v3222 = vlaneseq
    %v3223 = vshrl.u32 %v3222, 7
    %v3224 = vsub.s32 %v3221, %v3223
    %v3225 = vrot.slane %v3211, %v3224
    %v3226 = vcombine.low %v1167, %v1175
    %v3227 = vcombine.high %v1167, %v1175
    %v3229 = vunpack.c.l.s4 1983009808
    %v3230 = vunpack.c.0.s8 %v3229
    %v3231 = vlaneseq
    %v3232 = vshrl.u32 %v3231, 7
    %v3233 = vsub.s32 %v3230, %v3232
    %v3234 = vrot.slane %v3226, %v3233
    %v3236 = vunpack.c.l.s4 1983009808
    %v3237 = vunpack.c.0.s8 %v3236
    %v3238 = vlaneseq
    %v3239 = vshrl.u32 %v3238, 7
    %v3240 = vsub.s32 %v3237, %v3239
    %v3241 = vrot.slane %v3227, %v3240
    %v3242 = vcombine.low %v3186, %v3202
    %v3243 = vcombine.high %v3186, %v3202
    %v3245 = vunpack.c.l.s4 1934713408
    %v3246 = vunpack.c.0.s8 %v3245
    %v3247 = vlaneseq
    %v3248 = vshrl.u32 %v3247, 7
    %v3249 = vsub.s32 %v3246, %v3248
    %v3250 = vrot.slane %v3242, %v3249
    %v3252 = vunpack.c.l.s4 1934713408
    %v3253 = vunpack.c.0.s8 %v3252
    %v3254 = vlaneseq
    %v3255 = vshrl.u32 %v3254, 7
    %v3256 = vsub.s32 %v3253, %v3255
    %v3257 = vrot.slane %v3243, %v3256
    %v3258 = vcombine.low %v3193, %v3209
    %v3259 = vcombine.high %v3193, %v3209
    %v3261 = vunpack.c.l.s4 1934713408
    %v3262 = vunpack.c.0.s8 %v3261
    %v3263 = vlaneseq
    %v3264 = vshrl.u32 %v3263, 7
    %v3265 = vsub.s32 %v3262, %v3264
    %v3266 = vrot.slane %v3258, %v3265
    %v3268 = vunpack.c.l.s4 1934713408
    %v3269 = vunpack.c.0.s8 %v3268
    %v3270 = vlaneseq
    %v3271 = vshrl.u32 %v3270, 7
    %v3272 = vsub.s32 %v3269, %v3271
    %v3273 = vrot.slane %v3259, %v3272
    %v3274 = vcombine.low %v3218, %v3234
    %v3275 = vcombine.high %v3218, %v3234
    %v3277 = vunpack.c.l.s4 1934713408
    %v3278 = vunpack.c.0.s8 %v3277
    %v3279 = vlaneseq
    %v3280 = vshrl.u32 %v3279, 7
    %v3281 = vsub.s32 %v3278, %v3280
    %v3282 = vrot.slane %v3274, %v3281
    %v3284 = vunpack.c.l.s4 1934713408
    %v3285 = vunpack.c.0.s8 %v3284
    %v3286 = vlaneseq
    %v3287 = vshrl.u32 %v3286, 7
    %v3288 = vsub.s32 %v3285, %v3287
    %v3289 = vrot.slane %v3275, %v3288
    %v3290 = vcombine.low %v3225, %v3241
    %v3291 = vcombine.high %v3225, %v3241
    %v3293 = vunpack.c.l.s4 1934713408
    %v3294 = vunpack.c.0.s8 %v3293
    %v3295 = vlaneseq
    %v3296 = vshrl.u32 %v3295, 7
    %v3297 = vsub.s32 %v3294, %v3296
    %v3298 = vrot.slane %v3290, %v3297
    %v3300 = vunpack.c.l.s4 1934713408
    %v3301 = vunpack.c.0.s8 %v3300
    %v3302 = vlaneseq
    %v3303 = vshrl.u32 %v3302, 7
    %v3304 = vsub.s32 %v3301, %v3303
    %v3305 = vrot.slane %v3291, %v3304
    %v3306 = vcombine.low %v3250, %v3282
    %v3307 = vcombine.high %v3250, %v3282
    %v3308 = vcombine.low %v3257, %v3289
    %v3309 = vcombine.high %v3257, %v3289
    %v3310 = vcombine.low %v3266, %v3298
    %v3311 = vcombine.high %v3266, %v3298
    %v3312 = vcombine.low %v3273, %v3305
    %v3313 = vcombine.high %v3273, %v3305
    %v3314 = vcombine.low %v1179, %v1187
    %v3315 = vcombine.high %v1179, %v1187
    %v3317 = vunpack.c.l.s4 1983009808
    %v3318 = vunpack.c.0.s8 %v3317
    %v3319 = vlaneseq
    %v3320 = vshrl.u32 %v3319, 7
    %v3321 = vsub.s32 %v3318, %v3320
    %v3322 = vrot.slane %v3314, %v3321
    %v3324 = vunpack.c.l.s4 1983009808
    %v3325 = vunpack.c.0.s8 %v3324
    %v3326 = vlaneseq
    %v3327 = vshrl.u32 %v3326, 7
    %v3328 = vsub.s32 %v3325, %v3327
    %v3329 = vrot.slane %v3315, %v3328
    %v3330 = vcombine.low %v1183, %v1191
    %v3331 = vcombine.high %v1183, %v1191
    %v3333 = vunpack.c.l.s4 1983009808
    %v3334 = vunpack.c.0.s8 %v3333
    %v3335 = vlaneseq
    %v3336 = vshrl.u32 %v3335, 7
    %v3337 = vsub.s32 %v3334, %v3336
    %v3338 = vrot.slane %v3330, %v3337
    %v3340 = vunpack.c.l.s4 1983009808
    %v3341 = vunpack.c.0.s8 %v3340
    %v3342 = vlaneseq
    %v3343 = vshrl.u32 %v3342, 7
    %v3344 = vsub.s32 %v3341, %v3343
    %v3345 = vrot.slane %v3331, %v3344
    %v3346 = vcombine.low %v1195, %v1203
    %v3347 = vcombine.high %v1195, %v1203
    %v3349 = vunpack.c.l.s4 1983009808
    %v3350 = vunpack.c.0.s8 %v3349
    %v3351 = vlaneseq
    %v3352 = vshrl.u32 %v3351, 7
    %v3353 = vsub.s32 %v3350, %v3352
    %v3354 = vrot.slane %v3346, %v3353
    %v3356 = vunpack.c.l.s4 1983009808
    %v3357 = vunpack.c.0.s8 %v3356
    %v3358 = vlaneseq
    %v3359 = vshrl.u32 %v3358, 7
    %v3360 = vsub.s32 %v3357, %v3359
    %v3361 = vrot.slane %v3347, %v3360
    %v3362 = vcombine.low %v1199, %v1207
    %v3363 = vcombine.high %v1199, %v1207
    %v3365 = vunpack.c.l.s4 1983009808
    %v3366 = vunpack.c.0.s8 %v3365
    %v3367 = vlaneseq
    %v3368 = vshrl.u32 %v3367, 7
    %v3369 = vsub.s32 %v3366, %v3368
    %v3370 = vrot.slane %v3362, %v3369
    %v3372 = vunpack.c.l.s4 1983009808
    %v3373 = vunpack.c.0.s8 %v3372
    %v3374 = vlaneseq
    %v3375 = vshrl.u32 %v3374, 7
    %v3376 = vsub.s32 %v3373, %v3375
    %v3377 = vrot.slane %v3363, %v3376
    %v3378 = vcombine.low %v3322, %v3338
    %v3379 = vcombine.high %v3322, %v3338
    %v3381 = vunpack.c.l.s4 1934713408
    %v3382 = vunpack.c.0.s8 %v3381
    %v3383 = vlaneseq
    %v3384 = vshrl.u32 %v3383, 7
    %v3385 = vsub.s32 %v3382, %v3384
    %v3386 = vrot.slane %v3378, %v3385
    %v3388 = vunpack.c.l.s4 1934713408
    %v3389 = vunpack.c.0.s8 %v3388
    %v3390 = vlaneseq
    %v3391 = vshrl.u32 %v3390, 7
    %v3392 = vsub.s32 %v3389, %v3391
    %v3393 = vrot.slane %v3379, %v3392
    %v3394 = vcombine.low %v3329, %v3345
    %v3395 = vcombine.high %v3329, %v3345
    %v3397 = vunpack.c.l.s4 1934713408
    %v3398 = vunpack.c.0.s8 %v3397
    %v3399 = vlaneseq
    %v3400 = vshrl.u32 %v3399, 7
    %v3401 = vsub.s32 %v3398, %v3400
    %v3402 = vrot.slane %v3394, %v3401
    %v3404 = vunpack.c.l.s4 1934713408
    %v3405 = vunpack.c.0.s8 %v3404
    %v3406 = vlaneseq
    %v3407 = vshrl.u32 %v3406, 7
    %v3408 = vsub.s32 %v3405, %v3407
    %v3409 = vrot.slane %v3395, %v3408
    %v3410 = vcombine.low %v3354, %v3370
    %v3411 = vcombine.high %v3354, %v3370
    %v3413 = vunpack.c.l.s4 1934713408
    %v3414 = vunpack.c.0.s8 %v3413
    %v3415 = vlaneseq
    %v3416 = vshrl.u32 %v3415, 7
    %v3417 = vsub.s32 %v3414, %v3416
    %v3418 = vrot.slane %v3410, %v3417
    %v3420 = vunpack.c.l.s4 1934713408
    %v3421 = vunpack.c.0.s8 %v3420
    %v3422 = vlaneseq
    %v3423 = vshrl.u32 %v3422, 7
    %v3424 = vsub.s32 %v3421, %v3423
    %v3425 = vrot.slane %v3411, %v3424
    %v3426 = vcombine.low %v3361, %v3377
    %v3427 = vcombine.high %v3361, %v3377
    %v3429 = vunpack.c.l.s4 1934713408
    %v3430 = vunpack.c.0.s8 %v3429
    %v3431 = vlaneseq
    %v3432 = vshrl.u32 %v3431, 7
    %v3433 = vsub.s32 %v3430, %v3432
    %v3434 = vrot.slane %v3426, %v3433
    %v3436 = vunpack.c.l.s4 1934713408
    %v3437 = vunpack.c.0.s8 %v3436
    %v3438 = vlaneseq
    %v3439 = vshrl.u32 %v3438, 7
    %v3440 = vsub.s32 %v3437, %v3439
    %v3441 = vrot.slane %v3427, %v3440
    %v3442 = vcombine.low %v3386, %v3418
    %v3443 = vcombine.high %v3386, %v3418
    %v3444 = vcombine.low %v3393, %v3425
    %v3445 = vcombine.high %v3393, %v3425
    %v3446 = vcombine.low %v3402, %v3434
    %v3447 = vcombine.high %v3402, %v3434
    %v3448 = vcombine.low %v3409, %v3441
    %v3449 = vcombine.high %v3409, %v3441
    %v3450 = vcombine.low %v1211, %v1219
    %v3451 = vcombine.high %v1211, %v1219
    %v3453 = vunpack.c.l.s4 1983009808
    %v3454 = vunpack.c.0.s8 %v3453
    %v3455 = vlaneseq
    %v3456 = vshrl.u32 %v3455, 7
    %v3457 = vsub.s32 %v3454, %v3456
    %v3458 = vrot.slane %v3450, %v3457
    %v3460 = vunpack.c.l.s4 1983009808
    %v3461 = vunpack.c.0.s8 %v3460
    %v3462 = vlaneseq
    %v3463 = vshrl.u32 %v3462, 7
    %v3464 = vsub.s32 %v3461, %v3463
    %v3465 = vrot.slane %v3451, %v3464
    %v3466 = vcombine.low %v1215, %v1223
    %v3467 = vcombine.high %v1215, %v1223
    %v3469 = vunpack.c.l.s4 1983009808
    %v3470 = vunpack.c.0.s8 %v3469
    %v3471 = vlaneseq
    %v3472 = vshrl.u32 %v3471, 7
    %v3473 = vsub.s32 %v3470, %v3472
    %v3474 = vrot.slane %v3466, %v3473
    %v3476 = vunpack.c.l.s4 1983009808
    %v3477 = vunpack.c.0.s8 %v3476
    %v3478 = vlaneseq
    %v3479 = vshrl.u32 %v3478, 7
    %v3480 = vsub.s32 %v3477, %v3479
    %v3481 = vrot.slane %v3467, %v3480
    %v3482 = vcombine.low %v1227, %v1235
    %v3483 = vcombine.high %v1227, %v1235
    %v3485 = vunpack.c.l.s4 1983009808
    %v3486 = vunpack.c.0.s8 %v3485
    %v3487 = vlaneseq
    %v3488 = vshrl.u32 %v3487, 7
    %v3489 = vsub.s32 %v3486, %v3488
    %v3490 = vrot.slane %v3482, %v3489
    %v3492 = vunpack.c.l.s4 1983009808
    %v3493 = vunpack.c.0.s8 %v3492
    %v3494 = vlaneseq
    %v3495 = vshrl.u32 %v3494, 7
    %v3496 = vsub.s32 %v3493, %v3495
    %v3497 = vrot.slane %v3483, %v3496
    %v3498 = vcombine.low %v1231, %v1239
    %v3499 = vcombine.high %v1231, %v1239
    %v3501 = vunpack.c.l.s4 1983009808
    %v3502 = vunpack.c.0.s8 %v3501
    %v3503 = vlaneseq
    %v3504 = vshrl.u32 %v3503, 7
    %v3505 = vsub.s32 %v3502, %v3504
    %v3506 = vrot.slane %v3498, %v3505
    %v3508 = vunpack.c.l.s4 1983009808
    %v3509 = vunpack.c.0.s8 %v3508
    %v3510 = vlaneseq
    %v3511 = vshrl.u32 %v3510, 7
    %v3512 = vsub.s32 %v3509, %v3511
    %v3513 = vrot.slane %v3499, %v3512
    %v3514 = vcombine.low %v3458, %v3474
    %v3515 = vcombine.high %v3458, %v3474
    %v3517 = vunpack.c.l.s4 1934713408
    %v3518 = vunpack.c.0.s8 %v3517
    %v3519 = vlaneseq
    %v3520 = vshrl.u32 %v3519, 7
    %v3521 = vsub.s32 %v3518, %v3520
    %v3522 = vrot.slane %v3514, %v3521
    %v3524 = vunpack.c.l.s4 1934713408
    %v3525 = vunpack.c.0.s8 %v3524
    %v3526 = vlaneseq
    %v3527 = vshrl.u32 %v3526, 7
    %v3528 = vsub.s32 %v3525, %v3527
    %v3529 = vrot.slane %v3515, %v3528
    %v3530 = vcombine.low %v3465, %v3481
    %v3531 = vcombine.high %v3465, %v3481
    %v3533 = vunpack.c.l.s4 1934713408
    %v3534 = vunpack.c.0.s8 %v3533
    %v3535 = vlaneseq
    %v3536 = vshrl.u32 %v3535, 7
    %v3537 = vsub.s32 %v3534, %v3536
    %v3538 = vrot.slane %v3530, %v3537
    %v3540 = vunpack.c.l.s4 1934713408
    %v3541 = vunpack.c.0.s8 %v3540
    %v3542 = vlaneseq
    %v3543 = vshrl.u32 %v3542, 7
    %v3544 = vsub.s32 %v3541, %v3543
    %v3545 = vrot.slane %v3531, %v3544
    %v3546 = vcombine.low %v3490, %v3506
    %v3547 = vcombine.high %v3490, %v3506
    %v3549 = vunpack.c.l.s4 1934713408
    %v3550 = vunpack.c.0.s8 %v3549
    %v3551 = vlaneseq
    %v3552 = vshrl.u32 %v3551, 7
    %v3553 = vsub.s32 %v3550, %v3552
    %v3554 = vrot.slane %v3546, %v3553
    %v3556 = vunpack.c.l.s4 1934713408
    %v3557 = vunpack.c.0.s8 %v3556
    %v3558 = vlaneseq
    %v3559 = vshrl.u32 %v3558, 7
    %v3560 = vsub.s32 %v3557, %v3559
    %v3561 = vrot.slane %v3547, %v3560
    %v3562 = vcombine.low %v3497, %v3513
    %v3563 = vcombine.high %v3497, %v3513
    %v3565 = vunpack.c.l.s4 1934713408
    %v3566 = vunpack.c.0.s8 %v3565
    %v3567 = vlaneseq
    %v3568 = vshrl.u32 %v3567, 7
    %v3569 = vsub.s32 %v3566, %v3568
    %v3570 = vrot.slane %v3562, %v3569
    %v3572 = vunpack.c.l.s4 1934713408
    %v3573 = vunpack.c.0.s8 %v3572
    %v3574 = vlaneseq
    %v3575 = vshrl.u32 %v3574, 7
    %v3576 = vsub.s32 %v3573, %v3575
    %v3577 = vrot.slane %v3563, %v3576
    %v3578 = vcombine.low %v3522, %v3554
    %v3579 = vcombine.high %v3522, %v3554
    %v3580 = vcombine.low %v3529, %v3561
    %v3581 = vcombine.high %v3529, %v3561
    %v3582 = vcombine.low %v3538, %v3570
    %v3583 = vcombine.high %v3538, %v3570
    %v3584 = vcombine.low %v3545, %v3577
    %v3585 = vcombine.high %v3545, %v3577
    %v3586 = vcombine.low %v1243, %v1251
    %v3587 = vcombine.high %v1243, %v1251
    %v3589 = vunpack.c.l.s4 1983009808
    %v3590 = vunpack.c.0.s8 %v3589
    %v3591 = vlaneseq
    %v3592 = vshrl.u32 %v3591, 7
    %v3593 = vsub.s32 %v3590, %v3592
    %v3594 = vrot.slane %v3586, %v3593
    %v3596 = vunpack.c.l.s4 1983009808
    %v3597 = vunpack.c.0.s8 %v3596
    %v3598 = vlaneseq
    %v3599 = vshrl.u32 %v3598, 7
    %v3600 = vsub.s32 %v3597, %v3599
    %v3601 = vrot.slane %v3587, %v3600
    %v3602 = vcombine.low %v1247, %v1255
    %v3603 = vcombine.high %v1247, %v1255
    %v3605 = vunpack.c.l.s4 1983009808
    %v3606 = vunpack.c.0.s8 %v3605
    %v3607 = vlaneseq
    %v3608 = vshrl.u32 %v3607, 7
    %v3609 = vsub.s32 %v3606, %v3608
    %v3610 = vrot.slane %v3602, %v3609
    %v3612 = vunpack.c.l.s4 1983009808
    %v3613 = vunpack.c.0.s8 %v3612
    %v3614 = vlaneseq
    %v3615 = vshrl.u32 %v3614, 7
    %v3616 = vsub.s32 %v3613, %v3615
    %v3617 = vrot.slane %v3603, %v3616
    %v3618 = vcombine.low %v1259, %v1267
    %v3619 = vcombine.high %v1259, %v1267
    %v3621 = vunpack.c.l.s4 1983009808
    %v3622 = vunpack.c.0.s8 %v3621
    %v3623 = vlaneseq
    %v3624 = vshrl.u32 %v3623, 7
    %v3625 = vsub.s32 %v3622, %v3624
    %v3626 = vrot.slane %v3618, %v3625
    %v3628 = vunpack.c.l.s4 1983009808
    %v3629 = vunpack.c.0.s8 %v3628
    %v3630 = vlaneseq
    %v3631 = vshrl.u32 %v3630, 7
    %v3632 = vsub.s32 %v3629, %v3631
    %v3633 = vrot.slane %v3619, %v3632
    %v3634 = vcombine.low %v1263, %v1271
    %v3635 = vcombine.high %v1263, %v1271
    %v3637 = vunpack.c.l.s4 1983009808
    %v3638 = vunpack.c.0.s8 %v3637
    %v3639 = vlaneseq
    %v3640 = vshrl.u32 %v3639, 7
    %v3641 = vsub.s32 %v3638, %v3640
    %v3642 = vrot.slane %v3634, %v3641
    %v3644 = vunpack.c.l.s4 1983009808
    %v3645 = vunpack.c.0.s8 %v3644
    %v3646 = vlaneseq
    %v3647 = vshrl.u32 %v3646, 7
    %v3648 = vsub.s32 %v3645, %v3647
    %v3649 = vrot.slane %v3635, %v3648
    %v3650 = vcombine.low %v3594, %v3610
    %v3651 = vcombine.high %v3594, %v3610
    %v3653 = vunpack.c.l.s4 1934713408
    %v3654 = vunpack.c.0.s8 %v3653
    %v3655 = vlaneseq
    %v3656 = vshrl.u32 %v3655, 7
    %v3657 = vsub.s32 %v3654, %v3656
    %v3658 = vrot.slane %v3650, %v3657
    %v3660 = vunpack.c.l.s4 1934713408
    %v3661 = vunpack.c.0.s8 %v3660
    %v3662 = vlaneseq
    %v3663 = vshrl.u32 %v3662, 7
    %v3664 = vsub.s32 %v3661, %v3663
    %v3665 = vrot.slane %v3651, %v3664
    %v3666 = vcombine.low %v3601, %v3617
    %v3667 = vcombine.high %v3601, %v3617
    %v3669 = vunpack.c.l.s4 1934713408
    %v3670 = vunpack.c.0.s8 %v3669
    %v3671 = vlaneseq
    %v3672 = vshrl.u32 %v3671, 7
    %v3673 = vsub.s32 %v3670, %v3672
    %v3674 = vrot.slane %v3666, %v3673
    %v3676 = vunpack.c.l.s4 1934713408
    %v3677 = vunpack.c.0.s8 %v3676
    %v3678 = vlaneseq
    %v3679 = vshrl.u32 %v3678, 7
    %v3680 = vsub.s32 %v3677, %v3679
    %v3681 = vrot.slane %v3667, %v3680
    %v3682 = vcombine.low %v3626, %v3642
    %v3683 = vcombine.high %v3626, %v3642
    %v3685 = vunpack.c.l.s4 1934713408
    %v3686 = vunpack.c.0.s8 %v3685
    %v3687 = vlaneseq
    %v3688 = vshrl.u32 %v3687, 7
    %v3689 = vsub.s32 %v3686, %v3688
    %v3690 = vrot.slane %v3682, %v3689
    %v3692 = vunpack.c.l.s4 1934713408
    %v3693 = vunpack.c.0.s8 %v3692
    %v3694 = vlaneseq
    %v3695 = vshrl.u32 %v3694, 7
    %v3696 = vsub.s32 %v3693, %v3695
    %v3697 = vrot.slane %v3683, %v3696
    %v3698 = vcombine.low %v3633, %v3649
    %v3699 = vcombine.high %v3633, %v3649
    %v3701 = vunpack.c.l.s4 1934713408
    %v3702 = vunpack.c.0.s8 %v3701
    %v3703 = vlaneseq
    %v3704 = vshrl.u32 %v3703, 7
    %v3705 = vsub.s32 %v3702, %v3704
    %v3706 = vrot.slane %v3698, %v3705
    %v3708 = vunpack.c.l.s4 1934713408
    %v3709 = vunpack.c.0.s8 %v3708
    %v3710 = vlaneseq
    %v3711 = vshrl.u32 %v3710, 7
    %v3712 = vsub.s32 %v3709, %v3711
    %v3713 = vrot.slane %v3699, %v3712
    %v3714 = vcombine.low %v3658, %v3690
    %v3715 = vcombine.high %v3658, %v3690
    %v3716 = vcombine.low %v3665, %v3697
    %v3717 = vcombine.high %v3665, %v3697
    %v3718 = vcombine.low %v3674, %v3706
    %v3719 = vcombine.high %v3674, %v3706
    %v3720 = vcombine.low %v3681, %v3713
    %v3721 = vcombine.high %v3681, %v3713
    %v3722 = vcombine.low %v988, %v996
    %v3723 = vcombine.high %v988, %v996
    %v3725 = vunpack.c.l.s4 1983009808
    %v3726 = vunpack.c.0.s8 %v3725
    %v3727 = vlaneseq
    %v3728 = vshrl.u32 %v3727, 7
    %v3729 = vsub.s32 %v3726, %v3728
    %v3730 = vrot.slane %v3722, %v3729
    %v3732 = vunpack.c.l.s4 1983009808
    %v3733 = vunpack.c.0.s8 %v3732
    %v3734 = vlaneseq
    %v3735 = vshrl.u32 %v3734, 7
    %v3736 = vsub.s32 %v3733, %v3735
    %v3737 = vrot.slane %v3723, %v3736
    %v3738 = vcombine.low %v992, %v1000
    %v3739 = vcombine.high %v992, %v1000
    %v3741 = vunpack.c.l.s4 1983009808
    %v3742 = vunpack.c.0.s8 %v3741
    %v3743 = vlaneseq
    %v3744 = vshrl.u32 %v3743, 7
    %v3745 = vsub.s32 %v3742, %v3744
    %v3746 = vrot.slane %v3738, %v3745
    %v3748 = vunpack.c.l.s4 1983009808
    %v3749 = vunpack.c.0.s8 %v3748
    %v3750 = vlaneseq
    %v3751 = vshrl.u32 %v3750, 7
    %v3752 = vsub.s32 %v3749, %v3751
    %v3753 = vrot.slane %v3739, %v3752
    %v3754 = vcombine.low %v1004, %v1012
    %v3755 = vcombine.high %v1004, %v1012
    %v3757 = vunpack.c.l.s4 1983009808
    %v3758 = vunpack.c.0.s8 %v3757
    %v3759 = vlaneseq
    %v3760 = vshrl.u32 %v3759, 7
    %v3761 = vsub.s32 %v3758, %v3760
    %v3762 = vrot.slane %v3754, %v3761
    %v3764 = vunpack.c.l.s4 1983009808
    %v3765 = vunpack.c.0.s8 %v3764
    %v3766 = vlaneseq
    %v3767 = vshrl.u32 %v3766, 7
    %v3768 = vsub.s32 %v3765, %v3767
    %v3769 = vrot.slane %v3755, %v3768
    %v3770 = vcombine.low %v1008, %v1016
    %v3771 = vcombine.high %v1008, %v1016
    %v3773 = vunpack.c.l.s4 1983009808
    %v3774 = vunpack.c.0.s8 %v3773
    %v3775 = vlaneseq
    %v3776 = vshrl.u32 %v3775, 7
    %v3777 = vsub.s32 %v3774, %v3776
    %v3778 = vrot.slane %v3770, %v3777
    %v3780 = vunpack.c.l.s4 1983009808
    %v3781 = vunpack.c.0.s8 %v3780
    %v3782 = vlaneseq
    %v3783 = vshrl.u32 %v3782, 7
    %v3784 = vsub.s32 %v3781, %v3783
    %v3785 = vrot.slane %v3771, %v3784
    %v3786 = vcombine.low %v3730, %v3746
    %v3787 = vcombine.high %v3730, %v3746
    %v3789 = vunpack.c.l.s4 1934713408
    %v3790 = vunpack.c.0.s8 %v3789
    %v3791 = vlaneseq
    %v3792 = vshrl.u32 %v3791, 7
    %v3793 = vsub.s32 %v3790, %v3792
    %v3794 = vrot.slane %v3786, %v3793
    %v3796 = vunpack.c.l.s4 1934713408
    %v3797 = vunpack.c.0.s8 %v3796
    %v3798 = vlaneseq
    %v3799 = vshrl.u32 %v3798, 7
    %v3800 = vsub.s32 %v3797, %v3799
    %v3801 = vrot.slane %v3787, %v3800
    %v3802 = vcombine.low %v3737, %v3753
    %v3803 = vcombine.high %v3737, %v3753
    %v3805 = vunpack.c.l.s4 1934713408
    %v3806 = vunpack.c.0.s8 %v3805
    %v3807 = vlaneseq
    %v3808 = vshrl.u32 %v3807, 7
    %v3809 = vsub.s32 %v3806, %v3808
    %v3810 = vrot.slane %v3802, %v3809
    %v3812 = vunpack.c.l.s4 1934713408
    %v3813 = vunpack.c.0.s8 %v3812
    %v3814 = vlaneseq
    %v3815 = vshrl.u32 %v3814, 7
    %v3816 = vsub.s32 %v3813, %v3815
    %v3817 = vrot.slane %v3803, %v3816
    %v3818 = vcombine.low %v3762, %v3778
    %v3819 = vcombine.high %v3762, %v3778
    %v3821 = vunpack.c.l.s4 1934713408
    %v3822 = vunpack.c.0.s8 %v3821
    %v3823 = vlaneseq
    %v3824 = vshrl.u32 %v3823, 7
    %v3825 = vsub.s32 %v3822, %v3824
    %v3826 = vrot.slane %v3818, %v3825
    %v3828 = vunpack.c.l.s4 1934713408
    %v3829 = vunpack.c.0.s8 %v3828
    %v3830 = vlaneseq
    %v3831 = vshrl.u32 %v3830, 7
    %v3832 = vsub.s32 %v3829, %v3831
    %v3833 = vrot.slane %v3819, %v3832
    %v3834 = vcombine.low %v3769, %v3785
    %v3835 = vcombine.high %v3769, %v3785
    %v3837 = vunpack.c.l.s4 1934713408
    %v3838 = vunpack.c.0.s8 %v3837
    %v3839 = vlaneseq
    %v3840 = vshrl.u32 %v3839, 7
    %v3841 = vsub.s32 %v3838, %v3840
    %v3842 = vrot.slane %v3834, %v3841
    %v3844 = vunpack.c.l.s4 1934713408
    %v3845 = vunpack.c.0.s8 %v3844
    %v3846 = vlaneseq
    %v3847 = vshrl.u32 %v3846, 7
    %v3848 = vsub.s32 %v3845, %v3847
    %v3849 = vrot.slane %v3835, %v3848
    %v3850 = vcombine.low %v3794, %v3826
    %v3851 = vcombine.high %v3794, %v3826
    %v3852 = vcombine.low %v3801, %v3833
    %v3853 = vcombine.high %v3801, %v3833
    %v3854 = vcombine.low %v3810, %v3842
    %v3855 = vcombine.high %v3810, %v3842
    %v3856 = vcombine.low %v3817, %v3849
    %v3857 = vcombine.high %v3817, %v3849
    %v3858 = vcombine.low %v1020, %v1028
    %v3859 = vcombine.high %v1020, %v1028
    %v3861 = vunpack.c.l.s4 1983009808
    %v3862 = vunpack.c.0.s8 %v3861
    %v3863 = vlaneseq
    %v3864 = vshrl.u32 %v3863, 7
    %v3865 = vsub.s32 %v3862, %v3864
    %v3866 = vrot.slane %v3858, %v3865
    %v3868 = vunpack.c.l.s4 1983009808
    %v3869 = vunpack.c.0.s8 %v3868
    %v3870 = vlaneseq
    %v3871 = vshrl.u32 %v3870, 7
    %v3872 = vsub.s32 %v3869, %v3871
    %v3873 = vrot.slane %v3859, %v3872
    %v3874 = vcombine.low %v1024, %v1032
    %v3875 = vcombine.high %v1024, %v1032
    %v3877 = vunpack.c.l.s4 1983009808
    %v3878 = vunpack.c.0.s8 %v3877
    %v3879 = vlaneseq
    %v3880 = vshrl.u32 %v3879, 7
    %v3881 = vsub.s32 %v3878, %v3880
    %v3882 = vrot.slane %v3874, %v3881
    %v3884 = vunpack.c.l.s4 1983009808
    %v3885 = vunpack.c.0.s8 %v3884
    %v3886 = vlaneseq
    %v3887 = vshrl.u32 %v3886, 7
    %v3888 = vsub.s32 %v3885, %v3887
    %v3889 = vrot.slane %v3875, %v3888
    %v3890 = vcombine.low %v1036, %v1044
    %v3891 = vcombine.high %v1036, %v1044
    %v3893 = vunpack.c.l.s4 1983009808
    %v3894 = vunpack.c.0.s8 %v3893
    %v3895 = vlaneseq
    %v3896 = vshrl.u32 %v3895, 7
    %v3897 = vsub.s32 %v3894, %v3896
    %v3898 = vrot.slane %v3890, %v3897
    %v3900 = vunpack.c.l.s4 1983009808
    %v3901 = vunpack.c.0.s8 %v3900
    %v3902 = vlaneseq
    %v3903 = vshrl.u32 %v3902, 7
    %v3904 = vsub.s32 %v3901, %v3903
    %v3905 = vrot.slane %v3891, %v3904
    %v3906 = vcombine.low %v1040, %v1048
    %v3907 = vcombine.high %v1040, %v1048
    %v3909 = vunpack.c.l.s4 1983009808
    %v3910 = vunpack.c.0.s8 %v3909
    %v3911 = vlaneseq
    %v3912 = vshrl.u32 %v3911, 7
    %v3913 = vsub.s32 %v3910, %v3912
    %v3914 = vrot.slane %v3906, %v3913
    %v3916 = vunpack.c.l.s4 1983009808
    %v3917 = vunpack.c.0.s8 %v3916
    %v3918 = vlaneseq
    %v3919 = vshrl.u32 %v3918, 7
    %v3920 = vsub.s32 %v3917, %v3919
    %v3921 = vrot.slane %v3907, %v3920
    %v3922 = vcombine.low %v3866, %v3882
    %v3923 = vcombine.high %v3866, %v3882
    %v3925 = vunpack.c.l.s4 1934713408
    %v3926 = vunpack.c.0.s8 %v3925
    %v3927 = vlaneseq
    %v3928 = vshrl.u32 %v3927, 7
    %v3929 = vsub.s32 %v3926, %v3928
    %v3930 = vrot.slane %v3922, %v3929
    %v3932 = vunpack.c.l.s4 1934713408
    %v3933 = vunpack.c.0.s8 %v3932
    %v3934 = vlaneseq
    %v3935 = vshrl.u32 %v3934, 7
    %v3936 = vsub.s32 %v3933, %v3935
    %v3937 = vrot.slane %v3923, %v3936
    %v3938 = vcombine.low %v3873, %v3889
    %v3939 = vcombine.high %v3873, %v3889
    %v3941 = vunpack.c.l.s4 1934713408
    %v3942 = vunpack.c.0.s8 %v3941
    %v3943 = vlaneseq
    %v3944 = vshrl.u32 %v3943, 7
    %v3945 = vsub.s32 %v3942, %v3944
    %v3946 = vrot.slane %v3938, %v3945
    %v3948 = vunpack.c.l.s4 1934713408
    %v3949 = vunpack.c.0.s8 %v3948
    %v3950 = vlaneseq
    %v3951 = vshrl.u32 %v3950, 7
    %v3952 = vsub.s32 %v3949, %v3951
    %v3953 = vrot.slane %v3939, %v3952
    %v3954 = vcombine.low %v3898, %v3914
    %v3955 = vcombine.high %v3898, %v3914
    %v3957 = vunpack.c.l.s4 1934713408
    %v3958 = vunpack.c.0.s8 %v3957
    %v3959 = vlaneseq
    %v3960 = vshrl.u32 %v3959, 7
    %v3961 = vsub.s32 %v3958, %v3960
    %v3962 = vrot.slane %v3954, %v3961
    %v3964 = vunpack.c.l.s4 1934713408
    %v3965 = vunpack.c.0.s8 %v3964
    %v3966 = vlaneseq
    %v3967 = vshrl.u32 %v3966, 7
    %v3968 = vsub.s32 %v3965, %v3967
    %v3969 = vrot.slane %v3955, %v3968
    %v3970 = vcombine.low %v3905, %v3921
    %v3971 = vcombine.high %v3905, %v3921
    %v3973 = vunpack.c.l.s4 1934713408
    %v3974 = vunpack.c.0.s8 %v3973
    %v3975 = vlaneseq
    %v3976 = vshrl.u32 %v3975, 7
    %v3977 = vsub.s32 %v3974, %v3976
    %v3978 = vrot.slane %v3970, %v3977
    %v3980 = vunpack.c.l.s4 1934713408
    %v3981 = vunpack.c.0.s8 %v3980
    %v3982 = vlaneseq
    %v3983 = vshrl.u32 %v3982, 7
    %v3984 = vsub.s32 %v3981, %v3983
    %v3985 = vrot.slane %v3971, %v3984
    %v3986 = vcombine.low %v3930, %v3962
    %v3987 = vcombine.high %v3930, %v3962
    %v3988 = vcombine.low %v3937, %v3969
    %v3989 = vcombine.high %v3937, %v3969
    %v3990 = vcombine.low %v3946, %v3978
    %v3991 = vcombine.high %v3946, %v3978
    %v3992 = vcombine.low %v3953, %v3985
    %v3993 = vcombine.high %v3953, %v3985
    %v3994 = vcombine.low %v1052, %v1060
    %v3995 = vcombine.high %v1052, %v1060
    %v3997 = vunpack.c.l.s4 1983009808
    %v3998 = vunpack.c.0.s8 %v3997
    %v3999 = vlaneseq
    %v4000 = vshrl.u32 %v3999, 7
    %v4001 = vsub.s32 %v3998, %v4000
    %v4002 = vrot.slane %v3994, %v4001
    %v4004 = vunpack.c.l.s4 1983009808
    %v4005 = vunpack.c.0.s8 %v4004
    %v4006 = vlaneseq
    %v4007 = vshrl.u32 %v4006, 7
    %v4008 = vsub.s32 %v4005, %v4007
    %v4009 = vrot.slane %v3995, %v4008
    %v4010 = vcombine.low %v1056, %v1064
    %v4011 = vcombine.high %v1056, %v1064
    %v4013 = vunpack.c.l.s4 1983009808
    %v4014 = vunpack.c.0.s8 %v4013
    %v4015 = vlaneseq
    %v4016 = vshrl.u32 %v4015, 7
    %v4017 = vsub.s32 %v4014, %v4016
    %v4018 = vrot.slane %v4010, %v4017
    %v4020 = vunpack.c.l.s4 1983009808
    %v4021 = vunpack.c.0.s8 %v4020
    %v4022 = vlaneseq
    %v4023 = vshrl.u32 %v4022, 7
    %v4024 = vsub.s32 %v4021, %v4023
    %v4025 = vrot.slane %v4011, %v4024
    %v4026 = vcombine.low %v1068, %v1076
    %v4027 = vcombine.high %v1068, %v1076
    %v4029 = vunpack.c.l.s4 1983009808
    %v4030 = vunpack.c.0.s8 %v4029
    %v4031 = vlaneseq
    %v4032 = vshrl.u32 %v4031, 7
    %v4033 = vsub.s32 %v4030, %v4032
    %v4034 = vrot.slane %v4026, %v4033
    %v4036 = vunpack.c.l.s4 1983009808
    %v4037 = vunpack.c.0.s8 %v4036
    %v4038 = vlaneseq
    %v4039 = vshrl.u32 %v4038, 7
    %v4040 = vsub.s32 %v4037, %v4039
    %v4041 = vrot.slane %v4027, %v4040
    %v4042 = vcombine.low %v1072, %v1080
    %v4043 = vcombine.high %v1072, %v1080
    %v4045 = vunpack.c.l.s4 1983009808
    %v4046 = vunpack.c.0.s8 %v4045
    %v4047 = vlaneseq
    %v4048 = vshrl.u32 %v4047, 7
    %v4049 = vsub.s32 %v4046, %v4048
    %v4050 = vrot.slane %v4042, %v4049
    %v4052 = vunpack.c.l.s4 1983009808
    %v4053 = vunpack.c.0.s8 %v4052
    %v4054 = vlaneseq
    %v4055 = vshrl.u32 %v4054, 7
    %v4056 = vsub.s32 %v4053, %v4055
    %v4057 = vrot.slane %v4043, %v4056
    %v4058 = vcombine.low %v4002, %v4018
    %v4059 = vcombine.high %v4002, %v4018
    %v4061 = vunpack.c.l.s4 1934713408
    %v4062 = vunpack.c.0.s8 %v4061
    %v4063 = vlaneseq
    %v4064 = vshrl.u32 %v4063, 7
    %v4065 = vsub.s32 %v4062, %v4064
    %v4066 = vrot.slane %v4058, %v4065
    %v4068 = vunpack.c.l.s4 1934713408
    %v4069 = vunpack.c.0.s8 %v4068
    %v4070 = vlaneseq
    %v4071 = vshrl.u32 %v4070, 7
    %v4072 = vsub.s32 %v4069, %v4071
    %v4073 = vrot.slane %v4059, %v4072
    %v4074 = vcombine.low %v4009, %v4025
    %v4075 = vcombine.high %v4009, %v4025
    %v4077 = vunpack.c.l.s4 1934713408
    %v4078 = vunpack.c.0.s8 %v4077
    %v4079 = vlaneseq
    %v4080 = vshrl.u32 %v4079, 7
    %v4081 = vsub.s32 %v4078, %v4080
    %v4082 = vrot.slane %v4074, %v4081
    %v4084 = vunpack.c.l.s4 1934713408
    %v4085 = vunpack.c.0.s8 %v4084
    %v4086 = vlaneseq
    %v4087 = vshrl.u32 %v4086, 7
    %v4088 = vsub.s32 %v4085, %v4087
    %v4089 = vrot.slane %v4075, %v4088
    %v4090 = vcombine.low %v4034, %v4050
    %v4091 = vcombine.high %v4034, %v4050
    %v4093 = vunpack.c.l.s4 1934713408
    %v4094 = vunpack.c.0.s8 %v4093
    %v4095 = vlaneseq
    %v4096 = vshrl.u32 %v4095, 7
    %v4097 = vsub.s32 %v4094, %v4096
    %v4098 = vrot.slane %v4090, %v4097
    %v4100 = vunpack.c.l.s4 1934713408
    %v4101 = vunpack.c.0.s8 %v4100
    %v4102 = vlaneseq
    %v4103 = vshrl.u32 %v4102, 7
    %v4104 = vsub.s32 %v4101, %v4103
    %v4105 = vrot.slane %v4091, %v4104
    %v4106 = vcombine.low %v4041, %v4057
    %v4107 = vcombine.high %v4041, %v4057
    %v4109 = vunpack.c.l.s4 1934713408
    %v4110 = vunpack.c.0.s8 %v4109
    %v4111 = vlaneseq
    %v4112 = vshrl.u32 %v4111, 7
    %v4113 = vsub.s32 %v4110, %v4112
    %v4114 = vrot.slane %v4106, %v4113
    %v4116 = vunpack.c.l.s4 1934713408
    %v4117 = vunpack.c.0.s8 %v4116
    %v4118 = vlaneseq
    %v4119 = vshrl.u32 %v4118, 7
    %v4120 = vsub.s32 %v4117, %v4119
    %v4121 = vrot.slane %v4107, %v4120
    %v4122 = vcombine.low %v4066, %v4098
    %v4123 = vcombine.high %v4066, %v4098
    %v4124 = vcombine.low %v4073, %v4105
    %v4125 = vcombine.high %v4073, %v4105
    %v4126 = vcombine.low %v4082, %v4114
    %v4127 = vcombine.high %v4082, %v4114
    %v4128 = vcombine.low %v4089, %v4121
    %v4129 = vcombine.high %v4089, %v4121
    %v4130 = vcombine.low %v1084, %v1092
    %v4131 = vcombine.high %v1084, %v1092
    %v4133 = vunpack.c.l.s4 1983009808
    %v4134 = vunpack.c.0.s8 %v4133
    %v4135 = vlaneseq
    %v4136 = vshrl.u32 %v4135, 7
    %v4137 = vsub.s32 %v4134, %v4136
    %v4138 = vrot.slane %v4130, %v4137
    %v4140 = vunpack.c.l.s4 1983009808
    %v4141 = vunpack.c.0.s8 %v4140
    %v4142 = vlaneseq
    %v4143 = vshrl.u32 %v4142, 7
    %v4144 = vsub.s32 %v4141, %v4143
    %v4145 = vrot.slane %v4131, %v4144
    %v4146 = vcombine.low %v1088, %v1096
    %v4147 = vcombine.high %v1088, %v1096
    %v4149 = vunpack.c.l.s4 1983009808
    %v4150 = vunpack.c.0.s8 %v4149
    %v4151 = vlaneseq
    %v4152 = vshrl.u32 %v4151, 7
    %v4153 = vsub.s32 %v4150, %v4152
    %v4154 = vrot.slane %v4146, %v4153
    %v4156 = vunpack.c.l.s4 1983009808
    %v4157 = vunpack.c.0.s8 %v4156
    %v4158 = vlaneseq
    %v4159 = vshrl.u32 %v4158, 7
    %v4160 = vsub.s32 %v4157, %v4159
    %v4161 = vrot.slane %v4147, %v4160
    %v4162 = vcombine.low %v1100, %v1108
    %v4163 = vcombine.high %v1100, %v1108
    %v4165 = vunpack.c.l.s4 1983009808
    %v4166 = vunpack.c.0.s8 %v4165
    %v4167 = vlaneseq
    %v4168 = vshrl.u32 %v4167, 7
    %v4169 = vsub.s32 %v4166, %v4168
    %v4170 = vrot.slane %v4162, %v4169
    %v4172 = vunpack.c.l.s4 1983009808
    %v4173 = vunpack.c.0.s8 %v4172
    %v4174 = vlaneseq
    %v4175 = vshrl.u32 %v4174, 7
    %v4176 = vsub.s32 %v4173, %v4175
    %v4177 = vrot.slane %v4163, %v4176
    %v4178 = vcombine.low %v1104, %v1112
    %v4179 = vcombine.high %v1104, %v1112
    %v4181 = vunpack.c.l.s4 1983009808
    %v4182 = vunpack.c.0.s8 %v4181
    %v4183 = vlaneseq
    %v4184 = vshrl.u32 %v4183, 7
    %v4185 = vsub.s32 %v4182, %v4184
    %v4186 = vrot.slane %v4178, %v4185
    %v4188 = vunpack.c.l.s4 1983009808
    %v4189 = vunpack.c.0.s8 %v4188
    %v4190 = vlaneseq
    %v4191 = vshrl.u32 %v4190, 7
    %v4192 = vsub.s32 %v4189, %v4191
    %v4193 = vrot.slane %v4179, %v4192
    %v4194 = vcombine.low %v4138, %v4154
    %v4195 = vcombine.high %v4138, %v4154
    %v4197 = vunpack.c.l.s4 1934713408
    %v4198 = vunpack.c.0.s8 %v4197
    %v4199 = vlaneseq
    %v4200 = vshrl.u32 %v4199, 7
    %v4201 = vsub.s32 %v4198, %v4200
    %v4202 = vrot.slane %v4194, %v4201
    %v4204 = vunpack.c.l.s4 1934713408
    %v4205 = vunpack.c.0.s8 %v4204
    %v4206 = vlaneseq
    %v4207 = vshrl.u32 %v4206, 7
    %v4208 = vsub.s32 %v4205, %v4207
    %v4209 = vrot.slane %v4195, %v4208
    %v4210 = vcombine.low %v4145, %v4161
    %v4211 = vcombine.high %v4145, %v4161
    %v4213 = vunpack.c.l.s4 1934713408
    %v4214 = vunpack.c.0.s8 %v4213
    %v4215 = vlaneseq
    %v4216 = vshrl.u32 %v4215, 7
    %v4217 = vsub.s32 %v4214, %v4216
    %v4218 = vrot.slane %v4210, %v4217
    %v4220 = vunpack.c.l.s4 1934713408
    %v4221 = vunpack.c.0.s8 %v4220
    %v4222 = vlaneseq
    %v4223 = vshrl.u32 %v4222, 7
    %v4224 = vsub.s32 %v4221, %v4223
    %v4225 = vrot.slane %v4211, %v4224
    %v4226 = vcombine.low %v4170, %v4186
    %v4227 = vcombine.high %v4170, %v4186
    %v4229 = vunpack.c.l.s4 1934713408
    %v4230 = vunpack.c.0.s8 %v4229
    %v4231 = vlaneseq
    %v4232 = vshrl.u32 %v4231, 7
    %v4233 = vsub.s32 %v4230, %v4232
    %v4234 = vrot.slane %v4226, %v4233
    %v4236 = vunpack.c.l.s4 1934713408
    %v4237 = vunpack.c.0.s8 %v4236
    %v4238 = vlaneseq
    %v4239 = vshrl.u32 %v4238, 7
    %v4240 = vsub.s32 %v4237, %v4239
    %v4241 = vrot.slane %v4227, %v4240
    %v4242 = vcombine.low %v4177, %v4193
    %v4243 = vcombine.high %v4177, %v4193
    %v4245 = vunpack.c.l.s4 1934713408
    %v4246 = vunpack.c.0.s8 %v4245
    %v4247 = vlaneseq
    %v4248 = vshrl.u32 %v4247, 7
    %v4249 = vsub.s32 %v4246, %v4248
    %v4250 = vrot.slane %v4242, %v4249
    %v4252 = vunpack.c.l.s4 1934713408
    %v4253 = vunpack.c.0.s8 %v4252
    %v4254 = vlaneseq
    %v4255 = vshrl.u32 %v4254, 7
    %v4256 = vsub.s32 %v4253, %v4255
    %v4257 = vrot.slane %v4243, %v4256
    %v4258 = vcombine.low %v4202, %v4234
    %v4259 = vcombine.high %v4202, %v4234
    %v4260 = vcombine.low %v4209, %v4241
    %v4261 = vcombine.high %v4209, %v4241
    %v4262 = vcombine.low %v4218, %v4250
    %v4263 = vcombine.high %v4218, %v4250
    %v4264 = vcombine.low %v4225, %v4257
    %v4265 = vcombine.high %v4225, %v4257
    %v4266 = vcombine.low %v1116, %v1124
    %v4267 = vcombine.high %v1116, %v1124
    %v4269 = vunpack.c.l.s4 1983009808
    %v4270 = vunpack.c.0.s8 %v4269
    %v4271 = vlaneseq
    %v4272 = vshrl.u32 %v4271, 7
    %v4273 = vsub.s32 %v4270, %v4272
    %v4274 = vrot.slane %v4266, %v4273
    %v4276 = vunpack.c.l.s4 1983009808
    %v4277 = vunpack.c.0.s8 %v4276
    %v4278 = vlaneseq
    %v4279 = vshrl.u32 %v4278, 7
    %v4280 = vsub.s32 %v4277, %v4279
    %v4281 = vrot.slane %v4267, %v4280
    %v4282 = vcombine.low %v1120, %v1128
    %v4283 = vcombine.high %v1120, %v1128
    %v4285 = vunpack.c.l.s4 1983009808
    %v4286 = vunpack.c.0.s8 %v4285
    %v4287 = vlaneseq
    %v4288 = vshrl.u32 %v4287, 7
    %v4289 = vsub.s32 %v4286, %v4288
    %v4290 = vrot.slane %v4282, %v4289
    %v4292 = vunpack.c.l.s4 1983009808
    %v4293 = vunpack.c.0.s8 %v4292
    %v4294 = vlaneseq
    %v4295 = vshrl.u32 %v4294, 7
    %v4296 = vsub.s32 %v4293, %v4295
    %v4297 = vrot.slane %v4283, %v4296
    %v4298 = vcombine.low %v1132, %v1140
    %v4299 = vcombine.high %v1132, %v1140
    %v4301 = vunpack.c.l.s4 1983009808
    %v4302 = vunpack.c.0.s8 %v4301
    %v4303 = vlaneseq
    %v4304 = vshrl.u32 %v4303, 7
    %v4305 = vsub.s32 %v4302, %v4304
    %v4306 = vrot.slane %v4298, %v4305
    %v4308 = vunpack.c.l.s4 1983009808
    %v4309 = vunpack.c.0.s8 %v4308
    %v4310 = vlaneseq
    %v4311 = vshrl.u32 %v4310, 7
    %v4312 = vsub.s32 %v4309, %v4311
    %v4313 = vrot.slane %v4299, %v4312
    %v4314 = vcombine.low %v1136, %v1144
    %v4315 = vcombine.high %v1136, %v1144
    %v4317 = vunpack.c.l.s4 1983009808
    %v4318 = vunpack.c.0.s8 %v4317
    %v4319 = vlaneseq
    %v4320 = vshrl.u32 %v4319, 7
    %v4321 = vsub.s32 %v4318, %v4320
    %v4322 = vrot.slane %v4314, %v4321
    %v4324 = vunpack.c.l.s4 1983009808
    %v4325 = vunpack.c.0.s8 %v4324
    %v4326 = vlaneseq
    %v4327 = vshrl.u32 %v4326, 7
    %v4328 = vsub.s32 %v4325, %v4327
    %v4329 = vrot.slane %v4315, %v4328
    %v4330 = vcombine.low %v4274, %v4290
    %v4331 = vcombine.high %v4274, %v4290
    %v4333 = vunpack.c.l.s4 1934713408
    %v4334 = vunpack.c.0.s8 %v4333
    %v4335 = vlaneseq
    %v4336 = vshrl.u32 %v4335, 7
    %v4337 = vsub.s32 %v4334, %v4336
    %v4338 = vrot.slane %v4330, %v4337
    %v4340 = vunpack.c.l.s4 1934713408
    %v4341 = vunpack.c.0.s8 %v4340
    %v4342 = vlaneseq
    %v4343 = vshrl.u32 %v4342, 7
    %v4344 = vsub.s32 %v4341, %v4343
    %v4345 = vrot.slane %v4331, %v4344
    %v4346 = vcombine.low %v4281, %v4297
    %v4347 = vcombine.high %v4281, %v4297
    %v4349 = vunpack.c.l.s4 1934713408
    %v4350 = vunpack.c.0.s8 %v4349
    %v4351 = vlaneseq
    %v4352 = vshrl.u32 %v4351, 7
    %v4353 = vsub.s32 %v4350, %v4352
    %v4354 = vrot.slane %v4346, %v4353
    %v4356 = vunpack.c.l.s4 1934713408
    %v4357 = vunpack.c.0.s8 %v4356
    %v4358 = vlaneseq
    %v4359 = vshrl.u32 %v4358, 7
    %v4360 = vsub.s32 %v4357, %v4359
    %v4361 = vrot.slane %v4347, %v4360
    %v4362 = vcombine.low %v4306, %v4322
    %v4363 = vcombine.high %v4306, %v4322
    %v4365 = vunpack.c.l.s4 1934713408
    %v4366 = vunpack.c.0.s8 %v4365
    %v4367 = vlaneseq
    %v4368 = vshrl.u32 %v4367, 7
    %v4369 = vsub.s32 %v4366, %v4368
    %v4370 = vrot.slane %v4362, %v4369
    %v4372 = vunpack.c.l.s4 1934713408
    %v4373 = vunpack.c.0.s8 %v4372
    %v4374 = vlaneseq
    %v4375 = vshrl.u32 %v4374, 7
    %v4376 = vsub.s32 %v4373, %v4375
    %v4377 = vrot.slane %v4363, %v4376
    %v4378 = vcombine.low %v4313, %v4329
    %v4379 = vcombine.high %v4313, %v4329
    %v4381 = vunpack.c.l.s4 1934713408
    %v4382 = vunpack.c.0.s8 %v4381
    %v4383 = vlaneseq
    %v4384 = vshrl.u32 %v4383, 7
    %v4385 = vsub.s32 %v4382, %v4384
    %v4386 = vrot.slane %v4378, %v4385
    %v4388 = vunpack.c.l.s4 1934713408
    %v4389 = vunpack.c.0.s8 %v4388
    %v4390 = vlaneseq
    %v4391 = vshrl.u32 %v4390, 7
    %v4392 = vsub.s32 %v4389, %v4391
    %v4393 = vrot.slane %v4379, %v4392
    %v4394 = vcombine.low %v4338, %v4370
    %v4395 = vcombine.high %v4338, %v4370
    %v4396 = vcombine.low %v4345, %v4377
    %v4397 = vcombine.high %v4345, %v4377
    %v4398 = vcombine.low %v4354, %v4386
    %v4399 = vcombine.high %v4354, %v4386
    %v4400 = vcombine.low %v4361, %v4393
    %v4401 = vcombine.high %v4361, %v4393
    %v4402 = vcombine.low %v1148, %v1156
    %v4403 = vcombine.high %v1148, %v1156
    %v4405 = vunpack.c.l.s4 1983009808
    %v4406 = vunpack.c.0.s8 %v4405
    %v4407 = vlaneseq
    %v4408 = vshrl.u32 %v4407, 7
    %v4409 = vsub.s32 %v4406, %v4408
    %v4410 = vrot.slane %v4402, %v4409
    %v4412 = vunpack.c.l.s4 1983009808
    %v4413 = vunpack.c.0.s8 %v4412
    %v4414 = vlaneseq
    %v4415 = vshrl.u32 %v4414, 7
    %v4416 = vsub.s32 %v4413, %v4415
    %v4417 = vrot.slane %v4403, %v4416
    %v4418 = vcombine.low %v1152, %v1160
    %v4419 = vcombine.high %v1152, %v1160
    %v4421 = vunpack.c.l.s4 1983009808
    %v4422 = vunpack.c.0.s8 %v4421
    %v4423 = vlaneseq
    %v4424 = vshrl.u32 %v4423, 7
    %v4425 = vsub.s32 %v4422, %v4424
    %v4426 = vrot.slane %v4418, %v4425
    %v4428 = vunpack.c.l.s4 1983009808
    %v4429 = vunpack.c.0.s8 %v4428
    %v4430 = vlaneseq
    %v4431 = vshrl.u32 %v4430, 7
    %v4432 = vsub.s32 %v4429, %v4431
    %v4433 = vrot.slane %v4419, %v4432
    %v4434 = vcombine.low %v1164, %v1172
    %v4435 = vcombine.high %v1164, %v1172
    %v4437 = vunpack.c.l.s4 1983009808
    %v4438 = vunpack.c.0.s8 %v4437
    %v4439 = vlaneseq
    %v4440 = vshrl.u32 %v4439, 7
    %v4441 = vsub.s32 %v4438, %v4440
    %v4442 = vrot.slane %v4434, %v4441
    %v4444 = vunpack.c.l.s4 1983009808
    %v4445 = vunpack.c.0.s8 %v4444
    %v4446 = vlaneseq
    %v4447 = vshrl.u32 %v4446, 7
    %v4448 = vsub.s32 %v4445, %v4447
    %v4449 = vrot.slane %v4435, %v4448
    %v4450 = vcombine.low %v1168, %v1176
    %v4451 = vcombine.high %v1168, %v1176
    %v4453 = vunpack.c.l.s4 1983009808
    %v4454 = vunpack.c.0.s8 %v4453
    %v4455 = vlaneseq
    %v4456 = vshrl.u32 %v4455, 7
    %v4457 = vsub.s32 %v4454, %v4456
    %v4458 = vrot.slane %v4450, %v4457
    %v4460 = vunpack.c.l.s4 1983009808
    %v4461 = vunpack.c.0.s8 %v4460
    %v4462 = vlaneseq
    %v4463 = vshrl.u32 %v4462, 7
    %v4464 = vsub.s32 %v4461, %v4463
    %v4465 = vrot.slane %v4451, %v4464
    %v4466 = vcombine.low %v4410, %v4426
    %v4467 = vcombine.high %v4410, %v4426
    %v4469 = vunpack.c.l.s4 1934713408
    %v4470 = vunpack.c.0.s8 %v4469
    %v4471 = vlaneseq
    %v4472 = vshrl.u32 %v4471, 7
    %v4473 = vsub.s32 %v4470, %v4472
    %v4474 = vrot.slane %v4466, %v4473
    %v4476 = vunpack.c.l.s4 1934713408
    %v4477 = vunpack.c.0.s8 %v4476
    %v4478 = vlaneseq
    %v4479 = vshrl.u32 %v4478, 7
    %v4480 = vsub.s32 %v4477, %v4479
    %v4481 = vrot.slane %v4467, %v4480
    %v4482 = vcombine.low %v4417, %v4433
    %v4483 = vcombine.high %v4417, %v4433
    %v4485 = vunpack.c.l.s4 1934713408
    %v4486 = vunpack.c.0.s8 %v4485
    %v4487 = vlaneseq
    %v4488 = vshrl.u32 %v4487, 7
    %v4489 = vsub.s32 %v4486, %v4488
    %v4490 = vrot.slane %v4482, %v4489
    %v4492 = vunpack.c.l.s4 1934713408
    %v4493 = vunpack.c.0.s8 %v4492
    %v4494 = vlaneseq
    %v4495 = vshrl.u32 %v4494, 7
    %v4496 = vsub.s32 %v4493, %v4495
    %v4497 = vrot.slane %v4483, %v4496
    %v4498 = vcombine.low %v4442, %v4458
    %v4499 = vcombine.high %v4442, %v4458
    %v4501 = vunpack.c.l.s4 1934713408
    %v4502 = vunpack.c.0.s8 %v4501
    %v4503 = vlaneseq
    %v4504 = vshrl.u32 %v4503, 7
    %v4505 = vsub.s32 %v4502, %v4504
    %v4506 = vrot.slane %v4498, %v4505
    %v4508 = vunpack.c.l.s4 1934713408
    %v4509 = vunpack.c.0.s8 %v4508
    %v4510 = vlaneseq
    %v4511 = vshrl.u32 %v4510, 7
    %v4512 = vsub.s32 %v4509, %v4511
    %v4513 = vrot.slane %v4499, %v4512
    %v4514 = vcombine.low %v4449, %v4465
    %v4515 = vcombine.high %v4449, %v4465
    %v4517 = vunpack.c.l.s4 1934713408
    %v4518 = vunpack.c.0.s8 %v4517
    %v4519 = vlaneseq
    %v4520 = vshrl.u32 %v4519, 7
    %v4521 = vsub.s32 %v4518, %v4520
    %v4522 = vrot.slane %v4514, %v4521
    %v4524 = vunpack.c.l.s4 1934713408
    %v4525 = vunpack.c.0.s8 %v4524
    %v4526 = vlaneseq
    %v4527 = vshrl.u32 %v4526, 7
    %v4528 = vsub.s32 %v4525, %v4527
    %v4529 = vrot.slane %v4515, %v4528
    %v4530 = vcombine.low %v4474, %v4506
    %v4531 = vcombine.high %v4474, %v4506
    %v4532 = vcombine.low %v4481, %v4513
    %v4533 = vcombine.high %v4481, %v4513
    %v4534 = vcombine.low %v4490, %v4522
    %v4535 = vcombine.high %v4490, %v4522
    %v4536 = vcombine.low %v4497, %v4529
    %v4537 = vcombine.high %v4497, %v4529
    %v4538 = vcombine.low %v1180, %v1188
    %v4539 = vcombine.high %v1180, %v1188
    %v4541 = vunpack.c.l.s4 1983009808
    %v4542 = vunpack.c.0.s8 %v4541
    %v4543 = vlaneseq
    %v4544 = vshrl.u32 %v4543, 7
    %v4545 = vsub.s32 %v4542, %v4544
    %v4546 = vrot.slane %v4538, %v4545
    %v4548 = vunpack.c.l.s4 1983009808
    %v4549 = vunpack.c.0.s8 %v4548
    %v4550 = vlaneseq
    %v4551 = vshrl.u32 %v4550, 7
    %v4552 = vsub.s32 %v4549, %v4551
    %v4553 = vrot.slane %v4539, %v4552
    %v4554 = vcombine.low %v1184, %v1192
    %v4555 = vcombine.high %v1184, %v1192
    %v4557 = vunpack.c.l.s4 1983009808
    %v4558 = vunpack.c.0.s8 %v4557
    %v4559 = vlaneseq
    %v4560 = vshrl.u32 %v4559, 7
    %v4561 = vsub.s32 %v4558, %v4560
    %v4562 = vrot.slane %v4554, %v4561
    %v4564 = vunpack.c.l.s4 1983009808
    %v4565 = vunpack.c.0.s8 %v4564
    %v4566 = vlaneseq
    %v4567 = vshrl.u32 %v4566, 7
    %v4568 = vsub.s32 %v4565, %v4567
    %v4569 = vrot.slane %v4555, %v4568
    %v4570 = vcombine.low %v1196, %v1204
    %v4571 = vcombine.high %v1196, %v1204
    %v4573 = vunpack.c.l.s4 1983009808
    %v4574 = vunpack.c.0.s8 %v4573
    %v4575 = vlaneseq
    %v4576 = vshrl.u32 %v4575, 7
    %v4577 = vsub.s32 %v4574, %v4576
    %v4578 = vrot.slane %v4570, %v4577
    %v4580 = vunpack.c.l.s4 1983009808
    %v4581 = vunpack.c.0.s8 %v4580
    %v4582 = vlaneseq
    %v4583 = vshrl.u32 %v4582, 7
    %v4584 = vsub.s32 %v4581, %v4583
    %v4585 = vrot.slane %v4571, %v4584
    %v4586 = vcombine.low %v1200, %v1208
    %v4587 = vcombine.high %v1200, %v1208
    %v4589 = vunpack.c.l.s4 1983009808
    %v4590 = vunpack.c.0.s8 %v4589
    %v4591 = vlaneseq
    %v4592 = vshrl.u32 %v4591, 7
    %v4593 = vsub.s32 %v4590, %v4592
    %v4594 = vrot.slane %v4586, %v4593
    %v4596 = vunpack.c.l.s4 1983009808
    %v4597 = vunpack.c.0.s8 %v4596
    %v4598 = vlaneseq
    %v4599 = vshrl.u32 %v4598, 7
    %v4600 = vsub.s32 %v4597, %v4599
    %v4601 = vrot.slane %v4587, %v4600
    %v4602 = vcombine.low %v4546, %v4562
    %v4603 = vcombine.high %v4546, %v4562
    %v4605 = vunpack.c.l.s4 1934713408
    %v4606 = vunpack.c.0.s8 %v4605
    %v4607 = vlaneseq
    %v4608 = vshrl.u32 %v4607, 7
    %v4609 = vsub.s32 %v4606, %v4608
    %v4610 = vrot.slane %v4602, %v4609
    %v4612 = vunpack.c.l.s4 1934713408
    %v4613 = vunpack.c.0.s8 %v4612
    %v4614 = vlaneseq
    %v4615 = vshrl.u32 %v4614, 7
    %v4616 = vsub.s32 %v4613, %v4615
    %v4617 = vrot.slane %v4603, %v4616
    %v4618 = vcombine.low %v4553, %v4569
    %v4619 = vcombine.high %v4553, %v4569
    %v4621 = vunpack.c.l.s4 1934713408
    %v4622 = vunpack.c.0.s8 %v4621
    %v4623 = vlaneseq
    %v4624 = vshrl.u32 %v4623, 7
    %v4625 = vsub.s32 %v4622, %v4624
    %v4626 = vrot.slane %v4618, %v4625
    %v4628 = vunpack.c.l.s4 1934713408
    %v4629 = vunpack.c.0.s8 %v4628
    %v4630 = vlaneseq
    %v4631 = vshrl.u32 %v4630, 7
    %v4632 = vsub.s32 %v4629, %v4631
    %v4633 = vrot.slane %v4619, %v4632
    %v4634 = vcombine.low %v4578, %v4594
    %v4635 = vcombine.high %v4578, %v4594
    %v4637 = vunpack.c.l.s4 1934713408
    %v4638 = vunpack.c.0.s8 %v4637
    %v4639 = vlaneseq
    %v4640 = vshrl.u32 %v4639, 7
    %v4641 = vsub.s32 %v4638, %v4640
    %v4642 = vrot.slane %v4634, %v4641
    %v4644 = vunpack.c.l.s4 1934713408
    %v4645 = vunpack.c.0.s8 %v4644
    %v4646 = vlaneseq
    %v4647 = vshrl.u32 %v4646, 7
    %v4648 = vsub.s32 %v4645, %v4647
    %v4649 = vrot.slane %v4635, %v4648
    %v4650 = vcombine.low %v4585, %v4601
    %v4651 = vcombine.high %v4585, %v4601
    %v4653 = vunpack.c.l.s4 1934713408
    %v4654 = vunpack.c.0.s8 %v4653
    %v4655 = vlaneseq
    %v4656 = vshrl.u32 %v4655, 7
    %v4657 = vsub.s32 %v4654, %v4656
    %v4658 = vrot.slane %v4650, %v4657
    %v4660 = vunpack.c.l.s4 1934713408
    %v4661 = vunpack.c.0.s8 %v4660
    %v4662 = vlaneseq
    %v4663 = vshrl.u32 %v4662, 7
    %v4664 = vsub.s32 %v4661, %v4663
    %v4665 = vrot.slane %v4651, %v4664
    %v4666 = vcombine.low %v4610, %v4642
    %v4667 = vcombine.high %v4610, %v4642
    %v4668 = vcombine.low %v4617, %v4649
    %v4669 = vcombine.high %v4617, %v4649
    %v4670 = vcombine.low %v4626, %v4658
    %v4671 = vcombine.high %v4626, %v4658
    %v4672 = vcombine.low %v4633, %v4665
    %v4673 = vcombine.high %v4633, %v4665
    %v4674 = vcombine.low %v1212, %v1220
    %v4675 = vcombine.high %v1212, %v1220
    %v4677 = vunpack.c.l.s4 1983009808
    %v4678 = vunpack.c.0.s8 %v4677
    %v4679 = vlaneseq
    %v4680 = vshrl.u32 %v4679, 7
    %v4681 = vsub.s32 %v4678, %v4680
    %v4682 = vrot.slane %v4674, %v4681
    %v4684 = vunpack.c.l.s4 1983009808
    %v4685 = vunpack.c.0.s8 %v4684
    %v4686 = vlaneseq
    %v4687 = vshrl.u32 %v4686, 7
    %v4688 = vsub.s32 %v4685, %v4687
    %v4689 = vrot.slane %v4675, %v4688
    %v4690 = vcombine.low %v1216, %v1224
    %v4691 = vcombine.high %v1216, %v1224
    %v4693 = vunpack.c.l.s4 1983009808
    %v4694 = vunpack.c.0.s8 %v4693
    %v4695 = vlaneseq
    %v4696 = vshrl.u32 %v4695, 7
    %v4697 = vsub.s32 %v4694, %v4696
    %v4698 = vrot.slane %v4690, %v4697
    %v4700 = vunpack.c.l.s4 1983009808
    %v4701 = vunpack.c.0.s8 %v4700
    %v4702 = vlaneseq
    %v4703 = vshrl.u32 %v4702, 7
    %v4704 = vsub.s32 %v4701, %v4703
    %v4705 = vrot.slane %v4691, %v4704
    %v4706 = vcombine.low %v1228, %v1236
    %v4707 = vcombine.high %v1228, %v1236
    %v4709 = vunpack.c.l.s4 1983009808
    %v4710 = vunpack.c.0.s8 %v4709
    %v4711 = vlaneseq
    %v4712 = vshrl.u32 %v4711, 7
    %v4713 = vsub.s32 %v4710, %v4712
    %v4714 = vrot.slane %v4706, %v4713
    %v4716 = vunpack.c.l.s4 1983009808
    %v4717 = vunpack.c.0.s8 %v4716
    %v4718 = vlaneseq
    %v4719 = vshrl.u32 %v4718, 7
    %v4720 = vsub.s32 %v4717, %v4719
    %v4721 = vrot.slane %v4707, %v4720
    %v4722 = vcombine.low %v1232, %v1240
    %v4723 = vcombine.high %v1232, %v1240
    %v4725 = vunpack.c.l.s4 1983009808
    %v4726 = vunpack.c.0.s8 %v4725
    %v4727 = vlaneseq
    %v4728 = vshrl.u32 %v4727, 7
    %v4729 = vsub.s32 %v4726, %v4728
    %v4730 = vrot.slane %v4722, %v4729
    %v4732 = vunpack.c.l.s4 1983009808
    %v4733 = vunpack.c.0.s8 %v4732
    %v4734 = vlaneseq
    %v4735 = vshrl.u32 %v4734, 7
    %v4736 = vsub.s32 %v4733, %v4735
    %v4737 = vrot.slane %v4723, %v4736
    %v4738 = vcombine.low %v4682, %v4698
    %v4739 = vcombine.high %v4682, %v4698
    %v4741 = vunpack.c.l.s4 1934713408
    %v4742 = vunpack.c.0.s8 %v4741
    %v4743 = vlaneseq
    %v4744 = vshrl.u32 %v4743, 7
    %v4745 = vsub.s32 %v4742, %v4744
    %v4746 = vrot.slane %v4738, %v4745
    %v4748 = vunpack.c.l.s4 1934713408
    %v4749 = vunpack.c.0.s8 %v4748
    %v4750 = vlaneseq
    %v4751 = vshrl.u32 %v4750, 7
    %v4752 = vsub.s32 %v4749, %v4751
    %v4753 = vrot.slane %v4739, %v4752
    %v4754 = vcombine.low %v4689, %v4705
    %v4755 = vcombine.high %v4689, %v4705
    %v4757 = vunpack.c.l.s4 1934713408
    %v4758 = vunpack.c.0.s8 %v4757
    %v4759 = vlaneseq
    %v4760 = vshrl.u32 %v4759, 7
    %v4761 = vsub.s32 %v4758, %v4760
    %v4762 = vrot.slane %v4754, %v4761
    %v4764 = vunpack.c.l.s4 1934713408
    %v4765 = vunpack.c.0.s8 %v4764
    %v4766 = vlaneseq
    %v4767 = vshrl.u32 %v4766, 7
    %v4768 = vsub.s32 %v4765, %v4767
    %v4769 = vrot.slane %v4755, %v4768
    %v4770 = vcombine.low %v4714, %v4730
    %v4771 = vcombine.high %v4714, %v4730
    %v4773 = vunpack.c.l.s4 1934713408
    %v4774 = vunpack.c.0.s8 %v4773
    %v4775 = vlaneseq
    %v4776 = vshrl.u32 %v4775, 7
    %v4777 = vsub.s32 %v4774, %v4776
    %v4778 = vrot.slane %v4770, %v4777
    %v4780 = vunpack.c.l.s4 1934713408
    %v4781 = vunpack.c.0.s8 %v4780
    %v4782 = vlaneseq
    %v4783 = vshrl.u32 %v4782, 7
    %v4784 = vsub.s32 %v4781, %v4783
    %v4785 = vrot.slane %v4771, %v4784
    %v4786 = vcombine.low %v4721, %v4737
    %v4787 = vcombine.high %v4721, %v4737
    %v4789 = vunpack.c.l.s4 1934713408
    %v4790 = vunpack.c.0.s8 %v4789
    %v4791 = vlaneseq
    %v4792 = vshrl.u32 %v4791, 7
    %v4793 = vsub.s32 %v4790, %v4792
    %v4794 = vrot.slane %v4786, %v4793
    %v4796 = vunpack.c.l.s4 1934713408
    %v4797 = vunpack.c.0.s8 %v4796
    %v4798 = vlaneseq
    %v4799 = vshrl.u32 %v4798, 7
    %v4800 = vsub.s32 %v4797, %v4799
    %v4801 = vrot.slane %v4787, %v4800
    %v4802 = vcombine.low %v4746, %v4778
    %v4803 = vcombine.high %v4746, %v4778
    %v4804 = vcombine.low %v4753, %v4785
    %v4805 = vcombine.high %v4753, %v4785
    %v4806 = vcombine.low %v4762, %v4794
    %v4807 = vcombine.high %v4762, %v4794
    %v4808 = vcombine.low %v4769, %v4801
    %v4809 = vcombine.high %v4769, %v4801
    %v4810 = vcombine.low %v1244, %v1252
    %v4811 = vcombine.high %v1244, %v1252
    %v4813 = vunpack.c.l.s4 1983009808
    %v4814 = vunpack.c.0.s8 %v4813
    %v4815 = vlaneseq
    %v4816 = vshrl.u32 %v4815, 7
    %v4817 = vsub.s32 %v4814, %v4816
    %v4818 = vrot.slane %v4810, %v4817
    %v4820 = vunpack.c.l.s4 1983009808
    %v4821 = vunpack.c.0.s8 %v4820
    %v4822 = vlaneseq
    %v4823 = vshrl.u32 %v4822, 7
    %v4824 = vsub.s32 %v4821, %v4823
    %v4825 = vrot.slane %v4811, %v4824
    %v4826 = vcombine.low %v1248, %v1256
    %v4827 = vcombine.high %v1248, %v1256
    %v4829 = vunpack.c.l.s4 1983009808
    %v4830 = vunpack.c.0.s8 %v4829
    %v4831 = vlaneseq
    %v4832 = vshrl.u32 %v4831, 7
    %v4833 = vsub.s32 %v4830, %v4832
    %v4834 = vrot.slane %v4826, %v4833
    %v4836 = vunpack.c.l.s4 1983009808
    %v4837 = vunpack.c.0.s8 %v4836
    %v4838 = vlaneseq
    %v4839 = vshrl.u32 %v4838, 7
    %v4840 = vsub.s32 %v4837, %v4839
    %v4841 = vrot.slane %v4827, %v4840
    %v4842 = vcombine.low %v1260, %v1268
    %v4843 = vcombine.high %v1260, %v1268
    %v4845 = vunpack.c.l.s4 1983009808
    %v4846 = vunpack.c.0.s8 %v4845
    %v4847 = vlaneseq
    %v4848 = vshrl.u32 %v4847, 7
    %v4849 = vsub.s32 %v4846, %v4848
    %v4850 = vrot.slane %v4842, %v4849
    %v4852 = vunpack.c.l.s4 1983009808
    %v4853 = vunpack.c.0.s8 %v4852
    %v4854 = vlaneseq
    %v4855 = vshrl.u32 %v4854, 7
    %v4856 = vsub.s32 %v4853, %v4855
    %v4857 = vrot.slane %v4843, %v4856
    %v4858 = vcombine.low %v1264, %v1272
    %v4859 = vcombine.high %v1264, %v1272
    %v4861 = vunpack.c.l.s4 1983009808
    %v4862 = vunpack.c.0.s8 %v4861
    %v4863 = vlaneseq
    %v4864 = vshrl.u32 %v4863, 7
    %v4865 = vsub.s32 %v4862, %v4864
    %v4866 = vrot.slane %v4858, %v4865
    %v4868 = vunpack.c.l.s4 1983009808
    %v4869 = vunpack.c.0.s8 %v4868
    %v4870 = vlaneseq
    %v4871 = vshrl.u32 %v4870, 7
    %v4872 = vsub.s32 %v4869, %v4871
    %v4873 = vrot.slane %v4859, %v4872
    %v4874 = vcombine.low %v4818, %v4834
    %v4875 = vcombine.high %v4818, %v4834
    %v4877 = vunpack.c.l.s4 1934713408
    %v4878 = vunpack.c.0.s8 %v4877
    %v4879 = vlaneseq
    %v4880 = vshrl.u32 %v4879, 7
    %v4881 = vsub.s32 %v4878, %v4880
    %v4882 = vrot.slane %v4874, %v4881
    %v4884 = vunpack.c.l.s4 1934713408
    %v4885 = vunpack.c.0.s8 %v4884
    %v4886 = vlaneseq
    %v4887 = vshrl.u32 %v4886, 7
    %v4888 = vsub.s32 %v4885, %v4887
    %v4889 = vrot.slane %v4875, %v4888
    %v4890 = vcombine.low %v4825, %v4841
    %v4891 = vcombine.high %v4825, %v4841
    %v4893 = vunpack.c.l.s4 1934713408
    %v4894 = vunpack.c.0.s8 %v4893
    %v4895 = vlaneseq
    %v4896 = vshrl.u32 %v4895, 7
    %v4897 = vsub.s32 %v4894, %v4896
    %v4898 = vrot.slane %v4890, %v4897
    %v4900 = vunpack.c.l.s4 1934713408
    %v4901 = vunpack.c.0.s8 %v4900
    %v4902 = vlaneseq
    %v4903 = vshrl.u32 %v4902, 7
    %v4904 = vsub.s32 %v4901, %v4903
    %v4905 = vrot.slane %v4891, %v4904
    %v4906 = vcombine.low %v4850, %v4866
    %v4907 = vcombine.high %v4850, %v4866
    %v4909 = vunpack.c.l.s4 1934713408
    %v4910 = vunpack.c.0.s8 %v4909
    %v4911 = vlaneseq
    %v4912 = vshrl.u32 %v4911, 7
    %v4913 = vsub.s32 %v4910, %v4912
    %v4914 = vrot.slane %v4906, %v4913
    %v4916 = vunpack.c.l.s4 1934713408
    %v4917 = vunpack.c.0.s8 %v4916
    %v4918 = vlaneseq
    %v4919 = vshrl.u32 %v4918, 7
    %v4920 = vsub.s32 %v4917, %v4919
    %v4921 = vrot.slane %v4907, %v4920
    %v4922 = vcombine.low %v4857, %v4873
    %v4923 = vcombine.high %v4857, %v4873
    %v4925 = vunpack.c.l.s4 1934713408
    %v4926 = vunpack.c.0.s8 %v4925
    %v4927 = vlaneseq
    %v4928 = vshrl.u32 %v4927, 7
    %v4929 = vsub.s32 %v4926, %v4928
    %v4930 = vrot.slane %v4922, %v4929
    %v4932 = vunpack.c.l.s4 1934713408
    %v4933 = vunpack.c.0.s8 %v4932
    %v4934 = vlaneseq
    %v4935 = vshrl.u32 %v4934, 7
    %v4936 = vsub.s32 %v4933, %v4935
    %v4937 = vrot.slane %v4923, %v4936
    %v4938 = vcombine.low %v4882, %v4914
    %v4939 = vcombine.high %v4882, %v4914
    %v4940 = vcombine.low %v4889, %v4921
    %v4941 = vcombine.high %v4889, %v4921
    %v4942 = vcombine.low %v4898, %v4930
    %v4943 = vcombine.high %v4898, %v4930
    %v4944 = vcombine.low %v4905, %v4937
    %v4945 = vcombine.high %v4905, %v4937
    %v4946 = vcombine.low %v989, %v997
    %v4947 = vcombine.high %v989, %v997
    %v4949 = vunpack.c.l.s4 1983009808
    %v4950 = vunpack.c.0.s8 %v4949
    %v4951 = vlaneseq
    %v4952 = vshrl.u32 %v4951, 7
    %v4953 = vsub.s32 %v4950, %v4952
    %v4954 = vrot.slane %v4946, %v4953
    %v4956 = vunpack.c.l.s4 1983009808
    %v4957 = vunpack.c.0.s8 %v4956
    %v4958 = vlaneseq
    %v4959 = vshrl.u32 %v4958, 7
    %v4960 = vsub.s32 %v4957, %v4959
    %v4961 = vrot.slane %v4947, %v4960
    %v4962 = vcombine.low %v993, %v1001
    %v4963 = vcombine.high %v993, %v1001
    %v4965 = vunpack.c.l.s4 1983009808
    %v4966 = vunpack.c.0.s8 %v4965
    %v4967 = vlaneseq
    %v4968 = vshrl.u32 %v4967, 7
    %v4969 = vsub.s32 %v4966, %v4968
    %v4970 = vrot.slane %v4962, %v4969
    %v4972 = vunpack.c.l.s4 1983009808
    %v4973 = vunpack.c.0.s8 %v4972
    %v4974 = vlaneseq
    %v4975 = vshrl.u32 %v4974, 7
    %v4976 = vsub.s32 %v4973, %v4975
    %v4977 = vrot.slane %v4963, %v4976
    %v4978 = vcombine.low %v1005, %v1013
    %v4979 = vcombine.high %v1005, %v1013
    %v4981 = vunpack.c.l.s4 1983009808
    %v4982 = vunpack.c.0.s8 %v4981
    %v4983 = vlaneseq
    %v4984 = vshrl.u32 %v4983, 7
    %v4985 = vsub.s32 %v4982, %v4984
    %v4986 = vrot.slane %v4978, %v4985
    %v4988 = vunpack.c.l.s4 1983009808
    %v4989 = vunpack.c.0.s8 %v4988
    %v4990 = vlaneseq
    %v4991 = vshrl.u32 %v4990, 7
    %v4992 = vsub.s32 %v4989, %v4991
    %v4993 = vrot.slane %v4979, %v4992
    %v4994 = vcombine.low %v1009, %v1017
    %v4995 = vcombine.high %v1009, %v1017
    %v4997 = vunpack.c.l.s4 1983009808
    %v4998 = vunpack.c.0.s8 %v4997
    %v4999 = vlaneseq
    %v5000 = vshrl.u32 %v4999, 7
    %v5001 = vsub.s32 %v4998, %v5000
    %v5002 = vrot.slane %v4994, %v5001
    %v5004 = vunpack.c.l.s4 1983009808
    %v5005 = vunpack.c.0.s8 %v5004
    %v5006 = vlaneseq
    %v5007 = vshrl.u32 %v5006, 7
    %v5008 = vsub.s32 %v5005, %v5007
    %v5009 = vrot.slane %v4995, %v5008
    %v5010 = vcombine.low %v4954, %v4970
    %v5011 = vcombine.high %v4954, %v4970
    %v5013 = vunpack.c.l.s4 1934713408
    %v5014 = vunpack.c.0.s8 %v5013
    %v5015 = vlaneseq
    %v5016 = vshrl.u32 %v5015, 7
    %v5017 = vsub.s32 %v5014, %v5016
    %v5018 = vrot.slane %v5010, %v5017
    %v5020 = vunpack.c.l.s4 1934713408
    %v5021 = vunpack.c.0.s8 %v5020
    %v5022 = vlaneseq
    %v5023 = vshrl.u32 %v5022, 7
    %v5024 = vsub.s32 %v5021, %v5023
    %v5025 = vrot.slane %v5011, %v5024
    %v5026 = vcombine.low %v4961, %v4977
    %v5027 = vcombine.high %v4961, %v4977
    %v5029 = vunpack.c.l.s4 1934713408
    %v5030 = vunpack.c.0.s8 %v5029
    %v5031 = vlaneseq
    %v5032 = vshrl.u32 %v5031, 7
    %v5033 = vsub.s32 %v5030, %v5032
    %v5034 = vrot.slane %v5026, %v5033
    %v5036 = vunpack.c.l.s4 1934713408
    %v5037 = vunpack.c.0.s8 %v5036
    %v5038 = vlaneseq
    %v5039 = vshrl.u32 %v5038, 7
    %v5040 = vsub.s32 %v5037, %v5039
    %v5041 = vrot.slane %v5027, %v5040
    %v5042 = vcombine.low %v4986, %v5002
    %v5043 = vcombine.high %v4986, %v5002
    %v5045 = vunpack.c.l.s4 1934713408
    %v5046 = vunpack.c.0.s8 %v5045
    %v5047 = vlaneseq
    %v5048 = vshrl.u32 %v5047, 7
    %v5049 = vsub.s32 %v5046, %v5048
    %v5050 = vrot.slane %v5042, %v5049
    %v5052 = vunpack.c.l.s4 1934713408
    %v5053 = vunpack.c.0.s8 %v5052
    %v5054 = vlaneseq
    %v5055 = vshrl.u32 %v5054, 7
    %v5056 = vsub.s32 %v5053, %v5055
    %v5057 = vrot.slane %v5043, %v5056
    %v5058 = vcombine.low %v4993, %v5009
    %v5059 = vcombine.high %v4993, %v5009
    %v5061 = vunpack.c.l.s4 1934713408
    %v5062 = vunpack.c.0.s8 %v5061
    %v5063 = vlaneseq
    %v5064 = vshrl.u32 %v5063, 7
    %v5065 = vsub.s32 %v5062, %v5064
    %v5066 = vrot.slane %v5058, %v5065
    %v5068 = vunpack.c.l.s4 1934713408
    %v5069 = vunpack.c.0.s8 %v5068
    %v5070 = vlaneseq
    %v5071 = vshrl.u32 %v5070, 7
    %v5072 = vsub.s32 %v5069, %v5071
    %v5073 = vrot.slane %v5059, %v5072
    %v5074 = vcombine.low %v5018, %v5050
    %v5075 = vcombine.high %v5018, %v5050
    %v5076 = vcombine.low %v5025, %v5057
    %v5077 = vcombine.high %v5025, %v5057
    %v5078 = vcombine.low %v5034, %v5066
    %v5079 = vcombine.high %v5034, %v5066
    %v5080 = vcombine.low %v5041, %v5073
    %v5081 = vcombine.high %v5041, %v5073
    %v5082 = vcombine.low %v1021, %v1029
    %v5083 = vcombine.high %v1021, %v1029
    %v5085 = vunpack.c.l.s4 1983009808
    %v5086 = vunpack.c.0.s8 %v5085
    %v5087 = vlaneseq
    %v5088 = vshrl.u32 %v5087, 7
    %v5089 = vsub.s32 %v5086, %v5088
    %v5090 = vrot.slane %v5082, %v5089
    %v5092 = vunpack.c.l.s4 1983009808
    %v5093 = vunpack.c.0.s8 %v5092
    %v5094 = vlaneseq
    %v5095 = vshrl.u32 %v5094, 7
    %v5096 = vsub.s32 %v5093, %v5095
    %v5097 = vrot.slane %v5083, %v5096
    %v5098 = vcombine.low %v1025, %v1033
    %v5099 = vcombine.high %v1025, %v1033
    %v5101 = vunpack.c.l.s4 1983009808
    %v5102 = vunpack.c.0.s8 %v5101
    %v5103 = vlaneseq
    %v5104 = vshrl.u32 %v5103, 7
    %v5105 = vsub.s32 %v5102, %v5104
    %v5106 = vrot.slane %v5098, %v5105
    %v5108 = vunpack.c.l.s4 1983009808
    %v5109 = vunpack.c.0.s8 %v5108
    %v5110 = vlaneseq
    %v5111 = vshrl.u32 %v5110, 7
    %v5112 = vsub.s32 %v5109, %v5111
    %v5113 = vrot.slane %v5099, %v5112
    %v5114 = vcombine.low %v1037, %v1045
    %v5115 = vcombine.high %v1037, %v1045
    %v5117 = vunpack.c.l.s4 1983009808
    %v5118 = vunpack.c.0.s8 %v5117
    %v5119 = vlaneseq
    %v5120 = vshrl.u32 %v5119, 7
    %v5121 = vsub.s32 %v5118, %v5120
    %v5122 = vrot.slane %v5114, %v5121
    %v5124 = vunpack.c.l.s4 1983009808
    %v5125 = vunpack.c.0.s8 %v5124
    %v5126 = vlaneseq
    %v5127 = vshrl.u32 %v5126, 7
    %v5128 = vsub.s32 %v5125, %v5127
    %v5129 = vrot.slane %v5115, %v5128
    %v5130 = vcombine.low %v1041, %v1049
    %v5131 = vcombine.high %v1041, %v1049
    %v5133 = vunpack.c.l.s4 1983009808
    %v5134 = vunpack.c.0.s8 %v5133
    %v5135 = vlaneseq
    %v5136 = vshrl.u32 %v5135, 7
    %v5137 = vsub.s32 %v5134, %v5136
    %v5138 = vrot.slane %v5130, %v5137
    %v5140 = vunpack.c.l.s4 1983009808
    %v5141 = vunpack.c.0.s8 %v5140
    %v5142 = vlaneseq
    %v5143 = vshrl.u32 %v5142, 7
    %v5144 = vsub.s32 %v5141, %v5143
    %v5145 = vrot.slane %v5131, %v5144
    %v5146 = vcombine.low %v5090, %v5106
    %v5147 = vcombine.high %v5090, %v5106
    %v5149 = vunpack.c.l.s4 1934713408
    %v5150 = vunpack.c.0.s8 %v5149
    %v5151 = vlaneseq
    %v5152 = vshrl.u32 %v5151, 7
    %v5153 = vsub.s32 %v5150, %v5152
    %v5154 = vrot.slane %v5146, %v5153
    %v5156 = vunpack.c.l.s4 1934713408
    %v5157 = vunpack.c.0.s8 %v5156
    %v5158 = vlaneseq
    %v5159 = vshrl.u32 %v5158, 7
    %v5160 = vsub.s32 %v5157, %v5159
    %v5161 = vrot.slane %v5147, %v5160
    %v5162 = vcombine.low %v5097, %v5113
    %v5163 = vcombine.high %v5097, %v5113
    %v5165 = vunpack.c.l.s4 1934713408
    %v5166 = vunpack.c.0.s8 %v5165
    %v5167 = vlaneseq
    %v5168 = vshrl.u32 %v5167, 7
    %v5169 = vsub.s32 %v5166, %v5168
    %v5170 = vrot.slane %v5162, %v5169
    %v5172 = vunpack.c.l.s4 1934713408
    %v5173 = vunpack.c.0.s8 %v5172
    %v5174 = vlaneseq
    %v5175 = vshrl.u32 %v5174, 7
    %v5176 = vsub.s32 %v5173, %v5175
    %v5177 = vrot.slane %v5163, %v5176
    %v5178 = vcombine.low %v5122, %v5138
    %v5179 = vcombine.high %v5122, %v5138
    %v5181 = vunpack.c.l.s4 1934713408
    %v5182 = vunpack.c.0.s8 %v5181
    %v5183 = vlaneseq
    %v5184 = vshrl.u32 %v5183, 7
    %v5185 = vsub.s32 %v5182, %v5184
    %v5186 = vrot.slane %v5178, %v5185
    %v5188 = vunpack.c.l.s4 1934713408
    %v5189 = vunpack.c.0.s8 %v5188
    %v5190 = vlaneseq
    %v5191 = vshrl.u32 %v5190, 7
    %v5192 = vsub.s32 %v5189, %v5191
    %v5193 = vrot.slane %v5179, %v5192
    %v5194 = vcombine.low %v5129, %v5145
    %v5195 = vcombine.high %v5129, %v5145
    %v5197 = vunpack.c.l.s4 1934713408
    %v5198 = vunpack.c.0.s8 %v5197
    %v5199 = vlaneseq
    %v5200 = vshrl.u32 %v5199, 7
    %v5201 = vsub.s32 %v5198, %v5200
    %v5202 = vrot.slane %v5194, %v5201
    %v5204 = vunpack.c.l.s4 1934713408
    %v5205 = vunpack.c.0.s8 %v5204
    %v5206 = vlaneseq
    %v5207 = vshrl.u32 %v5206, 7
    %v5208 = vsub.s32 %v5205, %v5207
    %v5209 = vrot.slane %v5195, %v5208
    %v5210 = vcombine.low %v5154, %v5186
    %v5211 = vcombine.high %v5154, %v5186
    %v5212 = vcombine.low %v5161, %v5193
    %v5213 = vcombine.high %v5161, %v5193
    %v5214 = vcombine.low %v5170, %v5202
    %v5215 = vcombine.high %v5170, %v5202
    %v5216 = vcombine.low %v5177, %v5209
    %v5217 = vcombine.high %v5177, %v5209
    %v5218 = vcombine.low %v1053, %v1061
    %v5219 = vcombine.high %v1053, %v1061
    %v5221 = vunpack.c.l.s4 1983009808
    %v5222 = vunpack.c.0.s8 %v5221
    %v5223 = vlaneseq
    %v5224 = vshrl.u32 %v5223, 7
    %v5225 = vsub.s32 %v5222, %v5224
    %v5226 = vrot.slane %v5218, %v5225
    %v5228 = vunpack.c.l.s4 1983009808
    %v5229 = vunpack.c.0.s8 %v5228
    %v5230 = vlaneseq
    %v5231 = vshrl.u32 %v5230, 7
    %v5232 = vsub.s32 %v5229, %v5231
    %v5233 = vrot.slane %v5219, %v5232
    %v5234 = vcombine.low %v1057, %v1065
    %v5235 = vcombine.high %v1057, %v1065
    %v5237 = vunpack.c.l.s4 1983009808
    %v5238 = vunpack.c.0.s8 %v5237
    %v5239 = vlaneseq
    %v5240 = vshrl.u32 %v5239, 7
    %v5241 = vsub.s32 %v5238, %v5240
    %v5242 = vrot.slane %v5234, %v5241
    %v5244 = vunpack.c.l.s4 1983009808
    %v5245 = vunpack.c.0.s8 %v5244
    %v5246 = vlaneseq
    %v5247 = vshrl.u32 %v5246, 7
    %v5248 = vsub.s32 %v5245, %v5247
    %v5249 = vrot.slane %v5235, %v5248
    %v5250 = vcombine.low %v1069, %v1077
    %v5251 = vcombine.high %v1069, %v1077
    %v5253 = vunpack.c.l.s4 1983009808
    %v5254 = vunpack.c.0.s8 %v5253
    %v5255 = vlaneseq
    %v5256 = vshrl.u32 %v5255, 7
    %v5257 = vsub.s32 %v5254, %v5256
    %v5258 = vrot.slane %v5250, %v5257
    %v5260 = vunpack.c.l.s4 1983009808
    %v5261 = vunpack.c.0.s8 %v5260
    %v5262 = vlaneseq
    %v5263 = vshrl.u32 %v5262, 7
    %v5264 = vsub.s32 %v5261, %v5263
    %v5265 = vrot.slane %v5251, %v5264
    %v5266 = vcombine.low %v1073, %v1081
    %v5267 = vcombine.high %v1073, %v1081
    %v5269 = vunpack.c.l.s4 1983009808
    %v5270 = vunpack.c.0.s8 %v5269
    %v5271 = vlaneseq
    %v5272 = vshrl.u32 %v5271, 7
    %v5273 = vsub.s32 %v5270, %v5272
    %v5274 = vrot.slane %v5266, %v5273
    %v5276 = vunpack.c.l.s4 1983009808
    %v5277 = vunpack.c.0.s8 %v5276
    %v5278 = vlaneseq
    %v5279 = vshrl.u32 %v5278, 7
    %v5280 = vsub.s32 %v5277, %v5279
    %v5281 = vrot.slane %v5267, %v5280
    %v5282 = vcombine.low %v5226, %v5242
    %v5283 = vcombine.high %v5226, %v5242
    %v5285 = vunpack.c.l.s4 1934713408
    %v5286 = vunpack.c.0.s8 %v5285
    %v5287 = vlaneseq
    %v5288 = vshrl.u32 %v5287, 7
    %v5289 = vsub.s32 %v5286, %v5288
    %v5290 = vrot.slane %v5282, %v5289
    %v5292 = vunpack.c.l.s4 1934713408
    %v5293 = vunpack.c.0.s8 %v5292
    %v5294 = vlaneseq
    %v5295 = vshrl.u32 %v5294, 7
    %v5296 = vsub.s32 %v5293, %v5295
    %v5297 = vrot.slane %v5283, %v5296
    %v5298 = vcombine.low %v5233, %v5249
    %v5299 = vcombine.high %v5233, %v5249
    %v5301 = vunpack.c.l.s4 1934713408
    %v5302 = vunpack.c.0.s8 %v5301
    %v5303 = vlaneseq
    %v5304 = vshrl.u32 %v5303, 7
    %v5305 = vsub.s32 %v5302, %v5304
    %v5306 = vrot.slane %v5298, %v5305
    %v5308 = vunpack.c.l.s4 1934713408
    %v5309 = vunpack.c.0.s8 %v5308
    %v5310 = vlaneseq
    %v5311 = vshrl.u32 %v5310, 7
    %v5312 = vsub.s32 %v5309, %v5311
    %v5313 = vrot.slane %v5299, %v5312
    %v5314 = vcombine.low %v5258, %v5274
    %v5315 = vcombine.high %v5258, %v5274
    %v5317 = vunpack.c.l.s4 1934713408
    %v5318 = vunpack.c.0.s8 %v5317
    %v5319 = vlaneseq
    %v5320 = vshrl.u32 %v5319, 7
    %v5321 = vsub.s32 %v5318, %v5320
    %v5322 = vrot.slane %v5314, %v5321
    %v5324 = vunpack.c.l.s4 1934713408
    %v5325 = vunpack.c.0.s8 %v5324
    %v5326 = vlaneseq
    %v5327 = vshrl.u32 %v5326, 7
    %v5328 = vsub.s32 %v5325, %v5327
    %v5329 = vrot.slane %v5315, %v5328
    %v5330 = vcombine.low %v5265, %v5281
    %v5331 = vcombine.high %v5265, %v5281
    %v5333 = vunpack.c.l.s4 1934713408
    %v5334 = vunpack.c.0.s8 %v5333
    %v5335 = vlaneseq
    %v5336 = vshrl.u32 %v5335, 7
    %v5337 = vsub.s32 %v5334, %v5336
    %v5338 = vrot.slane %v5330, %v5337
    %v5340 = vunpack.c.l.s4 1934713408
    %v5341 = vunpack.c.0.s8 %v5340
    %v5342 = vlaneseq
    %v5343 = vshrl.u32 %v5342, 7
    %v5344 = vsub.s32 %v5341, %v5343
    %v5345 = vrot.slane %v5331, %v5344
    %v5346 = vcombine.low %v5290, %v5322
    %v5347 = vcombine.high %v5290, %v5322
    %v5348 = vcombine.low %v5297, %v5329
    %v5349 = vcombine.high %v5297, %v5329
    %v5350 = vcombine.low %v5306, %v5338
    %v5351 = vcombine.high %v5306, %v5338
    %v5352 = vcombine.low %v5313, %v5345
    %v5353 = vcombine.high %v5313, %v5345
    %v5354 = vcombine.low %v1085, %v1093
    %v5355 = vcombine.high %v1085, %v1093
    %v5357 = vunpack.c.l.s4 1983009808
    %v5358 = vunpack.c.0.s8 %v5357
    %v5359 = vlaneseq
    %v5360 = vshrl.u32 %v5359, 7
    %v5361 = vsub.s32 %v5358, %v5360
    %v5362 = vrot.slane %v5354, %v5361
    %v5364 = vunpack.c.l.s4 1983009808
    %v5365 = vunpack.c.0.s8 %v5364
    %v5366 = vlaneseq
    %v5367 = vshrl.u32 %v5366, 7
    %v5368 = vsub.s32 %v5365, %v5367
    %v5369 = vrot.slane %v5355, %v5368
    %v5370 = vcombine.low %v1089, %v1097
    %v5371 = vcombine.high %v1089, %v1097
    %v5373 = vunpack.c.l.s4 1983009808
    %v5374 = vunpack.c.0.s8 %v5373
    %v5375 = vlaneseq
    %v5376 = vshrl.u32 %v5375, 7
    %v5377 = vsub.s32 %v5374, %v5376
    %v5378 = vrot.slane %v5370, %v5377
    %v5380 = vunpack.c.l.s4 1983009808
    %v5381 = vunpack.c.0.s8 %v5380
    %v5382 = vlaneseq
    %v5383 = vshrl.u32 %v5382, 7
    %v5384 = vsub.s32 %v5381, %v5383
    %v5385 = vrot.slane %v5371, %v5384
    %v5386 = vcombine.low %v1101, %v1109
    %v5387 = vcombine.high %v1101, %v1109
    %v5389 = vunpack.c.l.s4 1983009808
    %v5390 = vunpack.c.0.s8 %v5389
    %v5391 = vlaneseq
    %v5392 = vshrl.u32 %v5391, 7
    %v5393 = vsub.s32 %v5390, %v5392
    %v5394 = vrot.slane %v5386, %v5393
    %v5396 = vunpack.c.l.s4 1983009808
    %v5397 = vunpack.c.0.s8 %v5396
    %v5398 = vlaneseq
    %v5399 = vshrl.u32 %v5398, 7
    %v5400 = vsub.s32 %v5397, %v5399
    %v5401 = vrot.slane %v5387, %v5400
    %v5402 = vcombine.low %v1105, %v1113
    %v5403 = vcombine.high %v1105, %v1113
    %v5405 = vunpack.c.l.s4 1983009808
    %v5406 = vunpack.c.0.s8 %v5405
    %v5407 = vlaneseq
    %v5408 = vshrl.u32 %v5407, 7
    %v5409 = vsub.s32 %v5406, %v5408
    %v5410 = vrot.slane %v5402, %v5409
    %v5412 = vunpack.c.l.s4 1983009808
    %v5413 = vunpack.c.0.s8 %v5412
    %v5414 = vlaneseq
    %v5415 = vshrl.u32 %v5414, 7
    %v5416 = vsub.s32 %v5413, %v5415
    %v5417 = vrot.slane %v5403, %v5416
    %v5418 = vcombine.low %v5362, %v5378
    %v5419 = vcombine.high %v5362, %v5378
    %v5421 = vunpack.c.l.s4 1934713408
    %v5422 = vunpack.c.0.s8 %v5421
    %v5423 = vlaneseq
    %v5424 = vshrl.u32 %v5423, 7
    %v5425 = vsub.s32 %v5422, %v5424
    %v5426 = vrot.slane %v5418, %v5425
    %v5428 = vunpack.c.l.s4 1934713408
    %v5429 = vunpack.c.0.s8 %v5428
    %v5430 = vlaneseq
    %v5431 = vshrl.u32 %v5430, 7
    %v5432 = vsub.s32 %v5429, %v5431
    %v5433 = vrot.slane %v5419, %v5432
    %v5434 = vcombine.low %v5369, %v5385
    %v5435 = vcombine.high %v5369, %v5385
    %v5437 = vunpack.c.l.s4 1934713408
    %v5438 = vunpack.c.0.s8 %v5437
    %v5439 = vlaneseq
    %v5440 = vshrl.u32 %v5439, 7
    %v5441 = vsub.s32 %v5438, %v5440
    %v5442 = vrot.slane %v5434, %v5441
    %v5444 = vunpack.c.l.s4 1934713408
    %v5445 = vunpack.c.0.s8 %v5444
    %v5446 = vlaneseq
    %v5447 = vshrl.u32 %v5446, 7
    %v5448 = vsub.s32 %v5445, %v5447
    %v5449 = vrot.slane %v5435, %v5448
    %v5450 = vcombine.low %v5394, %v5410
    %v5451 = vcombine.high %v5394, %v5410
    %v5453 = vunpack.c.l.s4 1934713408
    %v5454 = vunpack.c.0.s8 %v5453
    %v5455 = vlaneseq
    %v5456 = vshrl.u32 %v5455, 7
    %v5457 = vsub.s32 %v5454, %v5456
    %v5458 = vrot.slane %v5450, %v5457
    %v5460 = vunpack.c.l.s4 1934713408
    %v5461 = vunpack.c.0.s8 %v5460
    %v5462 = vlaneseq
    %v5463 = vshrl.u32 %v5462, 7
    %v5464 = vsub.s32 %v5461, %v5463
    %v5465 = vrot.slane %v5451, %v5464
    %v5466 = vcombine.low %v5401, %v5417
    %v5467 = vcombine.high %v5401, %v5417
    %v5469 = vunpack.c.l.s4 1934713408
    %v5470 = vunpack.c.0.s8 %v5469
    %v5471 = vlaneseq
    %v5472 = vshrl.u32 %v5471, 7
    %v5473 = vsub.s32 %v5470, %v5472
    %v5474 = vrot.slane %v5466, %v5473
    %v5476 = vunpack.c.l.s4 1934713408
    %v5477 = vunpack.c.0.s8 %v5476
    %v5478 = vlaneseq
    %v5479 = vshrl.u32 %v5478, 7
    %v5480 = vsub.s32 %v5477, %v5479
    %v5481 = vrot.slane %v5467, %v5480
    %v5482 = vcombine.low %v5426, %v5458
    %v5483 = vcombine.high %v5426, %v5458
    %v5484 = vcombine.low %v5433, %v5465
    %v5485 = vcombine.high %v5433, %v5465
    %v5486 = vcombine.low %v5442, %v5474
    %v5487 = vcombine.high %v5442, %v5474
    %v5488 = vcombine.low %v5449, %v5481
    %v5489 = vcombine.high %v5449, %v5481
    %v5490 = vcombine.low %v1117, %v1125
    %v5491 = vcombine.high %v1117, %v1125
    %v5493 = vunpack.c.l.s4 1983009808
    %v5494 = vunpack.c.0.s8 %v5493
    %v5495 = vlaneseq
    %v5496 = vshrl.u32 %v5495, 7
    %v5497 = vsub.s32 %v5494, %v5496
    %v5498 = vrot.slane %v5490, %v5497
    %v5500 = vunpack.c.l.s4 1983009808
    %v5501 = vunpack.c.0.s8 %v5500
    %v5502 = vlaneseq
    %v5503 = vshrl.u32 %v5502, 7
    %v5504 = vsub.s32 %v5501, %v5503
    %v5505 = vrot.slane %v5491, %v5504
    %v5506 = vcombine.low %v1121, %v1129
    %v5507 = vcombine.high %v1121, %v1129
    %v5509 = vunpack.c.l.s4 1983009808
    %v5510 = vunpack.c.0.s8 %v5509
    %v5511 = vlaneseq
    %v5512 = vshrl.u32 %v5511, 7
    %v5513 = vsub.s32 %v5510, %v5512
    %v5514 = vrot.slane %v5506, %v5513
    %v5516 = vunpack.c.l.s4 1983009808
    %v5517 = vunpack.c.0.s8 %v5516
    %v5518 = vlaneseq
    %v5519 = vshrl.u32 %v5518, 7
    %v5520 = vsub.s32 %v5517, %v5519
    %v5521 = vrot.slane %v5507, %v5520
    %v5522 = vcombine.low %v1133, %v1141
    %v5523 = vcombine.high %v1133, %v1141
    %v5525 = vunpack.c.l.s4 1983009808
    %v5526 = vunpack.c.0.s8 %v5525
    %v5527 = vlaneseq
    %v5528 = vshrl.u32 %v5527, 7
    %v5529 = vsub.s32 %v5526, %v5528
    %v5530 = vrot.slane %v5522, %v5529
    %v5532 = vunpack.c.l.s4 1983009808
    %v5533 = vunpack.c.0.s8 %v5532
    %v5534 = vlaneseq
    %v5535 = vshrl.u32 %v5534, 7
    %v5536 = vsub.s32 %v5533, %v5535
    %v5537 = vrot.slane %v5523, %v5536
    %v5538 = vcombine.low %v1137, %v1145
    %v5539 = vcombine.high %v1137, %v1145
    %v5541 = vunpack.c.l.s4 1983009808
    %v5542 = vunpack.c.0.s8 %v5541
    %v5543 = vlaneseq
    %v5544 = vshrl.u32 %v5543, 7
    %v5545 = vsub.s32 %v5542, %v5544
    %v5546 = vrot.slane %v5538, %v5545
    %v5548 = vunpack.c.l.s4 1983009808
    %v5549 = vunpack.c.0.s8 %v5548
    %v5550 = vlaneseq
    %v5551 = vshrl.u32 %v5550, 7
    %v5552 = vsub.s32 %v5549, %v5551
    %v5553 = vrot.slane %v5539, %v5552
    %v5554 = vcombine.low %v5498, %v5514
    %v5555 = vcombine.high %v5498, %v5514
    %v5557 = vunpack.c.l.s4 1934713408
    %v5558 = vunpack.c.0.s8 %v5557
    %v5559 = vlaneseq
    %v5560 = vshrl.u32 %v5559, 7
    %v5561 = vsub.s32 %v5558, %v5560
    %v5562 = vrot.slane %v5554, %v5561
    %v5564 = vunpack.c.l.s4 1934713408
    %v5565 = vunpack.c.0.s8 %v5564
    %v5566 = vlaneseq
    %v5567 = vshrl.u32 %v5566, 7
    %v5568 = vsub.s32 %v5565, %v5567
    %v5569 = vrot.slane %v5555, %v5568
    %v5570 = vcombine.low %v5505, %v5521
    %v5571 = vcombine.high %v5505, %v5521
    %v5573 = vunpack.c.l.s4 1934713408
    %v5574 = vunpack.c.0.s8 %v5573
    %v5575 = vlaneseq
    %v5576 = vshrl.u32 %v5575, 7
    %v5577 = vsub.s32 %v5574, %v5576
    %v5578 = vrot.slane %v5570, %v5577
    %v5580 = vunpack.c.l.s4 1934713408
    %v5581 = vunpack.c.0.s8 %v5580
    %v5582 = vlaneseq
    %v5583 = vshrl.u32 %v5582, 7
    %v5584 = vsub.s32 %v5581, %v5583
    %v5585 = vrot.slane %v5571, %v5584
    %v5586 = vcombine.low %v5530, %v5546
    %v5587 = vcombine.high %v5530, %v5546
    %v5589 = vunpack.c.l.s4 1934713408
    %v5590 = vunpack.c.0.s8 %v5589
    %v5591 = vlaneseq
    %v5592 = vshrl.u32 %v5591, 7
    %v5593 = vsub.s32 %v5590, %v5592
    %v5594 = vrot.slane %v5586, %v5593
    %v5596 = vunpack.c.l.s4 1934713408
    %v5597 = vunpack.c.0.s8 %v5596
    %v5598 = vlaneseq
    %v5599 = vshrl.u32 %v5598, 7
    %v5600 = vsub.s32 %v5597, %v5599
    %v5601 = vrot.slane %v5587, %v5600
    %v5602 = vcombine.low %v5537, %v5553
    %v5603 = vcombine.high %v5537, %v5553
    %v5605 = vunpack.c.l.s4 1934713408
    %v5606 = vunpack.c.0.s8 %v5605
    %v5607 = vlaneseq
    %v5608 = vshrl.u32 %v5607, 7
    %v5609 = vsub.s32 %v5606, %v5608
    %v5610 = vrot.slane %v5602, %v5609
    %v5612 = vunpack.c.l.s4 1934713408
    %v5613 = vunpack.c.0.s8 %v5612
    %v5614 = vlaneseq
    %v5615 = vshrl.u32 %v5614, 7
    %v5616 = vsub.s32 %v5613, %v5615
    %v5617 = vrot.slane %v5603, %v5616
    %v5618 = vcombine.low %v5562, %v5594
    %v5619 = vcombine.high %v5562, %v5594
    %v5620 = vcombine.low %v5569, %v5601
    %v5621 = vcombine.high %v5569, %v5601
    %v5622 = vcombine.low %v5578, %v5610
    %v5623 = vcombine.high %v5578, %v5610
    %v5624 = vcombine.low %v5585, %v5617
    %v5625 = vcombine.high %v5585, %v5617
    %v5626 = vcombine.low %v1149, %v1157
    %v5627 = vcombine.high %v1149, %v1157
    %v5629 = vunpack.c.l.s4 1983009808
    %v5630 = vunpack.c.0.s8 %v5629
    %v5631 = vlaneseq
    %v5632 = vshrl.u32 %v5631, 7
    %v5633 = vsub.s32 %v5630, %v5632
    %v5634 = vrot.slane %v5626, %v5633
    %v5636 = vunpack.c.l.s4 1983009808
    %v5637 = vunpack.c.0.s8 %v5636
    %v5638 = vlaneseq
    %v5639 = vshrl.u32 %v5638, 7
    %v5640 = vsub.s32 %v5637, %v5639
    %v5641 = vrot.slane %v5627, %v5640
    %v5642 = vcombine.low %v1153, %v1161
    %v5643 = vcombine.high %v1153, %v1161
    %v5645 = vunpack.c.l.s4 1983009808
    %v5646 = vunpack.c.0.s8 %v5645
    %v5647 = vlaneseq
    %v5648 = vshrl.u32 %v5647, 7
    %v5649 = vsub.s32 %v5646, %v5648
    %v5650 = vrot.slane %v5642, %v5649
    %v5652 = vunpack.c.l.s4 1983009808
    %v5653 = vunpack.c.0.s8 %v5652
    %v5654 = vlaneseq
    %v5655 = vshrl.u32 %v5654, 7
    %v5656 = vsub.s32 %v5653, %v5655
    %v5657 = vrot.slane %v5643, %v5656
    %v5658 = vcombine.low %v1165, %v1173
    %v5659 = vcombine.high %v1165, %v1173
    %v5661 = vunpack.c.l.s4 1983009808
    %v5662 = vunpack.c.0.s8 %v5661
    %v5663 = vlaneseq
    %v5664 = vshrl.u32 %v5663, 7
    %v5665 = vsub.s32 %v5662, %v5664
    %v5666 = vrot.slane %v5658, %v5665
    %v5668 = vunpack.c.l.s4 1983009808
    %v5669 = vunpack.c.0.s8 %v5668
    %v5670 = vlaneseq
    %v5671 = vshrl.u32 %v5670, 7
    %v5672 = vsub.s32 %v5669, %v5671
    %v5673 = vrot.slane %v5659, %v5672
    %v5674 = vcombine.low %v1169, %v1177
    %v5675 = vcombine.high %v1169, %v1177
    %v5677 = vunpack.c.l.s4 1983009808
    %v5678 = vunpack.c.0.s8 %v5677
    %v5679 = vlaneseq
    %v5680 = vshrl.u32 %v5679, 7
    %v5681 = vsub.s32 %v5678, %v5680
    %v5682 = vrot.slane %v5674, %v5681
    %v5684 = vunpack.c.l.s4 1983009808
    %v5685 = vunpack.c.0.s8 %v5684
    %v5686 = vlaneseq
    %v5687 = vshrl.u32 %v5686, 7
    %v5688 = vsub.s32 %v5685, %v5687
    %v5689 = vrot.slane %v5675, %v5688
    %v5690 = vcombine.low %v5634, %v5650
    %v5691 = vcombine.high %v5634, %v5650
    %v5693 = vunpack.c.l.s4 1934713408
    %v5694 = vunpack.c.0.s8 %v5693
    %v5695 = vlaneseq
    %v5696 = vshrl.u32 %v5695, 7
    %v5697 = vsub.s32 %v5694, %v5696
    %v5698 = vrot.slane %v5690, %v5697
    %v5700 = vunpack.c.l.s4 1934713408
    %v5701 = vunpack.c.0.s8 %v5700
    %v5702 = vlaneseq
    %v5703 = vshrl.u32 %v5702, 7
    %v5704 = vsub.s32 %v5701, %v5703
    %v5705 = vrot.slane %v5691, %v5704
    %v5706 = vcombine.low %v5641, %v5657
    %v5707 = vcombine.high %v5641, %v5657
    %v5709 = vunpack.c.l.s4 1934713408
    %v5710 = vunpack.c.0.s8 %v5709
    %v5711 = vlaneseq
    %v5712 = vshrl.u32 %v5711, 7
    %v5713 = vsub.s32 %v5710, %v5712
    %v5714 = vrot.slane %v5706, %v5713
    %v5716 = vunpack.c.l.s4 1934713408
    %v5717 = vunpack.c.0.s8 %v5716
    %v5718 = vlaneseq
    %v5719 = vshrl.u32 %v5718, 7
    %v5720 = vsub.s32 %v5717, %v5719
    %v5721 = vrot.slane %v5707, %v5720
    %v5722 = vcombine.low %v5666, %v5682
    %v5723 = vcombine.high %v5666, %v5682
    %v5725 = vunpack.c.l.s4 1934713408
    %v5726 = vunpack.c.0.s8 %v5725
    %v5727 = vlaneseq
    %v5728 = vshrl.u32 %v5727, 7
    %v5729 = vsub.s32 %v5726, %v5728
    %v5730 = vrot.slane %v5722, %v5729
    %v5732 = vunpack.c.l.s4 1934713408
    %v5733 = vunpack.c.0.s8 %v5732
    %v5734 = vlaneseq
    %v5735 = vshrl.u32 %v5734, 7
    %v5736 = vsub.s32 %v5733, %v5735
    %v5737 = vrot.slane %v5723, %v5736
    %v5738 = vcombine.low %v5673, %v5689
    %v5739 = vcombine.high %v5673, %v5689
    %v5741 = vunpack.c.l.s4 1934713408
    %v5742 = vunpack.c.0.s8 %v5741
    %v5743 = vlaneseq
    %v5744 = vshrl.u32 %v5743, 7
    %v5745 = vsub.s32 %v5742, %v5744
    %v5746 = vrot.slane %v5738, %v5745
    %v5748 = vunpack.c.l.s4 1934713408
    %v5749 = vunpack.c.0.s8 %v5748
    %v5750 = vlaneseq
    %v5751 = vshrl.u32 %v5750, 7
    %v5752 = vsub.s32 %v5749, %v5751
    %v5753 = vrot.slane %v5739, %v5752
    %v5754 = vcombine.low %v5698, %v5730
    %v5755 = vcombine.high %v5698, %v5730
    %v5756 = vcombine.low %v5705, %v5737
    %v5757 = vcombine.high %v5705, %v5737
    %v5758 = vcombine.low %v5714, %v5746
    %v5759 = vcombine.high %v5714, %v5746
    %v5760 = vcombine.low %v5721, %v5753
    %v5761 = vcombine.high %v5721, %v5753
    %v5762 = vcombine.low %v1181, %v1189
    %v5763 = vcombine.high %v1181, %v1189
    %v5765 = vunpack.c.l.s4 1983009808
    %v5766 = vunpack.c.0.s8 %v5765
    %v5767 = vlaneseq
    %v5768 = vshrl.u32 %v5767, 7
    %v5769 = vsub.s32 %v5766, %v5768
    %v5770 = vrot.slane %v5762, %v5769
    %v5772 = vunpack.c.l.s4 1983009808
    %v5773 = vunpack.c.0.s8 %v5772
    %v5774 = vlaneseq
    %v5775 = vshrl.u32 %v5774, 7
    %v5776 = vsub.s32 %v5773, %v5775
    %v5777 = vrot.slane %v5763, %v5776
    %v5778 = vcombine.low %v1185, %v1193
    %v5779 = vcombine.high %v1185, %v1193
    %v5781 = vunpack.c.l.s4 1983009808
    %v5782 = vunpack.c.0.s8 %v5781
    %v5783 = vlaneseq
    %v5784 = vshrl.u32 %v5783, 7
    %v5785 = vsub.s32 %v5782, %v5784
    %v5786 = vrot.slane %v5778, %v5785
    %v5788 = vunpack.c.l.s4 1983009808
    %v5789 = vunpack.c.0.s8 %v5788
    %v5790 = vlaneseq
    %v5791 = vshrl.u32 %v5790, 7
    %v5792 = vsub.s32 %v5789, %v5791
    %v5793 = vrot.slane %v5779, %v5792
    %v5794 = vcombine.low %v1197, %v1205
    %v5795 = vcombine.high %v1197, %v1205
    %v5797 = vunpack.c.l.s4 1983009808
    %v5798 = vunpack.c.0.s8 %v5797
    %v5799 = vlaneseq
    %v5800 = vshrl.u32 %v5799, 7
    %v5801 = vsub.s32 %v5798, %v5800
    %v5802 = vrot.slane %v5794, %v5801
    %v5804 = vunpack.c.l.s4 1983009808
    %v5805 = vunpack.c.0.s8 %v5804
    %v5806 = vlaneseq
    %v5807 = vshrl.u32 %v5806, 7
    %v5808 = vsub.s32 %v5805, %v5807
    %v5809 = vrot.slane %v5795, %v5808
    %v5810 = vcombine.low %v1201, %v1209
    %v5811 = vcombine.high %v1201, %v1209
    %v5813 = vunpack.c.l.s4 1983009808
    %v5814 = vunpack.c.0.s8 %v5813
    %v5815 = vlaneseq
    %v5816 = vshrl.u32 %v5815, 7
    %v5817 = vsub.s32 %v5814, %v5816
    %v5818 = vrot.slane %v5810, %v5817
    %v5820 = vunpack.c.l.s4 1983009808
    %v5821 = vunpack.c.0.s8 %v5820
    %v5822 = vlaneseq
    %v5823 = vshrl.u32 %v5822, 7
    %v5824 = vsub.s32 %v5821, %v5823
    %v5825 = vrot.slane %v5811, %v5824
    %v5826 = vcombine.low %v5770, %v5786
    %v5827 = vcombine.high %v5770, %v5786
    %v5829 = vunpack.c.l.s4 1934713408
    %v5830 = vunpack.c.0.s8 %v5829
    %v5831 = vlaneseq
    %v5832 = vshrl.u32 %v5831, 7
    %v5833 = vsub.s32 %v5830, %v5832
    %v5834 = vrot.slane %v5826, %v5833
    %v5836 = vunpack.c.l.s4 1934713408
    %v5837 = vunpack.c.0.s8 %v5836
    %v5838 = vlaneseq
    %v5839 = vshrl.u32 %v5838, 7
    %v5840 = vsub.s32 %v5837, %v5839
    %v5841 = vrot.slane %v5827, %v5840
    %v5842 = vcombine.low %v5777, %v5793
    %v5843 = vcombine.high %v5777, %v5793
    %v5845 = vunpack.c.l.s4 1934713408
    %v5846 = vunpack.c.0.s8 %v5845
    %v5847 = vlaneseq
    %v5848 = vshrl.u32 %v5847, 7
    %v5849 = vsub.s32 %v5846, %v5848
    %v5850 = vrot.slane %v5842, %v5849
    %v5852 = vunpack.c.l.s4 1934713408
    %v5853 = vunpack.c.0.s8 %v5852
    %v5854 = vlaneseq
    %v5855 = vshrl.u32 %v5854, 7
    %v5856 = vsub.s32 %v5853, %v5855
    %v5857 = vrot.slane %v5843, %v5856
    %v5858 = vcombine.low %v5802, %v5818
    %v5859 = vcombine.high %v5802, %v5818
    %v5861 = vunpack.c.l.s4 1934713408
    %v5862 = vunpack.c.0.s8 %v5861
    %v5863 = vlaneseq
    %v5864 = vshrl.u32 %v5863, 7
    %v5865 = vsub.s32 %v5862, %v5864
    %v5866 = vrot.slane %v5858, %v5865
    %v5868 = vunpack.c.l.s4 1934713408
    %v5869 = vunpack.c.0.s8 %v5868
    %v5870 = vlaneseq
    %v5871 = vshrl.u32 %v5870, 7
    %v5872 = vsub.s32 %v5869, %v5871
    %v5873 = vrot.slane %v5859, %v5872
    %v5874 = vcombine.low %v5809, %v5825
    %v5875 = vcombine.high %v5809, %v5825
    %v5877 = vunpack.c.l.s4 1934713408
    %v5878 = vunpack.c.0.s8 %v5877
    %v5879 = vlaneseq
    %v5880 = vshrl.u32 %v5879, 7
    %v5881 = vsub.s32 %v5878, %v5880
    %v5882 = vrot.slane %v5874, %v5881
    %v5884 = vunpack.c.l.s4 1934713408
    %v5885 = vunpack.c.0.s8 %v5884
    %v5886 = vlaneseq
    %v5887 = vshrl.u32 %v5886, 7
    %v5888 = vsub.s32 %v5885, %v5887
    %v5889 = vrot.slane %v5875, %v5888
    %v5890 = vcombine.low %v5834, %v5866
    %v5891 = vcombine.high %v5834, %v5866
    %v5892 = vcombine.low %v5841, %v5873
    %v5893 = vcombine.high %v5841, %v5873
    %v5894 = vcombine.low %v5850, %v5882
    %v5895 = vcombine.high %v5850, %v5882
    %v5896 = vcombine.low %v5857, %v5889
    %v5897 = vcombine.high %v5857, %v5889
    %v5898 = vcombine.low %v1213, %v1221
    %v5899 = vcombine.high %v1213, %v1221
    %v5901 = vunpack.c.l.s4 1983009808
    %v5902 = vunpack.c.0.s8 %v5901
    %v5903 = vlaneseq
    %v5904 = vshrl.u32 %v5903, 7
    %v5905 = vsub.s32 %v5902, %v5904
    %v5906 = vrot.slane %v5898, %v5905
    %v5908 = vunpack.c.l.s4 1983009808
    %v5909 = vunpack.c.0.s8 %v5908
    %v5910 = vlaneseq
    %v5911 = vshrl.u32 %v5910, 7
    %v5912 = vsub.s32 %v5909, %v5911
    %v5913 = vrot.slane %v5899, %v5912
    %v5914 = vcombine.low %v1217, %v1225
    %v5915 = vcombine.high %v1217, %v1225
    %v5917 = vunpack.c.l.s4 1983009808
    %v5918 = vunpack.c.0.s8 %v5917
    %v5919 = vlaneseq
    %v5920 = vshrl.u32 %v5919, 7
    %v5921 = vsub.s32 %v5918, %v5920
    %v5922 = vrot.slane %v5914, %v5921
    %v5924 = vunpack.c.l.s4 1983009808
    %v5925 = vunpack.c.0.s8 %v5924
    %v5926 = vlaneseq
    %v5927 = vshrl.u32 %v5926, 7
    %v5928 = vsub.s32 %v5925, %v5927
    %v5929 = vrot.slane %v5915, %v5928
    %v5930 = vcombine.low %v1229, %v1237
    %v5931 = vcombine.high %v1229, %v1237
    %v5933 = vunpack.c.l.s4 1983009808
    %v5934 = vunpack.c.0.s8 %v5933
    %v5935 = vlaneseq
    %v5936 = vshrl.u32 %v5935, 7
    %v5937 = vsub.s32 %v5934, %v5936
    %v5938 = vrot.slane %v5930, %v5937
    %v5940 = vunpack.c.l.s4 1983009808
    %v5941 = vunpack.c.0.s8 %v5940
    %v5942 = vlaneseq
    %v5943 = vshrl.u32 %v5942, 7
    %v5944 = vsub.s32 %v5941, %v5943
    %v5945 = vrot.slane %v5931, %v5944
    %v5946 = vcombine.low %v1233, %v1241
    %v5947 = vcombine.high %v1233, %v1241
    %v5949 = vunpack.c.l.s4 1983009808
    %v5950 = vunpack.c.0.s8 %v5949
    %v5951 = vlaneseq
    %v5952 = vshrl.u32 %v5951, 7
    %v5953 = vsub.s32 %v5950, %v5952
    %v5954 = vrot.slane %v5946, %v5953
    %v5956 = vunpack.c.l.s4 1983009808
    %v5957 = vunpack.c.0.s8 %v5956
    %v5958 = vlaneseq
    %v5959 = vshrl.u32 %v5958, 7
    %v5960 = vsub.s32 %v5957, %v5959
    %v5961 = vrot.slane %v5947, %v5960
    %v5962 = vcombine.low %v5906, %v5922
    %v5963 = vcombine.high %v5906, %v5922
    %v5965 = vunpack.c.l.s4 1934713408
    %v5966 = vunpack.c.0.s8 %v5965
    %v5967 = vlaneseq
    %v5968 = vshrl.u32 %v5967, 7
    %v5969 = vsub.s32 %v5966, %v5968
    %v5970 = vrot.slane %v5962, %v5969
    %v5972 = vunpack.c.l.s4 1934713408
    %v5973 = vunpack.c.0.s8 %v5972
    %v5974 = vlaneseq
    %v5975 = vshrl.u32 %v5974, 7
    %v5976 = vsub.s32 %v5973, %v5975
    %v5977 = vrot.slane %v5963, %v5976
    %v5978 = vcombine.low %v5913, %v5929
    %v5979 = vcombine.high %v5913, %v5929
    %v5981 = vunpack.c.l.s4 1934713408
    %v5982 = vunpack.c.0.s8 %v5981
    %v5983 = vlaneseq
    %v5984 = vshrl.u32 %v5983, 7
    %v5985 = vsub.s32 %v5982, %v5984
    %v5986 = vrot.slane %v5978, %v5985
    %v5988 = vunpack.c.l.s4 1934713408
    %v5989 = vunpack.c.0.s8 %v5988
    %v5990 = vlaneseq
    %v5991 = vshrl.u32 %v5990, 7
    %v5992 = vsub.s32 %v5989, %v5991
    %v5993 = vrot.slane %v5979, %v5992
    %v5994 = vcombine.low %v5938, %v5954
    %v5995 = vcombine.high %v5938, %v5954
    %v5997 = vunpack.c.l.s4 1934713408
    %v5998 = vunpack.c.0.s8 %v5997
    %v5999 = vlaneseq
    %v6000 = vshrl.u32 %v5999, 7
    %v6001 = vsub.s32 %v5998, %v6000
    %v6002 = vrot.slane %v5994, %v6001
    %v6004 = vunpack.c.l.s4 1934713408
    %v6005 = vunpack.c.0.s8 %v6004
    %v6006 = vlaneseq
    %v6007 = vshrl.u32 %v6006, 7
    %v6008 = vsub.s32 %v6005, %v6007
    %v6009 = vrot.slane %v5995, %v6008
    %v6010 = vcombine.low %v5945, %v5961
    %v6011 = vcombine.high %v5945, %v5961
    %v6013 = vunpack.c.l.s4 1934713408
    %v6014 = vunpack.c.0.s8 %v6013
    %v6015 = vlaneseq
    %v6016 = vshrl.u32 %v6015, 7
    %v6017 = vsub.s32 %v6014, %v6016
    %v6018 = vrot.slane %v6010, %v6017
    %v6020 = vunpack.c.l.s4 1934713408
    %v6021 = vunpack.c.0.s8 %v6020
    %v6022 = vlaneseq
    %v6023 = vshrl.u32 %v6022, 7
    %v6024 = vsub.s32 %v6021, %v6023
    %v6025 = vrot.slane %v6011, %v6024
    %v6026 = vcombine.low %v5970, %v6002
    %v6027 = vcombine.high %v5970, %v6002
    %v6028 = vcombine.low %v5977, %v6009
    %v6029 = vcombine.high %v5977, %v6009
    %v6030 = vcombine.low %v5986, %v6018
    %v6031 = vcombine.high %v5986, %v6018
    %v6032 = vcombine.low %v5993, %v6025
    %v6033 = vcombine.high %v5993, %v6025
    %v6034 = vcombine.low %v1245, %v1253
    %v6035 = vcombine.high %v1245, %v1253
    %v6037 = vunpack.c.l.s4 1983009808
    %v6038 = vunpack.c.0.s8 %v6037
    %v6039 = vlaneseq
    %v6040 = vshrl.u32 %v6039, 7
    %v6041 = vsub.s32 %v6038, %v6040
    %v6042 = vrot.slane %v6034, %v6041
    %v6044 = vunpack.c.l.s4 1983009808
    %v6045 = vunpack.c.0.s8 %v6044
    %v6046 = vlaneseq
    %v6047 = vshrl.u32 %v6046, 7
    %v6048 = vsub.s32 %v6045, %v6047
    %v6049 = vrot.slane %v6035, %v6048
    %v6050 = vcombine.low %v1249, %v1257
    %v6051 = vcombine.high %v1249, %v1257
    %v6053 = vunpack.c.l.s4 1983009808
    %v6054 = vunpack.c.0.s8 %v6053
    %v6055 = vlaneseq
    %v6056 = vshrl.u32 %v6055, 7
    %v6057 = vsub.s32 %v6054, %v6056
    %v6058 = vrot.slane %v6050, %v6057
    %v6060 = vunpack.c.l.s4 1983009808
    %v6061 = vunpack.c.0.s8 %v6060
    %v6062 = vlaneseq
    %v6063 = vshrl.u32 %v6062, 7
    %v6064 = vsub.s32 %v6061, %v6063
    %v6065 = vrot.slane %v6051, %v6064
    %v6066 = vcombine.low %v1261, %v1269
    %v6067 = vcombine.high %v1261, %v1269
    %v6069 = vunpack.c.l.s4 1983009808
    %v6070 = vunpack.c.0.s8 %v6069
    %v6071 = vlaneseq
    %v6072 = vshrl.u32 %v6071, 7
    %v6073 = vsub.s32 %v6070, %v6072
    %v6074 = vrot.slane %v6066, %v6073
    %v6076 = vunpack.c.l.s4 1983009808
    %v6077 = vunpack.c.0.s8 %v6076
    %v6078 = vlaneseq
    %v6079 = vshrl.u32 %v6078, 7
    %v6080 = vsub.s32 %v6077, %v6079
    %v6081 = vrot.slane %v6067, %v6080
    %v6082 = vcombine.low %v1265, %v1273
    %v6083 = vcombine.high %v1265, %v1273
    %v6085 = vunpack.c.l.s4 1983009808
    %v6086 = vunpack.c.0.s8 %v6085
    %v6087 = vlaneseq
    %v6088 = vshrl.u32 %v6087, 7
    %v6089 = vsub.s32 %v6086, %v6088
    %v6090 = vrot.slane %v6082, %v6089
    %v6092 = vunpack.c.l.s4 1983009808
    %v6093 = vunpack.c.0.s8 %v6092
    %v6094 = vlaneseq
    %v6095 = vshrl.u32 %v6094, 7
    %v6096 = vsub.s32 %v6093, %v6095
    %v6097 = vrot.slane %v6083, %v6096
    %v6098 = vcombine.low %v6042, %v6058
    %v6099 = vcombine.high %v6042, %v6058
    %v6101 = vunpack.c.l.s4 1934713408
    %v6102 = vunpack.c.0.s8 %v6101
    %v6103 = vlaneseq
    %v6104 = vshrl.u32 %v6103, 7
    %v6105 = vsub.s32 %v6102, %v6104
    %v6106 = vrot.slane %v6098, %v6105
    %v6108 = vunpack.c.l.s4 1934713408
    %v6109 = vunpack.c.0.s8 %v6108
    %v6110 = vlaneseq
    %v6111 = vshrl.u32 %v6110, 7
    %v6112 = vsub.s32 %v6109, %v6111
    %v6113 = vrot.slane %v6099, %v6112
    %v6114 = vcombine.low %v6049, %v6065
    %v6115 = vcombine.high %v6049, %v6065
    %v6117 = vunpack.c.l.s4 1934713408
    %v6118 = vunpack.c.0.s8 %v6117
    %v6119 = vlaneseq
    %v6120 = vshrl.u32 %v6119, 7
    %v6121 = vsub.s32 %v6118, %v6120
    %v6122 = vrot.slane %v6114, %v6121
    %v6124 = vunpack.c.l.s4 1934713408
    %v6125 = vunpack.c.0.s8 %v6124
    %v6126 = vlaneseq
    %v6127 = vshrl.u32 %v6126, 7
    %v6128 = vsub.s32 %v6125, %v6127
    %v6129 = vrot.slane %v6115, %v6128
    %v6130 = vcombine.low %v6074, %v6090
    %v6131 = vcombine.high %v6074, %v6090
    %v6133 = vunpack.c.l.s4 1934713408
    %v6134 = vunpack.c.0.s8 %v6133
    %v6135 = vlaneseq
    %v6136 = vshrl.u32 %v6135, 7
    %v6137 = vsub.s32 %v6134, %v6136
    %v6138 = vrot.slane %v6130, %v6137
    %v6140 = vunpack.c.l.s4 1934713408
    %v6141 = vunpack.c.0.s8 %v6140
    %v6142 = vlaneseq
    %v6143 = vshrl.u32 %v6142, 7
    %v6144 = vsub.s32 %v6141, %v6143
    %v6145 = vrot.slane %v6131, %v6144
    %v6146 = vcombine.low %v6081, %v6097
    %v6147 = vcombine.high %v6081, %v6097
    %v6149 = vunpack.c.l.s4 1934713408
    %v6150 = vunpack.c.0.s8 %v6149
    %v6151 = vlaneseq
    %v6152 = vshrl.u32 %v6151, 7
    %v6153 = vsub.s32 %v6150, %v6152
    %v6154 = vrot.slane %v6146, %v6153
    %v6156 = vunpack.c.l.s4 1934713408
    %v6157 = vunpack.c.0.s8 %v6156
    %v6158 = vlaneseq
    %v6159 = vshrl.u32 %v6158, 7
    %v6160 = vsub.s32 %v6157, %v6159
    %v6161 = vrot.slane %v6147, %v6160
    %v6162 = vcombine.low %v6106, %v6138
    %v6163 = vcombine.high %v6106, %v6138
    %v6164 = vcombine.low %v6113, %v6145
    %v6165 = vcombine.high %v6113, %v6145
    %v6166 = vcombine.low %v6122, %v6154
    %v6167 = vcombine.high %v6122, %v6154
    %v6168 = vcombine.low %v6129, %v6161
    %v6169 = vcombine.high %v6129, %v6161
    %6179 = vrot.lane.b32.xlu0 %v1403, 16
    %v6180 = vpop.permute.xlu0 %6179
    %6181 = vrot.lane.b32.xlu0 %v1539, 16
    %v6182 = vpop.permute.xlu0 %6181
    %6183 = vrot.lane.b32.xlu0 %v1675, 16
    %v6184 = vpop.permute.xlu0 %6183
    %6185 = vrot.lane.b32.xlu0 %v1811, 16
    %v6186 = vpop.permute.xlu0 %6185
    %6187 = vrot.lane.b32.xlu0 %v1947, 16
    %v6188 = vpop.permute.xlu0 %6187
    %6189 = vrot.lane.b32.xlu0 %v2083, 16
    %v6190 = vpop.permute.xlu0 %6189
    %6191 = vrot.lane.b32.xlu0 %v2219, 16
    %v6192 = vpop.permute.xlu0 %6191
    %6193 = vrot.lane.b32.xlu0 %v2355, 16
    %v6194 = vpop.permute.xlu0 %6193
    %6195 = vrot.lane.b32.xlu0 %v2491, 16
    %v6196 = vpop.permute.xlu0 %6195
    %6215 = vrot.lane.b32.xlu0 %v1404, 32
    %v6216 = vpop.permute.xlu0 %6215
    %6217 = vrot.lane.b32.xlu0 %v1540, 32
    %v6218 = vpop.permute.xlu0 %6217
    %6219 = vrot.lane.b32.xlu0 %v1676, 32
    %v6220 = vpop.permute.xlu0 %6219
    %6221 = vrot.lane.b32.xlu0 %v1812, 32
    %v6222 = vpop.permute.xlu0 %6221
    %6223 = vrot.lane.b32.xlu0 %v1948, 32
    %v6224 = vpop.permute.xlu0 %6223
    %6225 = vrot.lane.b32.xlu0 %v2084, 32
    %v6226 = vpop.permute.xlu0 %6225
    %6227 = vrot.lane.b32.xlu0 %v2220, 32
    %v6228 = vpop.permute.xlu0 %6227
    %6229 = vrot.lane.b32.xlu0 %v2356, 32
    %v6230 = vpop.permute.xlu0 %6229
    %6231 = vrot.lane.b32.xlu0 %v2492, 32
    %v6232 = vpop.permute.xlu0 %6231
    %6251 = vrot.lane.b32.xlu0 %v1405, 48
    %v6252 = vpop.permute.xlu0 %6251
    %6253 = vrot.lane.b32.xlu0 %v1541, 48
    %v6254 = vpop.permute.xlu0 %6253
    %6255 = vrot.lane.b32.xlu0 %v1677, 48
    %v6256 = vpop.permute.xlu0 %6255
    %6257 = vrot.lane.b32.xlu0 %v1813, 48
    %v6258 = vpop.permute.xlu0 %6257
    %6259 = vrot.lane.b32.xlu0 %v1949, 48
    %v6260 = vpop.permute.xlu0 %6259
    %6261 = vrot.lane.b32.xlu0 %v2085, 48
    %v6262 = vpop.permute.xlu0 %6261
    %6263 = vrot.lane.b32.xlu0 %v2221, 48
    %v6264 = vpop.permute.xlu0 %6263
    %6265 = vrot.lane.b32.xlu0 %v2357, 48
    %v6266 = vpop.permute.xlu0 %6265
    %6267 = vrot.lane.b32.xlu0 %v2493, 48
    %v6268 = vpop.permute.xlu0 %6267
    %6287 = vrot.lane.b32.xlu0 %v1406, 64
    %v6288 = vpop.permute.xlu0 %6287
    %6289 = vrot.lane.b32.xlu0 %v1542, 64
    %v6290 = vpop.permute.xlu0 %6289
    %6291 = vrot.lane.b32.xlu0 %v1678, 64
    %v6292 = vpop.permute.xlu0 %6291
    %6293 = vrot.lane.b32.xlu0 %v1814, 64
    %v6294 = vpop.permute.xlu0 %6293
    %6295 = vrot.lane.b32.xlu0 %v1950, 64
    %v6296 = vpop.permute.xlu0 %6295
    %6297 = vrot.lane.b32.xlu0 %v2086, 64
    %v6298 = vpop.permute.xlu0 %6297
    %6299 = vrot.lane.b32.xlu0 %v2222, 64
    %v6300 = vpop.permute.xlu0 %6299
    %6301 = vrot.lane.b32.xlu0 %v2358, 64
    %v6302 = vpop.permute.xlu0 %6301
    %6303 = vrot.lane.b32.xlu0 %v2494, 64
    %v6304 = vpop.permute.xlu0 %6303
    %6323 = vrot.lane.b32.xlu0 %v1407, 80
    %v6324 = vpop.permute.xlu0 %6323
    %6325 = vrot.lane.b32.xlu0 %v1543, 80
    %v6326 = vpop.permute.xlu0 %6325
    %6327 = vrot.lane.b32.xlu0 %v1679, 80
    %v6328 = vpop.permute.xlu0 %6327
    %6329 = vrot.lane.b32.xlu0 %v1815, 80
    %v6330 = vpop.permute.xlu0 %6329
    %6331 = vrot.lane.b32.xlu0 %v1951, 80
    %v6332 = vpop.permute.xlu0 %6331
    %6333 = vrot.lane.b32.xlu0 %v2087, 80
    %v6334 = vpop.permute.xlu0 %6333
    %6335 = vrot.lane.b32.xlu0 %v2223, 80
    %v6336 = vpop.permute.xlu0 %6335
    %6337 = vrot.lane.b32.xlu0 %v2359, 80
    %v6338 = vpop.permute.xlu0 %6337
    %6339 = vrot.lane.b32.xlu0 %v2495, 80
    %v6340 = vpop.permute.xlu0 %6339
    %6359 = vrot.lane.b32.xlu0 %v1408, 96
    %v6360 = vpop.permute.xlu0 %6359
    %6361 = vrot.lane.b32.xlu0 %v1544, 96
    %v6362 = vpop.permute.xlu0 %6361
    %6363 = vrot.lane.b32.xlu0 %v1680, 96
    %v6364 = vpop.permute.xlu0 %6363
    %6365 = vrot.lane.b32.xlu0 %v1816, 96
    %v6366 = vpop.permute.xlu0 %6365
    %6367 = vrot.lane.b32.xlu0 %v1952, 96
    %v6368 = vpop.permute.xlu0 %6367
    %6369 = vrot.lane.b32.xlu0 %v2088, 96
    %v6370 = vpop.permute.xlu0 %6369
    %6371 = vrot.lane.b32.xlu0 %v2224, 96
    %v6372 = vpop.permute.xlu0 %6371
    %6373 = vrot.lane.b32.xlu0 %v2360, 96
    %v6374 = vpop.permute.xlu0 %6373
    %6375 = vrot.lane.b32.xlu0 %v2496, 96
    %v6376 = vpop.permute.xlu0 %6375
    %6395 = vrot.lane.b32.xlu0 %v1409, 112
    %v6396 = vpop.permute.xlu0 %6395
    %6397 = vrot.lane.b32.xlu0 %v1545, 112
    %v6398 = vpop.permute.xlu0 %6397
    %6399 = vrot.lane.b32.xlu0 %v1681, 112
    %v6400 = vpop.permute.xlu0 %6399
    %6401 = vrot.lane.b32.xlu0 %v1817, 112
    %v6402 = vpop.permute.xlu0 %6401
    %6403 = vrot.lane.b32.xlu0 %v1953, 112
    %v6404 = vpop.permute.xlu0 %6403
    %6405 = vrot.lane.b32.xlu0 %v2089, 112
    %v6406 = vpop.permute.xlu0 %6405
    %6407 = vrot.lane.b32.xlu0 %v2225, 112
    %v6408 = vpop.permute.xlu0 %6407
    %6409 = vrot.lane.b32.xlu0 %v2361, 112
    %v6410 = vpop.permute.xlu0 %6409
    %6411 = vrot.lane.b32.xlu0 %v2497, 112
    %v6412 = vpop.permute.xlu0 %6411
    %6431 = vrot.lane.b32.xlu0 %v2627, 16
    %v6432 = vpop.permute.xlu0 %6431
    %6433 = vrot.lane.b32.xlu0 %v2763, 16
    %v6434 = vpop.permute.xlu0 %6433
    %6435 = vrot.lane.b32.xlu0 %v2899, 16
    %v6436 = vpop.permute.xlu0 %6435
    %6437 = vrot.lane.b32.xlu0 %v3035, 16
    %v6438 = vpop.permute.xlu0 %6437
    %6439 = vrot.lane.b32.xlu0 %v3171, 16
    %v6440 = vpop.permute.xlu0 %6439
    %6441 = vrot.lane.b32.xlu0 %v3307, 16
    %v6442 = vpop.permute.xlu0 %6441
    %6443 = vrot.lane.b32.xlu0 %v3443, 16
    %v6444 = vpop.permute.xlu0 %6443
    %6445 = vrot.lane.b32.xlu0 %v3579, 16
    %v6446 = vpop.permute.xlu0 %6445
    %6447 = vrot.lane.b32.xlu0 %v3715, 16
    %v6448 = vpop.permute.xlu0 %6447
    %6467 = vrot.lane.b32.xlu0 %v2628, 32
    %v6468 = vpop.permute.xlu0 %6467
    %6469 = vrot.lane.b32.xlu0 %v2764, 32
    %v6470 = vpop.permute.xlu0 %6469
    %6471 = vrot.lane.b32.xlu0 %v2900, 32
    %v6472 = vpop.permute.xlu0 %6471
    %6473 = vrot.lane.b32.xlu0 %v3036, 32
    %v6474 = vpop.permute.xlu0 %6473
    %6475 = vrot.lane.b32.xlu0 %v3172, 32
    %v6476 = vpop.permute.xlu0 %6475
    %6477 = vrot.lane.b32.xlu0 %v3308, 32
    %v6478 = vpop.permute.xlu0 %6477
    %6479 = vrot.lane.b32.xlu0 %v3444, 32
    %v6480 = vpop.permute.xlu0 %6479
    %6481 = vrot.lane.b32.xlu0 %v3580, 32
    %v6482 = vpop.permute.xlu0 %6481
    %6483 = vrot.lane.b32.xlu0 %v3716, 32
    %v6484 = vpop.permute.xlu0 %6483
    %6503 = vrot.lane.b32.xlu0 %v2629, 48
    %v6504 = vpop.permute.xlu0 %6503
    %6505 = vrot.lane.b32.xlu0 %v2765, 48
    %v6506 = vpop.permute.xlu0 %6505
    %6507 = vrot.lane.b32.xlu0 %v2901, 48
    %v6508 = vpop.permute.xlu0 %6507
    %6509 = vrot.lane.b32.xlu0 %v3037, 48
    %v6510 = vpop.permute.xlu0 %6509
    %6511 = vrot.lane.b32.xlu0 %v3173, 48
    %v6512 = vpop.permute.xlu0 %6511
    %6513 = vrot.lane.b32.xlu0 %v3309, 48
    %v6514 = vpop.permute.xlu0 %6513
    %6515 = vrot.lane.b32.xlu0 %v3445, 48
    %v6516 = vpop.permute.xlu0 %6515
    %6517 = vrot.lane.b32.xlu0 %v3581, 48
    %v6518 = vpop.permute.xlu0 %6517
    %6519 = vrot.lane.b32.xlu0 %v3717, 48
    %v6520 = vpop.permute.xlu0 %6519
    %6539 = vrot.lane.b32.xlu0 %v2630, 64
    %v6540 = vpop.permute.xlu0 %6539
    %6541 = vrot.lane.b32.xlu0 %v2766, 64
    %v6542 = vpop.permute.xlu0 %6541
    %6543 = vrot.lane.b32.xlu0 %v2902, 64
    %v6544 = vpop.permute.xlu0 %6543
    %6545 = vrot.lane.b32.xlu0 %v3038, 64
    %v6546 = vpop.permute.xlu0 %6545
    %6547 = vrot.lane.b32.xlu0 %v3174, 64
    %v6548 = vpop.permute.xlu0 %6547
    %6549 = vrot.lane.b32.xlu0 %v3310, 64
    %v6550 = vpop.permute.xlu0 %6549
    %6551 = vrot.lane.b32.xlu0 %v3446, 64
    %v6552 = vpop.permute.xlu0 %6551
    %6553 = vrot.lane.b32.xlu0 %v3582, 64
    %v6554 = vpop.permute.xlu0 %6553
    %6555 = vrot.lane.b32.xlu0 %v3718, 64
    %v6556 = vpop.permute.xlu0 %6555
    %6575 = vrot.lane.b32.xlu0 %v2631, 80
    %v6576 = vpop.permute.xlu0 %6575
    %6577 = vrot.lane.b32.xlu0 %v2767, 80
    %v6578 = vpop.permute.xlu0 %6577
    %6579 = vrot.lane.b32.xlu0 %v2903, 80
    %v6580 = vpop.permute.xlu0 %6579
    %6581 = vrot.lane.b32.xlu0 %v3039, 80
    %v6582 = vpop.permute.xlu0 %6581
    %6583 = vrot.lane.b32.xlu0 %v3175, 80
    %v6584 = vpop.permute.xlu0 %6583
    %6585 = vrot.lane.b32.xlu0 %v3311, 80
    %v6586 = vpop.permute.xlu0 %6585
    %6587 = vrot.lane.b32.xlu0 %v3447, 80
    %v6588 = vpop.permute.xlu0 %6587
    %6589 = vrot.lane.b32.xlu0 %v3583, 80
    %v6590 = vpop.permute.xlu0 %6589
    %6591 = vrot.lane.b32.xlu0 %v3719, 80
    %v6592 = vpop.permute.xlu0 %6591
    %6611 = vrot.lane.b32.xlu0 %v2632, 96
    %v6612 = vpop.permute.xlu0 %6611
    %6613 = vrot.lane.b32.xlu0 %v2768, 96
    %v6614 = vpop.permute.xlu0 %6613
    %6615 = vrot.lane.b32.xlu0 %v2904, 96
    %v6616 = vpop.permute.xlu0 %6615
    %6617 = vrot.lane.b32.xlu0 %v3040, 96
    %v6618 = vpop.permute.xlu0 %6617
    %6619 = vrot.lane.b32.xlu0 %v3176, 96
    %v6620 = vpop.permute.xlu0 %6619
    %6621 = vrot.lane.b32.xlu0 %v3312, 96
    %v6622 = vpop.permute.xlu0 %6621
    %6623 = vrot.lane.b32.xlu0 %v3448, 96
    %v6624 = vpop.permute.xlu0 %6623
    %6625 = vrot.lane.b32.xlu0 %v3584, 96
    %v6626 = vpop.permute.xlu0 %6625
    %6627 = vrot.lane.b32.xlu0 %v3720, 96
    %v6628 = vpop.permute.xlu0 %6627
    %6647 = vrot.lane.b32.xlu0 %v2633, 112
    %v6648 = vpop.permute.xlu0 %6647
    %6649 = vrot.lane.b32.xlu0 %v2769, 112
    %v6650 = vpop.permute.xlu0 %6649
    %6651 = vrot.lane.b32.xlu0 %v2905, 112
    %v6652 = vpop.permute.xlu0 %6651
    %6653 = vrot.lane.b32.xlu0 %v3041, 112
    %v6654 = vpop.permute.xlu0 %6653
    %6655 = vrot.lane.b32.xlu0 %v3177, 112
    %v6656 = vpop.permute.xlu0 %6655
    %6657 = vrot.lane.b32.xlu0 %v3313, 112
    %v6658 = vpop.permute.xlu0 %6657
    %6659 = vrot.lane.b32.xlu0 %v3449, 112
    %v6660 = vpop.permute.xlu0 %6659
    %6661 = vrot.lane.b32.xlu0 %v3585, 112
    %v6662 = vpop.permute.xlu0 %6661
    %6663 = vrot.lane.b32.xlu0 %v3721, 112
    %v6664 = vpop.permute.xlu0 %6663
    %6683 = vrot.lane.b32.xlu0 %v3851, 16
    %v6684 = vpop.permute.xlu0 %6683
    %6685 = vrot.lane.b32.xlu0 %v3987, 16
    %v6686 = vpop.permute.xlu0 %6685
    %6687 = vrot.lane.b32.xlu0 %v4123, 16
    %v6688 = vpop.permute.xlu0 %6687
    %6689 = vrot.lane.b32.xlu0 %v4259, 16
    %v6690 = vpop.permute.xlu0 %6689
    %6691 = vrot.lane.b32.xlu0 %v4395, 16
    %v6692 = vpop.permute.xlu0 %6691
    %6693 = vrot.lane.b32.xlu0 %v4531, 16
    %v6694 = vpop.permute.xlu0 %6693
    %6695 = vrot.lane.b32.xlu0 %v4667, 16
    %v6696 = vpop.permute.xlu0 %6695
    %6697 = vrot.lane.b32.xlu0 %v4803, 16
    %v6698 = vpop.permute.xlu0 %6697
    %6699 = vrot.lane.b32.xlu0 %v4939, 16
    %v6700 = vpop.permute.xlu0 %6699
    %6719 = vrot.lane.b32.xlu0 %v3852, 32
    %v6720 = vpop.permute.xlu0 %6719
    %6721 = vrot.lane.b32.xlu0 %v3988, 32
    %v6722 = vpop.permute.xlu0 %6721
    %6723 = vrot.lane.b32.xlu0 %v4124, 32
    %v6724 = vpop.permute.xlu0 %6723
    %6725 = vrot.lane.b32.xlu0 %v4260, 32
    %v6726 = vpop.permute.xlu0 %6725
    %6727 = vrot.lane.b32.xlu0 %v4396, 32
    %v6728 = vpop.permute.xlu0 %6727
    %6729 = vrot.lane.b32.xlu0 %v4532, 32
    %v6730 = vpop.permute.xlu0 %6729
    %6731 = vrot.lane.b32.xlu0 %v4668, 32
    %v6732 = vpop.permute.xlu0 %6731
    %6733 = vrot.lane.b32.xlu0 %v4804, 32
    %v6734 = vpop.permute.xlu0 %6733
    %6735 = vrot.lane.b32.xlu0 %v4940, 32
    %v6736 = vpop.permute.xlu0 %6735
    %6755 = vrot.lane.b32.xlu0 %v3853, 48
    %v6756 = vpop.permute.xlu0 %6755
    %6757 = vrot.lane.b32.xlu0 %v3989, 48
    %v6758 = vpop.permute.xlu0 %6757
    %6759 = vrot.lane.b32.xlu0 %v4125, 48
    %v6760 = vpop.permute.xlu0 %6759
    %6761 = vrot.lane.b32.xlu0 %v4261, 48
    %v6762 = vpop.permute.xlu0 %6761
    %6763 = vrot.lane.b32.xlu0 %v4397, 48
    %v6764 = vpop.permute.xlu0 %6763
    %6765 = vrot.lane.b32.xlu0 %v4533, 48
    %v6766 = vpop.permute.xlu0 %6765
    %6767 = vrot.lane.b32.xlu0 %v4669, 48
    %v6768 = vpop.permute.xlu0 %6767
    %6769 = vrot.lane.b32.xlu0 %v4805, 48
    %v6770 = vpop.permute.xlu0 %6769
    %6771 = vrot.lane.b32.xlu0 %v4941, 48
    %v6772 = vpop.permute.xlu0 %6771
    %6791 = vrot.lane.b32.xlu0 %v3854, 64
    %v6792 = vpop.permute.xlu0 %6791
    %6793 = vrot.lane.b32.xlu0 %v3990, 64
    %v6794 = vpop.permute.xlu0 %6793
    %6795 = vrot.lane.b32.xlu0 %v4126, 64
    %v6796 = vpop.permute.xlu0 %6795
    %6797 = vrot.lane.b32.xlu0 %v4262, 64
    %v6798 = vpop.permute.xlu0 %6797
    %6799 = vrot.lane.b32.xlu0 %v4398, 64
    %v6800 = vpop.permute.xlu0 %6799
    %6801 = vrot.lane.b32.xlu0 %v4534, 64
    %v6802 = vpop.permute.xlu0 %6801
    %6803 = vrot.lane.b32.xlu0 %v4670, 64
    %v6804 = vpop.permute.xlu0 %6803
    %6805 = vrot.lane.b32.xlu0 %v4806, 64
    %v6806 = vpop.permute.xlu0 %6805
    %6807 = vrot.lane.b32.xlu0 %v4942, 64
    %v6808 = vpop.permute.xlu0 %6807
    %6827 = vrot.lane.b32.xlu0 %v3855, 80
    %v6828 = vpop.permute.xlu0 %6827
    %6829 = vrot.lane.b32.xlu0 %v3991, 80
    %v6830 = vpop.permute.xlu0 %6829
    %6831 = vrot.lane.b32.xlu0 %v4127, 80
    %v6832 = vpop.permute.xlu0 %6831
    %6833 = vrot.lane.b32.xlu0 %v4263, 80
    %v6834 = vpop.permute.xlu0 %6833
    %6835 = vrot.lane.b32.xlu0 %v4399, 80
    %v6836 = vpop.permute.xlu0 %6835
    %6837 = vrot.lane.b32.xlu0 %v4535, 80
    %v6838 = vpop.permute.xlu0 %6837
    %6839 = vrot.lane.b32.xlu0 %v4671, 80
    %v6840 = vpop.permute.xlu0 %6839
    %6841 = vrot.lane.b32.xlu0 %v4807, 80
    %v6842 = vpop.permute.xlu0 %6841
    %6843 = vrot.lane.b32.xlu0 %v4943, 80
    %v6844 = vpop.permute.xlu0 %6843
    %6863 = vrot.lane.b32.xlu0 %v3856, 96
    %v6864 = vpop.permute.xlu0 %6863
    %6865 = vrot.lane.b32.xlu0 %v3992, 96
    %v6866 = vpop.permute.xlu0 %6865
    %6867 = vrot.lane.b32.xlu0 %v4128, 96
    %v6868 = vpop.permute.xlu0 %6867
    %6869 = vrot.lane.b32.xlu0 %v4264, 96
    %v6870 = vpop.permute.xlu0 %6869
    %6871 = vrot.lane.b32.xlu0 %v4400, 96
    %v6872 = vpop.permute.xlu0 %6871
    %6873 = vrot.lane.b32.xlu0 %v4536, 96
    %v6874 = vpop.permute.xlu0 %6873
    %6875 = vrot.lane.b32.xlu0 %v4672, 96
    %v6876 = vpop.permute.xlu0 %6875
    %6877 = vrot.lane.b32.xlu0 %v4808, 96
    %v6878 = vpop.permute.xlu0 %6877
    %6879 = vrot.lane.b32.xlu0 %v4944, 96
    %v6880 = vpop.permute.xlu0 %6879
    %6899 = vrot.lane.b32.xlu0 %v3857, 112
    %v6900 = vpop.permute.xlu0 %6899
    %6901 = vrot.lane.b32.xlu0 %v3993, 112
    %v6902 = vpop.permute.xlu0 %6901
    %6903 = vrot.lane.b32.xlu0 %v4129, 112
    %v6904 = vpop.permute.xlu0 %6903
    %6905 = vrot.lane.b32.xlu0 %v4265, 112
    %v6906 = vpop.permute.xlu0 %6905
    %6907 = vrot.lane.b32.xlu0 %v4401, 112
    %v6908 = vpop.permute.xlu0 %6907
    %6909 = vrot.lane.b32.xlu0 %v4537, 112
    %v6910 = vpop.permute.xlu0 %6909
    %6911 = vrot.lane.b32.xlu0 %v4673, 112
    %v6912 = vpop.permute.xlu0 %6911
    %6913 = vrot.lane.b32.xlu0 %v4809, 112
    %v6914 = vpop.permute.xlu0 %6913
    %6915 = vrot.lane.b32.xlu0 %v4945, 112
    %v6916 = vpop.permute.xlu0 %6915
    %6935 = vrot.lane.b32.xlu0 %v5075, 16
    %v6936 = vpop.permute.xlu0 %6935
    %6937 = vrot.lane.b32.xlu0 %v5211, 16
    %v6938 = vpop.permute.xlu0 %6937
    %6939 = vrot.lane.b32.xlu0 %v5347, 16
    %v6940 = vpop.permute.xlu0 %6939
    %6941 = vrot.lane.b32.xlu0 %v5483, 16
    %v6942 = vpop.permute.xlu0 %6941
    %6943 = vrot.lane.b32.xlu0 %v5619, 16
    %v6944 = vpop.permute.xlu0 %6943
    %6945 = vrot.lane.b32.xlu0 %v5755, 16
    %v6946 = vpop.permute.xlu0 %6945
    %6947 = vrot.lane.b32.xlu0 %v5891, 16
    %v6948 = vpop.permute.xlu0 %6947
    %6949 = vrot.lane.b32.xlu0 %v6027, 16
    %v6950 = vpop.permute.xlu0 %6949
    %6951 = vrot.lane.b32.xlu0 %v6163, 16
    %v6952 = vpop.permute.xlu0 %6951
    %6971 = vrot.lane.b32.xlu0 %v5076, 32
    %v6972 = vpop.permute.xlu0 %6971
    %6973 = vrot.lane.b32.xlu0 %v5212, 32
    %v6974 = vpop.permute.xlu0 %6973
    %6975 = vrot.lane.b32.xlu0 %v5348, 32
    %v6976 = vpop.permute.xlu0 %6975
    %6977 = vrot.lane.b32.xlu0 %v5484, 32
    %v6978 = vpop.permute.xlu0 %6977
    %6979 = vrot.lane.b32.xlu0 %v5620, 32
    %v6980 = vpop.permute.xlu0 %6979
    %6981 = vrot.lane.b32.xlu0 %v5756, 32
    %v6982 = vpop.permute.xlu0 %6981
    %6983 = vrot.lane.b32.xlu0 %v5892, 32
    %v6984 = vpop.permute.xlu0 %6983
    %6985 = vrot.lane.b32.xlu0 %v6028, 32
    %v6986 = vpop.permute.xlu0 %6985
    %6987 = vrot.lane.b32.xlu0 %v6164, 32
    %v6988 = vpop.permute.xlu0 %6987
    %7007 = vrot.lane.b32.xlu0 %v5077, 48
    %v7008 = vpop.permute.xlu0 %7007
    %7009 = vrot.lane.b32.xlu0 %v5213, 48
    %v7010 = vpop.permute.xlu0 %7009
    %7011 = vrot.lane.b32.xlu0 %v5349, 48
    %v7012 = vpop.permute.xlu0 %7011
    %7013 = vrot.lane.b32.xlu0 %v5485, 48
    %v7014 = vpop.permute.xlu0 %7013
    %7015 = vrot.lane.b32.xlu0 %v5621, 48
    %v7016 = vpop.permute.xlu0 %7015
    %7017 = vrot.lane.b32.xlu0 %v5757, 48
    %v7018 = vpop.permute.xlu0 %7017
    %7019 = vrot.lane.b32.xlu0 %v5893, 48
    %v7020 = vpop.permute.xlu0 %7019
    %7021 = vrot.lane.b32.xlu0 %v6029, 48
    %v7022 = vpop.permute.xlu0 %7021
    %7023 = vrot.lane.b32.xlu0 %v6165, 48
    %v7024 = vpop.permute.xlu0 %7023
    %7043 = vrot.lane.b32.xlu0 %v5078, 64
    %v7044 = vpop.permute.xlu0 %7043
    %7045 = vrot.lane.b32.xlu0 %v5214, 64
    %v7046 = vpop.permute.xlu0 %7045
    %7047 = vrot.lane.b32.xlu0 %v5350, 64
    %v7048 = vpop.permute.xlu0 %7047
    %7049 = vrot.lane.b32.xlu0 %v5486, 64
    %v7050 = vpop.permute.xlu0 %7049
    %7051 = vrot.lane.b32.xlu0 %v5622, 64
    %v7052 = vpop.permute.xlu0 %7051
    %7053 = vrot.lane.b32.xlu0 %v5758, 64
    %v7054 = vpop.permute.xlu0 %7053
    %7055 = vrot.lane.b32.xlu0 %v5894, 64
    %v7056 = vpop.permute.xlu0 %7055
    %7057 = vrot.lane.b32.xlu0 %v6030, 64
    %v7058 = vpop.permute.xlu0 %7057
    %7059 = vrot.lane.b32.xlu0 %v6166, 64
    %v7060 = vpop.permute.xlu0 %7059
    %7079 = vrot.lane.b32.xlu0 %v5079, 80
    %v7080 = vpop.permute.xlu0 %7079
    %7081 = vrot.lane.b32.xlu0 %v5215, 80
    %v7082 = vpop.permute.xlu0 %7081
    %7083 = vrot.lane.b32.xlu0 %v5351, 80
    %v7084 = vpop.permute.xlu0 %7083
    %7085 = vrot.lane.b32.xlu0 %v5487, 80
    %v7086 = vpop.permute.xlu0 %7085
    %7087 = vrot.lane.b32.xlu0 %v5623, 80
    %v7088 = vpop.permute.xlu0 %7087
    %7089 = vrot.lane.b32.xlu0 %v5759, 80
    %v7090 = vpop.permute.xlu0 %7089
    %7091 = vrot.lane.b32.xlu0 %v5895, 80
    %v7092 = vpop.permute.xlu0 %7091
    %7093 = vrot.lane.b32.xlu0 %v6031, 80
    %v7094 = vpop.permute.xlu0 %7093
    %7095 = vrot.lane.b32.xlu0 %v6167, 80
    %v7096 = vpop.permute.xlu0 %7095
    %7115 = vrot.lane.b32.xlu0 %v5080, 96
    %v7116 = vpop.permute.xlu0 %7115
    %7117 = vrot.lane.b32.xlu0 %v5216, 96
    %v7118 = vpop.permute.xlu0 %7117
    %7119 = vrot.lane.b32.xlu0 %v5352, 96
    %v7120 = vpop.permute.xlu0 %7119
    %7121 = vrot.lane.b32.xlu0 %v5488, 96
    %v7122 = vpop.permute.xlu0 %7121
    %7123 = vrot.lane.b32.xlu0 %v5624, 96
    %v7124 = vpop.permute.xlu0 %7123
    %7125 = vrot.lane.b32.xlu0 %v5760, 96
    %v7126 = vpop.permute.xlu0 %7125
    %7127 = vrot.lane.b32.xlu0 %v5896, 96
    %v7128 = vpop.permute.xlu0 %7127
    %7129 = vrot.lane.b32.xlu0 %v6032, 96
    %v7130 = vpop.permute.xlu0 %7129
    %7131 = vrot.lane.b32.xlu0 %v6168, 96
    %v7132 = vpop.permute.xlu0 %7131
    %7151 = vrot.lane.b32.xlu0 %v5081, 112
    %v7152 = vpop.permute.xlu0 %7151
    %7153 = vrot.lane.b32.xlu0 %v5217, 112
    %v7154 = vpop.permute.xlu0 %7153
    %7155 = vrot.lane.b32.xlu0 %v5353, 112
    %v7156 = vpop.permute.xlu0 %7155
    %7157 = vrot.lane.b32.xlu0 %v5489, 112
    %v7158 = vpop.permute.xlu0 %7157
    %7159 = vrot.lane.b32.xlu0 %v5625, 112
    %v7160 = vpop.permute.xlu0 %7159
    %7161 = vrot.lane.b32.xlu0 %v5761, 112
    %v7162 = vpop.permute.xlu0 %7161
    %7163 = vrot.lane.b32.xlu0 %v5897, 112
    %v7164 = vpop.permute.xlu0 %7163
    %7165 = vrot.lane.b32.xlu0 %v6033, 112
    %v7166 = vpop.permute.xlu0 %7165
    %7167 = vrot.lane.b32.xlu0 %v6169, 112
    %v7168 = vpop.permute.xlu0 %7167
    %v7178 = vsel %vm228, %v1402, %v6180
    %v7179 = vsel %vm228, %v1538, %v6182
    %v7180 = vsel %vm228, %v1674, %v6184
    %v7181 = vsel %vm228, %v1810, %v6186
    %v7182 = vsel %vm228, %v1946, %v6188
    %v7183 = vsel %vm228, %v2082, %v6190
    %v7184 = vsel %vm228, %v2218, %v6192
    %v7185 = vsel %vm228, %v2354, %v6194
    %v7186 = vsel %vm228, %v2490, %v6196
    %vm7187 = vcmask 261120
    %v7188 = vsel %vm7187, %v7178, %v6216
    %v7189 = vsel %vm7187, %v7179, %v6218
    %v7190 = vsel %vm7187, %v7180, %v6220
    %v7191 = vsel %vm7187, %v7181, %v6222
    %v7192 = vsel %vm7187, %v7182, %v6224
    %v7193 = vsel %vm7187, %v7183, %v6226
    %v7194 = vsel %vm7187, %v7184, %v6228
    %v7195 = vsel %vm7187, %v7185, %v6230
    %v7196 = vsel %vm7187, %v7186, %v6232
    %vm7197 = vcmask 392192
    %v7198 = vsel %vm7197, %v7188, %v6252
    %v7199 = vsel %vm7197, %v7189, %v6254
    %v7200 = vsel %vm7197, %v7190, %v6256
    %v7201 = vsel %vm7197, %v7191, %v6258
    %v7202 = vsel %vm7197, %v7192, %v6260
    %v7203 = vsel %vm7197, %v7193, %v6262
    %v7204 = vsel %vm7197, %v7194, %v6264
    %v7205 = vsel %vm7197, %v7195, %v6266
    %v7206 = vsel %vm7197, %v7196, %v6268
    %vm7207 = vcmask 523264
    %v7208 = vsel %vm7207, %v7198, %v6288
    %v7209 = vsel %vm7207, %v7199, %v6290
    %v7210 = vsel %vm7207, %v7200, %v6292
    %v7211 = vsel %vm7207, %v7201, %v6294
    %v7212 = vsel %vm7207, %v7202, %v6296
    %v7213 = vsel %vm7207, %v7203, %v6298
    %v7214 = vsel %vm7207, %v7204, %v6300
    %v7215 = vsel %vm7207, %v7205, %v6302
    %v7216 = vsel %vm7207, %v7206, %v6304
    %vm7217 = vcmask 654336
    %v7218 = vsel %vm7217, %v7208, %v6324
    %v7219 = vsel %vm7217, %v7209, %v6326
    %v7220 = vsel %vm7217, %v7210, %v6328
    %v7221 = vsel %vm7217, %v7211, %v6330
    %v7222 = vsel %vm7217, %v7212, %v6332
    %v7223 = vsel %vm7217, %v7213, %v6334
    %v7224 = vsel %vm7217, %v7214, %v6336
    %v7225 = vsel %vm7217, %v7215, %v6338
    %v7226 = vsel %vm7217, %v7216, %v6340
    %vm7227 = vcmask 785408
    %v7228 = vsel %vm7227, %v7218, %v6360
    %v7229 = vsel %vm7227, %v7219, %v6362
    %v7230 = vsel %vm7227, %v7220, %v6364
    %v7231 = vsel %vm7227, %v7221, %v6366
    %v7232 = vsel %vm7227, %v7222, %v6368
    %v7233 = vsel %vm7227, %v7223, %v6370
    %v7234 = vsel %vm7227, %v7224, %v6372
    %v7235 = vsel %vm7227, %v7225, %v6374
    %v7236 = vsel %vm7227, %v7226, %v6376
    %vm7237 = vcmask 916480
    %v7238 = vsel %vm7237, %v7228, %v6396
    %v7239 = vsel %vm7237, %v7229, %v6398
    %v7240 = vsel %vm7237, %v7230, %v6400
    %v7241 = vsel %vm7237, %v7231, %v6402
    %v7242 = vsel %vm7237, %v7232, %v6404
    %v7243 = vsel %vm7237, %v7233, %v6406
    %v7244 = vsel %vm7237, %v7234, %v6408
    %v7245 = vsel %vm7237, %v7235, %v6410
    %v7246 = vsel %vm7237, %v7236, %v6412
    %v7247 = vsel %vm228, %v2626, %v6432
    %v7248 = vsel %vm228, %v2762, %v6434
    %v7249 = vsel %vm228, %v2898, %v6436
    %v7250 = vsel %vm228, %v3034, %v6438
    %v7251 = vsel %vm228, %v3170, %v6440
    %v7252 = vsel %vm228, %v3306, %v6442
    %v7253 = vsel %vm228, %v3442, %v6444
    %v7254 = vsel %vm228, %v3578, %v6446
    %v7255 = vsel %vm228, %v3714, %v6448
    %v7256 = vsel %vm7187, %v7247, %v6468
    %v7257 = vsel %vm7187, %v7248, %v6470
    %v7258 = vsel %vm7187, %v7249, %v6472
    %v7259 = vsel %vm7187, %v7250, %v6474
    %v7260 = vsel %vm7187, %v7251, %v6476
    %v7261 = vsel %vm7187, %v7252, %v6478
    %v7262 = vsel %vm7187, %v7253, %v6480
    %v7263 = vsel %vm7187, %v7254, %v6482
    %v7264 = vsel %vm7187, %v7255, %v6484
    %v7265 = vsel %vm7197, %v7256, %v6504
    %v7266 = vsel %vm7197, %v7257, %v6506
    %v7267 = vsel %vm7197, %v7258, %v6508
    %v7268 = vsel %vm7197, %v7259, %v6510
    %v7269 = vsel %vm7197, %v7260, %v6512
    %v7270 = vsel %vm7197, %v7261, %v6514
    %v7271 = vsel %vm7197, %v7262, %v6516
    %v7272 = vsel %vm7197, %v7263, %v6518
    %v7273 = vsel %vm7197, %v7264, %v6520
    %v7274 = vsel %vm7207, %v7265, %v6540
    %v7275 = vsel %vm7207, %v7266, %v6542
    %v7276 = vsel %vm7207, %v7267, %v6544
    %v7277 = vsel %vm7207, %v7268, %v6546
    %v7278 = vsel %vm7207, %v7269, %v6548
    %v7279 = vsel %vm7207, %v7270, %v6550
    %v7280 = vsel %vm7207, %v7271, %v6552
    %v7281 = vsel %vm7207, %v7272, %v6554
    %v7282 = vsel %vm7207, %v7273, %v6556
    %v7283 = vsel %vm7217, %v7274, %v6576
    %v7284 = vsel %vm7217, %v7275, %v6578
    %v7285 = vsel %vm7217, %v7276, %v6580
    %v7286 = vsel %vm7217, %v7277, %v6582
    %v7287 = vsel %vm7217, %v7278, %v6584
    %v7288 = vsel %vm7217, %v7279, %v6586
    %v7289 = vsel %vm7217, %v7280, %v6588
    %v7290 = vsel %vm7217, %v7281, %v6590
    %v7291 = vsel %vm7217, %v7282, %v6592
    %v7292 = vsel %vm7227, %v7283, %v6612
    %v7293 = vsel %vm7227, %v7284, %v6614
    %v7294 = vsel %vm7227, %v7285, %v6616
    %v7295 = vsel %vm7227, %v7286, %v6618
    %v7296 = vsel %vm7227, %v7287, %v6620
    %v7297 = vsel %vm7227, %v7288, %v6622
    %v7298 = vsel %vm7227, %v7289, %v6624
    %v7299 = vsel %vm7227, %v7290, %v6626
    %v7300 = vsel %vm7227, %v7291, %v6628
    %v7301 = vsel %vm7237, %v7292, %v6648
    %v7302 = vsel %vm7237, %v7293, %v6650
    %v7303 = vsel %vm7237, %v7294, %v6652
    %v7304 = vsel %vm7237, %v7295, %v6654
    %v7305 = vsel %vm7237, %v7296, %v6656
    %v7306 = vsel %vm7237, %v7297, %v6658
    %v7307 = vsel %vm7237, %v7298, %v6660
    %v7308 = vsel %vm7237, %v7299, %v6662
    %v7309 = vsel %vm7237, %v7300, %v6664
    %v7310 = vsel %vm228, %v3850, %v6684
    %v7311 = vsel %vm228, %v3986, %v6686
    %v7312 = vsel %vm228, %v4122, %v6688
    %v7313 = vsel %vm228, %v4258, %v6690
    %v7314 = vsel %vm228, %v4394, %v6692
    %v7315 = vsel %vm228, %v4530, %v6694
    %v7316 = vsel %vm228, %v4666, %v6696
    %v7317 = vsel %vm228, %v4802, %v6698
    %v7318 = vsel %vm228, %v4938, %v6700
    %v7319 = vsel %vm7187, %v7310, %v6720
    %v7320 = vsel %vm7187, %v7311, %v6722
    %v7321 = vsel %vm7187, %v7312, %v6724
    %v7322 = vsel %vm7187, %v7313, %v6726
    %v7323 = vsel %vm7187, %v7314, %v6728
    %v7324 = vsel %vm7187, %v7315, %v6730
    %v7325 = vsel %vm7187, %v7316, %v6732
    %v7326 = vsel %vm7187, %v7317, %v6734
    %v7327 = vsel %vm7187, %v7318, %v6736
    %v7328 = vsel %vm7197, %v7319, %v6756
    %v7329 = vsel %vm7197, %v7320, %v6758
    %v7330 = vsel %vm7197, %v7321, %v6760
    %v7331 = vsel %vm7197, %v7322, %v6762
    %v7332 = vsel %vm7197, %v7323, %v6764
    %v7333 = vsel %vm7197, %v7324, %v6766
    %v7334 = vsel %vm7197, %v7325, %v6768
    %v7335 = vsel %vm7197, %v7326, %v6770
    %v7336 = vsel %vm7197, %v7327, %v6772
    %v7337 = vsel %vm7207, %v7328, %v6792
    %v7338 = vsel %vm7207, %v7329, %v6794
    %v7339 = vsel %vm7207, %v7330, %v6796
    %v7340 = vsel %vm7207, %v7331, %v6798
    %v7341 = vsel %vm7207, %v7332, %v6800
    %v7342 = vsel %vm7207, %v7333, %v6802
    %v7343 = vsel %vm7207, %v7334, %v6804
    %v7344 = vsel %vm7207, %v7335, %v6806
    %v7345 = vsel %vm7207, %v7336, %v6808
    %v7346 = vsel %vm7217, %v7337, %v6828
    %v7347 = vsel %vm7217, %v7338, %v6830
    %v7348 = vsel %vm7217, %v7339, %v6832
    %v7349 = vsel %vm7217, %v7340, %v6834
    %v7350 = vsel %vm7217, %v7341, %v6836
    %v7351 = vsel %vm7217, %v7342, %v6838
    %v7352 = vsel %vm7217, %v7343, %v6840
    %v7353 = vsel %vm7217, %v7344, %v6842
    %v7354 = vsel %vm7217, %v7345, %v6844
    %v7355 = vsel %vm7227, %v7346, %v6864
    %v7356 = vsel %vm7227, %v7347, %v6866
    %v7357 = vsel %vm7227, %v7348, %v6868
    %v7358 = vsel %vm7227, %v7349, %v6870
    %v7359 = vsel %vm7227, %v7350, %v6872
    %v7360 = vsel %vm7227, %v7351, %v6874
    %v7361 = vsel %vm7227, %v7352, %v6876
    %v7362 = vsel %vm7227, %v7353, %v6878
    %v7363 = vsel %vm7227, %v7354, %v6880
    %v7364 = vsel %vm7237, %v7355, %v6900
    %v7365 = vsel %vm7237, %v7356, %v6902
    %v7366 = vsel %vm7237, %v7357, %v6904
    %v7367 = vsel %vm7237, %v7358, %v6906
    %v7368 = vsel %vm7237, %v7359, %v6908
    %v7369 = vsel %vm7237, %v7360, %v6910
    %v7370 = vsel %vm7237, %v7361, %v6912
    %v7371 = vsel %vm7237, %v7362, %v6914
    %v7372 = vsel %vm7237, %v7363, %v6916
    %v7373 = vsel %vm228, %v5074, %v6936
    %v7374 = vsel %vm228, %v5210, %v6938
    %v7375 = vsel %vm228, %v5346, %v6940
    %v7376 = vsel %vm228, %v5482, %v6942
    %v7377 = vsel %vm228, %v5618, %v6944
    %v7378 = vsel %vm228, %v5754, %v6946
    %v7379 = vsel %vm228, %v5890, %v6948
    %v7380 = vsel %vm228, %v6026, %v6950
    %v7381 = vsel %vm228, %v6162, %v6952
    %v7382 = vsel %vm7187, %v7373, %v6972
    %v7383 = vsel %vm7187, %v7374, %v6974
    %v7384 = vsel %vm7187, %v7375, %v6976
    %v7385 = vsel %vm7187, %v7376, %v6978
    %v7386 = vsel %vm7187, %v7377, %v6980
    %v7387 = vsel %vm7187, %v7378, %v6982
    %v7388 = vsel %vm7187, %v7379, %v6984
    %v7389 = vsel %vm7187, %v7380, %v6986
    %v7390 = vsel %vm7187, %v7381, %v6988
    %v7391 = vsel %vm7197, %v7382, %v7008
    %v7392 = vsel %vm7197, %v7383, %v7010
    %v7393 = vsel %vm7197, %v7384, %v7012
    %v7394 = vsel %vm7197, %v7385, %v7014
    %v7395 = vsel %vm7197, %v7386, %v7016
    %v7396 = vsel %vm7197, %v7387, %v7018
    %v7397 = vsel %vm7197, %v7388, %v7020
    %v7398 = vsel %vm7197, %v7389, %v7022
    %v7399 = vsel %vm7197, %v7390, %v7024
    %v7400 = vsel %vm7207, %v7391, %v7044
    %v7401 = vsel %vm7207, %v7392, %v7046
    %v7402 = vsel %vm7207, %v7393, %v7048
    %v7403 = vsel %vm7207, %v7394, %v7050
    %v7404 = vsel %vm7207, %v7395, %v7052
    %v7405 = vsel %vm7207, %v7396, %v7054
    %v7406 = vsel %vm7207, %v7397, %v7056
    %v7407 = vsel %vm7207, %v7398, %v7058
    %v7408 = vsel %vm7207, %v7399, %v7060
    %v7409 = vsel %vm7217, %v7400, %v7080
    %v7410 = vsel %vm7217, %v7401, %v7082
    %v7411 = vsel %vm7217, %v7402, %v7084
    %v7412 = vsel %vm7217, %v7403, %v7086
    %v7413 = vsel %vm7217, %v7404, %v7088
    %v7414 = vsel %vm7217, %v7405, %v7090
    %v7415 = vsel %vm7217, %v7406, %v7092
    %v7416 = vsel %vm7217, %v7407, %v7094
    %v7417 = vsel %vm7217, %v7408, %v7096
    %v7418 = vsel %vm7227, %v7409, %v7116
    %v7419 = vsel %vm7227, %v7410, %v7118
    %v7420 = vsel %vm7227, %v7411, %v7120
    %v7421 = vsel %vm7227, %v7412, %v7122
    %v7422 = vsel %vm7227, %v7413, %v7124
    %v7423 = vsel %vm7227, %v7414, %v7126
    %v7424 = vsel %vm7227, %v7415, %v7128
    %v7425 = vsel %vm7227, %v7416, %v7130
    %v7426 = vsel %vm7227, %v7417, %v7132
    %v7427 = vsel %vm7237, %v7418, %v7152
    %v7428 = vsel %vm7237, %v7419, %v7154
    %v7429 = vsel %vm7237, %v7420, %v7156
    %v7430 = vsel %vm7237, %v7421, %v7158
    %v7431 = vsel %vm7237, %v7422, %v7160
    %v7432 = vsel %vm7237, %v7423, %v7162
    %v7433 = vsel %vm7237, %v7424, %v7164
    %v7434 = vsel %vm7237, %v7425, %v7166
    %v7435 = vsel %vm7237, %v7426, %v7168
    %v7436 = vpack.c.bf16 %v7239, %v7238
    %v7437 = vpack.c.bf16 %v7302, %v7301
    %v7438 = vpack.c.bf16 %v7365, %v7364
    %v7439 = vpack.c.bf16 %v7428, %v7427
    %v7440 = vpack.c.bf16 %v7241, %v7240
    %v7441 = vpack.c.bf16 %v7304, %v7303
    %v7442 = vpack.c.bf16 %v7367, %v7366
    %v7443 = vpack.c.bf16 %v7430, %v7429
    %v7444 = vpack.c.bf16 %v7243, %v7242
    %v7445 = vpack.c.bf16 %v7306, %v7305
    %v7446 = vpack.c.bf16 %v7369, %v7368
    %v7447 = vpack.c.bf16 %v7432, %v7431
    %v7448 = vpack.c.bf16 %v7245, %v7244
    %v7449 = vpack.c.bf16 %v7308, %v7307
    %v7450 = vpack.c.bf16 %v7371, %v7370
    %v7451 = vpack.c.bf16 %v7434, %v7433
    %v7452 = vpack.c.bf16 %v7246, %v7246
    %v7453 = vpack.c.bf16 %v7309, %v7309
    %v7454 = vpack.c.bf16 %v7372, %v7372
    %v7455 = vpack.c.bf16 %v7435, %v7435
    %v7456 = vld [vmem:[%s1] sm:$0xf]
    %v7457 = vld [vmem:[%s2] sm:$0xff]
    %7459 = vset.pattern.permute.xlu0 0
    %7460 = vperm.xlu0 %7459, %v7457
    %v7461 = vpop.permute.xlu0 %7460
    %vm7463 = vcmask 588800
    %v7465 = vsel %vm7463, %v7456, 0
    %vm7467 = vcmask 1043456
    %v7469 = vsel %vm7467, %v7452, 0
    %v7472 = vsel %vm7467, %v7453, 0
    %v7475 = vsel %vm7467, %v7454, 0
    %v7478 = vsel %vm7467, %v7455, 0
    %7480 = vmatprep.subr.bf16.mxu0 %v7437
    %7481 = vmatpush1.bf16.msra.mxu0 %v7436
    %7482 = vmatprep.subr.bf16.mxu0 %v7441
    %7483 = vmatpush1.bf16.msra.mxu0 %v7440
    %7484 = vmatprep.subr.bf16.mxu0 %v7445
    %7485 = vmatpush1.bf16.msra.mxu0 %v7444
    %7486 = vmatprep.subr.bf16.mxu0 %v7449
    %7487 = vmatpush1.bf16.msra.mxu0 %v7448
    %7488 = vmatprep.subr.bf16.mxu0 %v7472
    %7489 = vmatpush1.bf16.msra.mxu0 %v7469
    %7490 = vmatprep.subr.bf16.mxu0 0
    %7491 = vmatpush1.bf16.msra.mxu0 0
    %7492 = vmatprep.subr.bf16.mxu0 0
    %7493 = vmatpush1.bf16.msra.mxu0 0
    %7494 = vmatprep.subr.bf16.mxu0 0
    %7495 = vmatpush1.bf16.msra.mxu0 0
    %7496 = vmatprep.subr.bf16.mxu0 0
    %7497 = vmatpush1.bf16.msra.mxu0 0
    %7498 = vmatprep.subr.bf16.mxu0 0
    %7499 = vmatpush1.bf16.msra.mxu0 0
    %7500 = vmatprep.subr.bf16.mxu0 0
    %7501 = vmatpush1.bf16.msra.mxu0 0
    %7502 = vmatprep.subr.bf16.mxu0 0
    %7503 = vmatpush1.bf16.msra.mxu0 0
    %7504 = vmatprep.subr.bf16.mxu0 0
    %7505 = vmatpush1.bf16.msra.mxu0 0
    %7506 = vmatprep.subr.bf16.mxu0 0
    %7507 = vmatpush1.bf16.msra.mxu0 0
    %7508 = vmatprep.subr.bf16.mxu0 0
    %7509 = vmatpush1.bf16.msra.mxu0 0
    %7510 = vmatprep.subr.bf16.mxu0 0
    %7511 = vmatpush1.bf16.msra.mxu0 0
    %7512 = vmatprep.mubr.bf16.mxu0 0
    %7513 = vmatmul.mubr.bf16.gmra.mrb[0].mxu0 %v7465
    %v7514 = vpop.f32.mrb[0].mxu0
    %v7515 = vadd.f32 %v7461, %v7514
    %v7516 = vpop.f32.mrb[0].mxu0
    %v7517 = vadd.f32 %v7461, %v7516
    %v7518 = vpop.f32.mrb[0].mxu0
    %v7519 = vpop.f32.mrb[0].mxu0
    %7520 = vdwg.mxu0
    %7521 = vmatprep.subr.bf16.mxu0 %v7439
    %7522 = vmatpush1.bf16.msra.mxu0 %v7438
    %7523 = vmatprep.subr.bf16.mxu0 %v7443
    %7524 = vmatpush1.bf16.msra.mxu0 %v7442
    %7525 = vmatprep.subr.bf16.mxu0 %v7447
    %7526 = vmatpush1.bf16.msra.mxu0 %v7446
    %7527 = vmatprep.subr.bf16.mxu0 %v7451
    %7528 = vmatpush1.bf16.msra.mxu0 %v7450
    %7529 = vmatprep.subr.bf16.mxu0 %v7478
    %7530 = vmatpush1.bf16.msra.mxu0 %v7475
    %7531 = vmatprep.subr.bf16.mxu0 0
    %7532 = vmatpush1.bf16.msra.mxu0 0
    %7533 = vmatprep.subr.bf16.mxu0 0
    %7534 = vmatpush1.bf16.msra.mxu0 0
    %7535 = vmatprep.subr.bf16.mxu0 0
    %7536 = vmatpush1.bf16.msra.mxu0 0
    %7537 = vmatprep.subr.bf16.mxu0 0
    %7538 = vmatpush1.bf16.msra.mxu0 0
    %7539 = vmatprep.subr.bf16.mxu0 0
    %7540 = vmatpush1.bf16.msra.mxu0 0
    %7541 = vmatprep.subr.bf16.mxu0 0
    %7542 = vmatpush1.bf16.msra.mxu0 0
    %7543 = vmatprep.subr.bf16.mxu0 0
    %7544 = vmatpush1.bf16.msra.mxu0 0
    %7545 = vmatprep.subr.bf16.mxu0 0
    %7546 = vmatpush1.bf16.msra.mxu0 0
    %7547 = vmatprep.subr.bf16.mxu0 0
    %7548 = vmatpush1.bf16.msra.mxu0 0
    %7549 = vmatprep.subr.bf16.mxu0 0
    %7550 = vmatpush1.bf16.msra.mxu0 0
    %7551 = vmatprep.subr.bf16.mxu0 0
    %7552 = vmatpush1.bf16.msra.mxu0 0
    %7553 = vmatprep.mubr.bf16.mxu0 0
    %7554 = vmatmul.mubr.bf16.gmra.mrb[0].mxu0 %v7465
    %v7555 = vpop.f32.mrb[0].mxu0
    %v7556 = vadd.f32 %v7461, %v7555
    %v7557 = vpop.f32.mrb[0].mxu0
    %v7558 = vadd.f32 %v7461, %v7557
    %v7559 = vpop.f32.mrb[0].mxu0
    %v7560 = vpop.f32.mrb[0].mxu0
    %7561 = vdwg.mxu0
    %v7562 = vxor.u32 %v7515, 2147483648
    %v7563 = vxor.u32 %v7517, 2147483648
    %v7564 = vxor.u32 %v7556, 2147483648
    %v7565 = vxor.u32 %v7558, 2147483648
    %v7566 = vmul.f32 %v7562, 1.442695
    %v7567 = vpow.pop %v7566
    %v7568 = vmul.f32 %v7563, 1.442695
    %v7569 = vpow.pop %v7568
    %v7570 = vmul.f32 %v7564, 1.442695
    %v7571 = vpow.pop %v7570
    %v7572 = vmul.f32 %v7565, 1.442695
    %v7573 = vpow.pop %v7572
    %v7574 = vadd.f32 %v7567, 1.0
    %v7575 = vadd.f32 %v7569, 1.0
    %v7576 = vadd.f32 %v7571, 1.0
    %v7577 = vadd.f32 %v7573, 1.0
    %v7578 = vrcp.pop %v7574
    %v7579 = vmul.f32 1.0, %v7578
    %v7580 = vrcp.pop %v7575
    %v7581 = vmul.f32 1.0, %v7580
    %v7582 = vrcp.pop %v7576
    %v7583 = vmul.f32 1.0, %v7582
    %v7584 = vrcp.pop %v7577
    %v7585 = vmul.f32 1.0, %v7584
    %7586 = vst [vmem:[%s3] sm:$0xff] %v7579
    %7587 = vst [vmem:[%s3 + $0x8] sm:$0xff] %v7581
    %s7588 = scalar_lea.vmem %s3, 16
    %7589 = vst [vmem:[%s7588] sm:$0xff] %v7583
    %7590 = vst [vmem:[%s7588 + $0x8] sm:$0xff] %v7585
    // Predicated region
    $region18: #{cnn_1stnet_forward.1} parent=1 // pred_check
      _
    $region19: #{cnn_1stnet_forward.1} parent=1 // pred_check_branch
      %7592 = sbr.rel (0) target = $region21
    $region20: #{cnn_1stnet_forward.1} parent=1 // pred_region
      _
    $region21: #{cnn_1stnet_forward.1} parent=1 // pred_fallthru
      _
    // Predicated region
    $region22: #{cnn_1stnet_forward.1} parent=1 // pred_check
      _
    $region23: #{cnn_1stnet_forward.1} parent=1 // pred_check_branch
      %7594 = sbr.rel (0) target = $region25
    $region24: #{cnn_1stnet_forward.1} parent=1 // pred_region
      _
    $region25: #{cnn_1stnet_forward.1} parent=1 // pred_fallthru
      _
    %7595 = vsyncpa [#allocation5], 1

</llo_original>
